<compile_context>
chip_gen: v7x
topology: tpu7x:2x2x1
jax: 0.10.0
libtpu: 0.0.40
codegen_flags: <defaults>
</compile_context>

<pallas_src>
import numpy as np
import jax
import jax.numpy as jnp
from jax.experimental import pallas as pl
from jax.experimental.pallas import tpu as pltpu

PRIMITIVES = ("none", "skip_connect", "avg_pool_3x3", "max_pool_3x3", "conv_1x1")

STEPS = 2        # self._steps
MULTIPLIER = 2   # self._multiplier
BN_EPS = 1e-5
NEG_PAD = -3.0e38   # f32 max-pool out-of-bounds sentinel
RED_LANES = 128     # lane width of the MXU row-reduction ones-operand


def _full_spec(shape):
    nd = len(shape)
    return pl.BlockSpec(shape, lambda i, _nd=nd: (0,) * _nd)


def _pool_geometry(n, d, h, w):
    """Host-side, shape-only pooling geometry, packed as an (8, P) f32 array.

    rows 0..5 : "keep" masks (1.0 = neighbor valid) for W-left, W-right,
                H-left, H-right, D-left, D-right.  The D masks also kill
                cross-sample wrap contributions (batch axis is outermost).
    row 6     : 1 / valid-count for the 3x3x3 avg pool (count_include_pad=False,
                stride 1, pad 1: counts factorize per axis).
    row 7     : padding (sublane alignment).
    """
    p = n * d * h * w
    pos = np.arange(p)
    wc = pos % w
    hc = (pos // w) % h
    dc = (pos // (w * h)) % d
    kwl = (wc > 0).astype(np.float32)
    kwr = (wc < w - 1).astype(np.float32)
    khl = (hc > 0).astype(np.float32)
    khr = (hc < h - 1).astype(np.float32)
    kdl = (dc > 0).astype(np.float32)
    kdr = (dc < d - 1).astype(np.float32)
    cnt = (1.0 + kwl + kwr) * (1.0 + khl + khr) * (1.0 + kdl + kdr)
    geo = np.stack([kwl, kwr, khl, khr, kdl, kdr,
                    (1.0 / cnt).astype(np.float32),
                    np.zeros(p, np.float32)], axis=0)
    return jnp.asarray(geo, jnp.float32)


def _make_cell_kernel(c, n, d, h, w, num_edges):
    p = n * d * h * w
    hw = h * w
    inv_p = 1.0 / float(p)

    def kernel(aw_ref, x0_ref, x1_ref, w0_ref, w1_ref, ew_ref, geo_ref, out_ref):
        # ---- hoisted, cell-wide constants (shared by every edge) -----------
        # MXU row-reduction operand: splat of 1.0, no HBM traffic.
        ones_col = jnp.ones((p, RED_LANES), jnp.float32)

        def geo_row(r):
            # broadcast a geometry row once; reused by all 5 edges
            return jnp.broadcast_to(geo_ref[pl.ds(r, 1), :], (c, p))

        m_wl = geo_row(0) > 0.5
        m_wr = geo_row(1) > 0.5
        m_hl = geo_row(2) > 0.5
        m_hr = geo_row(3) > 0.5
        m_dl = geo_row(4) > 0.5
        m_dr = geo_row(5) > 0.5
        inv_cnt = geo_row(6)

        def row_sum(y):
            # (C, P) -> (C, 1) row sums on the otherwise-idle MXU:
            # y @ ones replicates the row sum across 128 lanes; the 1-vreg
            # lane-mean collapses it and yields a lane-replicated layout for
            # the subsequent broadcast subtract.
            return jnp.mean(
                jnp.dot(y, ones_col, preferred_element_type=jnp.float32),
                axis=1, keepdims=True)

        def bn(y):
            # BatchNorm3d(affine=False), training mode: per-channel batch
            # stats over P = N*D*H*W, biased variance.  Subtract-mean form
            # (numerically stable), f32 accumulation.
            yc = y - row_sum(y) * inv_p
            var = row_sum(yc * yc) * inv_p
            return yc * jax.lax.rsqrt(var + BN_EPS)

        def relu_conv_bn(x, wgt):
            # ReLU -> 1x1x1 Conv3d(bias=False) as a channel matmul -> BN.
            hr = jnp.maximum(x, 0.0)
            return bn(jnp.dot(wgt, hr, preferred_element_type=jnp.float32))

        def pool3x3(x):
            # Fused separable 3x3x3 max / avg pool (stride 1, pad 1) via XLU
            # lane rolls + precomputed boundary masks.  First axis shares its
            # two rolls between the max and sum paths (xm == xs == x there):
            # 10 rolls per edge.
            lx = pltpu.roll(x, 1, axis=1)          # left neighbor along W
            rx = pltpu.roll(x, p - 1, axis=1)      # right neighbor along W
            xm = jnp.maximum(x, jnp.maximum(jnp.where(m_wl, lx, NEG_PAD),
                                            jnp.where(m_wr, rx, NEG_PAD)))
            xs = x + jnp.where(m_wl, lx, 0.0) + jnp.where(m_wr, rx, 0.0)
            for stride, ml, mr in ((w, m_hl, m_hr), (hw, m_dl, m_dr)):
                lm = pltpu.roll(xm, stride, axis=1)
                rm = pltpu.roll(xm, p - stride, axis=1)
                xm = jnp.maximum(xm,
                                 jnp.maximum(jnp.where(ml, lm, NEG_PAD),
                                             jnp.where(mr, rm, NEG_PAD)))
                ls = pltpu.roll(xs, stride, axis=1)
                rs = pltpu.roll(xs, p - stride, axis=1)
                xs = xs + jnp.where(ml, ls, 0.0) + jnp.where(mr, rs, 0.0)
            # count_include_pad=False: divide the valid sum by the valid count
            # (precomputed exact reciprocal).
            return xm, xs * inv_cnt

        def mixed_edge(x, e):
            # MixedOp3D: sum_k w_k * op_k(x).  PRIMITIVES order:
            # none, skip_connect, avg_pool_3x3, max_pool_3x3, conv_1x1.
            # Pool branches are wrapped in BN(affine=False); 'none' adds 0.
            # Single running accumulator; conv branch evaluated last so it is
            # not live across the pooling loop.
            acc = aw_ref[e, 1] * x                       # skip_connect
            xm, avg = pool3x3(x)
            acc = acc + aw_ref[e, 2] * bn(avg)           # avg_pool_3x3 + BN
            acc = acc + aw_ref[e, 3] * bn(xm)            # max_pool_3x3 + BN
            acc = acc + aw_ref[e, 4] * relu_conv_bn(x, ew_ref[e])   # conv_1x1
            return acc

        # ---- Cell3D.forward (literal model_search_seq.py DAG) --------------
        s0 = relu_conv_bn(x0_ref[...], w0_ref[...])      # preprocess0
        s1 = relu_conv_bn(x1_ref[...], w1_ref[...])      # preprocess1
        states = [s0, s1]
        offset = 0
        for i in range(STEPS):
            for j in range(2 + i):
                states.append(mixed_edge(states[j], offset + j))
            offset += 2 + i

        # torch.cat(states[-multiplier:], dim=1) == row-concat in (C, P);
        # written directly into the lane-dense output slab.
        for m, st in enumerate(states[-MULTIPLIER:]):
            out_ref[pl.ds(m * c, c), :] = st

    return kernel


def cell3d_forward(s0, s1, weights, params):
    # reduction=False, reduction_prev=False -> both preprocesses are
    # ReLUConvBN3D 1x1x1.
    n, c_pp, d, h, w = s0.shape
    c_p = s1.shape[1]
    c = params["pre0_w"].shape[0]
    p = n * d * h * w
    num_edges = weights.shape[0]

    def to2d(a):
        # NCDHW -> channel-major lane-dense (C, P); done once per cell input.
        return jnp.transpose(a, (1, 0, 2, 3, 4)).reshape(a.shape[1], p)

    geo = _pool_geometry(n, d, h, w)
    kernel = _make_cell_kernel(c, n, d, h, w, num_edges)

    out2d = pl.pallas_call(
        kernel,
        out_shape=jax.ShapeDtypeStruct((MULTIPLIER * c, p), jnp.float32),
        grid=(1,),
        in_specs=[pl.BlockSpec(memory_space=pltpu.SMEM),   # arch weights (scalars)
                  _full_spec((c_pp, p)),                    # s0 in (C_pp, P)
                  _full_spec((c_p, p)),                     # s1 in (C_p, P)
                  _full_spec((c, c_pp)),                    # preprocess0 weight
                  _full_spec((c, c_p)),                     # preprocess1 weight
                  _full_spec((num_edges, c, c)),            # per-edge 1x1x1 conv weights
                  _full_spec((8, p))],                      # packed pooling geometry
        out_specs=_full_spec((MULTIPLIER * c, p)),
        compiler_params=pltpu.CompilerParams(
            dimension_semantics=("arbitrary",),
            vmem_limit_bytes=32 * 1024 * 1024),
    )(weights, to2d(s0), to2d(s1),
      params["pre0_w"], params["pre1_w"], params["edge_w"], geo)

    # One transpose back to NCDHW at cell exit.
    return jnp.transpose(out2d.reshape(MULTIPLIER * c, n, d, h, w),
                         (1, 0, 2, 3, 4))


# ----------------------------------------------------------------------------
if __name__ == "__main__":
    N, C_prev_prev, C_prev, C = 2, 8, 8, 8
    D = H = W = 8
    num_edges = sum(2 + i for i in range(STEPS))

    key = jax.random.PRNGKey(0)
    k1, k2, k3, k4, k5, k6 = jax.random.split(key, 6)
    s0 = jax.random.normal(k1, (N, C_prev_prev, D, H, W), jnp.float32)
    s1 = jax.random.normal(k2, (N, C_prev, D, H, W), jnp.float32)
    # architecture weights (softmaxed alphas), one row per edge
    weights = jax.nn.softmax(
        jax.random.normal(k3, (num_edges, len(PRIMITIVES)), jnp.float32), axis=-1)
    # deterministic parameter init (1x1x1 conv kernels; BN has no affine params)
    params = {
        "pre0_w": 0.1 * jax.random.normal(k4, (C, C_prev_prev), jnp.float32),
        "pre1_w": 0.1 * jax.random.normal(k5, (C, C_prev), jnp.float32),
        "edge_w": 0.1 * jax.random.normal(k6, (num_edges, C, C), jnp.float32),
    }

    fwd = jax.jit(cell3d_forward)
    out = fwd(s0, s1, weights, params)
    jax.block_until_ready(out)
    assert out.shape == (N, MULTIPLIER * C, D, H, W), out.shape
    assert bool(jnp.all(jnp.isfinite(out)))
    print("KERNEL_OK")
</pallas_src>

<mosaic_0001>
module attributes {stable_mosaic.version = 11 : i64} {
  func.func @kernel(%arg0: i32, %arg1: memref<5x5xf32, #tpu.memory_space<smem>>, %arg2: memref<8x1024xf32, #tpu.memory_space<vmem>>, %arg3: memref<8x1024xf32, #tpu.memory_space<vmem>>, %arg4: memref<8x8xf32, #tpu.memory_space<vmem>>, %arg5: memref<8x8xf32, #tpu.memory_space<vmem>>, %arg6: memref<5x8x8xf32, #tpu.memory_space<vmem>>, %arg7: memref<8x1024xf32, #tpu.memory_space<vmem>>, %arg8: memref<16x1024xf32, #tpu.memory_space<vmem>>) attributes {dimension_semantics = [#tpu.dimension_semantics<arbitrary>], iteration_bounds = array<i64: 1>, scalar_prefetch = 0 : i64, scratch_operands = 0 : i64, tpu.core_type = #tpu.core_type<tc>, window_params = [{transform_indices = @transform_0, window_bounds = array<i64: 5, 5>}, {pipeline_mode = #tpu.pipeline_mode<synchronous>, transform_indices = @transform_1, window_bounds = array<i64: 8, 1024>}, {pipeline_mode = #tpu.pipeline_mode<synchronous>, transform_indices = @transform_2, window_bounds = array<i64: 8, 1024>}, {pipeline_mode = #tpu.pipeline_mode<synchronous>, transform_indices = @transform_3, window_bounds = array<i64: 8, 8>}, {pipeline_mode = #tpu.pipeline_mode<synchronous>, transform_indices = @transform_4, window_bounds = array<i64: 8, 8>}, {pipeline_mode = #tpu.pipeline_mode<synchronous>, transform_indices = @transform_5, window_bounds = array<i64: 5, 8, 8>}, {pipeline_mode = #tpu.pipeline_mode<synchronous>, transform_indices = @transform_6, window_bounds = array<i64: 8, 1024>}, {pipeline_mode = #tpu.pipeline_mode<synchronous>, transform_indices = @transform_7, window_bounds = array<i64: 16, 1024>}]} {
    %cst = arith.constant 1.000000e+00 : f32
    %0 = vector.broadcast %cst : f32 to vector<1024x128xf32>
    %c0 = arith.constant 0 : index
    %c0_0 = arith.constant 0 : index
    %1 = vector.load %arg7[%c0, %c0_0] : memref<8x1024xf32, #tpu.memory_space<vmem>>, vector<1x1024xf32>
    %2 = vector.shape_cast %1 : vector<1x1024xf32> to vector<1x1024xf32>
    %3 = vector.broadcast %2 : vector<1x1024xf32> to vector<8x1024xf32>
    %cst_1 = arith.constant 5.000000e-01 : f32
    %4 = vector.broadcast %cst_1 : f32 to vector<8x1024xf32>
    %5 = arith.cmpf ogt, %3, %4 : vector<8x1024xf32>
    %c1 = arith.constant 1 : index
    %c0_2 = arith.constant 0 : index
    %6 = vector.load %arg7[%c1, %c0_2] : memref<8x1024xf32, #tpu.memory_space<vmem>>, vector<1x1024xf32>
    %7 = vector.shape_cast %6 : vector<1x1024xf32> to vector<1x1024xf32>
    %8 = vector.broadcast %7 : vector<1x1024xf32> to vector<8x1024xf32>
    %cst_3 = arith.constant 5.000000e-01 : f32
    %9 = vector.broadcast %cst_3 : f32 to vector<8x1024xf32>
    %10 = arith.cmpf ogt, %8, %9 : vector<8x1024xf32>
    %c2 = arith.constant 2 : index
    %c0_4 = arith.constant 0 : index
    %11 = vector.load %arg7[%c2, %c0_4] : memref<8x1024xf32, #tpu.memory_space<vmem>>, vector<1x1024xf32>
    %12 = vector.shape_cast %11 : vector<1x1024xf32> to vector<1x1024xf32>
    %13 = vector.broadcast %12 : vector<1x1024xf32> to vector<8x1024xf32>
    %cst_5 = arith.constant 5.000000e-01 : f32
    %14 = vector.broadcast %cst_5 : f32 to vector<8x1024xf32>
    %15 = arith.cmpf ogt, %13, %14 : vector<8x1024xf32>
    %c3 = arith.constant 3 : index
    %c0_6 = arith.constant 0 : index
    %16 = vector.load %arg7[%c3, %c0_6] : memref<8x1024xf32, #tpu.memory_space<vmem>>, vector<1x1024xf32>
    %17 = vector.shape_cast %16 : vector<1x1024xf32> to vector<1x1024xf32>
    %18 = vector.broadcast %17 : vector<1x1024xf32> to vector<8x1024xf32>
    %cst_7 = arith.constant 5.000000e-01 : f32
    %19 = vector.broadcast %cst_7 : f32 to vector<8x1024xf32>
    %20 = arith.cmpf ogt, %18, %19 : vector<8x1024xf32>
    %c4 = arith.constant 4 : index
    %c0_8 = arith.constant 0 : index
    %21 = vector.load %arg7[%c4, %c0_8] : memref<8x1024xf32, #tpu.memory_space<vmem>>, vector<1x1024xf32>
    %22 = vector.shape_cast %21 : vector<1x1024xf32> to vector<1x1024xf32>
    %23 = vector.broadcast %22 : vector<1x1024xf32> to vector<8x1024xf32>
    %cst_9 = arith.constant 5.000000e-01 : f32
    %24 = vector.broadcast %cst_9 : f32 to vector<8x1024xf32>
    %25 = arith.cmpf ogt, %23, %24 : vector<8x1024xf32>
    %c5 = arith.constant 5 : index
    %c0_10 = arith.constant 0 : index
    %26 = vector.load %arg7[%c5, %c0_10] : memref<8x1024xf32, #tpu.memory_space<vmem>>, vector<1x1024xf32>
    %27 = vector.shape_cast %26 : vector<1x1024xf32> to vector<1x1024xf32>
    %28 = vector.broadcast %27 : vector<1x1024xf32> to vector<8x1024xf32>
    %cst_11 = arith.constant 5.000000e-01 : f32
    %29 = vector.broadcast %cst_11 : f32 to vector<8x1024xf32>
    %30 = arith.cmpf ogt, %28, %29 : vector<8x1024xf32>
    %c6 = arith.constant 6 : index
    %c0_12 = arith.constant 0 : index
    %31 = vector.load %arg7[%c6, %c0_12] : memref<8x1024xf32, #tpu.memory_space<vmem>>, vector<1x1024xf32>
    %32 = vector.shape_cast %31 : vector<1x1024xf32> to vector<1x1024xf32>
    %33 = vector.broadcast %32 : vector<1x1024xf32> to vector<8x1024xf32>
    %c0_13 = arith.constant 0 : index
    %c0_14 = arith.constant 0 : index
    %34 = vector.load %arg2[%c0_13, %c0_14] : memref<8x1024xf32, #tpu.memory_space<vmem>>, vector<8x1024xf32>
    %c0_15 = arith.constant 0 : index
    %c0_16 = arith.constant 0 : index
    %35 = vector.load %arg4[%c0_15, %c0_16] : memref<8x8xf32, #tpu.memory_space<vmem>>, vector<8x8xf32>
    %cst_17 = arith.constant 0.000000e+00 : f32
    %36 = vector.broadcast %cst_17 : f32 to vector<8x1024xf32>
    %37 = arith.maximumf %34, %36 : vector<8x1024xf32>
    %cst_18 = arith.constant dense<0.000000e+00> : vector<8x1024xf32>
    %38 = tpu.matmul %35, %37, %cst_18 {dimension_numbers = #tpu.dot_dimension_numbers<[1], [0], [0], [1], [0, 0, 1, 1], [], []>} : vector<8x8xf32>, vector<8x1024xf32>, vector<8x1024xf32> -> vector<8x1024xf32>
    %cst_19 = arith.constant dense<0.000000e+00> : vector<8x128xf32>
    %39 = tpu.matmul %38, %0, %cst_19 {dimension_numbers = #tpu.dot_dimension_numbers<[1], [0], [0], [1], [0, 0, 1, 1], [], []>} : vector<8x1024xf32>, vector<1024x128xf32>, vector<8x128xf32> -> vector<8x128xf32>
    %cst_20 = arith.constant dense<0.000000e+00> : vector<8xf32>
    %40 = vector.multi_reduction <add>, %39, %cst_20 [1] : vector<8x128xf32> to vector<8xf32>
    %41 = vector.shape_cast %40 : vector<8xf32> to vector<8x1xf32>
    %cst_21 = arith.constant 1.280000e+02 : f32
    %42 = vector.broadcast %cst_21 : f32 to vector<8x1xf32>
    %43 = arith.divf %41, %42 : vector<8x1xf32>
    %cst_22 = arith.constant 9.765625E-4 : f32
    %44 = vector.broadcast %cst_22 : f32 to vector<8x1xf32>
    %45 = arith.mulf %43, %44 : vector<8x1xf32>
    %46 = vector.broadcast %45 : vector<8x1xf32> to vector<8x1024xf32>
    %47 = arith.subf %38, %46 : vector<8x1024xf32>
    %48 = arith.mulf %47, %47 : vector<8x1024xf32>
    %cst_23 = arith.constant dense<0.000000e+00> : vector<8x128xf32>
    %49 = tpu.matmul %48, %0, %cst_23 {dimension_numbers = #tpu.dot_dimension_numbers<[1], [0], [0], [1], [0, 0, 1, 1], [], []>} : vector<8x1024xf32>, vector<1024x128xf32>, vector<8x128xf32> -> vector<8x128xf32>
    %cst_24 = arith.constant dense<0.000000e+00> : vector<8xf32>
    %50 = vector.multi_reduction <add>, %49, %cst_24 [1] : vector<8x128xf32> to vector<8xf32>
    %51 = vector.shape_cast %50 : vector<8xf32> to vector<8x1xf32>
    %cst_25 = arith.constant 1.280000e+02 : f32
    %52 = vector.broadcast %cst_25 : f32 to vector<8x1xf32>
    %53 = arith.divf %51, %52 : vector<8x1xf32>
    %cst_26 = arith.constant 9.765625E-4 : f32
    %54 = vector.broadcast %cst_26 : f32 to vector<8x1xf32>
    %55 = arith.mulf %53, %54 : vector<8x1xf32>
    %cst_27 = arith.constant 9.99999974E-6 : f32
    %56 = vector.broadcast %cst_27 : f32 to vector<8x1xf32>
    %57 = arith.addf %55, %56 : vector<8x1xf32>
    %58 = math.rsqrt %57 : vector<8x1xf32>
    %59 = vector.broadcast %58 : vector<8x1xf32> to vector<8x1024xf32>
    %60 = arith.mulf %47, %59 : vector<8x1024xf32>
    %c0_28 = arith.constant 0 : index
    %c0_29 = arith.constant 0 : index
    %61 = vector.load %arg3[%c0_28, %c0_29] : memref<8x1024xf32, #tpu.memory_space<vmem>>, vector<8x1024xf32>
    %c0_30 = arith.constant 0 : index
    %c0_31 = arith.constant 0 : index
    %62 = vector.load %arg5[%c0_30, %c0_31] : memref<8x8xf32, #tpu.memory_space<vmem>>, vector<8x8xf32>
    %cst_32 = arith.constant 0.000000e+00 : f32
    %63 = vector.broadcast %cst_32 : f32 to vector<8x1024xf32>
    %64 = arith.maximumf %61, %63 : vector<8x1024xf32>
    %cst_33 = arith.constant dense<0.000000e+00> : vector<8x1024xf32>
    %65 = tpu.matmul %62, %64, %cst_33 {dimension_numbers = #tpu.dot_dimension_numbers<[1], [0], [0], [1], [0, 0, 1, 1], [], []>} : vector<8x8xf32>, vector<8x1024xf32>, vector<8x1024xf32> -> vector<8x1024xf32>
    %cst_34 = arith.constant dense<0.000000e+00> : vector<8x128xf32>
    %66 = tpu.matmul %65, %0, %cst_34 {dimension_numbers = #tpu.dot_dimension_numbers<[1], [0], [0], [1], [0, 0, 1, 1], [], []>} : vector<8x1024xf32>, vector<1024x128xf32>, vector<8x128xf32> -> vector<8x128xf32>
    %cst_35 = arith.constant dense<0.000000e+00> : vector<8xf32>
    %67 = vector.multi_reduction <add>, %66, %cst_35 [1] : vector<8x128xf32> to vector<8xf32>
    %68 = vector.shape_cast %67 : vector<8xf32> to vector<8x1xf32>
    %cst_36 = arith.constant 1.280000e+02 : f32
    %69 = vector.broadcast %cst_36 : f32 to vector<8x1xf32>
    %70 = arith.divf %68, %69 : vector<8x1xf32>
    %cst_37 = arith.constant 9.765625E-4 : f32
    %71 = vector.broadcast %cst_37 : f32 to vector<8x1xf32>
    %72 = arith.mulf %70, %71 : vector<8x1xf32>
    %73 = vector.broadcast %72 : vector<8x1xf32> to vector<8x1024xf32>
    %74 = arith.subf %65, %73 : vector<8x1024xf32>
    %75 = arith.mulf %74, %74 : vector<8x1024xf32>
    %cst_38 = arith.constant dense<0.000000e+00> : vector<8x128xf32>
    %76 = tpu.matmul %75, %0, %cst_38 {dimension_numbers = #tpu.dot_dimension_numbers<[1], [0], [0], [1], [0, 0, 1, 1], [], []>} : vector<8x1024xf32>, vector<1024x128xf32>, vector<8x128xf32> -> vector<8x128xf32>
    %cst_39 = arith.constant dense<0.000000e+00> : vector<8xf32>
    %77 = vector.multi_reduction <add>, %76, %cst_39 [1] : vector<8x128xf32> to vector<8xf32>
    %78 = vector.shape_cast %77 : vector<8xf32> to vector<8x1xf32>
    %cst_40 = arith.constant 1.280000e+02 : f32
    %79 = vector.broadcast %cst_40 : f32 to vector<8x1xf32>
    %80 = arith.divf %78, %79 : vector<8x1xf32>
    %cst_41 = arith.constant 9.765625E-4 : f32
    %81 = vector.broadcast %cst_41 : f32 to vector<8x1xf32>
    %82 = arith.mulf %80, %81 : vector<8x1xf32>
    %cst_42 = arith.constant 9.99999974E-6 : f32
    %83 = vector.broadcast %cst_42 : f32 to vector<8x1xf32>
    %84 = arith.addf %82, %83 : vector<8x1xf32>
    %85 = math.rsqrt %84 : vector<8x1xf32>
    %86 = vector.broadcast %85 : vector<8x1xf32> to vector<8x1024xf32>
    %87 = arith.mulf %74, %86 : vector<8x1024xf32>
    %c0_43 = arith.constant 0 : index
    %c1_44 = arith.constant 1 : index
    %88 = memref.load %arg1[%c0_43, %c1_44] : memref<5x5xf32, #tpu.memory_space<smem>>
    %89 = vector.broadcast %88 : f32 to vector<8x1024xf32>
    %90 = arith.mulf %89, %60 : vector<8x1024xf32>
    %c1_i32 = arith.constant 1 : i32
    %91 = tpu.dynamic_rotate %60 by %c1_i32 dim 1 : vector<8x1024xf32>, i32 -> vector<8x1024xf32>
    %c1023_i32 = arith.constant 1023 : i32
    %92 = tpu.dynamic_rotate %60 by %c1023_i32 dim 1 : vector<8x1024xf32>, i32 -> vector<8x1024xf32>
    %cst_45 = arith.constant -3.000000e+38 : f32
    %93 = vector.broadcast %cst_45 : f32 to vector<8x1024xf32>
    %94 = arith.select %5, %91, %93 : vector<8x1024xi1>, vector<8x1024xf32>
    %cst_46 = arith.constant -3.000000e+38 : f32
    %95 = vector.broadcast %cst_46 : f32 to vector<8x1024xf32>
    %96 = arith.select %10, %92, %95 : vector<8x1024xi1>, vector<8x1024xf32>
    %97 = arith.maximumf %94, %96 : vector<8x1024xf32>
    %98 = arith.maximumf %60, %97 : vector<8x1024xf32>
    %cst_47 = arith.constant 0.000000e+00 : f32
    %99 = vector.broadcast %cst_47 : f32 to vector<8x1024xf32>
    %100 = arith.select %5, %91, %99 : vector<8x1024xi1>, vector<8x1024xf32>
    %101 = arith.addf %60, %100 : vector<8x1024xf32>
    %cst_48 = arith.constant 0.000000e+00 : f32
    %102 = vector.broadcast %cst_48 : f32 to vector<8x1024xf32>
    %103 = arith.select %10, %92, %102 : vector<8x1024xi1>, vector<8x1024xf32>
    %104 = arith.addf %101, %103 : vector<8x1024xf32>
    %c8_i32 = arith.constant 8 : i32
    %105 = tpu.dynamic_rotate %98 by %c8_i32 dim 1 : vector<8x1024xf32>, i32 -> vector<8x1024xf32>
    %c1016_i32 = arith.constant 1016 : i32
    %106 = tpu.dynamic_rotate %98 by %c1016_i32 dim 1 : vector<8x1024xf32>, i32 -> vector<8x1024xf32>
    %cst_49 = arith.constant -3.000000e+38 : f32
    %107 = vector.broadcast %cst_49 : f32 to vector<8x1024xf32>
    %108 = arith.select %15, %105, %107 : vector<8x1024xi1>, vector<8x1024xf32>
    %cst_50 = arith.constant -3.000000e+38 : f32
    %109 = vector.broadcast %cst_50 : f32 to vector<8x1024xf32>
    %110 = arith.select %20, %106, %109 : vector<8x1024xi1>, vector<8x1024xf32>
    %111 = arith.maximumf %108, %110 : vector<8x1024xf32>
    %112 = arith.maximumf %98, %111 : vector<8x1024xf32>
    %c8_i32_51 = arith.constant 8 : i32
    %113 = tpu.dynamic_rotate %104 by %c8_i32_51 dim 1 : vector<8x1024xf32>, i32 -> vector<8x1024xf32>
    %c1016_i32_52 = arith.constant 1016 : i32
    %114 = tpu.dynamic_rotate %104 by %c1016_i32_52 dim 1 : vector<8x1024xf32>, i32 -> vector<8x1024xf32>
    %cst_53 = arith.constant 0.000000e+00 : f32
    %115 = vector.broadcast %cst_53 : f32 to vector<8x1024xf32>
    %116 = arith.select %15, %113, %115 : vector<8x1024xi1>, vector<8x1024xf32>
    %117 = arith.addf %104, %116 : vector<8x1024xf32>
    %cst_54 = arith.constant 0.000000e+00 : f32
    %118 = vector.broadcast %cst_54 : f32 to vector<8x1024xf32>
    %119 = arith.select %20, %114, %118 : vector<8x1024xi1>, vector<8x1024xf32>
    %120 = arith.addf %117, %119 : vector<8x1024xf32>
    %c64_i32 = arith.constant 64 : i32
    %121 = tpu.dynamic_rotate %112 by %c64_i32 dim 1 : vector<8x1024xf32>, i32 -> vector<8x1024xf32>
    %c960_i32 = arith.constant 960 : i32
    %122 = tpu.dynamic_rotate %112 by %c960_i32 dim 1 : vector<8x1024xf32>, i32 -> vector<8x1024xf32>
    %cst_55 = arith.constant -3.000000e+38 : f32
    %123 = vector.broadcast %cst_55 : f32 to vector<8x1024xf32>
    %124 = arith.select %25, %121, %123 : vector<8x1024xi1>, vector<8x1024xf32>
    %cst_56 = arith.constant -3.000000e+38 : f32
    %125 = vector.broadcast %cst_56 : f32 to vector<8x1024xf32>
    %126 = arith.select %30, %122, %125 : vector<8x1024xi1>, vector<8x1024xf32>
    %127 = arith.maximumf %124, %126 : vector<8x1024xf32>
    %128 = arith.maximumf %112, %127 : vector<8x1024xf32>
    %c64_i32_57 = arith.constant 64 : i32
    %129 = tpu.dynamic_rotate %120 by %c64_i32_57 dim 1 : vector<8x1024xf32>, i32 -> vector<8x1024xf32>
    %c960_i32_58 = arith.constant 960 : i32
    %130 = tpu.dynamic_rotate %120 by %c960_i32_58 dim 1 : vector<8x1024xf32>, i32 -> vector<8x1024xf32>
    %cst_59 = arith.constant 0.000000e+00 : f32
    %131 = vector.broadcast %cst_59 : f32 to vector<8x1024xf32>
    %132 = arith.select %25, %129, %131 : vector<8x1024xi1>, vector<8x1024xf32>
    %133 = arith.addf %120, %132 : vector<8x1024xf32>
    %cst_60 = arith.constant 0.000000e+00 : f32
    %134 = vector.broadcast %cst_60 : f32 to vector<8x1024xf32>
    %135 = arith.select %30, %130, %134 : vector<8x1024xi1>, vector<8x1024xf32>
    %136 = arith.addf %133, %135 : vector<8x1024xf32>
    %137 = arith.mulf %136, %33 : vector<8x1024xf32>
    %c0_61 = arith.constant 0 : index
    %c2_62 = arith.constant 2 : index
    %138 = memref.load %arg1[%c0_61, %c2_62] : memref<5x5xf32, #tpu.memory_space<smem>>
    %cst_63 = arith.constant dense<0.000000e+00> : vector<8x128xf32>
    %139 = tpu.matmul %137, %0, %cst_63 {dimension_numbers = #tpu.dot_dimension_numbers<[1], [0], [0], [1], [0, 0, 1, 1], [], []>} : vector<8x1024xf32>, vector<1024x128xf32>, vector<8x128xf32> -> vector<8x128xf32>
    %cst_64 = arith.constant dense<0.000000e+00> : vector<8xf32>
    %140 = vector.multi_reduction <add>, %139, %cst_64 [1] : vector<8x128xf32> to vector<8xf32>
    %141 = vector.shape_cast %140 : vector<8xf32> to vector<8x1xf32>
    %cst_65 = arith.constant 1.280000e+02 : f32
    %142 = vector.broadcast %cst_65 : f32 to vector<8x1xf32>
    %143 = arith.divf %141, %142 : vector<8x1xf32>
    %cst_66 = arith.constant 9.765625E-4 : f32
    %144 = vector.broadcast %cst_66 : f32 to vector<8x1xf32>
    %145 = arith.mulf %143, %144 : vector<8x1xf32>
    %146 = vector.broadcast %145 : vector<8x1xf32> to vector<8x1024xf32>
    %147 = arith.subf %137, %146 : vector<8x1024xf32>
    %148 = arith.mulf %147, %147 : vector<8x1024xf32>
    %cst_67 = arith.constant dense<0.000000e+00> : vector<8x128xf32>
    %149 = tpu.matmul %148, %0, %cst_67 {dimension_numbers = #tpu.dot_dimension_numbers<[1], [0], [0], [1], [0, 0, 1, 1], [], []>} : vector<8x1024xf32>, vector<1024x128xf32>, vector<8x128xf32> -> vector<8x128xf32>
    %cst_68 = arith.constant dense<0.000000e+00> : vector<8xf32>
    %150 = vector.multi_reduction <add>, %149, %cst_68 [1] : vector<8x128xf32> to vector<8xf32>
    %151 = vector.shape_cast %150 : vector<8xf32> to vector<8x1xf32>
    %cst_69 = arith.constant 1.280000e+02 : f32
    %152 = vector.broadcast %cst_69 : f32 to vector<8x1xf32>
    %153 = arith.divf %151, %152 : vector<8x1xf32>
    %cst_70 = arith.constant 9.765625E-4 : f32
    %154 = vector.broadcast %cst_70 : f32 to vector<8x1xf32>
    %155 = arith.mulf %153, %154 : vector<8x1xf32>
    %cst_71 = arith.constant 9.99999974E-6 : f32
    %156 = vector.broadcast %cst_71 : f32 to vector<8x1xf32>
    %157 = arith.addf %155, %156 : vector<8x1xf32>
    %158 = math.rsqrt %157 : vector<8x1xf32>
    %159 = vector.broadcast %158 : vector<8x1xf32> to vector<8x1024xf32>
    %160 = arith.mulf %147, %159 : vector<8x1024xf32>
    %161 = vector.broadcast %138 : f32 to vector<8x1024xf32>
    %162 = arith.mulf %161, %160 : vector<8x1024xf32>
    %163 = arith.addf %90, %162 : vector<8x1024xf32>
    %c0_72 = arith.constant 0 : index
    %c3_73 = arith.constant 3 : index
    %164 = memref.load %arg1[%c0_72, %c3_73] : memref<5x5xf32, #tpu.memory_space<smem>>
    %cst_74 = arith.constant dense<0.000000e+00> : vector<8x128xf32>
    %165 = tpu.matmul %128, %0, %cst_74 {dimension_numbers = #tpu.dot_dimension_numbers<[1], [0], [0], [1], [0, 0, 1, 1], [], []>} : vector<8x1024xf32>, vector<1024x128xf32>, vector<8x128xf32> -> vector<8x128xf32>
    %cst_75 = arith.constant dense<0.000000e+00> : vector<8xf32>
    %166 = vector.multi_reduction <add>, %165, %cst_75 [1] : vector<8x128xf32> to vector<8xf32>
    %167 = vector.shape_cast %166 : vector<8xf32> to vector<8x1xf32>
    %cst_76 = arith.constant 1.280000e+02 : f32
    %168 = vector.broadcast %cst_76 : f32 to vector<8x1xf32>
    %169 = arith.divf %167, %168 : vector<8x1xf32>
    %cst_77 = arith.constant 9.765625E-4 : f32
    %170 = vector.broadcast %cst_77 : f32 to vector<8x1xf32>
    %171 = arith.mulf %169, %170 : vector<8x1xf32>
    %172 = vector.broadcast %171 : vector<8x1xf32> to vector<8x1024xf32>
    %173 = arith.subf %128, %172 : vector<8x1024xf32>
    %174 = arith.mulf %173, %173 : vector<8x1024xf32>
    %cst_78 = arith.constant dense<0.000000e+00> : vector<8x128xf32>
    %175 = tpu.matmul %174, %0, %cst_78 {dimension_numbers = #tpu.dot_dimension_numbers<[1], [0], [0], [1], [0, 0, 1, 1], [], []>} : vector<8x1024xf32>, vector<1024x128xf32>, vector<8x128xf32> -> vector<8x128xf32>
    %cst_79 = arith.constant dense<0.000000e+00> : vector<8xf32>
    %176 = vector.multi_reduction <add>, %175, %cst_79 [1] : vector<8x128xf32> to vector<8xf32>
    %177 = vector.shape_cast %176 : vector<8xf32> to vector<8x1xf32>
    %cst_80 = arith.constant 1.280000e+02 : f32
    %178 = vector.broadcast %cst_80 : f32 to vector<8x1xf32>
    %179 = arith.divf %177, %178 : vector<8x1xf32>
    %cst_81 = arith.constant 9.765625E-4 : f32
    %180 = vector.broadcast %cst_81 : f32 to vector<8x1xf32>
    %181 = arith.mulf %179, %180 : vector<8x1xf32>
    %cst_82 = arith.constant 9.99999974E-6 : f32
    %182 = vector.broadcast %cst_82 : f32 to vector<8x1xf32>
    %183 = arith.addf %181, %182 : vector<8x1xf32>
    %184 = math.rsqrt %183 : vector<8x1xf32>
    %185 = vector.broadcast %184 : vector<8x1xf32> to vector<8x1024xf32>
    %186 = arith.mulf %173, %185 : vector<8x1024xf32>
    %187 = vector.broadcast %164 : f32 to vector<8x1024xf32>
    %188 = arith.mulf %187, %186 : vector<8x1024xf32>
    %189 = arith.addf %163, %188 : vector<8x1024xf32>
    %c0_83 = arith.constant 0 : index
    %c4_84 = arith.constant 4 : index
    %190 = memref.load %arg1[%c0_83, %c4_84] : memref<5x5xf32, #tpu.memory_space<smem>>
    %c0_85 = arith.constant 0 : index
    %c0_86 = arith.constant 0 : index
    %c0_87 = arith.constant 0 : index
    %191 = vector.load %arg6[%c0_85, %c0_86, %c0_87] : memref<5x8x8xf32, #tpu.memory_space<vmem>>, vector<1x8x8xf32>
    %192 = vector.shape_cast %191 : vector<1x8x8xf32> to vector<8x8xf32>
    %cst_88 = arith.constant 0.000000e+00 : f32
    %193 = vector.broadcast %cst_88 : f32 to vector<8x1024xf32>
    %194 = arith.maximumf %60, %193 : vector<8x1024xf32>
    %cst_89 = arith.constant dense<0.000000e+00> : vector<8x1024xf32>
    %195 = tpu.matmul %192, %194, %cst_89 {dimension_numbers = #tpu.dot_dimension_numbers<[1], [0], [0], [1], [0, 0, 1, 1], [], []>} : vector<8x8xf32>, vector<8x1024xf32>, vector<8x1024xf32> -> vector<8x1024xf32>
    %cst_90 = arith.constant dense<0.000000e+00> : vector<8x128xf32>
    %196 = tpu.matmul %195, %0, %cst_90 {dimension_numbers = #tpu.dot_dimension_numbers<[1], [0], [0], [1], [0, 0, 1, 1], [], []>} : vector<8x1024xf32>, vector<1024x128xf32>, vector<8x128xf32> -> vector<8x128xf32>
    %cst_91 = arith.constant dense<0.000000e+00> : vector<8xf32>
    %197 = vector.multi_reduction <add>, %196, %cst_91 [1] : vector<8x128xf32> to vector<8xf32>
    %198 = vector.shape_cast %197 : vector<8xf32> to vector<8x1xf32>
    %cst_92 = arith.constant 1.280000e+02 : f32
    %199 = vector.broadcast %cst_92 : f32 to vector<8x1xf32>
    %200 = arith.divf %198, %199 : vector<8x1xf32>
    %cst_93 = arith.constant 9.765625E-4 : f32
    %201 = vector.broadcast %cst_93 : f32 to vector<8x1xf32>
    %202 = arith.mulf %200, %201 : vector<8x1xf32>
    %203 = vector.broadcast %202 : vector<8x1xf32> to vector<8x1024xf32>
    %204 = arith.subf %195, %203 : vector<8x1024xf32>
    %205 = arith.mulf %204, %204 : vector<8x1024xf32>
    %cst_94 = arith.constant dense<0.000000e+00> : vector<8x128xf32>
    %206 = tpu.matmul %205, %0, %cst_94 {dimension_numbers = #tpu.dot_dimension_numbers<[1], [0], [0], [1], [0, 0, 1, 1], [], []>} : vector<8x1024xf32>, vector<1024x128xf32>, vector<8x128xf32> -> vector<8x128xf32>
    %cst_95 = arith.constant dense<0.000000e+00> : vector<8xf32>
    %207 = vector.multi_reduction <add>, %206, %cst_95 [1] : vector<8x128xf32> to vector<8xf32>
    %208 = vector.shape_cast %207 : vector<8xf32> to vector<8x1xf32>
    %cst_96 = arith.constant 1.280000e+02 : f32
    %209 = vector.broadcast %cst_96 : f32 to vector<8x1xf32>
    %210 = arith.divf %208, %209 : vector<8x1xf32>
    %cst_97 = arith.constant 9.765625E-4 : f32
    %211 = vector.broadcast %cst_97 : f32 to vector<8x1xf32>
    %212 = arith.mulf %210, %211 : vector<8x1xf32>
    %cst_98 = arith.constant 9.99999974E-6 : f32
    %213 = vector.broadcast %cst_98 : f32 to vector<8x1xf32>
    %214 = arith.addf %212, %213 : vector<8x1xf32>
    %215 = math.rsqrt %214 : vector<8x1xf32>
    %216 = vector.broadcast %215 : vector<8x1xf32> to vector<8x1024xf32>
    %217 = arith.mulf %204, %216 : vector<8x1024xf32>
    %218 = vector.broadcast %190 : f32 to vector<8x1024xf32>
    %219 = arith.mulf %218, %217 : vector<8x1024xf32>
    %220 = arith.addf %189, %219 : vector<8x1024xf32>
    %c3_99 = arith.constant 3 : index
    %c1_100 = arith.constant 1 : index
    %221 = memref.load %arg1[%c3_99, %c1_100] : memref<5x5xf32, #tpu.memory_space<smem>>
    %222 = vector.broadcast %221 : f32 to vector<8x1024xf32>
    %223 = arith.mulf %222, %87 : vector<8x1024xf32>
    %c1_i32_101 = arith.constant 1 : i32
    %224 = tpu.dynamic_rotate %87 by %c1_i32_101 dim 1 : vector<8x1024xf32>, i32 -> vector<8x1024xf32>
    %c1023_i32_102 = arith.constant 1023 : i32
    %225 = tpu.dynamic_rotate %87 by %c1023_i32_102 dim 1 : vector<8x1024xf32>, i32 -> vector<8x1024xf32>
    %cst_103 = arith.constant -3.000000e+38 : f32
    %226 = vector.broadcast %cst_103 : f32 to vector<8x1024xf32>
    %227 = arith.select %5, %224, %226 : vector<8x1024xi1>, vector<8x1024xf32>
    %cst_104 = arith.constant -3.000000e+38 : f32
    %228 = vector.broadcast %cst_104 : f32 to vector<8x1024xf32>
    %229 = arith.select %10, %225, %228 : vector<8x1024xi1>, vector<8x1024xf32>
    %230 = arith.maximumf %227, %229 : vector<8x1024xf32>
    %231 = arith.maximumf %87, %230 : vector<8x1024xf32>
    %cst_105 = arith.constant 0.000000e+00 : f32
    %232 = vector.broadcast %cst_105 : f32 to vector<8x1024xf32>
    %233 = arith.select %5, %224, %232 : vector<8x1024xi1>, vector<8x1024xf32>
    %234 = arith.addf %87, %233 : vector<8x1024xf32>
    %cst_106 = arith.constant 0.000000e+00 : f32
    %235 = vector.broadcast %cst_106 : f32 to vector<8x1024xf32>
    %236 = arith.select %10, %225, %235 : vector<8x1024xi1>, vector<8x1024xf32>
    %237 = arith.addf %234, %236 : vector<8x1024xf32>
    %c8_i32_107 = arith.constant 8 : i32
    %238 = tpu.dynamic_rotate %231 by %c8_i32_107 dim 1 : vector<8x1024xf32>, i32 -> vector<8x1024xf32>
    %c1016_i32_108 = arith.constant 1016 : i32
    %239 = tpu.dynamic_rotate %231 by %c1016_i32_108 dim 1 : vector<8x1024xf32>, i32 -> vector<8x1024xf32>
    %cst_109 = arith.constant -3.000000e+38 : f32
    %240 = vector.broadcast %cst_109 : f32 to vector<8x1024xf32>
    %241 = arith.select %15, %238, %240 : vector<8x1024xi1>, vector<8x1024xf32>
    %cst_110 = arith.constant -3.000000e+38 : f32
    %242 = vector.broadcast %cst_110 : f32 to vector<8x1024xf32>
    %243 = arith.select %20, %239, %242 : vector<8x1024xi1>, vector<8x1024xf32>
    %244 = arith.maximumf %241, %243 : vector<8x1024xf32>
    %245 = arith.maximumf %231, %244 : vector<8x1024xf32>
    %c8_i32_111 = arith.constant 8 : i32
    %246 = tpu.dynamic_rotate %237 by %c8_i32_111 dim 1 : vector<8x1024xf32>, i32 -> vector<8x1024xf32>
    %c1016_i32_112 = arith.constant 1016 : i32
    %247 = tpu.dynamic_rotate %237 by %c1016_i32_112 dim 1 : vector<8x1024xf32>, i32 -> vector<8x1024xf32>
    %cst_113 = arith.constant 0.000000e+00 : f32
    %248 = vector.broadcast %cst_113 : f32 to vector<8x1024xf32>
    %249 = arith.select %15, %246, %248 : vector<8x1024xi1>, vector<8x1024xf32>
    %250 = arith.addf %237, %249 : vector<8x1024xf32>
    %cst_114 = arith.constant 0.000000e+00 : f32
    %251 = vector.broadcast %cst_114 : f32 to vector<8x1024xf32>
    %252 = arith.select %20, %247, %251 : vector<8x1024xi1>, vector<8x1024xf32>
    %253 = arith.addf %250, %252 : vector<8x1024xf32>
    %c64_i32_115 = arith.constant 64 : i32
    %254 = tpu.dynamic_rotate %245 by %c64_i32_115 dim 1 : vector<8x1024xf32>, i32 -> vector<8x1024xf32>
    %c960_i32_116 = arith.constant 960 : i32
    %255 = tpu.dynamic_rotate %245 by %c960_i32_116 dim 1 : vector<8x1024xf32>, i32 -> vector<8x1024xf32>
    %cst_117 = arith.constant -3.000000e+38 : f32
    %256 = vector.broadcast %cst_117 : f32 to vector<8x1024xf32>
    %257 = arith.select %25, %254, %256 : vector<8x1024xi1>, vector<8x1024xf32>
    %cst_118 = arith.constant -3.000000e+38 : f32
    %258 = vector.broadcast %cst_118 : f32 to vector<8x1024xf32>
    %259 = arith.select %30, %255, %258 : vector<8x1024xi1>, vector<8x1024xf32>
    %260 = arith.maximumf %257, %259 : vector<8x1024xf32>
    %261 = arith.maximumf %245, %260 : vector<8x1024xf32>
    %c64_i32_119 = arith.constant 64 : i32
    %262 = tpu.dynamic_rotate %253 by %c64_i32_119 dim 1 : vector<8x1024xf32>, i32 -> vector<8x1024xf32>
    %c960_i32_120 = arith.constant 960 : i32
    %263 = tpu.dynamic_rotate %253 by %c960_i32_120 dim 1 : vector<8x1024xf32>, i32 -> vector<8x1024xf32>
    %cst_121 = arith.constant 0.000000e+00 : f32
    %264 = vector.broadcast %cst_121 : f32 to vector<8x1024xf32>
    %265 = arith.select %25, %262, %264 : vector<8x1024xi1>, vector<8x1024xf32>
    %266 = arith.addf %253, %265 : vector<8x1024xf32>
    %cst_122 = arith.constant 0.000000e+00 : f32
    %267 = vector.broadcast %cst_122 : f32 to vector<8x1024xf32>
    %268 = arith.select %30, %263, %267 : vector<8x1024xi1>, vector<8x1024xf32>
    %269 = arith.addf %266, %268 : vector<8x1024xf32>
    %270 = arith.mulf %269, %33 : vector<8x1024xf32>
    %c3_123 = arith.constant 3 : index
    %c2_124 = arith.constant 2 : index
    %271 = memref.load %arg1[%c3_123, %c2_124] : memref<5x5xf32, #tpu.memory_space<smem>>
    %cst_125 = arith.constant dense<0.000000e+00> : vector<8x128xf32>
    %272 = tpu.matmul %270, %0, %cst_125 {dimension_numbers = #tpu.dot_dimension_numbers<[1], [0], [0], [1], [0, 0, 1, 1], [], []>} : vector<8x1024xf32>, vector<1024x128xf32>, vector<8x128xf32> -> vector<8x128xf32>
    %cst_126 = arith.constant dense<0.000000e+00> : vector<8xf32>
    %273 = vector.multi_reduction <add>, %272, %cst_126 [1] : vector<8x128xf32> to vector<8xf32>
    %274 = vector.shape_cast %273 : vector<8xf32> to vector<8x1xf32>
    %cst_127 = arith.constant 1.280000e+02 : f32
    %275 = vector.broadcast %cst_127 : f32 to vector<8x1xf32>
    %276 = arith.divf %274, %275 : vector<8x1xf32>
    %cst_128 = arith.constant 9.765625E-4 : f32
    %277 = vector.broadcast %cst_128 : f32 to vector<8x1xf32>
    %278 = arith.mulf %276, %277 : vector<8x1xf32>
    %279 = vector.broadcast %278 : vector<8x1xf32> to vector<8x1024xf32>
    %280 = arith.subf %270, %279 : vector<8x1024xf32>
    %281 = arith.mulf %280, %280 : vector<8x1024xf32>
    %cst_129 = arith.constant dense<0.000000e+00> : vector<8x128xf32>
    %282 = tpu.matmul %281, %0, %cst_129 {dimension_numbers = #tpu.dot_dimension_numbers<[1], [0], [0], [1], [0, 0, 1, 1], [], []>} : vector<8x1024xf32>, vector<1024x128xf32>, vector<8x128xf32> -> vector<8x128xf32>
    %cst_130 = arith.constant dense<0.000000e+00> : vector<8xf32>
    %283 = vector.multi_reduction <add>, %282, %cst_130 [1] : vector<8x128xf32> to vector<8xf32>
    %284 = vector.shape_cast %283 : vector<8xf32> to vector<8x1xf32>
    %cst_131 = arith.constant 1.280000e+02 : f32
    %285 = vector.broadcast %cst_131 : f32 to vector<8x1xf32>
    %286 = arith.divf %284, %285 : vector<8x1xf32>
    %cst_132 = arith.constant 9.765625E-4 : f32
    %287 = vector.broadcast %cst_132 : f32 to vector<8x1xf32>
    %288 = arith.mulf %286, %287 : vector<8x1xf32>
    %cst_133 = arith.constant 9.99999974E-6 : f32
    %289 = vector.broadcast %cst_133 : f32 to vector<8x1xf32>
    %290 = arith.addf %288, %289 : vector<8x1xf32>
    %291 = math.rsqrt %290 : vector<8x1xf32>
    %292 = vector.broadcast %291 : vector<8x1xf32> to vector<8x1024xf32>
    %293 = arith.mulf %280, %292 : vector<8x1024xf32>
    %294 = vector.broadcast %271 : f32 to vector<8x1024xf32>
    %295 = arith.mulf %294, %293 : vector<8x1024xf32>
    %296 = arith.addf %223, %295 : vector<8x1024xf32>
    %c3_134 = arith.constant 3 : index
    %c3_135 = arith.constant 3 : index
    %297 = memref.load %arg1[%c3_134, %c3_135] : memref<5x5xf32, #tpu.memory_space<smem>>
    %cst_136 = arith.constant dense<0.000000e+00> : vector<8x128xf32>
    %298 = tpu.matmul %261, %0, %cst_136 {dimension_numbers = #tpu.dot_dimension_numbers<[1], [0], [0], [1], [0, 0, 1, 1], [], []>} : vector<8x1024xf32>, vector<1024x128xf32>, vector<8x128xf32> -> vector<8x128xf32>
    %cst_137 = arith.constant dense<0.000000e+00> : vector<8xf32>
    %299 = vector.multi_reduction <add>, %298, %cst_137 [1] : vector<8x128xf32> to vector<8xf32>
    %300 = vector.shape_cast %299 : vector<8xf32> to vector<8x1xf32>
    %cst_138 = arith.constant 1.280000e+02 : f32
    %301 = vector.broadcast %cst_138 : f32 to vector<8x1xf32>
    %302 = arith.divf %300, %301 : vector<8x1xf32>
    %cst_139 = arith.constant 9.765625E-4 : f32
    %303 = vector.broadcast %cst_139 : f32 to vector<8x1xf32>
    %304 = arith.mulf %302, %303 : vector<8x1xf32>
    %305 = vector.broadcast %304 : vector<8x1xf32> to vector<8x1024xf32>
    %306 = arith.subf %261, %305 : vector<8x1024xf32>
    %307 = arith.mulf %306, %306 : vector<8x1024xf32>
    %cst_140 = arith.constant dense<0.000000e+00> : vector<8x128xf32>
    %308 = tpu.matmul %307, %0, %cst_140 {dimension_numbers = #tpu.dot_dimension_numbers<[1], [0], [0], [1], [0, 0, 1, 1], [], []>} : vector<8x1024xf32>, vector<1024x128xf32>, vector<8x128xf32> -> vector<8x128xf32>
    %cst_141 = arith.constant dense<0.000000e+00> : vector<8xf32>
    %309 = vector.multi_reduction <add>, %308, %cst_141 [1] : vector<8x128xf32> to vector<8xf32>
    %310 = vector.shape_cast %309 : vector<8xf32> to vector<8x1xf32>
    %cst_142 = arith.constant 1.280000e+02 : f32
    %311 = vector.broadcast %cst_142 : f32 to vector<8x1xf32>
    %312 = arith.divf %310, %311 : vector<8x1xf32>
    %cst_143 = arith.constant 9.765625E-4 : f32
    %313 = vector.broadcast %cst_143 : f32 to vector<8x1xf32>
    %314 = arith.mulf %312, %313 : vector<8x1xf32>
    %cst_144 = arith.constant 9.99999974E-6 : f32
    %315 = vector.broadcast %cst_144 : f32 to vector<8x1xf32>
    %316 = arith.addf %314, %315 : vector<8x1xf32>
    %317 = math.rsqrt %316 : vector<8x1xf32>
    %318 = vector.broadcast %317 : vector<8x1xf32> to vector<8x1024xf32>
    %319 = arith.mulf %306, %318 : vector<8x1024xf32>
    %320 = vector.broadcast %297 : f32 to vector<8x1024xf32>
    %321 = arith.mulf %320, %319 : vector<8x1024xf32>
    %322 = arith.addf %296, %321 : vector<8x1024xf32>
    %c3_145 = arith.constant 3 : index
    %c4_146 = arith.constant 4 : index
    %323 = memref.load %arg1[%c3_145, %c4_146] : memref<5x5xf32, #tpu.memory_space<smem>>
    %c3_147 = arith.constant 3 : index
    %c0_148 = arith.constant 0 : index
    %c0_149 = arith.constant 0 : index
    %324 = vector.load %arg6[%c3_147, %c0_148, %c0_149] : memref<5x8x8xf32, #tpu.memory_space<vmem>>, vector<1x8x8xf32>
    %325 = vector.shape_cast %324 : vector<1x8x8xf32> to vector<8x8xf32>
    %cst_150 = arith.constant 0.000000e+00 : f32
    %326 = vector.broadcast %cst_150 : f32 to vector<8x1024xf32>
    %327 = arith.maximumf %87, %326 : vector<8x1024xf32>
    %cst_151 = arith.constant dense<0.000000e+00> : vector<8x1024xf32>
    %328 = tpu.matmul %325, %327, %cst_151 {dimension_numbers = #tpu.dot_dimension_numbers<[1], [0], [0], [1], [0, 0, 1, 1], [], []>} : vector<8x8xf32>, vector<8x1024xf32>, vector<8x1024xf32> -> vector<8x1024xf32>
    %cst_152 = arith.constant dense<0.000000e+00> : vector<8x128xf32>
    %329 = tpu.matmul %328, %0, %cst_152 {dimension_numbers = #tpu.dot_dimension_numbers<[1], [0], [0], [1], [0, 0, 1, 1], [], []>} : vector<8x1024xf32>, vector<1024x128xf32>, vector<8x128xf32> -> vector<8x128xf32>
    %cst_153 = arith.constant dense<0.000000e+00> : vector<8xf32>
    %330 = vector.multi_reduction <add>, %329, %cst_153 [1] : vector<8x128xf32> to vector<8xf32>
    %331 = vector.shape_cast %330 : vector<8xf32> to vector<8x1xf32>
    %cst_154 = arith.constant 1.280000e+02 : f32
    %332 = vector.broadcast %cst_154 : f32 to vector<8x1xf32>
    %333 = arith.divf %331, %332 : vector<8x1xf32>
    %cst_155 = arith.constant 9.765625E-4 : f32
    %334 = vector.broadcast %cst_155 : f32 to vector<8x1xf32>
    %335 = arith.mulf %333, %334 : vector<8x1xf32>
    %336 = vector.broadcast %335 : vector<8x1xf32> to vector<8x1024xf32>
    %337 = arith.subf %328, %336 : vector<8x1024xf32>
    %338 = arith.mulf %337, %337 : vector<8x1024xf32>
    %cst_156 = arith.constant dense<0.000000e+00> : vector<8x128xf32>
    %339 = tpu.matmul %338, %0, %cst_156 {dimension_numbers = #tpu.dot_dimension_numbers<[1], [0], [0], [1], [0, 0, 1, 1], [], []>} : vector<8x1024xf32>, vector<1024x128xf32>, vector<8x128xf32> -> vector<8x128xf32>
    %cst_157 = arith.constant dense<0.000000e+00> : vector<8xf32>
    %340 = vector.multi_reduction <add>, %339, %cst_157 [1] : vector<8x128xf32> to vector<8xf32>
    %341 = vector.shape_cast %340 : vector<8xf32> to vector<8x1xf32>
    %cst_158 = arith.constant 1.280000e+02 : f32
    %342 = vector.broadcast %cst_158 : f32 to vector<8x1xf32>
    %343 = arith.divf %341, %342 : vector<8x1xf32>
    %cst_159 = arith.constant 9.765625E-4 : f32
    %344 = vector.broadcast %cst_159 : f32 to vector<8x1xf32>
    %345 = arith.mulf %343, %344 : vector<8x1xf32>
    %cst_160 = arith.constant 9.99999974E-6 : f32
    %346 = vector.broadcast %cst_160 : f32 to vector<8x1xf32>
    %347 = arith.addf %345, %346 : vector<8x1xf32>
    %348 = math.rsqrt %347 : vector<8x1xf32>
    %349 = vector.broadcast %348 : vector<8x1xf32> to vector<8x1024xf32>
    %350 = arith.mulf %337, %349 : vector<8x1024xf32>
    %351 = vector.broadcast %323 : f32 to vector<8x1024xf32>
    %352 = arith.mulf %351, %350 : vector<8x1024xf32>
    %353 = arith.addf %322, %352 : vector<8x1024xf32>
    %c4_161 = arith.constant 4 : index
    %c1_162 = arith.constant 1 : index
    %354 = memref.load %arg1[%c4_161, %c1_162] : memref<5x5xf32, #tpu.memory_space<smem>>
    %355 = vector.broadcast %354 : f32 to vector<8x1024xf32>
    %356 = arith.mulf %355, %220 : vector<8x1024xf32>
    %c1_i32_163 = arith.constant 1 : i32
    %357 = tpu.dynamic_rotate %220 by %c1_i32_163 dim 1 : vector<8x1024xf32>, i32 -> vector<8x1024xf32>
    %c1023_i32_164 = arith.constant 1023 : i32
    %358 = tpu.dynamic_rotate %220 by %c1023_i32_164 dim 1 : vector<8x1024xf32>, i32 -> vector<8x1024xf32>
    %cst_165 = arith.constant -3.000000e+38 : f32
    %359 = vector.broadcast %cst_165 : f32 to vector<8x1024xf32>
    %360 = arith.select %5, %357, %359 : vector<8x1024xi1>, vector<8x1024xf32>
    %cst_166 = arith.constant -3.000000e+38 : f32
    %361 = vector.broadcast %cst_166 : f32 to vector<8x1024xf32>
    %362 = arith.select %10, %358, %361 : vector<8x1024xi1>, vector<8x1024xf32>
    %363 = arith.maximumf %360, %362 : vector<8x1024xf32>
    %364 = arith.maximumf %220, %363 : vector<8x1024xf32>
    %cst_167 = arith.constant 0.000000e+00 : f32
    %365 = vector.broadcast %cst_167 : f32 to vector<8x1024xf32>
    %366 = arith.select %5, %357, %365 : vector<8x1024xi1>, vector<8x1024xf32>
    %367 = arith.addf %220, %366 : vector<8x1024xf32>
    %cst_168 = arith.constant 0.000000e+00 : f32
    %368 = vector.broadcast %cst_168 : f32 to vector<8x1024xf32>
    %369 = arith.select %10, %358, %368 : vector<8x1024xi1>, vector<8x1024xf32>
    %370 = arith.addf %367, %369 : vector<8x1024xf32>
    %c8_i32_169 = arith.constant 8 : i32
    %371 = tpu.dynamic_rotate %364 by %c8_i32_169 dim 1 : vector<8x1024xf32>, i32 -> vector<8x1024xf32>
    %c1016_i32_170 = arith.constant 1016 : i32
    %372 = tpu.dynamic_rotate %364 by %c1016_i32_170 dim 1 : vector<8x1024xf32>, i32 -> vector<8x1024xf32>
    %cst_171 = arith.constant -3.000000e+38 : f32
    %373 = vector.broadcast %cst_171 : f32 to vector<8x1024xf32>
    %374 = arith.select %15, %371, %373 : vector<8x1024xi1>, vector<8x1024xf32>
    %cst_172 = arith.constant -3.000000e+38 : f32
    %375 = vector.broadcast %cst_172 : f32 to vector<8x1024xf32>
    %376 = arith.select %20, %372, %375 : vector<8x1024xi1>, vector<8x1024xf32>
    %377 = arith.maximumf %374, %376 : vector<8x1024xf32>
    %378 = arith.maximumf %364, %377 : vector<8x1024xf32>
    %c8_i32_173 = arith.constant 8 : i32
    %379 = tpu.dynamic_rotate %370 by %c8_i32_173 dim 1 : vector<8x1024xf32>, i32 -> vector<8x1024xf32>
    %c1016_i32_174 = arith.constant 1016 : i32
    %380 = tpu.dynamic_rotate %370 by %c1016_i32_174 dim 1 : vector<8x1024xf32>, i32 -> vector<8x1024xf32>
    %cst_175 = arith.constant 0.000000e+00 : f32
    %381 = vector.broadcast %cst_175 : f32 to vector<8x1024xf32>
    %382 = arith.select %15, %379, %381 : vector<8x1024xi1>, vector<8x1024xf32>
    %383 = arith.addf %370, %382 : vector<8x1024xf32>
    %cst_176 = arith.constant 0.000000e+00 : f32
    %384 = vector.broadcast %cst_176 : f32 to vector<8x1024xf32>
    %385 = arith.select %20, %380, %384 : vector<8x1024xi1>, vector<8x1024xf32>
    %386 = arith.addf %383, %385 : vector<8x1024xf32>
    %c64_i32_177 = arith.constant 64 : i32
    %387 = tpu.dynamic_rotate %378 by %c64_i32_177 dim 1 : vector<8x1024xf32>, i32 -> vector<8x1024xf32>
    %c960_i32_178 = arith.constant 960 : i32
    %388 = tpu.dynamic_rotate %378 by %c960_i32_178 dim 1 : vector<8x1024xf32>, i32 -> vector<8x1024xf32>
    %cst_179 = arith.constant -3.000000e+38 : f32
    %389 = vector.broadcast %cst_179 : f32 to vector<8x1024xf32>
    %390 = arith.select %25, %387, %389 : vector<8x1024xi1>, vector<8x1024xf32>
    %cst_180 = arith.constant -3.000000e+38 : f32
    %391 = vector.broadcast %cst_180 : f32 to vector<8x1024xf32>
    %392 = arith.select %30, %388, %391 : vector<8x1024xi1>, vector<8x1024xf32>
    %393 = arith.maximumf %390, %392 : vector<8x1024xf32>
    %394 = arith.maximumf %378, %393 : vector<8x1024xf32>
    %c64_i32_181 = arith.constant 64 : i32
    %395 = tpu.dynamic_rotate %386 by %c64_i32_181 dim 1 : vector<8x1024xf32>, i32 -> vector<8x1024xf32>
    %c960_i32_182 = arith.constant 960 : i32
    %396 = tpu.dynamic_rotate %386 by %c960_i32_182 dim 1 : vector<8x1024xf32>, i32 -> vector<8x1024xf32>
    %cst_183 = arith.constant 0.000000e+00 : f32
    %397 = vector.broadcast %cst_183 : f32 to vector<8x1024xf32>
    %398 = arith.select %25, %395, %397 : vector<8x1024xi1>, vector<8x1024xf32>
    %399 = arith.addf %386, %398 : vector<8x1024xf32>
    %cst_184 = arith.constant 0.000000e+00 : f32
    %400 = vector.broadcast %cst_184 : f32 to vector<8x1024xf32>
    %401 = arith.select %30, %396, %400 : vector<8x1024xi1>, vector<8x1024xf32>
    %402 = arith.addf %399, %401 : vector<8x1024xf32>
    %403 = arith.mulf %402, %33 : vector<8x1024xf32>
    %c4_185 = arith.constant 4 : index
    %c2_186 = arith.constant 2 : index
    %404 = memref.load %arg1[%c4_185, %c2_186] : memref<5x5xf32, #tpu.memory_space<smem>>
    %cst_187 = arith.constant dense<0.000000e+00> : vector<8x128xf32>
    %405 = tpu.matmul %403, %0, %cst_187 {dimension_numbers = #tpu.dot_dimension_numbers<[1], [0], [0], [1], [0, 0, 1, 1], [], []>} : vector<8x1024xf32>, vector<1024x128xf32>, vector<8x128xf32> -> vector<8x128xf32>
    %cst_188 = arith.constant dense<0.000000e+00> : vector<8xf32>
    %406 = vector.multi_reduction <add>, %405, %cst_188 [1] : vector<8x128xf32> to vector<8xf32>
    %407 = vector.shape_cast %406 : vector<8xf32> to vector<8x1xf32>
    %cst_189 = arith.constant 1.280000e+02 : f32
    %408 = vector.broadcast %cst_189 : f32 to vector<8x1xf32>
    %409 = arith.divf %407, %408 : vector<8x1xf32>
    %cst_190 = arith.constant 9.765625E-4 : f32
    %410 = vector.broadcast %cst_190 : f32 to vector<8x1xf32>
    %411 = arith.mulf %409, %410 : vector<8x1xf32>
    %412 = vector.broadcast %411 : vector<8x1xf32> to vector<8x1024xf32>
    %413 = arith.subf %403, %412 : vector<8x1024xf32>
    %414 = arith.mulf %413, %413 : vector<8x1024xf32>
    %cst_191 = arith.constant dense<0.000000e+00> : vector<8x128xf32>
    %415 = tpu.matmul %414, %0, %cst_191 {dimension_numbers = #tpu.dot_dimension_numbers<[1], [0], [0], [1], [0, 0, 1, 1], [], []>} : vector<8x1024xf32>, vector<1024x128xf32>, vector<8x128xf32> -> vector<8x128xf32>
    %cst_192 = arith.constant dense<0.000000e+00> : vector<8xf32>
    %416 = vector.multi_reduction <add>, %415, %cst_192 [1] : vector<8x128xf32> to vector<8xf32>
    %417 = vector.shape_cast %416 : vector<8xf32> to vector<8x1xf32>
    %cst_193 = arith.constant 1.280000e+02 : f32
    %418 = vector.broadcast %cst_193 : f32 to vector<8x1xf32>
    %419 = arith.divf %417, %418 : vector<8x1xf32>
    %cst_194 = arith.constant 9.765625E-4 : f32
    %420 = vector.broadcast %cst_194 : f32 to vector<8x1xf32>
    %421 = arith.mulf %419, %420 : vector<8x1xf32>
    %cst_195 = arith.constant 9.99999974E-6 : f32
    %422 = vector.broadcast %cst_195 : f32 to vector<8x1xf32>
    %423 = arith.addf %421, %422 : vector<8x1xf32>
    %424 = math.rsqrt %423 : vector<8x1xf32>
    %425 = vector.broadcast %424 : vector<8x1xf32> to vector<8x1024xf32>
    %426 = arith.mulf %413, %425 : vector<8x1024xf32>
    %427 = vector.broadcast %404 : f32 to vector<8x1024xf32>
    %428 = arith.mulf %427, %426 : vector<8x1024xf32>
    %429 = arith.addf %356, %428 : vector<8x1024xf32>
    %c4_196 = arith.constant 4 : index
    %c3_197 = arith.constant 3 : index
    %430 = memref.load %arg1[%c4_196, %c3_197] : memref<5x5xf32, #tpu.memory_space<smem>>
    %cst_198 = arith.constant dense<0.000000e+00> : vector<8x128xf32>
    %431 = tpu.matmul %394, %0, %cst_198 {dimension_numbers = #tpu.dot_dimension_numbers<[1], [0], [0], [1], [0, 0, 1, 1], [], []>} : vector<8x1024xf32>, vector<1024x128xf32>, vector<8x128xf32> -> vector<8x128xf32>
    %cst_199 = arith.constant dense<0.000000e+00> : vector<8xf32>
    %432 = vector.multi_reduction <add>, %431, %cst_199 [1] : vector<8x128xf32> to vector<8xf32>
    %433 = vector.shape_cast %432 : vector<8xf32> to vector<8x1xf32>
    %cst_200 = arith.constant 1.280000e+02 : f32
    %434 = vector.broadcast %cst_200 : f32 to vector<8x1xf32>
    %435 = arith.divf %433, %434 : vector<8x1xf32>
    %cst_201 = arith.constant 9.765625E-4 : f32
    %436 = vector.broadcast %cst_201 : f32 to vector<8x1xf32>
    %437 = arith.mulf %435, %436 : vector<8x1xf32>
    %438 = vector.broadcast %437 : vector<8x1xf32> to vector<8x1024xf32>
    %439 = arith.subf %394, %438 : vector<8x1024xf32>
    %440 = arith.mulf %439, %439 : vector<8x1024xf32>
    %cst_202 = arith.constant dense<0.000000e+00> : vector<8x128xf32>
    %441 = tpu.matmul %440, %0, %cst_202 {dimension_numbers = #tpu.dot_dimension_numbers<[1], [0], [0], [1], [0, 0, 1, 1], [], []>} : vector<8x1024xf32>, vector<1024x128xf32>, vector<8x128xf32> -> vector<8x128xf32>
    %cst_203 = arith.constant dense<0.000000e+00> : vector<8xf32>
    %442 = vector.multi_reduction <add>, %441, %cst_203 [1] : vector<8x128xf32> to vector<8xf32>
    %443 = vector.shape_cast %442 : vector<8xf32> to vector<8x1xf32>
    %cst_204 = arith.constant 1.280000e+02 : f32
    %444 = vector.broadcast %cst_204 : f32 to vector<8x1xf32>
    %445 = arith.divf %443, %444 : vector<8x1xf32>
    %cst_205 = arith.constant 9.765625E-4 : f32
    %446 = vector.broadcast %cst_205 : f32 to vector<8x1xf32>
    %447 = arith.mulf %445, %446 : vector<8x1xf32>
    %cst_206 = arith.constant 9.99999974E-6 : f32
    %448 = vector.broadcast %cst_206 : f32 to vector<8x1xf32>
    %449 = arith.addf %447, %448 : vector<8x1xf32>
    %450 = math.rsqrt %449 : vector<8x1xf32>
    %451 = vector.broadcast %450 : vector<8x1xf32> to vector<8x1024xf32>
    %452 = arith.mulf %439, %451 : vector<8x1024xf32>
    %453 = vector.broadcast %430 : f32 to vector<8x1024xf32>
    %454 = arith.mulf %453, %452 : vector<8x1024xf32>
    %455 = arith.addf %429, %454 : vector<8x1024xf32>
    %c4_207 = arith.constant 4 : index
    %c4_208 = arith.constant 4 : index
    %456 = memref.load %arg1[%c4_207, %c4_208] : memref<5x5xf32, #tpu.memory_space<smem>>
    %c4_209 = arith.constant 4 : index
    %c0_210 = arith.constant 0 : index
    %c0_211 = arith.constant 0 : index
    %457 = vector.load %arg6[%c4_209, %c0_210, %c0_211] : memref<5x8x8xf32, #tpu.memory_space<vmem>>, vector<1x8x8xf32>
    %458 = vector.shape_cast %457 : vector<1x8x8xf32> to vector<8x8xf32>
    %cst_212 = arith.constant 0.000000e+00 : f32
    %459 = vector.broadcast %cst_212 : f32 to vector<8x1024xf32>
    %460 = arith.maximumf %220, %459 : vector<8x1024xf32>
    %cst_213 = arith.constant dense<0.000000e+00> : vector<8x1024xf32>
    %461 = tpu.matmul %458, %460, %cst_213 {dimension_numbers = #tpu.dot_dimension_numbers<[1], [0], [0], [1], [0, 0, 1, 1], [], []>} : vector<8x8xf32>, vector<8x1024xf32>, vector<8x1024xf32> -> vector<8x1024xf32>
    %cst_214 = arith.constant dense<0.000000e+00> : vector<8x128xf32>
    %462 = tpu.matmul %461, %0, %cst_214 {dimension_numbers = #tpu.dot_dimension_numbers<[1], [0], [0], [1], [0, 0, 1, 1], [], []>} : vector<8x1024xf32>, vector<1024x128xf32>, vector<8x128xf32> -> vector<8x128xf32>
    %cst_215 = arith.constant dense<0.000000e+00> : vector<8xf32>
    %463 = vector.multi_reduction <add>, %462, %cst_215 [1] : vector<8x128xf32> to vector<8xf32>
    %464 = vector.shape_cast %463 : vector<8xf32> to vector<8x1xf32>
    %cst_216 = arith.constant 1.280000e+02 : f32
    %465 = vector.broadcast %cst_216 : f32 to vector<8x1xf32>
    %466 = arith.divf %464, %465 : vector<8x1xf32>
    %cst_217 = arith.constant 9.765625E-4 : f32
    %467 = vector.broadcast %cst_217 : f32 to vector<8x1xf32>
    %468 = arith.mulf %466, %467 : vector<8x1xf32>
    %469 = vector.broadcast %468 : vector<8x1xf32> to vector<8x1024xf32>
    %470 = arith.subf %461, %469 : vector<8x1024xf32>
    %471 = arith.mulf %470, %470 : vector<8x1024xf32>
    %cst_218 = arith.constant dense<0.000000e+00> : vector<8x128xf32>
    %472 = tpu.matmul %471, %0, %cst_218 {dimension_numbers = #tpu.dot_dimension_numbers<[1], [0], [0], [1], [0, 0, 1, 1], [], []>} : vector<8x1024xf32>, vector<1024x128xf32>, vector<8x128xf32> -> vector<8x128xf32>
    %cst_219 = arith.constant dense<0.000000e+00> : vector<8xf32>
    %473 = vector.multi_reduction <add>, %472, %cst_219 [1] : vector<8x128xf32> to vector<8xf32>
    %474 = vector.shape_cast %473 : vector<8xf32> to vector<8x1xf32>
    %cst_220 = arith.constant 1.280000e+02 : f32
    %475 = vector.broadcast %cst_220 : f32 to vector<8x1xf32>
    %476 = arith.divf %474, %475 : vector<8x1xf32>
    %cst_221 = arith.constant 9.765625E-4 : f32
    %477 = vector.broadcast %cst_221 : f32 to vector<8x1xf32>
    %478 = arith.mulf %476, %477 : vector<8x1xf32>
    %cst_222 = arith.constant 9.99999974E-6 : f32
    %479 = vector.broadcast %cst_222 : f32 to vector<8x1xf32>
    %480 = arith.addf %478, %479 : vector<8x1xf32>
    %481 = math.rsqrt %480 : vector<8x1xf32>
    %482 = vector.broadcast %481 : vector<8x1xf32> to vector<8x1024xf32>
    %483 = arith.mulf %470, %482 : vector<8x1024xf32>
    %484 = vector.broadcast %456 : f32 to vector<8x1024xf32>
    %485 = arith.mulf %484, %483 : vector<8x1024xf32>
    %486 = arith.addf %455, %485 : vector<8x1024xf32>
    %c0_223 = arith.constant 0 : index
    %c0_224 = arith.constant 0 : index
    %487 = vector.load %arg8[%c0_223, %c0_224] : memref<16x1024xf32, #tpu.memory_space<vmem>>, vector<8x1024xf32>
    tpu.vector_store %arg8[%c0_223, %c0_224], %353 {strides = array<i32>} : memref<16x1024xf32, #tpu.memory_space<vmem>>, vector<8x1024xf32>,
    %c8 = arith.constant 8 : index
    %c0_225 = arith.constant 0 : index
    %488 = vector.load %arg8[%c8, %c0_225] : memref<16x1024xf32, #tpu.memory_space<vmem>>, vector<8x1024xf32>
    tpu.vector_store %arg8[%c8, %c0_225], %486 {strides = array<i32>} : memref<16x1024xf32, #tpu.memory_space<vmem>>, vector<8x1024xf32>,
    return
  }
  func.func @transform_0(%arg0: i32) -> (i32, i32) {
    %c0_i32 = arith.constant 0 : i32
    %c0_i32_0 = arith.constant 0 : i32
    %c0_i32_1 = arith.constant 0 : i32
    return %c0_i32, %c0_i32_0 : i32, i32
  }
  func.func @transform_1(%arg0: i32) -> (i32, i32) {
    %c0_i32 = arith.constant 0 : i32
    %c0_i32_0 = arith.constant 0 : i32
    %c0_i32_1 = arith.constant 0 : i32
    return %c0_i32, %c0_i32_0 : i32, i32
  }
  func.func @transform_2(%arg0: i32) -> (i32, i32) {
    %c0_i32 = arith.constant 0 : i32
    %c0_i32_0 = arith.constant 0 : i32
    %c0_i32_1 = arith.constant 0 : i32
    return %c0_i32, %c0_i32_0 : i32, i32
  }
  func.func @transform_3(%arg0: i32) -> (i32, i32) {
    %c0_i32 = arith.constant 0 : i32
    %c0_i32_0 = arith.constant 0 : i32
    %c0_i32_1 = arith.constant 0 : i32
    return %c0_i32, %c0_i32_0 : i32, i32
  }
  func.func @transform_4(%arg0: i32) -> (i32, i32) {
    %c0_i32 = arith.constant 0 : i32
    %c0_i32_0 = arith.constant 0 : i32
    %c0_i32_1 = arith.constant 0 : i32
    return %c0_i32, %c0_i32_0 : i32, i32
  }
  func.func @transform_5(%arg0: i32) -> (i32, i32, i32) {
    %c0_i32 = arith.constant 0 : i32
    %c0_i32_0 = arith.constant 0 : i32
    %c0_i32_1 = arith.constant 0 : i32
    %c0_i32_2 = arith.constant 0 : i32
    return %c0_i32, %c0_i32_0, %c0_i32_1 : i32, i32, i32
  }
  func.func @transform_6(%arg0: i32) -> (i32, i32) {
    %c0_i32 = arith.constant 0 : i32
    %c0_i32_0 = arith.constant 0 : i32
    %c0_i32_1 = arith.constant 0 : i32
    return %c0_i32, %c0_i32_0 : i32, i32
  }
  func.func @transform_7(%arg0: i32) -> (i32, i32) {
    %c0_i32 = arith.constant 0 : i32
    %c0_i32_0 = arith.constant 0 : i32
    %c0_i32_1 = arith.constant 0 : i32
    return %c0_i32, %c0_i32_0 : i32, i32
  }
}

</mosaic_0001>

<llo_original>
// kernel: cell3d_forward.1
$region0: #{cell3d_forward.1}
  #allocation0 [shape = 'u32[]', space=smem, size = 0x4, offset = 0x4, fixed_abs, tag = 'smem constant byte address 0x4 - core index']
  #allocation1 [shape = 'u32[144,128]{1,0:T(1,128)}', space=vmem, size = 0x12000, scoped, tag = 'internal scratch']
  %s0 = inlined_call_operand.vmem [shape: f32[5,5], index: 0, kind: input, shape index: {}]
  %s1 = inlined_call_operand.vmem [shape: f32[8,1024], index: 1, kind: input, shape index: {}]
  %s2 = inlined_call_operand.vmem [shape: f32[8,1024], index: 2, kind: input, shape index: {}]
  %s3 = inlined_call_operand.vmem [shape: f32[8,8], index: 3, kind: input, shape index: {}]
  %s4 = inlined_call_operand.vmem [shape: f32[8,8], index: 4, kind: input, shape index: {}]
  %s5 = inlined_call_operand.vmem [shape: f32[5,8,8], index: 5, kind: input, shape index: {}]
  %s6 = inlined_call_operand.vmem [shape: f32[8,1024], index: 6, kind: input, shape index: {}]
  %s7 = inlined_call_operand.vmem [shape: f32[16,1024], index: 7, kind: output, shape index: {}]
  %s8 = sld [smem:[#allocation0]]
  $region42: #{cell3d_forward.1} parent=0
    _
  %s10 = ssub.s32 1, %s8
  %s11 = scalar_select 0, %s10, %s8
  $region1: #{cell3d_forward.1} parent=0
    #allocation2 [shape = 'u8[4096]{0}', space=smem, size = 0x1000, scoped, tag = 'input window, operand 0, single buffered']
    #allocation3 [shape = 's32[1]{0}', space=sflag, size = 0x4, scoped, tag = 'scoped memory for cell3d_forward.1']
    %12 = vsyncpa [#allocation3], 0
    // Predicated region
    $region2: #{cell3d_forward.1} parent=1 // pred_check
      _
    $region3: #{cell3d_forward.1} parent=1 // pred_check_branch
      %14 = sbr.rel (0) target = $region5
    $region4: #{cell3d_forward.1} parent=1 // pred_region
      %s16 = ssub.s32 128, 128
      %17 = vsyncadd [#allocation3], %s16
      %s19 = sshll.u32 %s0, 4
      %s20 = int_to_ptr.vmem [resolvable:$true] %s19
      %22 = dma.vmem_to_smem %s20, 128, [#allocation2], [#allocation3]
    $region5: #{cell3d_forward.1} parent=1 // pred_fallthru
      _
    // Predicated region
    $region6: #{cell3d_forward.1} parent=1 // pred_check
      _
    $region7: #{cell3d_forward.1} parent=1 // pred_check_branch
      %24 = sbr.rel (0) target = $region9
    $region8: #{cell3d_forward.1} parent=1 // pred_region
      _
    $region9: #{cell3d_forward.1} parent=1 // pred_fallthru
      _
    // Predicated region
    $region10: #{cell3d_forward.1} parent=1 // pred_check
      _
    $region11: #{cell3d_forward.1} parent=1 // pred_check_branch
      %26 = sbr.rel (0) target = $region13
    $region12: #{cell3d_forward.1} parent=1 // pred_region
      _
    $region13: #{cell3d_forward.1} parent=1 // pred_fallthru
      _
    // Predicated region
    $region14: #{cell3d_forward.1} parent=1 // pred_check
      _
    $region15: #{cell3d_forward.1} parent=1 // pred_check_branch
      %28 = sbr.rel (0) target = $region17
    $region16: #{cell3d_forward.1} parent=1 // pred_region
      _
    $region17: #{cell3d_forward.1} parent=1 // pred_fallthru
      _
    // Predicated region
    $region18: #{cell3d_forward.1} parent=1 // pred_check
      _
    $region19: #{cell3d_forward.1} parent=1 // pred_check_branch
      %30 = sbr.rel (0) target = $region21
    $region20: #{cell3d_forward.1} parent=1 // pred_region
      _
    $region21: #{cell3d_forward.1} parent=1 // pred_fallthru
      _
    // Predicated region
    $region22: #{cell3d_forward.1} parent=1 // pred_check
      _
    $region23: #{cell3d_forward.1} parent=1 // pred_check_branch
      %32 = sbr.rel (0) target = $region25
    $region24: #{cell3d_forward.1} parent=1 // pred_region
      _
    $region25: #{cell3d_forward.1} parent=1 // pred_fallthru
      _
    // Predicated region
    $region26: #{cell3d_forward.1} parent=1 // pred_check
      _
    $region27: #{cell3d_forward.1} parent=1 // pred_check_branch
      %34 = sbr.rel (0) target = $region29
    $region28: #{cell3d_forward.1} parent=1 // pred_region
      _
    $region29: #{cell3d_forward.1} parent=1 // pred_fallthru
      _
    // Predicated region
    $region30: #{cell3d_forward.1} parent=1 // pred_check
      _
    $region31: #{cell3d_forward.1} parent=1 // pred_check_branch
      %36 = sbr.rel (0) target = $region33
    $region32: #{cell3d_forward.1} parent=1 // pred_region
      %37 = dma.done [#allocation3], 128
    $region33: #{cell3d_forward.1} parent=1 // pred_fallthru
      _
    %38 = sfence
    %v39 = vld [vmem:[%s6] ss:$8 sm:$0xf]
    %v40 = vld [vmem:[%s6] ss:$8 sm:$0xf0]
    %v41 = vor.u32 %v39, %v40
    %v43 = vlaneseq
    %v44 = vshrl.u32 %v43, 7
    %v45 = vsub.s32 0, %v44
    %v46 = vrot.slane %v41, %v45
    %v47 = vlaneseq
    %v48 = vshrl.u32 %v47, 7
    %v49 = vsub.s32 1, %v48
    %v50 = vrot.slane %v41, %v49
    %v51 = vlaneseq
    %v52 = vshrl.u32 %v51, 7
    %v53 = vsub.s32 2, %v52
    %v54 = vrot.slane %v41, %v53
    %v55 = vlaneseq
    %v56 = vshrl.u32 %v55, 7
    %v57 = vsub.s32 3, %v56
    %v58 = vrot.slane %v41, %v57
    %v59 = vlaneseq
    %v60 = vshrl.u32 %v59, 7
    %v61 = vsub.s32 4, %v60
    %v62 = vrot.slane %v41, %v61
    %v63 = vlaneseq
    %v64 = vshrl.u32 %v63, 7
    %v65 = vsub.s32 5, %v64
    %v66 = vrot.slane %v41, %v65
    %v67 = vlaneseq
    %v68 = vshrl.u32 %v67, 7
    %v69 = vsub.s32 6, %v68
    %v70 = vrot.slane %v41, %v69
    %v71 = vlaneseq
    %v72 = vshrl.u32 %v71, 7
    %v73 = vsub.s32 7, %v72
    %v74 = vrot.slane %v41, %v73
    %vm83 = vcmp.gt.f32.partialorder %v46, 0.5
    %vm84 = vcmp.gt.f32.partialorder %v50, 0.5
    %vm85 = vcmp.gt.f32.partialorder %v54, 0.5
    %vm86 = vcmp.gt.f32.partialorder %v58, 0.5
    %vm87 = vcmp.gt.f32.partialorder %v62, 0.5
    %vm88 = vcmp.gt.f32.partialorder %v66, 0.5
    %vm89 = vcmp.gt.f32.partialorder %v70, 0.5
    %vm90 = vcmp.gt.f32.partialorder %v74, 0.5
    %s91 = scalar_lea.vmem %s6, 1
    %v92 = vld [vmem:[%s91] ss:$8 sm:$0xf]
    %v93 = vld [vmem:[%s91] ss:$8 sm:$0xf0]
    %v94 = vor.u32 %v92, %v93
    %v96 = vlaneseq
    %v97 = vshrl.u32 %v96, 7
    %v98 = vsub.s32 0, %v97
    %v99 = vrot.slane %v94, %v98
    %v100 = vlaneseq
    %v101 = vshrl.u32 %v100, 7
    %v102 = vsub.s32 1, %v101
    %v103 = vrot.slane %v94, %v102
    %v104 = vlaneseq
    %v105 = vshrl.u32 %v104, 7
    %v106 = vsub.s32 2, %v105
    %v107 = vrot.slane %v94, %v106
    %v108 = vlaneseq
    %v109 = vshrl.u32 %v108, 7
    %v110 = vsub.s32 3, %v109
    %v111 = vrot.slane %v94, %v110
    %v112 = vlaneseq
    %v113 = vshrl.u32 %v112, 7
    %v114 = vsub.s32 4, %v113
    %v115 = vrot.slane %v94, %v114
    %v116 = vlaneseq
    %v117 = vshrl.u32 %v116, 7
    %v118 = vsub.s32 5, %v117
    %v119 = vrot.slane %v94, %v118
    %v120 = vlaneseq
    %v121 = vshrl.u32 %v120, 7
    %v122 = vsub.s32 6, %v121
    %v123 = vrot.slane %v94, %v122
    %v124 = vlaneseq
    %v125 = vshrl.u32 %v124, 7
    %v126 = vsub.s32 7, %v125
    %v127 = vrot.slane %v94, %v126
    %vm136 = vcmp.gt.f32.partialorder %v99, 0.5
    %vm137 = vcmp.gt.f32.partialorder %v103, 0.5
    %vm138 = vcmp.gt.f32.partialorder %v107, 0.5
    %vm139 = vcmp.gt.f32.partialorder %v111, 0.5
    %vm140 = vcmp.gt.f32.partialorder %v115, 0.5
    %vm141 = vcmp.gt.f32.partialorder %v119, 0.5
    %vm142 = vcmp.gt.f32.partialorder %v123, 0.5
    %vm143 = vcmp.gt.f32.partialorder %v127, 0.5
    %s144 = scalar_lea.vmem %s6, 2
    %v145 = vld [vmem:[%s144] ss:$8 sm:$0xf]
    %v146 = vld [vmem:[%s144] ss:$8 sm:$0xf0]
    %v147 = vor.u32 %v145, %v146
    %v149 = vlaneseq
    %v150 = vshrl.u32 %v149, 7
    %v151 = vsub.s32 0, %v150
    %v152 = vrot.slane %v147, %v151
    %v153 = vlaneseq
    %v154 = vshrl.u32 %v153, 7
    %v155 = vsub.s32 1, %v154
    %v156 = vrot.slane %v147, %v155
    %v157 = vlaneseq
    %v158 = vshrl.u32 %v157, 7
    %v159 = vsub.s32 2, %v158
    %v160 = vrot.slane %v147, %v159
    %v161 = vlaneseq
    %v162 = vshrl.u32 %v161, 7
    %v163 = vsub.s32 3, %v162
    %v164 = vrot.slane %v147, %v163
    %v165 = vlaneseq
    %v166 = vshrl.u32 %v165, 7
    %v167 = vsub.s32 4, %v166
    %v168 = vrot.slane %v147, %v167
    %v169 = vlaneseq
    %v170 = vshrl.u32 %v169, 7
    %v171 = vsub.s32 5, %v170
    %v172 = vrot.slane %v147, %v171
    %v173 = vlaneseq
    %v174 = vshrl.u32 %v173, 7
    %v175 = vsub.s32 6, %v174
    %v176 = vrot.slane %v147, %v175
    %v177 = vlaneseq
    %v178 = vshrl.u32 %v177, 7
    %v179 = vsub.s32 7, %v178
    %v180 = vrot.slane %v147, %v179
    %vm189 = vcmp.gt.f32.partialorder %v152, 0.5
    %vm190 = vcmp.gt.f32.partialorder %v156, 0.5
    %vm191 = vcmp.gt.f32.partialorder %v160, 0.5
    %vm192 = vcmp.gt.f32.partialorder %v164, 0.5
    %vm193 = vcmp.gt.f32.partialorder %v168, 0.5
    %vm194 = vcmp.gt.f32.partialorder %v172, 0.5
    %vm195 = vcmp.gt.f32.partialorder %v176, 0.5
    %vm196 = vcmp.gt.f32.partialorder %v180, 0.5
    %s197 = scalar_lea.vmem %s6, 3
    %v198 = vld [vmem:[%s197] ss:$8 sm:$0xf]
    %v199 = vld [vmem:[%s197] ss:$8 sm:$0xf0]
    %v200 = vor.u32 %v198, %v199
    %v202 = vlaneseq
    %v203 = vshrl.u32 %v202, 7
    %v204 = vsub.s32 0, %v203
    %v205 = vrot.slane %v200, %v204
    %v206 = vlaneseq
    %v207 = vshrl.u32 %v206, 7
    %v208 = vsub.s32 1, %v207
    %v209 = vrot.slane %v200, %v208
    %v210 = vlaneseq
    %v211 = vshrl.u32 %v210, 7
    %v212 = vsub.s32 2, %v211
    %v213 = vrot.slane %v200, %v212
    %v214 = vlaneseq
    %v215 = vshrl.u32 %v214, 7
    %v216 = vsub.s32 3, %v215
    %v217 = vrot.slane %v200, %v216
    %v218 = vlaneseq
    %v219 = vshrl.u32 %v218, 7
    %v220 = vsub.s32 4, %v219
    %v221 = vrot.slane %v200, %v220
    %v222 = vlaneseq
    %v223 = vshrl.u32 %v222, 7
    %v224 = vsub.s32 5, %v223
    %v225 = vrot.slane %v200, %v224
    %v226 = vlaneseq
    %v227 = vshrl.u32 %v226, 7
    %v228 = vsub.s32 6, %v227
    %v229 = vrot.slane %v200, %v228
    %v230 = vlaneseq
    %v231 = vshrl.u32 %v230, 7
    %v232 = vsub.s32 7, %v231
    %v233 = vrot.slane %v200, %v232
    %vm242 = vcmp.gt.f32.partialorder %v205, 0.5
    %vm243 = vcmp.gt.f32.partialorder %v209, 0.5
    %vm244 = vcmp.gt.f32.partialorder %v213, 0.5
    %vm245 = vcmp.gt.f32.partialorder %v217, 0.5
    %vm246 = vcmp.gt.f32.partialorder %v221, 0.5
    %vm247 = vcmp.gt.f32.partialorder %v225, 0.5
    %vm248 = vcmp.gt.f32.partialorder %v229, 0.5
    %vm249 = vcmp.gt.f32.partialorder %v233, 0.5
    %s250 = scalar_lea.vmem %s6, 4
    %v251 = vld [vmem:[%s250] ss:$8 sm:$0xf]
    %v252 = vld [vmem:[%s250] ss:$8 sm:$0xf0]
    %v253 = vor.u32 %v251, %v252
    %v255 = vlaneseq
    %v256 = vshrl.u32 %v255, 7
    %v257 = vsub.s32 0, %v256
    %v258 = vrot.slane %v253, %v257
    %v259 = vlaneseq
    %v260 = vshrl.u32 %v259, 7
    %v261 = vsub.s32 1, %v260
    %v262 = vrot.slane %v253, %v261
    %v263 = vlaneseq
    %v264 = vshrl.u32 %v263, 7
    %v265 = vsub.s32 2, %v264
    %v266 = vrot.slane %v253, %v265
    %v267 = vlaneseq
    %v268 = vshrl.u32 %v267, 7
    %v269 = vsub.s32 3, %v268
    %v270 = vrot.slane %v253, %v269
    %v271 = vlaneseq
    %v272 = vshrl.u32 %v271, 7
    %v273 = vsub.s32 4, %v272
    %v274 = vrot.slane %v253, %v273
    %v275 = vlaneseq
    %v276 = vshrl.u32 %v275, 7
    %v277 = vsub.s32 5, %v276
    %v278 = vrot.slane %v253, %v277
    %v279 = vlaneseq
    %v280 = vshrl.u32 %v279, 7
    %v281 = vsub.s32 6, %v280
    %v282 = vrot.slane %v253, %v281
    %v283 = vlaneseq
    %v284 = vshrl.u32 %v283, 7
    %v285 = vsub.s32 7, %v284
    %v286 = vrot.slane %v253, %v285
    %vm295 = vcmp.gt.f32.partialorder %v258, 0.5
    %vm296 = vcmp.gt.f32.partialorder %v262, 0.5
    %vm297 = vcmp.gt.f32.partialorder %v266, 0.5
    %vm298 = vcmp.gt.f32.partialorder %v270, 0.5
    %vm299 = vcmp.gt.f32.partialorder %v274, 0.5
    %vm300 = vcmp.gt.f32.partialorder %v278, 0.5
    %vm301 = vcmp.gt.f32.partialorder %v282, 0.5
    %vm302 = vcmp.gt.f32.partialorder %v286, 0.5
    %s303 = scalar_lea.vmem %s6, 5
    %v304 = vld [vmem:[%s303] ss:$8 sm:$0xf]
    %v305 = vld [vmem:[%s303] ss:$8 sm:$0xf0]
    %v306 = vor.u32 %v304, %v305
    %v308 = vlaneseq
    %v309 = vshrl.u32 %v308, 7
    %v310 = vsub.s32 0, %v309
    %v311 = vrot.slane %v306, %v310
    %v312 = vlaneseq
    %v313 = vshrl.u32 %v312, 7
    %v314 = vsub.s32 1, %v313
    %v315 = vrot.slane %v306, %v314
    %v316 = vlaneseq
    %v317 = vshrl.u32 %v316, 7
    %v318 = vsub.s32 2, %v317
    %v319 = vrot.slane %v306, %v318
    %v320 = vlaneseq
    %v321 = vshrl.u32 %v320, 7
    %v322 = vsub.s32 3, %v321
    %v323 = vrot.slane %v306, %v322
    %v324 = vlaneseq
    %v325 = vshrl.u32 %v324, 7
    %v326 = vsub.s32 4, %v325
    %v327 = vrot.slane %v306, %v326
    %v328 = vlaneseq
    %v329 = vshrl.u32 %v328, 7
    %v330 = vsub.s32 5, %v329
    %v331 = vrot.slane %v306, %v330
    %v332 = vlaneseq
    %v333 = vshrl.u32 %v332, 7
    %v334 = vsub.s32 6, %v333
    %v335 = vrot.slane %v306, %v334
    %v336 = vlaneseq
    %v337 = vshrl.u32 %v336, 7
    %v338 = vsub.s32 7, %v337
    %v339 = vrot.slane %v306, %v338
    %vm348 = vcmp.gt.f32.partialorder %v311, 0.5
    %vm349 = vcmp.gt.f32.partialorder %v315, 0.5
    %vm350 = vcmp.gt.f32.partialorder %v319, 0.5
    %vm351 = vcmp.gt.f32.partialorder %v323, 0.5
    %vm352 = vcmp.gt.f32.partialorder %v327, 0.5
    %vm353 = vcmp.gt.f32.partialorder %v331, 0.5
    %vm354 = vcmp.gt.f32.partialorder %v335, 0.5
    %vm355 = vcmp.gt.f32.partialorder %v339, 0.5
    %s356 = scalar_lea.vmem %s6, 6
    %v357 = vld [vmem:[%s356] ss:$8 sm:$0xf]
    %v358 = vld [vmem:[%s356] ss:$8 sm:$0xf0]
    %v359 = vor.u32 %v357, %v358
    %v361 = vlaneseq
    %v362 = vshrl.u32 %v361, 7
    %v363 = vsub.s32 0, %v362
    %v364 = vrot.slane %v359, %v363
    %v365 = vlaneseq
    %v366 = vshrl.u32 %v365, 7
    %v367 = vsub.s32 1, %v366
    %v368 = vrot.slane %v359, %v367
    %v369 = vlaneseq
    %v370 = vshrl.u32 %v369, 7
    %v371 = vsub.s32 2, %v370
    %v372 = vrot.slane %v359, %v371
    %v373 = vlaneseq
    %v374 = vshrl.u32 %v373, 7
    %v375 = vsub.s32 3, %v374
    %v376 = vrot.slane %v359, %v375
    %v377 = vlaneseq
    %v378 = vshrl.u32 %v377, 7
    %v379 = vsub.s32 4, %v378
    %v380 = vrot.slane %v359, %v379
    %v381 = vlaneseq
    %v382 = vshrl.u32 %v381, 7
    %v383 = vsub.s32 5, %v382
    %v384 = vrot.slane %v359, %v383
    %v385 = vlaneseq
    %v386 = vshrl.u32 %v385, 7
    %v387 = vsub.s32 6, %v386
    %v388 = vrot.slane %v359, %v387
    %v389 = vlaneseq
    %v390 = vshrl.u32 %v389, 7
    %v391 = vsub.s32 7, %v390
    %v392 = vrot.slane %v359, %v391
    %v401 = vld [vmem:[%s1] sm:$0xff]
    %v402 = vld [vmem:[%s1 + $0x8] sm:$0xff]
    %v403 = vld [vmem:[%s1 + $0x10] sm:$0xff]
    %v404 = vld [vmem:[%s1 + $0x18] sm:$0xff]
    %v405 = vld [vmem:[%s1 + $0x20] sm:$0xff]
    %v406 = vld [vmem:[%s1 + $0x28] sm:$0xff]
    %v407 = vld [vmem:[%s1 + $0x30] sm:$0xff]
    %v408 = vld [vmem:[%s1 + $0x38] sm:$0xff]
    %v409 = vld [vmem:[%s3] sm:$0xff]
    %v410 = vmax.f32 %v401, 0.0
    %v411 = vmax.f32 %v402, 0.0
    %v412 = vmax.f32 %v403, 0.0
    %v413 = vmax.f32 %v404, 0.0
    %v414 = vmax.f32 %v405, 0.0
    %v415 = vmax.f32 %v406, 0.0
    %v416 = vmax.f32 %v407, 0.0
    %v417 = vmax.f32 %v408, 0.0
    %vm418 = vcmask 64512
    %v420 = vsel %vm418, %v409, 0
    %422 = vmatprep.subr.mxu0 %v411
    %423 = vmatpush1.msra.mxu0 %v410
    %424 = vmatprep.subr.mxu0 0.0
    %425 = vmatpush1.msra.mxu0 0.0
    %426 = vmatprep.subr.mxu0 0.0
    %427 = vmatpush1.msra.mxu0 0.0
    %428 = vmatprep.subr.mxu0 0.0
    %429 = vmatpush1.msra.mxu0 0.0
    %430 = vmatprep.subr.mxu0 0.0
    %431 = vmatpush1.msra.mxu0 0.0
    %432 = vmatprep.subr.mxu0 0.0
    %433 = vmatpush1.msra.mxu0 0.0
    %434 = vmatprep.subr.mxu0 0.0
    %435 = vmatpush1.msra.mxu0 0.0
    %436 = vmatprep.subr.mxu0 0.0
    %437 = vmatpush1.msra.mxu0 0.0
    %438 = vmatprep.subr.mxu0 0.0
    %439 = vmatpush1.msra.mxu0 0.0
    %440 = vmatprep.subr.mxu0 0.0
    %441 = vmatpush1.msra.mxu0 0.0
    %442 = vmatprep.subr.mxu0 0.0
    %443 = vmatpush1.msra.mxu0 0.0
    %444 = vmatprep.subr.mxu0 0.0
    %445 = vmatpush1.msra.mxu0 0.0
    %446 = vmatprep.subr.mxu0 0.0
    %447 = vmatpush1.msra.mxu0 0.0
    %448 = vmatprep.subr.mxu0 0.0
    %449 = vmatpush1.msra.mxu0 0.0
    %450 = vmatprep.subr.mxu0 0.0
    %451 = vmatpush1.msra.mxu0 0.0
    %452 = vmatprep.subr.mxu0 0.0
    %453 = vmatpush1.msra.mxu0 0.0
    %454 = vmatprep.subr.mxu0 0.0
    %455 = vmatpush1.msra.mxu0 0.0
    %456 = vmatprep.subr.mxu0 0.0
    %457 = vmatpush1.msra.mxu0 0.0
    %458 = vmatprep.subr.mxu0 0.0
    %459 = vmatpush1.msra.mxu0 0.0
    %460 = vmatprep.subr.mxu0 0.0
    %461 = vmatpush1.msra.mxu0 0.0
    %462 = vmatprep.subr.mxu0 0.0
    %463 = vmatpush1.msra.mxu0 0.0
    %464 = vmatprep.subr.mxu0 0.0
    %465 = vmatpush1.msra.mxu0 0.0
    %466 = vmatprep.subr.mxu0 0.0
    %467 = vmatpush1.msra.mxu0 0.0
    %468 = vmatprep.subr.mxu0 0.0
    %469 = vmatpush1.msra.mxu0 0.0
    %470 = vmatprep.subr.mxu0 0.0
    %471 = vmatpush1.msra.mxu0 0.0
    %472 = vmatprep.subr.mxu0 0.0
    %473 = vmatpush1.msra.mxu0 0.0
    %474 = vmatprep.subr.mxu0 0.0
    %475 = vmatpush1.msra.mxu0 0.0
    %476 = vmatprep.subr.mxu0 0.0
    %477 = vmatpush1.msra.mxu0 0.0
    %478 = vmatprep.subr.mxu0 0.0
    %479 = vmatpush1.msra.mxu0 0.0
    %480 = vmatprep.subr.mxu0 0.0
    %481 = vmatpush1.msra.mxu0 0.0
    %482 = vmatprep.subr.mxu0 0.0
    %483 = vmatpush1.msra.mxu0 0.0
    %484 = vmatprep.subr.mxu0 0.0
    %485 = vmatpush1.msra.mxu0 0.0
    %486 = vmatprep.mubr.f32.mxu0 0.0
    %487 = vmatmul.mubr.f32.gmra.mrb[0].mxu0 %v420
    %v488 = vpop.f32.mrb[0].mxu0
    %v489 = vadd.f32 0.0, %v488
    %v490 = vpop.f32.mrb[0].mxu0
    %v491 = vadd.f32 0.0, %v490
    %492 = vdwg.mxu0
    %493 = vmatprep.subr.mxu0 %v413
    %494 = vmatpush1.msra.mxu0 %v412
    %495 = vmatprep.subr.mxu0 0.0
    %496 = vmatpush1.msra.mxu0 0.0
    %497 = vmatprep.subr.mxu0 0.0
    %498 = vmatpush1.msra.mxu0 0.0
    %499 = vmatprep.subr.mxu0 0.0
    %500 = vmatpush1.msra.mxu0 0.0
    %501 = vmatprep.subr.mxu0 0.0
    %502 = vmatpush1.msra.mxu0 0.0
    %503 = vmatprep.subr.mxu0 0.0
    %504 = vmatpush1.msra.mxu0 0.0
    %505 = vmatprep.subr.mxu0 0.0
    %506 = vmatpush1.msra.mxu0 0.0
    %507 = vmatprep.subr.mxu0 0.0
    %508 = vmatpush1.msra.mxu0 0.0
    %509 = vmatprep.subr.mxu0 0.0
    %510 = vmatpush1.msra.mxu0 0.0
    %511 = vmatprep.subr.mxu0 0.0
    %512 = vmatpush1.msra.mxu0 0.0
    %513 = vmatprep.subr.mxu0 0.0
    %514 = vmatpush1.msra.mxu0 0.0
    %515 = vmatprep.subr.mxu0 0.0
    %516 = vmatpush1.msra.mxu0 0.0
    %517 = vmatprep.subr.mxu0 0.0
    %518 = vmatpush1.msra.mxu0 0.0
    %519 = vmatprep.subr.mxu0 0.0
    %520 = vmatpush1.msra.mxu0 0.0
    %521 = vmatprep.subr.mxu0 0.0
    %522 = vmatpush1.msra.mxu0 0.0
    %523 = vmatprep.subr.mxu0 0.0
    %524 = vmatpush1.msra.mxu0 0.0
    %525 = vmatprep.subr.mxu0 0.0
    %526 = vmatpush1.msra.mxu0 0.0
    %527 = vmatprep.subr.mxu0 0.0
    %528 = vmatpush1.msra.mxu0 0.0
    %529 = vmatprep.subr.mxu0 0.0
    %530 = vmatpush1.msra.mxu0 0.0
    %531 = vmatprep.subr.mxu0 0.0
    %532 = vmatpush1.msra.mxu0 0.0
    %533 = vmatprep.subr.mxu0 0.0
    %534 = vmatpush1.msra.mxu0 0.0
    %535 = vmatprep.subr.mxu0 0.0
    %536 = vmatpush1.msra.mxu0 0.0
    %537 = vmatprep.subr.mxu0 0.0
    %538 = vmatpush1.msra.mxu0 0.0
    %539 = vmatprep.subr.mxu0 0.0
    %540 = vmatpush1.msra.mxu0 0.0
    %541 = vmatprep.subr.mxu0 0.0
    %542 = vmatpush1.msra.mxu0 0.0
    %543 = vmatprep.subr.mxu0 0.0
    %544 = vmatpush1.msra.mxu0 0.0
    %545 = vmatprep.subr.mxu0 0.0
    %546 = vmatpush1.msra.mxu0 0.0
    %547 = vmatprep.subr.mxu0 0.0
    %548 = vmatpush1.msra.mxu0 0.0
    %549 = vmatprep.subr.mxu0 0.0
    %550 = vmatpush1.msra.mxu0 0.0
    %551 = vmatprep.subr.mxu0 0.0
    %552 = vmatpush1.msra.mxu0 0.0
    %553 = vmatprep.subr.mxu0 0.0
    %554 = vmatpush1.msra.mxu0 0.0
    %555 = vmatprep.subr.mxu0 0.0
    %556 = vmatpush1.msra.mxu0 0.0
    %557 = vmatprep.mubr.f32.mxu0 0.0
    %558 = vmatmul.mubr.f32.gmra.mrb[0].mxu0 %v420
    %v559 = vpop.f32.mrb[0].mxu0
    %v560 = vadd.f32 0.0, %v559
    %v561 = vpop.f32.mrb[0].mxu0
    %v562 = vadd.f32 0.0, %v561
    %563 = vdwg.mxu0
    %564 = vmatprep.subr.mxu0 %v415
    %565 = vmatpush1.msra.mxu0 %v414
    %566 = vmatprep.subr.mxu0 0.0
    %567 = vmatpush1.msra.mxu0 0.0
    %568 = vmatprep.subr.mxu0 0.0
    %569 = vmatpush1.msra.mxu0 0.0
    %570 = vmatprep.subr.mxu0 0.0
    %571 = vmatpush1.msra.mxu0 0.0
    %572 = vmatprep.subr.mxu0 0.0
    %573 = vmatpush1.msra.mxu0 0.0
    %574 = vmatprep.subr.mxu0 0.0
    %575 = vmatpush1.msra.mxu0 0.0
    %576 = vmatprep.subr.mxu0 0.0
    %577 = vmatpush1.msra.mxu0 0.0
    %578 = vmatprep.subr.mxu0 0.0
    %579 = vmatpush1.msra.mxu0 0.0
    %580 = vmatprep.subr.mxu0 0.0
    %581 = vmatpush1.msra.mxu0 0.0
    %582 = vmatprep.subr.mxu0 0.0
    %583 = vmatpush1.msra.mxu0 0.0
    %584 = vmatprep.subr.mxu0 0.0
    %585 = vmatpush1.msra.mxu0 0.0
    %586 = vmatprep.subr.mxu0 0.0
    %587 = vmatpush1.msra.mxu0 0.0
    %588 = vmatprep.subr.mxu0 0.0
    %589 = vmatpush1.msra.mxu0 0.0
    %590 = vmatprep.subr.mxu0 0.0
    %591 = vmatpush1.msra.mxu0 0.0
    %592 = vmatprep.subr.mxu0 0.0
    %593 = vmatpush1.msra.mxu0 0.0
    %594 = vmatprep.subr.mxu0 0.0
    %595 = vmatpush1.msra.mxu0 0.0
    %596 = vmatprep.subr.mxu0 0.0
    %597 = vmatpush1.msra.mxu0 0.0
    %598 = vmatprep.subr.mxu0 0.0
    %599 = vmatpush1.msra.mxu0 0.0
    %600 = vmatprep.subr.mxu0 0.0
    %601 = vmatpush1.msra.mxu0 0.0
    %602 = vmatprep.subr.mxu0 0.0
    %603 = vmatpush1.msra.mxu0 0.0
    %604 = vmatprep.subr.mxu0 0.0
    %605 = vmatpush1.msra.mxu0 0.0
    %606 = vmatprep.subr.mxu0 0.0
    %607 = vmatpush1.msra.mxu0 0.0
    %608 = vmatprep.subr.mxu0 0.0
    %609 = vmatpush1.msra.mxu0 0.0
    %610 = vmatprep.subr.mxu0 0.0
    %611 = vmatpush1.msra.mxu0 0.0
    %612 = vmatprep.subr.mxu0 0.0
    %613 = vmatpush1.msra.mxu0 0.0
    %614 = vmatprep.subr.mxu0 0.0
    %615 = vmatpush1.msra.mxu0 0.0
    %616 = vmatprep.subr.mxu0 0.0
    %617 = vmatpush1.msra.mxu0 0.0
    %618 = vmatprep.subr.mxu0 0.0
    %619 = vmatpush1.msra.mxu0 0.0
    %620 = vmatprep.subr.mxu0 0.0
    %621 = vmatpush1.msra.mxu0 0.0
    %622 = vmatprep.subr.mxu0 0.0
    %623 = vmatpush1.msra.mxu0 0.0
    %624 = vmatprep.subr.mxu0 0.0
    %625 = vmatpush1.msra.mxu0 0.0
    %626 = vmatprep.subr.mxu0 0.0
    %627 = vmatpush1.msra.mxu0 0.0
    %628 = vmatprep.mubr.f32.mxu0 0.0
    %629 = vmatmul.mubr.f32.gmra.mrb[0].mxu0 %v420
    %v630 = vpop.f32.mrb[0].mxu0
    %v631 = vadd.f32 0.0, %v630
    %v632 = vpop.f32.mrb[0].mxu0
    %v633 = vadd.f32 0.0, %v632
    %634 = vdwg.mxu0
    %635 = vmatprep.subr.mxu0 %v417
    %636 = vmatpush1.msra.mxu0 %v416
    %637 = vmatprep.subr.mxu0 0.0
    %638 = vmatpush1.msra.mxu0 0.0
    %639 = vmatprep.subr.mxu0 0.0
    %640 = vmatpush1.msra.mxu0 0.0
    %641 = vmatprep.subr.mxu0 0.0
    %642 = vmatpush1.msra.mxu0 0.0
    %643 = vmatprep.subr.mxu0 0.0
    %644 = vmatpush1.msra.mxu0 0.0
    %645 = vmatprep.subr.mxu0 0.0
    %646 = vmatpush1.msra.mxu0 0.0
    %647 = vmatprep.subr.mxu0 0.0
    %648 = vmatpush1.msra.mxu0 0.0
    %649 = vmatprep.subr.mxu0 0.0
    %650 = vmatpush1.msra.mxu0 0.0
    %651 = vmatprep.subr.mxu0 0.0
    %652 = vmatpush1.msra.mxu0 0.0
    %653 = vmatprep.subr.mxu0 0.0
    %654 = vmatpush1.msra.mxu0 0.0
    %655 = vmatprep.subr.mxu0 0.0
    %656 = vmatpush1.msra.mxu0 0.0
    %657 = vmatprep.subr.mxu0 0.0
    %658 = vmatpush1.msra.mxu0 0.0
    %659 = vmatprep.subr.mxu0 0.0
    %660 = vmatpush1.msra.mxu0 0.0
    %661 = vmatprep.subr.mxu0 0.0
    %662 = vmatpush1.msra.mxu0 0.0
    %663 = vmatprep.subr.mxu0 0.0
    %664 = vmatpush1.msra.mxu0 0.0
    %665 = vmatprep.subr.mxu0 0.0
    %666 = vmatpush1.msra.mxu0 0.0
    %667 = vmatprep.subr.mxu0 0.0
    %668 = vmatpush1.msra.mxu0 0.0
    %669 = vmatprep.subr.mxu0 0.0
    %670 = vmatpush1.msra.mxu0 0.0
    %671 = vmatprep.subr.mxu0 0.0
    %672 = vmatpush1.msra.mxu0 0.0
    %673 = vmatprep.subr.mxu0 0.0
    %674 = vmatpush1.msra.mxu0 0.0
    %675 = vmatprep.subr.mxu0 0.0
    %676 = vmatpush1.msra.mxu0 0.0
    %677 = vmatprep.subr.mxu0 0.0
    %678 = vmatpush1.msra.mxu0 0.0
    %679 = vmatprep.subr.mxu0 0.0
    %680 = vmatpush1.msra.mxu0 0.0
    %681 = vmatprep.subr.mxu0 0.0
    %682 = vmatpush1.msra.mxu0 0.0
    %683 = vmatprep.subr.mxu0 0.0
    %684 = vmatpush1.msra.mxu0 0.0
    %685 = vmatprep.subr.mxu0 0.0
    %686 = vmatpush1.msra.mxu0 0.0
    %687 = vmatprep.subr.mxu0 0.0
    %688 = vmatpush1.msra.mxu0 0.0
    %689 = vmatprep.subr.mxu0 0.0
    %690 = vmatpush1.msra.mxu0 0.0
    %691 = vmatprep.subr.mxu0 0.0
    %692 = vmatpush1.msra.mxu0 0.0
    %693 = vmatprep.subr.mxu0 0.0
    %694 = vmatpush1.msra.mxu0 0.0
    %695 = vmatprep.subr.mxu0 0.0
    %696 = vmatpush1.msra.mxu0 0.0
    %697 = vmatprep.subr.mxu0 0.0
    %698 = vmatpush1.msra.mxu0 0.0
    %699 = vmatprep.mubr.f32.mxu0 0.0
    %700 = vmatmul.mubr.f32.gmra.mrb[0].mxu0 %v420
    %v701 = vpop.f32.mrb[0].mxu0
    %v702 = vadd.f32 0.0, %v701
    %v703 = vpop.f32.mrb[0].mxu0
    %v704 = vadd.f32 0.0, %v703
    %705 = vdwg.mxu0
    %706 = vmatprep.subr.mxu0 0.0
    %707 = vmatpush1.msra.mxu0 1.0
    %708 = vmatprep.subr.mxu0 0.0
    %709 = vmatpush1.msra.mxu0 1.0
    %710 = vmatprep.subr.mxu0 0.0
    %711 = vmatpush1.msra.mxu0 1.0
    %712 = vmatprep.subr.mxu0 0.0
    %713 = vmatpush1.msra.mxu0 1.0
    %714 = vmatprep.subr.mxu0 0.0
    %715 = vmatpush1.msra.mxu0 1.0
    %716 = vmatprep.subr.mxu0 0.0
    %717 = vmatpush1.msra.mxu0 1.0
    %718 = vmatprep.subr.mxu0 0.0
    %719 = vmatpush1.msra.mxu0 1.0
    %720 = vmatprep.subr.mxu0 0.0
    %721 = vmatpush1.msra.mxu0 1.0
    %722 = vmatprep.subr.mxu0 0.0
    %723 = vmatpush1.msra.mxu0 1.0
    %724 = vmatprep.subr.mxu0 0.0
    %725 = vmatpush1.msra.mxu0 1.0
    %726 = vmatprep.subr.mxu0 0.0
    %727 = vmatpush1.msra.mxu0 1.0
    %728 = vmatprep.subr.mxu0 0.0
    %729 = vmatpush1.msra.mxu0 1.0
    %730 = vmatprep.subr.mxu0 0.0
    %731 = vmatpush1.msra.mxu0 1.0
    %732 = vmatprep.subr.mxu0 0.0
    %733 = vmatpush1.msra.mxu0 1.0
    %734 = vmatprep.subr.mxu0 0.0
    %735 = vmatpush1.msra.mxu0 1.0
    %736 = vmatprep.subr.mxu0 0.0
    %737 = vmatpush1.msra.mxu0 1.0
    %738 = vmatprep.subr.mxu0 0.0
    %739 = vmatpush1.msra.mxu0 1.0
    %740 = vmatprep.subr.mxu0 0.0
    %741 = vmatpush1.msra.mxu0 1.0
    %742 = vmatprep.subr.mxu0 0.0
    %743 = vmatpush1.msra.mxu0 1.0
    %744 = vmatprep.subr.mxu0 0.0
    %745 = vmatpush1.msra.mxu0 1.0
    %746 = vmatprep.subr.mxu0 0.0
    %747 = vmatpush1.msra.mxu0 1.0
    %748 = vmatprep.subr.mxu0 0.0
    %749 = vmatpush1.msra.mxu0 1.0
    %750 = vmatprep.subr.mxu0 0.0
    %751 = vmatpush1.msra.mxu0 1.0
    %752 = vmatprep.subr.mxu0 0.0
    %753 = vmatpush1.msra.mxu0 1.0
    %754 = vmatprep.subr.mxu0 0.0
    %755 = vmatpush1.msra.mxu0 1.0
    %756 = vmatprep.subr.mxu0 0.0
    %757 = vmatpush1.msra.mxu0 1.0
    %758 = vmatprep.subr.mxu0 0.0
    %759 = vmatpush1.msra.mxu0 1.0
    %760 = vmatprep.subr.mxu0 0.0
    %761 = vmatpush1.msra.mxu0 1.0
    %762 = vmatprep.subr.mxu0 0.0
    %763 = vmatpush1.msra.mxu0 1.0
    %764 = vmatprep.subr.mxu0 0.0
    %765 = vmatpush1.msra.mxu0 1.0
    %766 = vmatprep.subr.mxu0 0.0
    %767 = vmatpush1.msra.mxu0 1.0
    %768 = vmatprep.subr.mxu0 0.0
    %769 = vmatpush1.msra.mxu0 1.0
    %770 = vmatprep.mubr.f32.mxu0 %v491
    %771 = vmatmul.mubr.f32.gmra.mrb[0].mxu0 %v489
    %v772 = vpop.f32.mrb[0].mxu0
    %v773 = vadd.f32 0.0, %v772
    %v774 = vpop.f32.mrb[0].mxu0
    %775 = vdwg.mxu0
    %776 = vmatprep.subr.mxu0 0.0
    %777 = vmatpush1.msra.mxu0 1.0
    %778 = vmatprep.subr.mxu0 0.0
    %779 = vmatpush1.msra.mxu0 1.0
    %780 = vmatprep.subr.mxu0 0.0
    %781 = vmatpush1.msra.mxu0 1.0
    %782 = vmatprep.subr.mxu0 0.0
    %783 = vmatpush1.msra.mxu0 1.0
    %784 = vmatprep.subr.mxu0 0.0
    %785 = vmatpush1.msra.mxu0 1.0
    %786 = vmatprep.subr.mxu0 0.0
    %787 = vmatpush1.msra.mxu0 1.0
    %788 = vmatprep.subr.mxu0 0.0
    %789 = vmatpush1.msra.mxu0 1.0
    %790 = vmatprep.subr.mxu0 0.0
    %791 = vmatpush1.msra.mxu0 1.0
    %792 = vmatprep.subr.mxu0 0.0
    %793 = vmatpush1.msra.mxu0 1.0
    %794 = vmatprep.subr.mxu0 0.0
    %795 = vmatpush1.msra.mxu0 1.0
    %796 = vmatprep.subr.mxu0 0.0
    %797 = vmatpush1.msra.mxu0 1.0
    %798 = vmatprep.subr.mxu0 0.0
    %799 = vmatpush1.msra.mxu0 1.0
    %800 = vmatprep.subr.mxu0 0.0
    %801 = vmatpush1.msra.mxu0 1.0
    %802 = vmatprep.subr.mxu0 0.0
    %803 = vmatpush1.msra.mxu0 1.0
    %804 = vmatprep.subr.mxu0 0.0
    %805 = vmatpush1.msra.mxu0 1.0
    %806 = vmatprep.subr.mxu0 0.0
    %807 = vmatpush1.msra.mxu0 1.0
    %808 = vmatprep.subr.mxu0 0.0
    %809 = vmatpush1.msra.mxu0 1.0
    %810 = vmatprep.subr.mxu0 0.0
    %811 = vmatpush1.msra.mxu0 1.0
    %812 = vmatprep.subr.mxu0 0.0
    %813 = vmatpush1.msra.mxu0 1.0
    %814 = vmatprep.subr.mxu0 0.0
    %815 = vmatpush1.msra.mxu0 1.0
    %816 = vmatprep.subr.mxu0 0.0
    %817 = vmatpush1.msra.mxu0 1.0
    %818 = vmatprep.subr.mxu0 0.0
    %819 = vmatpush1.msra.mxu0 1.0
    %820 = vmatprep.subr.mxu0 0.0
    %821 = vmatpush1.msra.mxu0 1.0
    %822 = vmatprep.subr.mxu0 0.0
    %823 = vmatpush1.msra.mxu0 1.0
    %824 = vmatprep.subr.mxu0 0.0
    %825 = vmatpush1.msra.mxu0 1.0
    %826 = vmatprep.subr.mxu0 0.0
    %827 = vmatpush1.msra.mxu0 1.0
    %828 = vmatprep.subr.mxu0 0.0
    %829 = vmatpush1.msra.mxu0 1.0
    %830 = vmatprep.subr.mxu0 0.0
    %831 = vmatpush1.msra.mxu0 1.0
    %832 = vmatprep.subr.mxu0 0.0
    %833 = vmatpush1.msra.mxu0 1.0
    %834 = vmatprep.subr.mxu0 0.0
    %835 = vmatpush1.msra.mxu0 1.0
    %836 = vmatprep.subr.mxu0 0.0
    %837 = vmatpush1.msra.mxu0 1.0
    %838 = vmatprep.subr.mxu0 0.0
    %839 = vmatpush1.msra.mxu0 1.0
    %840 = vmatprep.mubr.f32.mxu0 %v562
    %841 = vmatmul.mubr.f32.gmra.mrb[0].mxu0 %v560
    %v842 = vpop.f32.mrb[0].mxu0
    %v843 = vadd.f32 %v773, %v842
    %v844 = vpop.f32.mrb[0].mxu0
    %845 = vdwg.mxu0
    %846 = vmatprep.subr.mxu0 0.0
    %847 = vmatpush1.msra.mxu0 1.0
    %848 = vmatprep.subr.mxu0 0.0
    %849 = vmatpush1.msra.mxu0 1.0
    %850 = vmatprep.subr.mxu0 0.0
    %851 = vmatpush1.msra.mxu0 1.0
    %852 = vmatprep.subr.mxu0 0.0
    %853 = vmatpush1.msra.mxu0 1.0
    %854 = vmatprep.subr.mxu0 0.0
    %855 = vmatpush1.msra.mxu0 1.0
    %856 = vmatprep.subr.mxu0 0.0
    %857 = vmatpush1.msra.mxu0 1.0
    %858 = vmatprep.subr.mxu0 0.0
    %859 = vmatpush1.msra.mxu0 1.0
    %860 = vmatprep.subr.mxu0 0.0
    %861 = vmatpush1.msra.mxu0 1.0
    %862 = vmatprep.subr.mxu0 0.0
    %863 = vmatpush1.msra.mxu0 1.0
    %864 = vmatprep.subr.mxu0 0.0
    %865 = vmatpush1.msra.mxu0 1.0
    %866 = vmatprep.subr.mxu0 0.0
    %867 = vmatpush1.msra.mxu0 1.0
    %868 = vmatprep.subr.mxu0 0.0
    %869 = vmatpush1.msra.mxu0 1.0
    %870 = vmatprep.subr.mxu0 0.0
    %871 = vmatpush1.msra.mxu0 1.0
    %872 = vmatprep.subr.mxu0 0.0
    %873 = vmatpush1.msra.mxu0 1.0
    %874 = vmatprep.subr.mxu0 0.0
    %875 = vmatpush1.msra.mxu0 1.0
    %876 = vmatprep.subr.mxu0 0.0
    %877 = vmatpush1.msra.mxu0 1.0
    %878 = vmatprep.subr.mxu0 0.0
    %879 = vmatpush1.msra.mxu0 1.0
    %880 = vmatprep.subr.mxu0 0.0
    %881 = vmatpush1.msra.mxu0 1.0
    %882 = vmatprep.subr.mxu0 0.0
    %883 = vmatpush1.msra.mxu0 1.0
    %884 = vmatprep.subr.mxu0 0.0
    %885 = vmatpush1.msra.mxu0 1.0
    %886 = vmatprep.subr.mxu0 0.0
    %887 = vmatpush1.msra.mxu0 1.0
    %888 = vmatprep.subr.mxu0 0.0
    %889 = vmatpush1.msra.mxu0 1.0
    %890 = vmatprep.subr.mxu0 0.0
    %891 = vmatpush1.msra.mxu0 1.0
    %892 = vmatprep.subr.mxu0 0.0
    %893 = vmatpush1.msra.mxu0 1.0
    %894 = vmatprep.subr.mxu0 0.0
    %895 = vmatpush1.msra.mxu0 1.0
    %896 = vmatprep.subr.mxu0 0.0
    %897 = vmatpush1.msra.mxu0 1.0
    %898 = vmatprep.subr.mxu0 0.0
    %899 = vmatpush1.msra.mxu0 1.0
    %900 = vmatprep.subr.mxu0 0.0
    %901 = vmatpush1.msra.mxu0 1.0
    %902 = vmatprep.subr.mxu0 0.0
    %903 = vmatpush1.msra.mxu0 1.0
    %904 = vmatprep.subr.mxu0 0.0
    %905 = vmatpush1.msra.mxu0 1.0
    %906 = vmatprep.subr.mxu0 0.0
    %907 = vmatpush1.msra.mxu0 1.0
    %908 = vmatprep.subr.mxu0 0.0
    %909 = vmatpush1.msra.mxu0 1.0
    %910 = vmatprep.mubr.f32.mxu0 %v633
    %911 = vmatmul.mubr.f32.gmra.mrb[0].mxu0 %v631
    %v912 = vpop.f32.mrb[0].mxu0
    %v913 = vadd.f32 %v843, %v912
    %v914 = vpop.f32.mrb[0].mxu0
    %915 = vdwg.mxu0
    %916 = vmatprep.subr.mxu0 0.0
    %917 = vmatpush1.msra.mxu0 1.0
    %918 = vmatprep.subr.mxu0 0.0
    %919 = vmatpush1.msra.mxu0 1.0
    %920 = vmatprep.subr.mxu0 0.0
    %921 = vmatpush1.msra.mxu0 1.0
    %922 = vmatprep.subr.mxu0 0.0
    %923 = vmatpush1.msra.mxu0 1.0
    %924 = vmatprep.subr.mxu0 0.0
    %925 = vmatpush1.msra.mxu0 1.0
    %926 = vmatprep.subr.mxu0 0.0
    %927 = vmatpush1.msra.mxu0 1.0
    %928 = vmatprep.subr.mxu0 0.0
    %929 = vmatpush1.msra.mxu0 1.0
    %930 = vmatprep.subr.mxu0 0.0
    %931 = vmatpush1.msra.mxu0 1.0
    %932 = vmatprep.subr.mxu0 0.0
    %933 = vmatpush1.msra.mxu0 1.0
    %934 = vmatprep.subr.mxu0 0.0
    %935 = vmatpush1.msra.mxu0 1.0
    %936 = vmatprep.subr.mxu0 0.0
    %937 = vmatpush1.msra.mxu0 1.0
    %938 = vmatprep.subr.mxu0 0.0
    %939 = vmatpush1.msra.mxu0 1.0
    %940 = vmatprep.subr.mxu0 0.0
    %941 = vmatpush1.msra.mxu0 1.0
    %942 = vmatprep.subr.mxu0 0.0
    %943 = vmatpush1.msra.mxu0 1.0
    %944 = vmatprep.subr.mxu0 0.0
    %945 = vmatpush1.msra.mxu0 1.0
    %946 = vmatprep.subr.mxu0 0.0
    %947 = vmatpush1.msra.mxu0 1.0
    %948 = vmatprep.subr.mxu0 0.0
    %949 = vmatpush1.msra.mxu0 1.0
    %950 = vmatprep.subr.mxu0 0.0
    %951 = vmatpush1.msra.mxu0 1.0
    %952 = vmatprep.subr.mxu0 0.0
    %953 = vmatpush1.msra.mxu0 1.0
    %954 = vmatprep.subr.mxu0 0.0
    %955 = vmatpush1.msra.mxu0 1.0
    %956 = vmatprep.subr.mxu0 0.0
    %957 = vmatpush1.msra.mxu0 1.0
    %958 = vmatprep.subr.mxu0 0.0
    %959 = vmatpush1.msra.mxu0 1.0
    %960 = vmatprep.subr.mxu0 0.0
    %961 = vmatpush1.msra.mxu0 1.0
    %962 = vmatprep.subr.mxu0 0.0
    %963 = vmatpush1.msra.mxu0 1.0
    %964 = vmatprep.subr.mxu0 0.0
    %965 = vmatpush1.msra.mxu0 1.0
    %966 = vmatprep.subr.mxu0 0.0
    %967 = vmatpush1.msra.mxu0 1.0
    %968 = vmatprep.subr.mxu0 0.0
    %969 = vmatpush1.msra.mxu0 1.0
    %970 = vmatprep.subr.mxu0 0.0
    %971 = vmatpush1.msra.mxu0 1.0
    %972 = vmatprep.subr.mxu0 0.0
    %973 = vmatpush1.msra.mxu0 1.0
    %974 = vmatprep.subr.mxu0 0.0
    %975 = vmatpush1.msra.mxu0 1.0
    %976 = vmatprep.subr.mxu0 0.0
    %977 = vmatpush1.msra.mxu0 1.0
    %978 = vmatprep.subr.mxu0 0.0
    %979 = vmatpush1.msra.mxu0 1.0
    %980 = vmatprep.mubr.f32.mxu0 %v704
    %981 = vmatmul.mubr.f32.gmra.mrb[0].mxu0 %v702
    %v982 = vpop.f32.mrb[0].mxu0
    %v983 = vadd.f32 %v913, %v982
    %v984 = vpop.f32.mrb[0].mxu0
    %985 = vdwg.mxu0
    %986 = vadd.xlane.f32.xlu0 %v983
    %v987 = vpop.xlane.xlu0 %986
    %v988 = vrcp.pop 128.0
    %v989 = vmul.f32 %v987, %v988
    %v990 = vmul.f32 %v989, 0.0009765625
    %v991 = vsub.f32 %v489, %v990
    %v992 = vsub.f32 %v491, %v990
    %v993 = vsub.f32 %v560, %v990
    %v994 = vsub.f32 %v562, %v990
    %v995 = vsub.f32 %v631, %v990
    %v996 = vsub.f32 %v633, %v990
    %v997 = vsub.f32 %v702, %v990
    %v998 = vsub.f32 %v704, %v990
    %v999 = vmul.f32 %v991, %v991
    %v1000 = vmul.f32 %v992, %v992
    %v1001 = vmul.f32 %v993, %v993
    %v1002 = vmul.f32 %v994, %v994
    %v1003 = vmul.f32 %v995, %v995
    %v1004 = vmul.f32 %v996, %v996
    %v1005 = vmul.f32 %v997, %v997
    %v1006 = vmul.f32 %v998, %v998
    %1007 = vmatprep.subr.mxu0 0.0
    %1008 = vmatpush1.msra.mxu0 1.0
    %1009 = vmatprep.subr.mxu0 0.0
    %1010 = vmatpush1.msra.mxu0 1.0
    %1011 = vmatprep.subr.mxu0 0.0
    %1012 = vmatpush1.msra.mxu0 1.0
    %1013 = vmatprep.subr.mxu0 0.0
    %1014 = vmatpush1.msra.mxu0 1.0
    %1015 = vmatprep.subr.mxu0 0.0
    %1016 = vmatpush1.msra.mxu0 1.0
    %1017 = vmatprep.subr.mxu0 0.0
    %1018 = vmatpush1.msra.mxu0 1.0
    %1019 = vmatprep.subr.mxu0 0.0
    %1020 = vmatpush1.msra.mxu0 1.0
    %1021 = vmatprep.subr.mxu0 0.0
    %1022 = vmatpush1.msra.mxu0 1.0
    %1023 = vmatprep.subr.mxu0 0.0
    %1024 = vmatpush1.msra.mxu0 1.0
    %1025 = vmatprep.subr.mxu0 0.0
    %1026 = vmatpush1.msra.mxu0 1.0
    %1027 = vmatprep.subr.mxu0 0.0
    %1028 = vmatpush1.msra.mxu0 1.0
    %1029 = vmatprep.subr.mxu0 0.0
    %1030 = vmatpush1.msra.mxu0 1.0
    %1031 = vmatprep.subr.mxu0 0.0
    %1032 = vmatpush1.msra.mxu0 1.0
    %1033 = vmatprep.subr.mxu0 0.0
    %1034 = vmatpush1.msra.mxu0 1.0
    %1035 = vmatprep.subr.mxu0 0.0
    %1036 = vmatpush1.msra.mxu0 1.0
    %1037 = vmatprep.subr.mxu0 0.0
    %1038 = vmatpush1.msra.mxu0 1.0
    %1039 = vmatprep.subr.mxu0 0.0
    %1040 = vmatpush1.msra.mxu0 1.0
    %1041 = vmatprep.subr.mxu0 0.0
    %1042 = vmatpush1.msra.mxu0 1.0
    %1043 = vmatprep.subr.mxu0 0.0
    %1044 = vmatpush1.msra.mxu0 1.0
    %1045 = vmatprep.subr.mxu0 0.0
    %1046 = vmatpush1.msra.mxu0 1.0
    %1047 = vmatprep.subr.mxu0 0.0
    %1048 = vmatpush1.msra.mxu0 1.0
    %1049 = vmatprep.subr.mxu0 0.0
    %1050 = vmatpush1.msra.mxu0 1.0
    %1051 = vmatprep.subr.mxu0 0.0
    %1052 = vmatpush1.msra.mxu0 1.0
    %1053 = vmatprep.subr.mxu0 0.0
    %1054 = vmatpush1.msra.mxu0 1.0
    %1055 = vmatprep.subr.mxu0 0.0
    %1056 = vmatpush1.msra.mxu0 1.0
    %1057 = vmatprep.subr.mxu0 0.0
    %1058 = vmatpush1.msra.mxu0 1.0
    %1059 = vmatprep.subr.mxu0 0.0
    %1060 = vmatpush1.msra.mxu0 1.0
    %1061 = vmatprep.subr.mxu0 0.0
    %1062 = vmatpush1.msra.mxu0 1.0
    %1063 = vmatprep.subr.mxu0 0.0
    %1064 = vmatpush1.msra.mxu0 1.0
    %1065 = vmatprep.subr.mxu0 0.0
    %1066 = vmatpush1.msra.mxu0 1.0
    %1067 = vmatprep.subr.mxu0 0.0
    %1068 = vmatpush1.msra.mxu0 1.0
    %1069 = vmatprep.subr.mxu0 0.0
    %1070 = vmatpush1.msra.mxu0 1.0
    %1071 = vmatprep.mubr.f32.mxu0 %v1000
    %1072 = vmatmul.mubr.f32.gmra.mrb[0].mxu0 %v999
    %v1073 = vpop.f32.mrb[0].mxu0
    %v1074 = vadd.f32 0.0, %v1073
    %v1075 = vpop.f32.mrb[0].mxu0
    %1076 = vdwg.mxu0
    %1077 = vmatprep.subr.mxu0 0.0
    %1078 = vmatpush1.msra.mxu0 1.0
    %1079 = vmatprep.subr.mxu0 0.0
    %1080 = vmatpush1.msra.mxu0 1.0
    %1081 = vmatprep.subr.mxu0 0.0
    %1082 = vmatpush1.msra.mxu0 1.0
    %1083 = vmatprep.subr.mxu0 0.0
    %1084 = vmatpush1.msra.mxu0 1.0
    %1085 = vmatprep.subr.mxu0 0.0
    %1086 = vmatpush1.msra.mxu0 1.0
    %1087 = vmatprep.subr.mxu0 0.0
    %1088 = vmatpush1.msra.mxu0 1.0
    %1089 = vmatprep.subr.mxu0 0.0
    %1090 = vmatpush1.msra.mxu0 1.0
    %1091 = vmatprep.subr.mxu0 0.0
    %1092 = vmatpush1.msra.mxu0 1.0
    %1093 = vmatprep.subr.mxu0 0.0
    %1094 = vmatpush1.msra.mxu0 1.0
    %1095 = vmatprep.subr.mxu0 0.0
    %1096 = vmatpush1.msra.mxu0 1.0
    %1097 = vmatprep.subr.mxu0 0.0
    %1098 = vmatpush1.msra.mxu0 1.0
    %1099 = vmatprep.subr.mxu0 0.0
    %1100 = vmatpush1.msra.mxu0 1.0
    %1101 = vmatprep.subr.mxu0 0.0
    %1102 = vmatpush1.msra.mxu0 1.0
    %1103 = vmatprep.subr.mxu0 0.0
    %1104 = vmatpush1.msra.mxu0 1.0
    %1105 = vmatprep.subr.mxu0 0.0
    %1106 = vmatpush1.msra.mxu0 1.0
    %1107 = vmatprep.subr.mxu0 0.0
    %1108 = vmatpush1.msra.mxu0 1.0
    %1109 = vmatprep.subr.mxu0 0.0
    %1110 = vmatpush1.msra.mxu0 1.0
    %1111 = vmatprep.subr.mxu0 0.0
    %1112 = vmatpush1.msra.mxu0 1.0
    %1113 = vmatprep.subr.mxu0 0.0
    %1114 = vmatpush1.msra.mxu0 1.0
    %1115 = vmatprep.subr.mxu0 0.0
    %1116 = vmatpush1.msra.mxu0 1.0
    %1117 = vmatprep.subr.mxu0 0.0
    %1118 = vmatpush1.msra.mxu0 1.0
    %1119 = vmatprep.subr.mxu0 0.0
    %1120 = vmatpush1.msra.mxu0 1.0
    %1121 = vmatprep.subr.mxu0 0.0
    %1122 = vmatpush1.msra.mxu0 1.0
    %1123 = vmatprep.subr.mxu0 0.0
    %1124 = vmatpush1.msra.mxu0 1.0
    %1125 = vmatprep.subr.mxu0 0.0
    %1126 = vmatpush1.msra.mxu0 1.0
    %1127 = vmatprep.subr.mxu0 0.0
    %1128 = vmatpush1.msra.mxu0 1.0
    %1129 = vmatprep.subr.mxu0 0.0
    %1130 = vmatpush1.msra.mxu0 1.0
    %1131 = vmatprep.subr.mxu0 0.0
    %1132 = vmatpush1.msra.mxu0 1.0
    %1133 = vmatprep.subr.mxu0 0.0
    %1134 = vmatpush1.msra.mxu0 1.0
    %1135 = vmatprep.subr.mxu0 0.0
    %1136 = vmatpush1.msra.mxu0 1.0
    %1137 = vmatprep.subr.mxu0 0.0
    %1138 = vmatpush1.msra.mxu0 1.0
    %1139 = vmatprep.subr.mxu0 0.0
    %1140 = vmatpush1.msra.mxu0 1.0
    %1141 = vmatprep.mubr.f32.mxu0 %v1002
    %1142 = vmatmul.mubr.f32.gmra.mrb[0].mxu0 %v1001
    %v1143 = vpop.f32.mrb[0].mxu0
    %v1144 = vadd.f32 %v1074, %v1143
    %v1145 = vpop.f32.mrb[0].mxu0
    %1146 = vdwg.mxu0
    %1147 = vmatprep.subr.mxu0 0.0
    %1148 = vmatpush1.msra.mxu0 1.0
    %1149 = vmatprep.subr.mxu0 0.0
    %1150 = vmatpush1.msra.mxu0 1.0
    %1151 = vmatprep.subr.mxu0 0.0
    %1152 = vmatpush1.msra.mxu0 1.0
    %1153 = vmatprep.subr.mxu0 0.0
    %1154 = vmatpush1.msra.mxu0 1.0
    %1155 = vmatprep.subr.mxu0 0.0
    %1156 = vmatpush1.msra.mxu0 1.0
    %1157 = vmatprep.subr.mxu0 0.0
    %1158 = vmatpush1.msra.mxu0 1.0
    %1159 = vmatprep.subr.mxu0 0.0
    %1160 = vmatpush1.msra.mxu0 1.0
    %1161 = vmatprep.subr.mxu0 0.0
    %1162 = vmatpush1.msra.mxu0 1.0
    %1163 = vmatprep.subr.mxu0 0.0
    %1164 = vmatpush1.msra.mxu0 1.0
    %1165 = vmatprep.subr.mxu0 0.0
    %1166 = vmatpush1.msra.mxu0 1.0
    %1167 = vmatprep.subr.mxu0 0.0
    %1168 = vmatpush1.msra.mxu0 1.0
    %1169 = vmatprep.subr.mxu0 0.0
    %1170 = vmatpush1.msra.mxu0 1.0
    %1171 = vmatprep.subr.mxu0 0.0
    %1172 = vmatpush1.msra.mxu0 1.0
    %1173 = vmatprep.subr.mxu0 0.0
    %1174 = vmatpush1.msra.mxu0 1.0
    %1175 = vmatprep.subr.mxu0 0.0
    %1176 = vmatpush1.msra.mxu0 1.0
    %1177 = vmatprep.subr.mxu0 0.0
    %1178 = vmatpush1.msra.mxu0 1.0
    %1179 = vmatprep.subr.mxu0 0.0
    %1180 = vmatpush1.msra.mxu0 1.0
    %1181 = vmatprep.subr.mxu0 0.0
    %1182 = vmatpush1.msra.mxu0 1.0
    %1183 = vmatprep.subr.mxu0 0.0
    %1184 = vmatpush1.msra.mxu0 1.0
    %1185 = vmatprep.subr.mxu0 0.0
    %1186 = vmatpush1.msra.mxu0 1.0
    %1187 = vmatprep.subr.mxu0 0.0
    %1188 = vmatpush1.msra.mxu0 1.0
    %1189 = vmatprep.subr.mxu0 0.0
    %1190 = vmatpush1.msra.mxu0 1.0
    %1191 = vmatprep.subr.mxu0 0.0
    %1192 = vmatpush1.msra.mxu0 1.0
    %1193 = vmatprep.subr.mxu0 0.0
    %1194 = vmatpush1.msra.mxu0 1.0
    %1195 = vmatprep.subr.mxu0 0.0
    %1196 = vmatpush1.msra.mxu0 1.0
    %1197 = vmatprep.subr.mxu0 0.0
    %1198 = vmatpush1.msra.mxu0 1.0
    %1199 = vmatprep.subr.mxu0 0.0
    %1200 = vmatpush1.msra.mxu0 1.0
    %1201 = vmatprep.subr.mxu0 0.0
    %1202 = vmatpush1.msra.mxu0 1.0
    %1203 = vmatprep.subr.mxu0 0.0
    %1204 = vmatpush1.msra.mxu0 1.0
    %1205 = vmatprep.subr.mxu0 0.0
    %1206 = vmatpush1.msra.mxu0 1.0
    %1207 = vmatprep.subr.mxu0 0.0
    %1208 = vmatpush1.msra.mxu0 1.0
    %1209 = vmatprep.subr.mxu0 0.0
    %1210 = vmatpush1.msra.mxu0 1.0
    %1211 = vmatprep.mubr.f32.mxu0 %v1004
    %1212 = vmatmul.mubr.f32.gmra.mrb[0].mxu0 %v1003
    %v1213 = vpop.f32.mrb[0].mxu0
    %v1214 = vadd.f32 %v1144, %v1213
    %v1215 = vpop.f32.mrb[0].mxu0
    %1216 = vdwg.mxu0
    %1217 = vmatprep.subr.mxu0 0.0
    %1218 = vmatpush1.msra.mxu0 1.0
    %1219 = vmatprep.subr.mxu0 0.0
    %1220 = vmatpush1.msra.mxu0 1.0
    %1221 = vmatprep.subr.mxu0 0.0
    %1222 = vmatpush1.msra.mxu0 1.0
    %1223 = vmatprep.subr.mxu0 0.0
    %1224 = vmatpush1.msra.mxu0 1.0
    %1225 = vmatprep.subr.mxu0 0.0
    %1226 = vmatpush1.msra.mxu0 1.0
    %1227 = vmatprep.subr.mxu0 0.0
    %1228 = vmatpush1.msra.mxu0 1.0
    %1229 = vmatprep.subr.mxu0 0.0
    %1230 = vmatpush1.msra.mxu0 1.0
    %1231 = vmatprep.subr.mxu0 0.0
    %1232 = vmatpush1.msra.mxu0 1.0
    %1233 = vmatprep.subr.mxu0 0.0
    %1234 = vmatpush1.msra.mxu0 1.0
    %1235 = vmatprep.subr.mxu0 0.0
    %1236 = vmatpush1.msra.mxu0 1.0
    %1237 = vmatprep.subr.mxu0 0.0
    %1238 = vmatpush1.msra.mxu0 1.0
    %1239 = vmatprep.subr.mxu0 0.0
    %1240 = vmatpush1.msra.mxu0 1.0
    %1241 = vmatprep.subr.mxu0 0.0
    %1242 = vmatpush1.msra.mxu0 1.0
    %1243 = vmatprep.subr.mxu0 0.0
    %1244 = vmatpush1.msra.mxu0 1.0
    %1245 = vmatprep.subr.mxu0 0.0
    %1246 = vmatpush1.msra.mxu0 1.0
    %1247 = vmatprep.subr.mxu0 0.0
    %1248 = vmatpush1.msra.mxu0 1.0
    %1249 = vmatprep.subr.mxu0 0.0
    %1250 = vmatpush1.msra.mxu0 1.0
    %1251 = vmatprep.subr.mxu0 0.0
    %1252 = vmatpush1.msra.mxu0 1.0
    %1253 = vmatprep.subr.mxu0 0.0
    %1254 = vmatpush1.msra.mxu0 1.0
    %1255 = vmatprep.subr.mxu0 0.0
    %1256 = vmatpush1.msra.mxu0 1.0
    %1257 = vmatprep.subr.mxu0 0.0
    %1258 = vmatpush1.msra.mxu0 1.0
    %1259 = vmatprep.subr.mxu0 0.0
    %1260 = vmatpush1.msra.mxu0 1.0
    %1261 = vmatprep.subr.mxu0 0.0
    %1262 = vmatpush1.msra.mxu0 1.0
    %1263 = vmatprep.subr.mxu0 0.0
    %1264 = vmatpush1.msra.mxu0 1.0
    %1265 = vmatprep.subr.mxu0 0.0
    %1266 = vmatpush1.msra.mxu0 1.0
    %1267 = vmatprep.subr.mxu0 0.0
    %1268 = vmatpush1.msra.mxu0 1.0
    %1269 = vmatprep.subr.mxu0 0.0
    %1270 = vmatpush1.msra.mxu0 1.0
    %1271 = vmatprep.subr.mxu0 0.0
    %1272 = vmatpush1.msra.mxu0 1.0
    %1273 = vmatprep.subr.mxu0 0.0
    %1274 = vmatpush1.msra.mxu0 1.0
    %1275 = vmatprep.subr.mxu0 0.0
    %1276 = vmatpush1.msra.mxu0 1.0
    %1277 = vmatprep.subr.mxu0 0.0
    %1278 = vmatpush1.msra.mxu0 1.0
    %1279 = vmatprep.subr.mxu0 0.0
    %1280 = vmatpush1.msra.mxu0 1.0
    %1281 = vmatprep.mubr.f32.mxu0 %v1006
    %1282 = vmatmul.mubr.f32.gmra.mrb[0].mxu0 %v1005
    %v1283 = vpop.f32.mrb[0].mxu0
    %v1284 = vadd.f32 %v1214, %v1283
    %v1285 = vpop.f32.mrb[0].mxu0
    %1286 = vdwg.mxu0
    %1287 = vadd.xlane.f32.xlu0 %v1284
    %v1288 = vpop.xlane.xlu0 %1287
    %v1289 = vmul.f32 %v1288, %v988
    %v1290 = vmul.f32 %v1289, 0.0009765625
    %v1291 = vadd.f32 %v1290, 1e-05
    %v1292 = vrsqrt.pop %v1291
    %v1293 = vmul.f32 %v991, %v1292
    %v1294 = vmul.f32 %v992, %v1292
    %v1295 = vmul.f32 %v993, %v1292
    %v1296 = vmul.f32 %v994, %v1292
    %v1297 = vmul.f32 %v995, %v1292
    %v1298 = vmul.f32 %v996, %v1292
    %v1299 = vmul.f32 %v997, %v1292
    %v1300 = vmul.f32 %v998, %v1292
    %v1301 = vld [vmem:[%s2] sm:$0xff]
    %v1302 = vld [vmem:[%s2 + $0x8] sm:$0xff]
    %v1303 = vld [vmem:[%s2 + $0x10] sm:$0xff]
    %v1304 = vld [vmem:[%s2 + $0x18] sm:$0xff]
    %v1305 = vld [vmem:[%s2 + $0x20] sm:$0xff]
    %v1306 = vld [vmem:[%s2 + $0x28] sm:$0xff]
    %v1307 = vld [vmem:[%s2 + $0x30] sm:$0xff]
    %v1308 = vld [vmem:[%s2 + $0x38] sm:$0xff]
    %v1309 = vld [vmem:[%s4] sm:$0xff]
    %v1310 = vmax.f32 %v1301, 0.0
    %v1311 = vmax.f32 %v1302, 0.0
    %v1312 = vmax.f32 %v1303, 0.0
    %v1313 = vmax.f32 %v1304, 0.0
    %v1314 = vmax.f32 %v1305, 0.0
    %v1315 = vmax.f32 %v1306, 0.0
    %v1316 = vmax.f32 %v1307, 0.0
    %v1317 = vmax.f32 %v1308, 0.0
    %v1319 = vsel %vm418, %v1309, 0
    %1321 = vmatprep.subr.mxu0 %v1311
    %1322 = vmatpush1.msra.mxu0 %v1310
    %1323 = vmatprep.subr.mxu0 0.0
    %1324 = vmatpush1.msra.mxu0 0.0
    %1325 = vmatprep.subr.mxu0 0.0
    %1326 = vmatpush1.msra.mxu0 0.0
    %1327 = vmatprep.subr.mxu0 0.0
    %1328 = vmatpush1.msra.mxu0 0.0
    %1329 = vmatprep.subr.mxu0 0.0
    %1330 = vmatpush1.msra.mxu0 0.0
    %1331 = vmatprep.subr.mxu0 0.0
    %1332 = vmatpush1.msra.mxu0 0.0
    %1333 = vmatprep.subr.mxu0 0.0
    %1334 = vmatpush1.msra.mxu0 0.0
    %1335 = vmatprep.subr.mxu0 0.0
    %1336 = vmatpush1.msra.mxu0 0.0
    %1337 = vmatprep.subr.mxu0 0.0
    %1338 = vmatpush1.msra.mxu0 0.0
    %1339 = vmatprep.subr.mxu0 0.0
    %1340 = vmatpush1.msra.mxu0 0.0
    %1341 = vmatprep.subr.mxu0 0.0
    %1342 = vmatpush1.msra.mxu0 0.0
    %1343 = vmatprep.subr.mxu0 0.0
    %1344 = vmatpush1.msra.mxu0 0.0
    %1345 = vmatprep.subr.mxu0 0.0
    %1346 = vmatpush1.msra.mxu0 0.0
    %1347 = vmatprep.subr.mxu0 0.0
    %1348 = vmatpush1.msra.mxu0 0.0
    %1349 = vmatprep.subr.mxu0 0.0
    %1350 = vmatpush1.msra.mxu0 0.0
    %1351 = vmatprep.subr.mxu0 0.0
    %1352 = vmatpush1.msra.mxu0 0.0
    %1353 = vmatprep.subr.mxu0 0.0
    %1354 = vmatpush1.msra.mxu0 0.0
    %1355 = vmatprep.subr.mxu0 0.0
    %1356 = vmatpush1.msra.mxu0 0.0
    %1357 = vmatprep.subr.mxu0 0.0
    %1358 = vmatpush1.msra.mxu0 0.0
    %1359 = vmatprep.subr.mxu0 0.0
    %1360 = vmatpush1.msra.mxu0 0.0
    %1361 = vmatprep.subr.mxu0 0.0
    %1362 = vmatpush1.msra.mxu0 0.0
    %1363 = vmatprep.subr.mxu0 0.0
    %1364 = vmatpush1.msra.mxu0 0.0
    %1365 = vmatprep.subr.mxu0 0.0
    %1366 = vmatpush1.msra.mxu0 0.0
    %1367 = vmatprep.subr.mxu0 0.0
    %1368 = vmatpush1.msra.mxu0 0.0
    %1369 = vmatprep.subr.mxu0 0.0
    %1370 = vmatpush1.msra.mxu0 0.0
    %1371 = vmatprep.subr.mxu0 0.0
    %1372 = vmatpush1.msra.mxu0 0.0
    %1373 = vmatprep.subr.mxu0 0.0
    %1374 = vmatpush1.msra.mxu0 0.0
    %1375 = vmatprep.subr.mxu0 0.0
    %1376 = vmatpush1.msra.mxu0 0.0
    %1377 = vmatprep.subr.mxu0 0.0
    %1378 = vmatpush1.msra.mxu0 0.0
    %1379 = vmatprep.subr.mxu0 0.0
    %1380 = vmatpush1.msra.mxu0 0.0
    %1381 = vmatprep.subr.mxu0 0.0
    %1382 = vmatpush1.msra.mxu0 0.0
    %1383 = vmatprep.subr.mxu0 0.0
    %1384 = vmatpush1.msra.mxu0 0.0
    %1385 = vmatprep.mubr.f32.mxu0 0.0
    %1386 = vmatmul.mubr.f32.gmra.mrb[0].mxu0 %v1319
    %v1387 = vpop.f32.mrb[0].mxu0
    %v1388 = vadd.f32 0.0, %v1387
    %v1389 = vpop.f32.mrb[0].mxu0
    %v1390 = vadd.f32 0.0, %v1389
    %1391 = vdwg.mxu0
    %1392 = vmatprep.subr.mxu0 %v1313
    %1393 = vmatpush1.msra.mxu0 %v1312
    %1394 = vmatprep.subr.mxu0 0.0
    %1395 = vmatpush1.msra.mxu0 0.0
    %1396 = vmatprep.subr.mxu0 0.0
    %1397 = vmatpush1.msra.mxu0 0.0
    %1398 = vmatprep.subr.mxu0 0.0
    %1399 = vmatpush1.msra.mxu0 0.0
    %1400 = vmatprep.subr.mxu0 0.0
    %1401 = vmatpush1.msra.mxu0 0.0
    %1402 = vmatprep.subr.mxu0 0.0
    %1403 = vmatpush1.msra.mxu0 0.0
    %1404 = vmatprep.subr.mxu0 0.0
    %1405 = vmatpush1.msra.mxu0 0.0
    %1406 = vmatprep.subr.mxu0 0.0
    %1407 = vmatpush1.msra.mxu0 0.0
    %1408 = vmatprep.subr.mxu0 0.0
    %1409 = vmatpush1.msra.mxu0 0.0
    %1410 = vmatprep.subr.mxu0 0.0
    %1411 = vmatpush1.msra.mxu0 0.0
    %1412 = vmatprep.subr.mxu0 0.0
    %1413 = vmatpush1.msra.mxu0 0.0
    %1414 = vmatprep.subr.mxu0 0.0
    %1415 = vmatpush1.msra.mxu0 0.0
    %1416 = vmatprep.subr.mxu0 0.0
    %1417 = vmatpush1.msra.mxu0 0.0
    %1418 = vmatprep.subr.mxu0 0.0
    %1419 = vmatpush1.msra.mxu0 0.0
    %1420 = vmatprep.subr.mxu0 0.0
    %1421 = vmatpush1.msra.mxu0 0.0
    %1422 = vmatprep.subr.mxu0 0.0
    %1423 = vmatpush1.msra.mxu0 0.0
    %1424 = vmatprep.subr.mxu0 0.0
    %1425 = vmatpush1.msra.mxu0 0.0
    %1426 = vmatprep.subr.mxu0 0.0
    %1427 = vmatpush1.msra.mxu0 0.0
    %1428 = vmatprep.subr.mxu0 0.0
    %1429 = vmatpush1.msra.mxu0 0.0
    %1430 = vmatprep.subr.mxu0 0.0
    %1431 = vmatpush1.msra.mxu0 0.0
    %1432 = vmatprep.subr.mxu0 0.0
    %1433 = vmatpush1.msra.mxu0 0.0
    %1434 = vmatprep.subr.mxu0 0.0
    %1435 = vmatpush1.msra.mxu0 0.0
    %1436 = vmatprep.subr.mxu0 0.0
    %1437 = vmatpush1.msra.mxu0 0.0
    %1438 = vmatprep.subr.mxu0 0.0
    %1439 = vmatpush1.msra.mxu0 0.0
    %1440 = vmatprep.subr.mxu0 0.0
    %1441 = vmatpush1.msra.mxu0 0.0
    %1442 = vmatprep.subr.mxu0 0.0
    %1443 = vmatpush1.msra.mxu0 0.0
    %1444 = vmatprep.subr.mxu0 0.0
    %1445 = vmatpush1.msra.mxu0 0.0
    %1446 = vmatprep.subr.mxu0 0.0
    %1447 = vmatpush1.msra.mxu0 0.0
    %1448 = vmatprep.subr.mxu0 0.0
    %1449 = vmatpush1.msra.mxu0 0.0
    %1450 = vmatprep.subr.mxu0 0.0
    %1451 = vmatpush1.msra.mxu0 0.0
    %1452 = vmatprep.subr.mxu0 0.0
    %1453 = vmatpush1.msra.mxu0 0.0
    %1454 = vmatprep.subr.mxu0 0.0
    %1455 = vmatpush1.msra.mxu0 0.0
    %1456 = vmatprep.mubr.f32.mxu0 0.0
    %1457 = vmatmul.mubr.f32.gmra.mrb[0].mxu0 %v1319
    %v1458 = vpop.f32.mrb[0].mxu0
    %v1459 = vadd.f32 0.0, %v1458
    %v1460 = vpop.f32.mrb[0].mxu0
    %v1461 = vadd.f32 0.0, %v1460
    %1462 = vdwg.mxu0
    %1463 = vmatprep.subr.mxu0 %v1315
    %1464 = vmatpush1.msra.mxu0 %v1314
    %1465 = vmatprep.subr.mxu0 0.0
    %1466 = vmatpush1.msra.mxu0 0.0
    %1467 = vmatprep.subr.mxu0 0.0
    %1468 = vmatpush1.msra.mxu0 0.0
    %1469 = vmatprep.subr.mxu0 0.0
    %1470 = vmatpush1.msra.mxu0 0.0
    %1471 = vmatprep.subr.mxu0 0.0
    %1472 = vmatpush1.msra.mxu0 0.0
    %1473 = vmatprep.subr.mxu0 0.0
    %1474 = vmatpush1.msra.mxu0 0.0
    %1475 = vmatprep.subr.mxu0 0.0
    %1476 = vmatpush1.msra.mxu0 0.0
    %1477 = vmatprep.subr.mxu0 0.0
    %1478 = vmatpush1.msra.mxu0 0.0
    %1479 = vmatprep.subr.mxu0 0.0
    %1480 = vmatpush1.msra.mxu0 0.0
    %1481 = vmatprep.subr.mxu0 0.0
    %1482 = vmatpush1.msra.mxu0 0.0
    %1483 = vmatprep.subr.mxu0 0.0
    %1484 = vmatpush1.msra.mxu0 0.0
    %1485 = vmatprep.subr.mxu0 0.0
    %1486 = vmatpush1.msra.mxu0 0.0
    %1487 = vmatprep.subr.mxu0 0.0
    %1488 = vmatpush1.msra.mxu0 0.0
    %1489 = vmatprep.subr.mxu0 0.0
    %1490 = vmatpush1.msra.mxu0 0.0
    %1491 = vmatprep.subr.mxu0 0.0
    %1492 = vmatpush1.msra.mxu0 0.0
    %1493 = vmatprep.subr.mxu0 0.0
    %1494 = vmatpush1.msra.mxu0 0.0
    %1495 = vmatprep.subr.mxu0 0.0
    %1496 = vmatpush1.msra.mxu0 0.0
    %1497 = vmatprep.subr.mxu0 0.0
    %1498 = vmatpush1.msra.mxu0 0.0
    %1499 = vmatprep.subr.mxu0 0.0
    %1500 = vmatpush1.msra.mxu0 0.0
    %1501 = vmatprep.subr.mxu0 0.0
    %1502 = vmatpush1.msra.mxu0 0.0
    %1503 = vmatprep.subr.mxu0 0.0
    %1504 = vmatpush1.msra.mxu0 0.0
    %1505 = vmatprep.subr.mxu0 0.0
    %1506 = vmatpush1.msra.mxu0 0.0
    %1507 = vmatprep.subr.mxu0 0.0
    %1508 = vmatpush1.msra.mxu0 0.0
    %1509 = vmatprep.subr.mxu0 0.0
    %1510 = vmatpush1.msra.mxu0 0.0
    %1511 = vmatprep.subr.mxu0 0.0
    %1512 = vmatpush1.msra.mxu0 0.0
    %1513 = vmatprep.subr.mxu0 0.0
    %1514 = vmatpush1.msra.mxu0 0.0
    %1515 = vmatprep.subr.mxu0 0.0
    %1516 = vmatpush1.msra.mxu0 0.0
    %1517 = vmatprep.subr.mxu0 0.0
    %1518 = vmatpush1.msra.mxu0 0.0
    %1519 = vmatprep.subr.mxu0 0.0
    %1520 = vmatpush1.msra.mxu0 0.0
    %1521 = vmatprep.subr.mxu0 0.0
    %1522 = vmatpush1.msra.mxu0 0.0
    %1523 = vmatprep.subr.mxu0 0.0
    %1524 = vmatpush1.msra.mxu0 0.0
    %1525 = vmatprep.subr.mxu0 0.0
    %1526 = vmatpush1.msra.mxu0 0.0
    %1527 = vmatprep.mubr.f32.mxu0 0.0
    %1528 = vmatmul.mubr.f32.gmra.mrb[0].mxu0 %v1319
    %v1529 = vpop.f32.mrb[0].mxu0
    %v1530 = vadd.f32 0.0, %v1529
    %v1531 = vpop.f32.mrb[0].mxu0
    %v1532 = vadd.f32 0.0, %v1531
    %1533 = vdwg.mxu0
    %1534 = vmatprep.subr.mxu0 %v1317
    %1535 = vmatpush1.msra.mxu0 %v1316
    %1536 = vmatprep.subr.mxu0 0.0
    %1537 = vmatpush1.msra.mxu0 0.0
    %1538 = vmatprep.subr.mxu0 0.0
    %1539 = vmatpush1.msra.mxu0 0.0
    %1540 = vmatprep.subr.mxu0 0.0
    %1541 = vmatpush1.msra.mxu0 0.0
    %1542 = vmatprep.subr.mxu0 0.0
    %1543 = vmatpush1.msra.mxu0 0.0
    %1544 = vmatprep.subr.mxu0 0.0
    %1545 = vmatpush1.msra.mxu0 0.0
    %1546 = vmatprep.subr.mxu0 0.0
    %1547 = vmatpush1.msra.mxu0 0.0
    %1548 = vmatprep.subr.mxu0 0.0
    %1549 = vmatpush1.msra.mxu0 0.0
    %1550 = vmatprep.subr.mxu0 0.0
    %1551 = vmatpush1.msra.mxu0 0.0
    %1552 = vmatprep.subr.mxu0 0.0
    %1553 = vmatpush1.msra.mxu0 0.0
    %1554 = vmatprep.subr.mxu0 0.0
    %1555 = vmatpush1.msra.mxu0 0.0
    %1556 = vmatprep.subr.mxu0 0.0
    %1557 = vmatpush1.msra.mxu0 0.0
    %1558 = vmatprep.subr.mxu0 0.0
    %1559 = vmatpush1.msra.mxu0 0.0
    %1560 = vmatprep.subr.mxu0 0.0
    %1561 = vmatpush1.msra.mxu0 0.0
    %1562 = vmatprep.subr.mxu0 0.0
    %1563 = vmatpush1.msra.mxu0 0.0
    %1564 = vmatprep.subr.mxu0 0.0
    %1565 = vmatpush1.msra.mxu0 0.0
    %1566 = vmatprep.subr.mxu0 0.0
    %1567 = vmatpush1.msra.mxu0 0.0
    %1568 = vmatprep.subr.mxu0 0.0
    %1569 = vmatpush1.msra.mxu0 0.0
    %1570 = vmatprep.subr.mxu0 0.0
    %1571 = vmatpush1.msra.mxu0 0.0
    %1572 = vmatprep.subr.mxu0 0.0
    %1573 = vmatpush1.msra.mxu0 0.0
    %1574 = vmatprep.subr.mxu0 0.0
    %1575 = vmatpush1.msra.mxu0 0.0
    %1576 = vmatprep.subr.mxu0 0.0
    %1577 = vmatpush1.msra.mxu0 0.0
    %1578 = vmatprep.subr.mxu0 0.0
    %1579 = vmatpush1.msra.mxu0 0.0
    %1580 = vmatprep.subr.mxu0 0.0
    %1581 = vmatpush1.msra.mxu0 0.0
    %1582 = vmatprep.subr.mxu0 0.0
    %1583 = vmatpush1.msra.mxu0 0.0
    %1584 = vmatprep.subr.mxu0 0.0
    %1585 = vmatpush1.msra.mxu0 0.0
    %1586 = vmatprep.subr.mxu0 0.0
    %1587 = vmatpush1.msra.mxu0 0.0
    %1588 = vmatprep.subr.mxu0 0.0
    %1589 = vmatpush1.msra.mxu0 0.0
    %1590 = vmatprep.subr.mxu0 0.0
    %1591 = vmatpush1.msra.mxu0 0.0
    %1592 = vmatprep.subr.mxu0 0.0
    %1593 = vmatpush1.msra.mxu0 0.0
    %1594 = vmatprep.subr.mxu0 0.0
    %1595 = vmatpush1.msra.mxu0 0.0
    %1596 = vmatprep.subr.mxu0 0.0
    %1597 = vmatpush1.msra.mxu0 0.0
    %1598 = vmatprep.mubr.f32.mxu0 0.0
    %1599 = vmatmul.mubr.f32.gmra.mrb[0].mxu0 %v1319
    %v1600 = vpop.f32.mrb[0].mxu0
    %v1601 = vadd.f32 0.0, %v1600
    %v1602 = vpop.f32.mrb[0].mxu0
    %v1603 = vadd.f32 0.0, %v1602
    %1604 = vdwg.mxu0
    %1605 = vmatprep.subr.mxu0 0.0
    %1606 = vmatpush1.msra.mxu0 1.0
    %1607 = vmatprep.subr.mxu0 0.0
    %1608 = vmatpush1.msra.mxu0 1.0
    %1609 = vmatprep.subr.mxu0 0.0
    %1610 = vmatpush1.msra.mxu0 1.0
    %1611 = vmatprep.subr.mxu0 0.0
    %1612 = vmatpush1.msra.mxu0 1.0
    %1613 = vmatprep.subr.mxu0 0.0
    %1614 = vmatpush1.msra.mxu0 1.0
    %1615 = vmatprep.subr.mxu0 0.0
    %1616 = vmatpush1.msra.mxu0 1.0
    %1617 = vmatprep.subr.mxu0 0.0
    %1618 = vmatpush1.msra.mxu0 1.0
    %1619 = vmatprep.subr.mxu0 0.0
    %1620 = vmatpush1.msra.mxu0 1.0
    %1621 = vmatprep.subr.mxu0 0.0
    %1622 = vmatpush1.msra.mxu0 1.0
    %1623 = vmatprep.subr.mxu0 0.0
    %1624 = vmatpush1.msra.mxu0 1.0
    %1625 = vmatprep.subr.mxu0 0.0
    %1626 = vmatpush1.msra.mxu0 1.0
    %1627 = vmatprep.subr.mxu0 0.0
    %1628 = vmatpush1.msra.mxu0 1.0
    %1629 = vmatprep.subr.mxu0 0.0
    %1630 = vmatpush1.msra.mxu0 1.0
    %1631 = vmatprep.subr.mxu0 0.0
    %1632 = vmatpush1.msra.mxu0 1.0
    %1633 = vmatprep.subr.mxu0 0.0
    %1634 = vmatpush1.msra.mxu0 1.0
    %1635 = vmatprep.subr.mxu0 0.0
    %1636 = vmatpush1.msra.mxu0 1.0
    %1637 = vmatprep.subr.mxu0 0.0
    %1638 = vmatpush1.msra.mxu0 1.0
    %1639 = vmatprep.subr.mxu0 0.0
    %1640 = vmatpush1.msra.mxu0 1.0
    %1641 = vmatprep.subr.mxu0 0.0
    %1642 = vmatpush1.msra.mxu0 1.0
    %1643 = vmatprep.subr.mxu0 0.0
    %1644 = vmatpush1.msra.mxu0 1.0
    %1645 = vmatprep.subr.mxu0 0.0
    %1646 = vmatpush1.msra.mxu0 1.0
    %1647 = vmatprep.subr.mxu0 0.0
    %1648 = vmatpush1.msra.mxu0 1.0
    %1649 = vmatprep.subr.mxu0 0.0
    %1650 = vmatpush1.msra.mxu0 1.0
    %1651 = vmatprep.subr.mxu0 0.0
    %1652 = vmatpush1.msra.mxu0 1.0
    %1653 = vmatprep.subr.mxu0 0.0
    %1654 = vmatpush1.msra.mxu0 1.0
    %1655 = vmatprep.subr.mxu0 0.0
    %1656 = vmatpush1.msra.mxu0 1.0
    %1657 = vmatprep.subr.mxu0 0.0
    %1658 = vmatpush1.msra.mxu0 1.0
    %1659 = vmatprep.subr.mxu0 0.0
    %1660 = vmatpush1.msra.mxu0 1.0
    %1661 = vmatprep.subr.mxu0 0.0
    %1662 = vmatpush1.msra.mxu0 1.0
    %1663 = vmatprep.subr.mxu0 0.0
    %1664 = vmatpush1.msra.mxu0 1.0
    %1665 = vmatprep.subr.mxu0 0.0
    %1666 = vmatpush1.msra.mxu0 1.0
    %1667 = vmatprep.subr.mxu0 0.0
    %1668 = vmatpush1.msra.mxu0 1.0
    %1669 = vmatprep.mubr.f32.mxu0 %v1390
    %1670 = vmatmul.mubr.f32.gmra.mrb[0].mxu0 %v1388
    %v1671 = vpop.f32.mrb[0].mxu0
    %v1672 = vadd.f32 0.0, %v1671
    %v1673 = vpop.f32.mrb[0].mxu0
    %1674 = vdwg.mxu0
    %1675 = vmatprep.subr.mxu0 0.0
    %1676 = vmatpush1.msra.mxu0 1.0
    %1677 = vmatprep.subr.mxu0 0.0
    %1678 = vmatpush1.msra.mxu0 1.0
    %1679 = vmatprep.subr.mxu0 0.0
    %1680 = vmatpush1.msra.mxu0 1.0
    %1681 = vmatprep.subr.mxu0 0.0
    %1682 = vmatpush1.msra.mxu0 1.0
    %1683 = vmatprep.subr.mxu0 0.0
    %1684 = vmatpush1.msra.mxu0 1.0
    %1685 = vmatprep.subr.mxu0 0.0
    %1686 = vmatpush1.msra.mxu0 1.0
    %1687 = vmatprep.subr.mxu0 0.0
    %1688 = vmatpush1.msra.mxu0 1.0
    %1689 = vmatprep.subr.mxu0 0.0
    %1690 = vmatpush1.msra.mxu0 1.0
    %1691 = vmatprep.subr.mxu0 0.0
    %1692 = vmatpush1.msra.mxu0 1.0
    %1693 = vmatprep.subr.mxu0 0.0
    %1694 = vmatpush1.msra.mxu0 1.0
    %1695 = vmatprep.subr.mxu0 0.0
    %1696 = vmatpush1.msra.mxu0 1.0
    %1697 = vmatprep.subr.mxu0 0.0
    %1698 = vmatpush1.msra.mxu0 1.0
    %1699 = vmatprep.subr.mxu0 0.0
    %1700 = vmatpush1.msra.mxu0 1.0
    %1701 = vmatprep.subr.mxu0 0.0
    %1702 = vmatpush1.msra.mxu0 1.0
    %1703 = vmatprep.subr.mxu0 0.0
    %1704 = vmatpush1.msra.mxu0 1.0
    %1705 = vmatprep.subr.mxu0 0.0
    %1706 = vmatpush1.msra.mxu0 1.0
    %1707 = vmatprep.subr.mxu0 0.0
    %1708 = vmatpush1.msra.mxu0 1.0
    %1709 = vmatprep.subr.mxu0 0.0
    %1710 = vmatpush1.msra.mxu0 1.0
    %1711 = vmatprep.subr.mxu0 0.0
    %1712 = vmatpush1.msra.mxu0 1.0
    %1713 = vmatprep.subr.mxu0 0.0
    %1714 = vmatpush1.msra.mxu0 1.0
    %1715 = vmatprep.subr.mxu0 0.0
    %1716 = vmatpush1.msra.mxu0 1.0
    %1717 = vmatprep.subr.mxu0 0.0
    %1718 = vmatpush1.msra.mxu0 1.0
    %1719 = vmatprep.subr.mxu0 0.0
    %1720 = vmatpush1.msra.mxu0 1.0
    %1721 = vmatprep.subr.mxu0 0.0
    %1722 = vmatpush1.msra.mxu0 1.0
    %1723 = vmatprep.subr.mxu0 0.0
    %1724 = vmatpush1.msra.mxu0 1.0
    %1725 = vmatprep.subr.mxu0 0.0
    %1726 = vmatpush1.msra.mxu0 1.0
    %1727 = vmatprep.subr.mxu0 0.0
    %1728 = vmatpush1.msra.mxu0 1.0
    %1729 = vmatprep.subr.mxu0 0.0
    %1730 = vmatpush1.msra.mxu0 1.0
    %1731 = vmatprep.subr.mxu0 0.0
    %1732 = vmatpush1.msra.mxu0 1.0
    %1733 = vmatprep.subr.mxu0 0.0
    %1734 = vmatpush1.msra.mxu0 1.0
    %1735 = vmatprep.subr.mxu0 0.0
    %1736 = vmatpush1.msra.mxu0 1.0
    %1737 = vmatprep.subr.mxu0 0.0
    %1738 = vmatpush1.msra.mxu0 1.0
    %1739 = vmatprep.mubr.f32.mxu0 %v1461
    %1740 = vmatmul.mubr.f32.gmra.mrb[0].mxu0 %v1459
    %v1741 = vpop.f32.mrb[0].mxu0
    %v1742 = vadd.f32 %v1672, %v1741
    %v1743 = vpop.f32.mrb[0].mxu0
    %1744 = vdwg.mxu0
    %1745 = vmatprep.subr.mxu0 0.0
    %1746 = vmatpush1.msra.mxu0 1.0
    %1747 = vmatprep.subr.mxu0 0.0
    %1748 = vmatpush1.msra.mxu0 1.0
    %1749 = vmatprep.subr.mxu0 0.0
    %1750 = vmatpush1.msra.mxu0 1.0
    %1751 = vmatprep.subr.mxu0 0.0
    %1752 = vmatpush1.msra.mxu0 1.0
    %1753 = vmatprep.subr.mxu0 0.0
    %1754 = vmatpush1.msra.mxu0 1.0
    %1755 = vmatprep.subr.mxu0 0.0
    %1756 = vmatpush1.msra.mxu0 1.0
    %1757 = vmatprep.subr.mxu0 0.0
    %1758 = vmatpush1.msra.mxu0 1.0
    %1759 = vmatprep.subr.mxu0 0.0
    %1760 = vmatpush1.msra.mxu0 1.0
    %1761 = vmatprep.subr.mxu0 0.0
    %1762 = vmatpush1.msra.mxu0 1.0
    %1763 = vmatprep.subr.mxu0 0.0
    %1764 = vmatpush1.msra.mxu0 1.0
    %1765 = vmatprep.subr.mxu0 0.0
    %1766 = vmatpush1.msra.mxu0 1.0
    %1767 = vmatprep.subr.mxu0 0.0
    %1768 = vmatpush1.msra.mxu0 1.0
    %1769 = vmatprep.subr.mxu0 0.0
    %1770 = vmatpush1.msra.mxu0 1.0
    %1771 = vmatprep.subr.mxu0 0.0
    %1772 = vmatpush1.msra.mxu0 1.0
    %1773 = vmatprep.subr.mxu0 0.0
    %1774 = vmatpush1.msra.mxu0 1.0
    %1775 = vmatprep.subr.mxu0 0.0
    %1776 = vmatpush1.msra.mxu0 1.0
    %1777 = vmatprep.subr.mxu0 0.0
    %1778 = vmatpush1.msra.mxu0 1.0
    %1779 = vmatprep.subr.mxu0 0.0
    %1780 = vmatpush1.msra.mxu0 1.0
    %1781 = vmatprep.subr.mxu0 0.0
    %1782 = vmatpush1.msra.mxu0 1.0
    %1783 = vmatprep.subr.mxu0 0.0
    %1784 = vmatpush1.msra.mxu0 1.0
    %1785 = vmatprep.subr.mxu0 0.0
    %1786 = vmatpush1.msra.mxu0 1.0
    %1787 = vmatprep.subr.mxu0 0.0
    %1788 = vmatpush1.msra.mxu0 1.0
    %1789 = vmatprep.subr.mxu0 0.0
    %1790 = vmatpush1.msra.mxu0 1.0
    %1791 = vmatprep.subr.mxu0 0.0
    %1792 = vmatpush1.msra.mxu0 1.0
    %1793 = vmatprep.subr.mxu0 0.0
    %1794 = vmatpush1.msra.mxu0 1.0
    %1795 = vmatprep.subr.mxu0 0.0
    %1796 = vmatpush1.msra.mxu0 1.0
    %1797 = vmatprep.subr.mxu0 0.0
    %1798 = vmatpush1.msra.mxu0 1.0
    %1799 = vmatprep.subr.mxu0 0.0
    %1800 = vmatpush1.msra.mxu0 1.0
    %1801 = vmatprep.subr.mxu0 0.0
    %1802 = vmatpush1.msra.mxu0 1.0
    %1803 = vmatprep.subr.mxu0 0.0
    %1804 = vmatpush1.msra.mxu0 1.0
    %1805 = vmatprep.subr.mxu0 0.0
    %1806 = vmatpush1.msra.mxu0 1.0
    %1807 = vmatprep.subr.mxu0 0.0
    %1808 = vmatpush1.msra.mxu0 1.0
    %1809 = vmatprep.mubr.f32.mxu0 %v1532
    %1810 = vmatmul.mubr.f32.gmra.mrb[0].mxu0 %v1530
    %v1811 = vpop.f32.mrb[0].mxu0
    %v1812 = vadd.f32 %v1742, %v1811
    %v1813 = vpop.f32.mrb[0].mxu0
    %1814 = vdwg.mxu0
    %1815 = vmatprep.subr.mxu0 0.0
    %1816 = vmatpush1.msra.mxu0 1.0
    %1817 = vmatprep.subr.mxu0 0.0
    %1818 = vmatpush1.msra.mxu0 1.0
    %1819 = vmatprep.subr.mxu0 0.0
    %1820 = vmatpush1.msra.mxu0 1.0
    %1821 = vmatprep.subr.mxu0 0.0
    %1822 = vmatpush1.msra.mxu0 1.0
    %1823 = vmatprep.subr.mxu0 0.0
    %1824 = vmatpush1.msra.mxu0 1.0
    %1825 = vmatprep.subr.mxu0 0.0
    %1826 = vmatpush1.msra.mxu0 1.0
    %1827 = vmatprep.subr.mxu0 0.0
    %1828 = vmatpush1.msra.mxu0 1.0
    %1829 = vmatprep.subr.mxu0 0.0
    %1830 = vmatpush1.msra.mxu0 1.0
    %1831 = vmatprep.subr.mxu0 0.0
    %1832 = vmatpush1.msra.mxu0 1.0
    %1833 = vmatprep.subr.mxu0 0.0
    %1834 = vmatpush1.msra.mxu0 1.0
    %1835 = vmatprep.subr.mxu0 0.0
    %1836 = vmatpush1.msra.mxu0 1.0
    %1837 = vmatprep.subr.mxu0 0.0
    %1838 = vmatpush1.msra.mxu0 1.0
    %1839 = vmatprep.subr.mxu0 0.0
    %1840 = vmatpush1.msra.mxu0 1.0
    %1841 = vmatprep.subr.mxu0 0.0
    %1842 = vmatpush1.msra.mxu0 1.0
    %1843 = vmatprep.subr.mxu0 0.0
    %1844 = vmatpush1.msra.mxu0 1.0
    %1845 = vmatprep.subr.mxu0 0.0
    %1846 = vmatpush1.msra.mxu0 1.0
    %1847 = vmatprep.subr.mxu0 0.0
    %1848 = vmatpush1.msra.mxu0 1.0
    %1849 = vmatprep.subr.mxu0 0.0
    %1850 = vmatpush1.msra.mxu0 1.0
    %1851 = vmatprep.subr.mxu0 0.0
    %1852 = vmatpush1.msra.mxu0 1.0
    %1853 = vmatprep.subr.mxu0 0.0
    %1854 = vmatpush1.msra.mxu0 1.0
    %1855 = vmatprep.subr.mxu0 0.0
    %1856 = vmatpush1.msra.mxu0 1.0
    %1857 = vmatprep.subr.mxu0 0.0
    %1858 = vmatpush1.msra.mxu0 1.0
    %1859 = vmatprep.subr.mxu0 0.0
    %1860 = vmatpush1.msra.mxu0 1.0
    %1861 = vmatprep.subr.mxu0 0.0
    %1862 = vmatpush1.msra.mxu0 1.0
    %1863 = vmatprep.subr.mxu0 0.0
    %1864 = vmatpush1.msra.mxu0 1.0
    %1865 = vmatprep.subr.mxu0 0.0
    %1866 = vmatpush1.msra.mxu0 1.0
    %1867 = vmatprep.subr.mxu0 0.0
    %1868 = vmatpush1.msra.mxu0 1.0
    %1869 = vmatprep.subr.mxu0 0.0
    %1870 = vmatpush1.msra.mxu0 1.0
    %1871 = vmatprep.subr.mxu0 0.0
    %1872 = vmatpush1.msra.mxu0 1.0
    %1873 = vmatprep.subr.mxu0 0.0
    %1874 = vmatpush1.msra.mxu0 1.0
    %1875 = vmatprep.subr.mxu0 0.0
    %1876 = vmatpush1.msra.mxu0 1.0
    %1877 = vmatprep.subr.mxu0 0.0
    %1878 = vmatpush1.msra.mxu0 1.0
    %1879 = vmatprep.mubr.f32.mxu0 %v1603
    %1880 = vmatmul.mubr.f32.gmra.mrb[0].mxu0 %v1601
    %v1881 = vpop.f32.mrb[0].mxu0
    %v1882 = vadd.f32 %v1812, %v1881
    %v1883 = vpop.f32.mrb[0].mxu0
    %1884 = vdwg.mxu0
    %1885 = vadd.xlane.f32.xlu0 %v1882
    %v1886 = vpop.xlane.xlu0 %1885
    %v1887 = vmul.f32 %v1886, %v988
    %v1888 = vmul.f32 %v1887, 0.0009765625
    %v1889 = vsub.f32 %v1388, %v1888
    %v1890 = vsub.f32 %v1390, %v1888
    %v1891 = vsub.f32 %v1459, %v1888
    %v1892 = vsub.f32 %v1461, %v1888
    %v1893 = vsub.f32 %v1530, %v1888
    %v1894 = vsub.f32 %v1532, %v1888
    %v1895 = vsub.f32 %v1601, %v1888
    %v1896 = vsub.f32 %v1603, %v1888
    %v1897 = vmul.f32 %v1889, %v1889
    %v1898 = vmul.f32 %v1890, %v1890
    %v1899 = vmul.f32 %v1891, %v1891
    %v1900 = vmul.f32 %v1892, %v1892
    %v1901 = vmul.f32 %v1893, %v1893
    %v1902 = vmul.f32 %v1894, %v1894
    %v1903 = vmul.f32 %v1895, %v1895
    %v1904 = vmul.f32 %v1896, %v1896
    %1905 = vmatprep.subr.mxu0 0.0
    %1906 = vmatpush1.msra.mxu0 1.0
    %1907 = vmatprep.subr.mxu0 0.0
    %1908 = vmatpush1.msra.mxu0 1.0
    %1909 = vmatprep.subr.mxu0 0.0
    %1910 = vmatpush1.msra.mxu0 1.0
    %1911 = vmatprep.subr.mxu0 0.0
    %1912 = vmatpush1.msra.mxu0 1.0
    %1913 = vmatprep.subr.mxu0 0.0
    %1914 = vmatpush1.msra.mxu0 1.0
    %1915 = vmatprep.subr.mxu0 0.0
    %1916 = vmatpush1.msra.mxu0 1.0
    %1917 = vmatprep.subr.mxu0 0.0
    %1918 = vmatpush1.msra.mxu0 1.0
    %1919 = vmatprep.subr.mxu0 0.0
    %1920 = vmatpush1.msra.mxu0 1.0
    %1921 = vmatprep.subr.mxu0 0.0
    %1922 = vmatpush1.msra.mxu0 1.0
    %1923 = vmatprep.subr.mxu0 0.0
    %1924 = vmatpush1.msra.mxu0 1.0
    %1925 = vmatprep.subr.mxu0 0.0
    %1926 = vmatpush1.msra.mxu0 1.0
    %1927 = vmatprep.subr.mxu0 0.0
    %1928 = vmatpush1.msra.mxu0 1.0
    %1929 = vmatprep.subr.mxu0 0.0
    %1930 = vmatpush1.msra.mxu0 1.0
    %1931 = vmatprep.subr.mxu0 0.0
    %1932 = vmatpush1.msra.mxu0 1.0
    %1933 = vmatprep.subr.mxu0 0.0
    %1934 = vmatpush1.msra.mxu0 1.0
    %1935 = vmatprep.subr.mxu0 0.0
    %1936 = vmatpush1.msra.mxu0 1.0
    %1937 = vmatprep.subr.mxu0 0.0
    %1938 = vmatpush1.msra.mxu0 1.0
    %1939 = vmatprep.subr.mxu0 0.0
    %1940 = vmatpush1.msra.mxu0 1.0
    %1941 = vmatprep.subr.mxu0 0.0
    %1942 = vmatpush1.msra.mxu0 1.0
    %1943 = vmatprep.subr.mxu0 0.0
    %1944 = vmatpush1.msra.mxu0 1.0
    %1945 = vmatprep.subr.mxu0 0.0
    %1946 = vmatpush1.msra.mxu0 1.0
    %1947 = vmatprep.subr.mxu0 0.0
    %1948 = vmatpush1.msra.mxu0 1.0
    %1949 = vmatprep.subr.mxu0 0.0
    %1950 = vmatpush1.msra.mxu0 1.0
    %1951 = vmatprep.subr.mxu0 0.0
    %1952 = vmatpush1.msra.mxu0 1.0
    %1953 = vmatprep.subr.mxu0 0.0
    %1954 = vmatpush1.msra.mxu0 1.0
    %1955 = vmatprep.subr.mxu0 0.0
    %1956 = vmatpush1.msra.mxu0 1.0
    %1957 = vmatprep.subr.mxu0 0.0
    %1958 = vmatpush1.msra.mxu0 1.0
    %1959 = vmatprep.subr.mxu0 0.0
    %1960 = vmatpush1.msra.mxu0 1.0
    %1961 = vmatprep.subr.mxu0 0.0
    %1962 = vmatpush1.msra.mxu0 1.0
    %1963 = vmatprep.subr.mxu0 0.0
    %1964 = vmatpush1.msra.mxu0 1.0
    %1965 = vmatprep.subr.mxu0 0.0
    %1966 = vmatpush1.msra.mxu0 1.0
    %1967 = vmatprep.subr.mxu0 0.0
    %1968 = vmatpush1.msra.mxu0 1.0
    %1969 = vmatprep.mubr.f32.mxu0 %v1898
    %1970 = vmatmul.mubr.f32.gmra.mrb[0].mxu0 %v1897
    %v1971 = vpop.f32.mrb[0].mxu0
    %v1972 = vadd.f32 0.0, %v1971
    %v1973 = vpop.f32.mrb[0].mxu0
    %1974 = vdwg.mxu0
    %1975 = vmatprep.subr.mxu0 0.0
    %1976 = vmatpush1.msra.mxu0 1.0
    %1977 = vmatprep.subr.mxu0 0.0
    %1978 = vmatpush1.msra.mxu0 1.0
    %1979 = vmatprep.subr.mxu0 0.0
    %1980 = vmatpush1.msra.mxu0 1.0
    %1981 = vmatprep.subr.mxu0 0.0
    %1982 = vmatpush1.msra.mxu0 1.0
    %1983 = vmatprep.subr.mxu0 0.0
    %1984 = vmatpush1.msra.mxu0 1.0
    %1985 = vmatprep.subr.mxu0 0.0
    %1986 = vmatpush1.msra.mxu0 1.0
    %1987 = vmatprep.subr.mxu0 0.0
    %1988 = vmatpush1.msra.mxu0 1.0
    %1989 = vmatprep.subr.mxu0 0.0
    %1990 = vmatpush1.msra.mxu0 1.0
    %1991 = vmatprep.subr.mxu0 0.0
    %1992 = vmatpush1.msra.mxu0 1.0
    %1993 = vmatprep.subr.mxu0 0.0
    %1994 = vmatpush1.msra.mxu0 1.0
    %1995 = vmatprep.subr.mxu0 0.0
    %1996 = vmatpush1.msra.mxu0 1.0
    %1997 = vmatprep.subr.mxu0 0.0
    %1998 = vmatpush1.msra.mxu0 1.0
    %1999 = vmatprep.subr.mxu0 0.0
    %2000 = vmatpush1.msra.mxu0 1.0
    %2001 = vmatprep.subr.mxu0 0.0
    %2002 = vmatpush1.msra.mxu0 1.0
    %2003 = vmatprep.subr.mxu0 0.0
    %2004 = vmatpush1.msra.mxu0 1.0
    %2005 = vmatprep.subr.mxu0 0.0
    %2006 = vmatpush1.msra.mxu0 1.0
    %2007 = vmatprep.subr.mxu0 0.0
    %2008 = vmatpush1.msra.mxu0 1.0
    %2009 = vmatprep.subr.mxu0 0.0
    %2010 = vmatpush1.msra.mxu0 1.0
    %2011 = vmatprep.subr.mxu0 0.0
    %2012 = vmatpush1.msra.mxu0 1.0
    %2013 = vmatprep.subr.mxu0 0.0
    %2014 = vmatpush1.msra.mxu0 1.0
    %2015 = vmatprep.subr.mxu0 0.0
    %2016 = vmatpush1.msra.mxu0 1.0
    %2017 = vmatprep.subr.mxu0 0.0
    %2018 = vmatpush1.msra.mxu0 1.0
    %2019 = vmatprep.subr.mxu0 0.0
    %2020 = vmatpush1.msra.mxu0 1.0
    %2021 = vmatprep.subr.mxu0 0.0
    %2022 = vmatpush1.msra.mxu0 1.0
    %2023 = vmatprep.subr.mxu0 0.0
    %2024 = vmatpush1.msra.mxu0 1.0
    %2025 = vmatprep.subr.mxu0 0.0
    %2026 = vmatpush1.msra.mxu0 1.0
    %2027 = vmatprep.subr.mxu0 0.0
    %2028 = vmatpush1.msra.mxu0 1.0
    %2029 = vmatprep.subr.mxu0 0.0
    %2030 = vmatpush1.msra.mxu0 1.0
    %2031 = vmatprep.subr.mxu0 0.0
    %2032 = vmatpush1.msra.mxu0 1.0
    %2033 = vmatprep.subr.mxu0 0.0
    %2034 = vmatpush1.msra.mxu0 1.0
    %2035 = vmatprep.subr.mxu0 0.0
    %2036 = vmatpush1.msra.mxu0 1.0
    %2037 = vmatprep.subr.mxu0 0.0
    %2038 = vmatpush1.msra.mxu0 1.0
    %2039 = vmatprep.mubr.f32.mxu0 %v1900
    %2040 = vmatmul.mubr.f32.gmra.mrb[0].mxu0 %v1899
    %v2041 = vpop.f32.mrb[0].mxu0
    %v2042 = vadd.f32 %v1972, %v2041
    %v2043 = vpop.f32.mrb[0].mxu0
    %2044 = vdwg.mxu0
    %2045 = vmatprep.subr.mxu0 0.0
    %2046 = vmatpush1.msra.mxu0 1.0
    %2047 = vmatprep.subr.mxu0 0.0
    %2048 = vmatpush1.msra.mxu0 1.0
    %2049 = vmatprep.subr.mxu0 0.0
    %2050 = vmatpush1.msra.mxu0 1.0
    %2051 = vmatprep.subr.mxu0 0.0
    %2052 = vmatpush1.msra.mxu0 1.0
    %2053 = vmatprep.subr.mxu0 0.0
    %2054 = vmatpush1.msra.mxu0 1.0
    %2055 = vmatprep.subr.mxu0 0.0
    %2056 = vmatpush1.msra.mxu0 1.0
    %2057 = vmatprep.subr.mxu0 0.0
    %2058 = vmatpush1.msra.mxu0 1.0
    %2059 = vmatprep.subr.mxu0 0.0
    %2060 = vmatpush1.msra.mxu0 1.0
    %2061 = vmatprep.subr.mxu0 0.0
    %2062 = vmatpush1.msra.mxu0 1.0
    %2063 = vmatprep.subr.mxu0 0.0
    %2064 = vmatpush1.msra.mxu0 1.0
    %2065 = vmatprep.subr.mxu0 0.0
    %2066 = vmatpush1.msra.mxu0 1.0
    %2067 = vmatprep.subr.mxu0 0.0
    %2068 = vmatpush1.msra.mxu0 1.0
    %2069 = vmatprep.subr.mxu0 0.0
    %2070 = vmatpush1.msra.mxu0 1.0
    %2071 = vmatprep.subr.mxu0 0.0
    %2072 = vmatpush1.msra.mxu0 1.0
    %2073 = vmatprep.subr.mxu0 0.0
    %2074 = vmatpush1.msra.mxu0 1.0
    %2075 = vmatprep.subr.mxu0 0.0
    %2076 = vmatpush1.msra.mxu0 1.0
    %2077 = vmatprep.subr.mxu0 0.0
    %2078 = vmatpush1.msra.mxu0 1.0
    %2079 = vmatprep.subr.mxu0 0.0
    %2080 = vmatpush1.msra.mxu0 1.0
    %2081 = vmatprep.subr.mxu0 0.0
    %2082 = vmatpush1.msra.mxu0 1.0
    %2083 = vmatprep.subr.mxu0 0.0
    %2084 = vmatpush1.msra.mxu0 1.0
    %2085 = vmatprep.subr.mxu0 0.0
    %2086 = vmatpush1.msra.mxu0 1.0
    %2087 = vmatprep.subr.mxu0 0.0
    %2088 = vmatpush1.msra.mxu0 1.0
    %2089 = vmatprep.subr.mxu0 0.0
    %2090 = vmatpush1.msra.mxu0 1.0
    %2091 = vmatprep.subr.mxu0 0.0
    %2092 = vmatpush1.msra.mxu0 1.0
    %2093 = vmatprep.subr.mxu0 0.0
    %2094 = vmatpush1.msra.mxu0 1.0
    %2095 = vmatprep.subr.mxu0 0.0
    %2096 = vmatpush1.msra.mxu0 1.0
    %2097 = vmatprep.subr.mxu0 0.0
    %2098 = vmatpush1.msra.mxu0 1.0
    %2099 = vmatprep.subr.mxu0 0.0
    %2100 = vmatpush1.msra.mxu0 1.0
    %2101 = vmatprep.subr.mxu0 0.0
    %2102 = vmatpush1.msra.mxu0 1.0
    %2103 = vmatprep.subr.mxu0 0.0
    %2104 = vmatpush1.msra.mxu0 1.0
    %2105 = vmatprep.subr.mxu0 0.0
    %2106 = vmatpush1.msra.mxu0 1.0
    %2107 = vmatprep.subr.mxu0 0.0
    %2108 = vmatpush1.msra.mxu0 1.0
    %2109 = vmatprep.mubr.f32.mxu0 %v1902
    %2110 = vmatmul.mubr.f32.gmra.mrb[0].mxu0 %v1901
    %v2111 = vpop.f32.mrb[0].mxu0
    %v2112 = vadd.f32 %v2042, %v2111
    %v2113 = vpop.f32.mrb[0].mxu0
    %2114 = vdwg.mxu0
    %2115 = vmatprep.subr.mxu0 0.0
    %2116 = vmatpush1.msra.mxu0 1.0
    %2117 = vmatprep.subr.mxu0 0.0
    %2118 = vmatpush1.msra.mxu0 1.0
    %2119 = vmatprep.subr.mxu0 0.0
    %2120 = vmatpush1.msra.mxu0 1.0
    %2121 = vmatprep.subr.mxu0 0.0
    %2122 = vmatpush1.msra.mxu0 1.0
    %2123 = vmatprep.subr.mxu0 0.0
    %2124 = vmatpush1.msra.mxu0 1.0
    %2125 = vmatprep.subr.mxu0 0.0
    %2126 = vmatpush1.msra.mxu0 1.0
    %2127 = vmatprep.subr.mxu0 0.0
    %2128 = vmatpush1.msra.mxu0 1.0
    %2129 = vmatprep.subr.mxu0 0.0
    %2130 = vmatpush1.msra.mxu0 1.0
    %2131 = vmatprep.subr.mxu0 0.0
    %2132 = vmatpush1.msra.mxu0 1.0
    %2133 = vmatprep.subr.mxu0 0.0
    %2134 = vmatpush1.msra.mxu0 1.0
    %2135 = vmatprep.subr.mxu0 0.0
    %2136 = vmatpush1.msra.mxu0 1.0
    %2137 = vmatprep.subr.mxu0 0.0
    %2138 = vmatpush1.msra.mxu0 1.0
    %2139 = vmatprep.subr.mxu0 0.0
    %2140 = vmatpush1.msra.mxu0 1.0
    %2141 = vmatprep.subr.mxu0 0.0
    %2142 = vmatpush1.msra.mxu0 1.0
    %2143 = vmatprep.subr.mxu0 0.0
    %2144 = vmatpush1.msra.mxu0 1.0
    %2145 = vmatprep.subr.mxu0 0.0
    %2146 = vmatpush1.msra.mxu0 1.0
    %2147 = vmatprep.subr.mxu0 0.0
    %2148 = vmatpush1.msra.mxu0 1.0
    %2149 = vmatprep.subr.mxu0 0.0
    %2150 = vmatpush1.msra.mxu0 1.0
    %2151 = vmatprep.subr.mxu0 0.0
    %2152 = vmatpush1.msra.mxu0 1.0
    %2153 = vmatprep.subr.mxu0 0.0
    %2154 = vmatpush1.msra.mxu0 1.0
    %2155 = vmatprep.subr.mxu0 0.0
    %2156 = vmatpush1.msra.mxu0 1.0
    %2157 = vmatprep.subr.mxu0 0.0
    %2158 = vmatpush1.msra.mxu0 1.0
    %2159 = vmatprep.subr.mxu0 0.0
    %2160 = vmatpush1.msra.mxu0 1.0
    %2161 = vmatprep.subr.mxu0 0.0
    %2162 = vmatpush1.msra.mxu0 1.0
    %2163 = vmatprep.subr.mxu0 0.0
    %2164 = vmatpush1.msra.mxu0 1.0
    %2165 = vmatprep.subr.mxu0 0.0
    %2166 = vmatpush1.msra.mxu0 1.0
    %2167 = vmatprep.subr.mxu0 0.0
    %2168 = vmatpush1.msra.mxu0 1.0
    %2169 = vmatprep.subr.mxu0 0.0
    %2170 = vmatpush1.msra.mxu0 1.0
    %2171 = vmatprep.subr.mxu0 0.0
    %2172 = vmatpush1.msra.mxu0 1.0
    %2173 = vmatprep.subr.mxu0 0.0
    %2174 = vmatpush1.msra.mxu0 1.0
    %2175 = vmatprep.subr.mxu0 0.0
    %2176 = vmatpush1.msra.mxu0 1.0
    %2177 = vmatprep.subr.mxu0 0.0
    %2178 = vmatpush1.msra.mxu0 1.0
    %2179 = vmatprep.mubr.f32.mxu0 %v1904
    %2180 = vmatmul.mubr.f32.gmra.mrb[0].mxu0 %v1903
    %v2181 = vpop.f32.mrb[0].mxu0
    %v2182 = vadd.f32 %v2112, %v2181
    %v2183 = vpop.f32.mrb[0].mxu0
    %2184 = vdwg.mxu0
    %2185 = vadd.xlane.f32.xlu0 %v2182
    %v2186 = vpop.xlane.xlu0 %2185
    %v2187 = vmul.f32 %v2186, %v988
    %v2188 = vmul.f32 %v2187, 0.0009765625
    %v2189 = vadd.f32 %v2188, 1e-05
    %v2190 = vrsqrt.pop %v2189
    %v2191 = vmul.f32 %v1889, %v2190
    %v2192 = vmul.f32 %v1890, %v2190
    %v2193 = vmul.f32 %v1891, %v2190
    %v2194 = vmul.f32 %v1892, %v2190
    %v2195 = vmul.f32 %v1893, %v2190
    %v2196 = vmul.f32 %v1894, %v2190
    %v2197 = vmul.f32 %v1895, %v2190
    %v2198 = vmul.f32 %v1896, %v2190
    %s2199 = sld [smem:[#allocation2 + $0x1]]
    %v2200 = vstv %s2199
    %v2201 = vmul.f32 %v2200, %v1293
    %v2202 = vmul.f32 %v2200, %v1294
    %v2203 = vmul.f32 %v2200, %v1295
    %v2204 = vmul.f32 %v2200, %v1296
    %v2205 = vmul.f32 %v2200, %v1297
    %v2206 = vmul.f32 %v2200, %v1298
    %v2207 = vmul.f32 %v2200, %v1299
    %v2208 = vmul.f32 %v2200, %v1300
    %2209 = vrot.lane.b32.xlu0 %v1293, 1
    %v2210 = vpop.permute.xlu0 %2209
    %2211 = vrot.lane.b32.xlu0 %v1294, 1
    %v2212 = vpop.permute.xlu0 %2211
    %2213 = vrot.lane.b32.xlu0 %v1295, 1
    %v2214 = vpop.permute.xlu0 %2213
    %2215 = vrot.lane.b32.xlu0 %v1296, 1
    %v2216 = vpop.permute.xlu0 %2215
    %2217 = vrot.lane.b32.xlu0 %v1297, 1
    %v2218 = vpop.permute.xlu0 %2217
    %2219 = vrot.lane.b32.xlu0 %v1298, 1
    %v2220 = vpop.permute.xlu0 %2219
    %2221 = vrot.lane.b32.xlu0 %v1299, 1
    %v2222 = vpop.permute.xlu0 %2221
    %2223 = vrot.lane.b32.xlu0 %v1300, 1
    %v2224 = vpop.permute.xlu0 %2223
    %v2225 = vlaneseq
    %v2226 = vand.u32 %v2225, 127
    %vm2227 = vcmp.lt.s32.totalorder %v2226, 1
    %v2228 = vsel %vm2227, %v2222, %v2224
    %v2229 = vsel %vm2227, %v2220, %v2222
    %v2230 = vsel %vm2227, %v2218, %v2220
    %v2231 = vsel %vm2227, %v2216, %v2218
    %v2232 = vsel %vm2227, %v2214, %v2216
    %v2233 = vsel %vm2227, %v2212, %v2214
    %v2234 = vsel %vm2227, %v2210, %v2212
    %v2235 = vsel %vm2227, %v2224, %v2210
    %2236 = vrot.lane.b32.xlu0 %v1293, 127
    %v2237 = vpop.permute.xlu0 %2236
    %2238 = vrot.lane.b32.xlu0 %v1294, 127
    %v2239 = vpop.permute.xlu0 %2238
    %2240 = vrot.lane.b32.xlu0 %v1295, 127
    %v2241 = vpop.permute.xlu0 %2240
    %2242 = vrot.lane.b32.xlu0 %v1296, 127
    %v2243 = vpop.permute.xlu0 %2242
    %2244 = vrot.lane.b32.xlu0 %v1297, 127
    %v2245 = vpop.permute.xlu0 %2244
    %2246 = vrot.lane.b32.xlu0 %v1298, 127
    %v2247 = vpop.permute.xlu0 %2246
    %2248 = vrot.lane.b32.xlu0 %v1299, 127
    %v2249 = vpop.permute.xlu0 %2248
    %2250 = vrot.lane.b32.xlu0 %v1300, 127
    %v2251 = vpop.permute.xlu0 %2250
    %vm2252 = vcmp.lt.s32.totalorder %v2226, 127
    %v2253 = vsel %vm2252, %v2249, %v2251
    %v2254 = vsel %vm2252, %v2247, %v2249
    %v2255 = vsel %vm2252, %v2245, %v2247
    %v2256 = vsel %vm2252, %v2243, %v2245
    %v2257 = vsel %vm2252, %v2241, %v2243
    %v2258 = vsel %vm2252, %v2239, %v2241
    %v2259 = vsel %vm2252, %v2237, %v2239
    %v2260 = vsel %vm2252, %v2251, %v2237
    %v2261 = vsel %vm83, %v2235, -3e+38
    %v2262 = vsel %vm84, %v2234, -3e+38
    %v2263 = vsel %vm85, %v2233, -3e+38
    %v2264 = vsel %vm86, %v2232, -3e+38
    %v2265 = vsel %vm87, %v2231, -3e+38
    %v2266 = vsel %vm88, %v2230, -3e+38
    %v2267 = vsel %vm89, %v2229, -3e+38
    %v2268 = vsel %vm90, %v2228, -3e+38
    %v2269 = vsel %vm136, %v2259, -3e+38
    %v2270 = vsel %vm137, %v2258, -3e+38
    %v2271 = vsel %vm138, %v2257, -3e+38
    %v2272 = vsel %vm139, %v2256, -3e+38
    %v2273 = vsel %vm140, %v2255, -3e+38
    %v2274 = vsel %vm141, %v2254, -3e+38
    %v2275 = vsel %vm142, %v2253, -3e+38
    %v2276 = vsel %vm143, %v2260, -3e+38
    %v2277 = vmax.f32 %v2261, %v2269
    %v2278 = vmax.f32 %v2262, %v2270
    %v2279 = vmax.f32 %v2263, %v2271
    %v2280 = vmax.f32 %v2264, %v2272
    %v2281 = vmax.f32 %v2265, %v2273
    %v2282 = vmax.f32 %v2266, %v2274
    %v2283 = vmax.f32 %v2267, %v2275
    %v2284 = vmax.f32 %v2268, %v2276
    %v2285 = vmax.f32 %v1293, %v2277
    %v2286 = vmax.f32 %v1294, %v2278
    %v2287 = vmax.f32 %v1295, %v2279
    %v2288 = vmax.f32 %v1296, %v2280
    %v2289 = vmax.f32 %v1297, %v2281
    %v2290 = vmax.f32 %v1298, %v2282
    %v2291 = vmax.f32 %v1299, %v2283
    %v2292 = vmax.f32 %v1300, %v2284
    %v2293 = vsel %vm83, %v2235, 0.0
    %v2294 = vsel %vm84, %v2234, 0.0
    %v2295 = vsel %vm85, %v2233, 0.0
    %v2296 = vsel %vm86, %v2232, 0.0
    %v2297 = vsel %vm87, %v2231, 0.0
    %v2298 = vsel %vm88, %v2230, 0.0
    %v2299 = vsel %vm89, %v2229, 0.0
    %v2300 = vsel %vm90, %v2228, 0.0
    %v2301 = vadd.f32 %v1293, %v2293
    %v2302 = vadd.f32 %v1294, %v2294
    %v2303 = vadd.f32 %v1295, %v2295
    %v2304 = vadd.f32 %v1296, %v2296
    %v2305 = vadd.f32 %v1297, %v2297
    %v2306 = vadd.f32 %v1298, %v2298
    %v2307 = vadd.f32 %v1299, %v2299
    %v2308 = vadd.f32 %v1300, %v2300
    %v2309 = vsel %vm136, %v2259, 0.0
    %v2310 = vsel %vm137, %v2258, 0.0
    %v2311 = vsel %vm138, %v2257, 0.0
    %v2312 = vsel %vm139, %v2256, 0.0
    %v2313 = vsel %vm140, %v2255, 0.0
    %v2314 = vsel %vm141, %v2254, 0.0
    %v2315 = vsel %vm142, %v2253, 0.0
    %v2316 = vsel %vm143, %v2260, 0.0
    %v2317 = vadd.f32 %v2301, %v2309
    %v2318 = vadd.f32 %v2302, %v2310
    %v2319 = vadd.f32 %v2303, %v2311
    %v2320 = vadd.f32 %v2304, %v2312
    %v2321 = vadd.f32 %v2305, %v2313
    %v2322 = vadd.f32 %v2306, %v2314
    %v2323 = vadd.f32 %v2307, %v2315
    %v2324 = vadd.f32 %v2308, %v2316
    %2325 = vrot.lane.b32.xlu0 %v2285, 8
    %v2326 = vpop.permute.xlu0 %2325
    %2327 = vrot.lane.b32.xlu0 %v2286, 8
    %v2328 = vpop.permute.xlu0 %2327
    %2329 = vrot.lane.b32.xlu0 %v2287, 8
    %v2330 = vpop.permute.xlu0 %2329
    %2331 = vrot.lane.b32.xlu0 %v2288, 8
    %v2332 = vpop.permute.xlu0 %2331
    %2333 = vrot.lane.b32.xlu0 %v2289, 8
    %v2334 = vpop.permute.xlu0 %2333
    %2335 = vrot.lane.b32.xlu0 %v2290, 8
    %v2336 = vpop.permute.xlu0 %2335
    %2337 = vrot.lane.b32.xlu0 %v2291, 8
    %v2338 = vpop.permute.xlu0 %2337
    %2339 = vrot.lane.b32.xlu0 %v2292, 8
    %v2340 = vpop.permute.xlu0 %2339
    %vm2341 = vcmp.lt.s32.totalorder %v2226, 8
    %v2342 = vsel %vm2341, %v2338, %v2340
    %v2343 = vsel %vm2341, %v2336, %v2338
    %v2344 = vsel %vm2341, %v2334, %v2336
    %v2345 = vsel %vm2341, %v2332, %v2334
    %v2346 = vsel %vm2341, %v2330, %v2332
    %v2347 = vsel %vm2341, %v2328, %v2330
    %v2348 = vsel %vm2341, %v2326, %v2328
    %v2349 = vsel %vm2341, %v2340, %v2326
    %2350 = vrot.lane.b32.xlu0 %v2285, 120
    %v2351 = vpop.permute.xlu0 %2350
    %2352 = vrot.lane.b32.xlu0 %v2286, 120
    %v2353 = vpop.permute.xlu0 %2352
    %2354 = vrot.lane.b32.xlu0 %v2287, 120
    %v2355 = vpop.permute.xlu0 %2354
    %2356 = vrot.lane.b32.xlu0 %v2288, 120
    %v2357 = vpop.permute.xlu0 %2356
    %2358 = vrot.lane.b32.xlu0 %v2289, 120
    %v2359 = vpop.permute.xlu0 %2358
    %2360 = vrot.lane.b32.xlu0 %v2290, 120
    %v2361 = vpop.permute.xlu0 %2360
    %2362 = vrot.lane.b32.xlu0 %v2291, 120
    %v2363 = vpop.permute.xlu0 %2362
    %2364 = vrot.lane.b32.xlu0 %v2292, 120
    %v2365 = vpop.permute.xlu0 %2364
    %vm2366 = vcmp.lt.s32.totalorder %v2226, 120
    %v2367 = vsel %vm2366, %v2363, %v2365
    %v2368 = vsel %vm2366, %v2361, %v2363
    %v2369 = vsel %vm2366, %v2359, %v2361
    %v2370 = vsel %vm2366, %v2357, %v2359
    %v2371 = vsel %vm2366, %v2355, %v2357
    %v2372 = vsel %vm2366, %v2353, %v2355
    %v2373 = vsel %vm2366, %v2351, %v2353
    %v2374 = vsel %vm2366, %v2365, %v2351
    %v2375 = vsel %vm189, %v2349, -3e+38
    %v2376 = vsel %vm190, %v2348, -3e+38
    %v2377 = vsel %vm191, %v2347, -3e+38
    %v2378 = vsel %vm192, %v2346, -3e+38
    %v2379 = vsel %vm193, %v2345, -3e+38
    %v2380 = vsel %vm194, %v2344, -3e+38
    %v2381 = vsel %vm195, %v2343, -3e+38
    %v2382 = vsel %vm196, %v2342, -3e+38
    %v2383 = vsel %vm242, %v2373, -3e+38
    %v2384 = vsel %vm243, %v2372, -3e+38
    %v2385 = vsel %vm244, %v2371, -3e+38
    %v2386 = vsel %vm245, %v2370, -3e+38
    %v2387 = vsel %vm246, %v2369, -3e+38
    %v2388 = vsel %vm247, %v2368, -3e+38
    %v2389 = vsel %vm248, %v2367, -3e+38
    %v2390 = vsel %vm249, %v2374, -3e+38
    %v2391 = vmax.f32 %v2375, %v2383
    %v2392 = vmax.f32 %v2376, %v2384
    %v2393 = vmax.f32 %v2377, %v2385
    %v2394 = vmax.f32 %v2378, %v2386
    %v2395 = vmax.f32 %v2379, %v2387
    %v2396 = vmax.f32 %v2380, %v2388
    %v2397 = vmax.f32 %v2381, %v2389
    %v2398 = vmax.f32 %v2382, %v2390
    %v2399 = vmax.f32 %v2285, %v2391
    %v2400 = vmax.f32 %v2286, %v2392
    %v2401 = vmax.f32 %v2287, %v2393
    %v2402 = vmax.f32 %v2288, %v2394
    %v2403 = vmax.f32 %v2289, %v2395
    %v2404 = vmax.f32 %v2290, %v2396
    %v2405 = vmax.f32 %v2291, %v2397
    %v2406 = vmax.f32 %v2292, %v2398
    %2407 = vrot.lane.b32.xlu0 %v2317, 8
    %v2408 = vpop.permute.xlu0 %2407
    %2409 = vrot.lane.b32.xlu0 %v2318, 8
    %v2410 = vpop.permute.xlu0 %2409
    %2411 = vrot.lane.b32.xlu0 %v2319, 8
    %v2412 = vpop.permute.xlu0 %2411
    %2413 = vrot.lane.b32.xlu0 %v2320, 8
    %v2414 = vpop.permute.xlu0 %2413
    %2415 = vrot.lane.b32.xlu0 %v2321, 8
    %v2416 = vpop.permute.xlu0 %2415
    %2417 = vrot.lane.b32.xlu0 %v2322, 8
    %v2418 = vpop.permute.xlu0 %2417
    %2419 = vrot.lane.b32.xlu0 %v2323, 8
    %v2420 = vpop.permute.xlu0 %2419
    %2421 = vrot.lane.b32.xlu0 %v2324, 8
    %v2422 = vpop.permute.xlu0 %2421
    %v2423 = vsel %vm2341, %v2420, %v2422
    %v2424 = vsel %vm2341, %v2418, %v2420
    %v2425 = vsel %vm2341, %v2416, %v2418
    %v2426 = vsel %vm2341, %v2414, %v2416
    %v2427 = vsel %vm2341, %v2412, %v2414
    %v2428 = vsel %vm2341, %v2410, %v2412
    %v2429 = vsel %vm2341, %v2408, %v2410
    %v2430 = vsel %vm2341, %v2422, %v2408
    %2431 = vrot.lane.b32.xlu0 %v2317, 120
    %v2432 = vpop.permute.xlu0 %2431
    %2433 = vrot.lane.b32.xlu0 %v2318, 120
    %v2434 = vpop.permute.xlu0 %2433
    %2435 = vrot.lane.b32.xlu0 %v2319, 120
    %v2436 = vpop.permute.xlu0 %2435
    %2437 = vrot.lane.b32.xlu0 %v2320, 120
    %v2438 = vpop.permute.xlu0 %2437
    %2439 = vrot.lane.b32.xlu0 %v2321, 120
    %v2440 = vpop.permute.xlu0 %2439
    %2441 = vrot.lane.b32.xlu0 %v2322, 120
    %v2442 = vpop.permute.xlu0 %2441
    %2443 = vrot.lane.b32.xlu0 %v2323, 120
    %v2444 = vpop.permute.xlu0 %2443
    %2445 = vrot.lane.b32.xlu0 %v2324, 120
    %v2446 = vpop.permute.xlu0 %2445
    %v2447 = vsel %vm2366, %v2444, %v2446
    %v2448 = vsel %vm2366, %v2442, %v2444
    %v2449 = vsel %vm2366, %v2440, %v2442
    %v2450 = vsel %vm2366, %v2438, %v2440
    %v2451 = vsel %vm2366, %v2436, %v2438
    %v2452 = vsel %vm2366, %v2434, %v2436
    %v2453 = vsel %vm2366, %v2432, %v2434
    %v2454 = vsel %vm2366, %v2446, %v2432
    %v2455 = vsel %vm189, %v2430, 0.0
    %v2456 = vsel %vm190, %v2429, 0.0
    %v2457 = vsel %vm191, %v2428, 0.0
    %v2458 = vsel %vm192, %v2427, 0.0
    %v2459 = vsel %vm193, %v2426, 0.0
    %v2460 = vsel %vm194, %v2425, 0.0
    %v2461 = vsel %vm195, %v2424, 0.0
    %v2462 = vsel %vm196, %v2423, 0.0
    %v2463 = vadd.f32 %v2317, %v2455
    %v2464 = vadd.f32 %v2318, %v2456
    %v2465 = vadd.f32 %v2319, %v2457
    %v2466 = vadd.f32 %v2320, %v2458
    %v2467 = vadd.f32 %v2321, %v2459
    %v2468 = vadd.f32 %v2322, %v2460
    %v2469 = vadd.f32 %v2323, %v2461
    %v2470 = vadd.f32 %v2324, %v2462
    %v2471 = vsel %vm242, %v2453, 0.0
    %v2472 = vsel %vm243, %v2452, 0.0
    %v2473 = vsel %vm244, %v2451, 0.0
    %v2474 = vsel %vm245, %v2450, 0.0
    %v2475 = vsel %vm246, %v2449, 0.0
    %v2476 = vsel %vm247, %v2448, 0.0
    %v2477 = vsel %vm248, %v2447, 0.0
    %v2478 = vsel %vm249, %v2454, 0.0
    %v2479 = vadd.f32 %v2463, %v2471
    %v2480 = vadd.f32 %v2464, %v2472
    %v2481 = vadd.f32 %v2465, %v2473
    %v2482 = vadd.f32 %v2466, %v2474
    %v2483 = vadd.f32 %v2467, %v2475
    %v2484 = vadd.f32 %v2468, %v2476
    %v2485 = vadd.f32 %v2469, %v2477
    %v2486 = vadd.f32 %v2470, %v2478
    %2487 = vrot.lane.b32.xlu0 %v2399, 64
    %v2488 = vpop.permute.xlu0 %2487
    %2489 = vrot.lane.b32.xlu0 %v2400, 64
    %v2490 = vpop.permute.xlu0 %2489
    %2491 = vrot.lane.b32.xlu0 %v2401, 64
    %v2492 = vpop.permute.xlu0 %2491
    %2493 = vrot.lane.b32.xlu0 %v2402, 64
    %v2494 = vpop.permute.xlu0 %2493
    %2495 = vrot.lane.b32.xlu0 %v2403, 64
    %v2496 = vpop.permute.xlu0 %2495
    %2497 = vrot.lane.b32.xlu0 %v2404, 64
    %v2498 = vpop.permute.xlu0 %2497
    %2499 = vrot.lane.b32.xlu0 %v2405, 64
    %v2500 = vpop.permute.xlu0 %2499
    %2501 = vrot.lane.b32.xlu0 %v2406, 64
    %v2502 = vpop.permute.xlu0 %2501
    %vm2503 = vcmp.lt.s32.totalorder %v2226, 64
    %v2504 = vsel %vm2503, %v2500, %v2502
    %v2505 = vsel %vm2503, %v2498, %v2500
    %v2506 = vsel %vm2503, %v2496, %v2498
    %v2507 = vsel %vm2503, %v2494, %v2496
    %v2508 = vsel %vm2503, %v2492, %v2494
    %v2509 = vsel %vm2503, %v2490, %v2492
    %v2510 = vsel %vm2503, %v2488, %v2490
    %v2511 = vsel %vm2503, %v2502, %v2488
    %v2512 = vsel %vm295, %v2511, -3e+38
    %v2513 = vsel %vm296, %v2510, -3e+38
    %v2514 = vsel %vm297, %v2509, -3e+38
    %v2515 = vsel %vm298, %v2508, -3e+38
    %v2516 = vsel %vm299, %v2507, -3e+38
    %v2517 = vsel %vm300, %v2506, -3e+38
    %v2518 = vsel %vm301, %v2505, -3e+38
    %v2519 = vsel %vm302, %v2504, -3e+38
    %v2520 = vsel %vm348, %v2510, -3e+38
    %v2521 = vsel %vm349, %v2509, -3e+38
    %v2522 = vsel %vm350, %v2508, -3e+38
    %v2523 = vsel %vm351, %v2507, -3e+38
    %v2524 = vsel %vm352, %v2506, -3e+38
    %v2525 = vsel %vm353, %v2505, -3e+38
    %v2526 = vsel %vm354, %v2504, -3e+38
    %v2527 = vsel %vm355, %v2511, -3e+38
    %v2528 = vmax.f32 %v2512, %v2520
    %v2529 = vmax.f32 %v2513, %v2521
    %v2530 = vmax.f32 %v2514, %v2522
    %v2531 = vmax.f32 %v2515, %v2523
    %v2532 = vmax.f32 %v2516, %v2524
    %v2533 = vmax.f32 %v2517, %v2525
    %v2534 = vmax.f32 %v2518, %v2526
    %v2535 = vmax.f32 %v2519, %v2527
    %v2536 = vmax.f32 %v2399, %v2528
    %v2537 = vmax.f32 %v2400, %v2529
    %v2538 = vmax.f32 %v2401, %v2530
    %v2539 = vmax.f32 %v2402, %v2531
    %v2540 = vmax.f32 %v2403, %v2532
    %v2541 = vmax.f32 %v2404, %v2533
    %v2542 = vmax.f32 %v2405, %v2534
    %v2543 = vmax.f32 %v2406, %v2535
    %2544 = vrot.lane.b32.xlu0 %v2479, 64
    %v2545 = vpop.permute.xlu0 %2544
    %2546 = vrot.lane.b32.xlu0 %v2480, 64
    %v2547 = vpop.permute.xlu0 %2546
    %2548 = vrot.lane.b32.xlu0 %v2481, 64
    %v2549 = vpop.permute.xlu0 %2548
    %2550 = vrot.lane.b32.xlu0 %v2482, 64
    %v2551 = vpop.permute.xlu0 %2550
    %2552 = vrot.lane.b32.xlu0 %v2483, 64
    %v2553 = vpop.permute.xlu0 %2552
    %2554 = vrot.lane.b32.xlu0 %v2484, 64
    %v2555 = vpop.permute.xlu0 %2554
    %2556 = vrot.lane.b32.xlu0 %v2485, 64
    %v2557 = vpop.permute.xlu0 %2556
    %2558 = vrot.lane.b32.xlu0 %v2486, 64
    %v2559 = vpop.permute.xlu0 %2558
    %v2560 = vsel %vm2503, %v2557, %v2559
    %v2561 = vsel %vm2503, %v2555, %v2557
    %v2562 = vsel %vm2503, %v2553, %v2555
    %v2563 = vsel %vm2503, %v2551, %v2553
    %v2564 = vsel %vm2503, %v2549, %v2551
    %v2565 = vsel %vm2503, %v2547, %v2549
    %v2566 = vsel %vm2503, %v2545, %v2547
    %v2567 = vsel %vm2503, %v2559, %v2545
    %v2568 = vsel %vm295, %v2567, 0.0
    %v2569 = vsel %vm296, %v2566, 0.0
    %v2570 = vsel %vm297, %v2565, 0.0
    %v2571 = vsel %vm298, %v2564, 0.0
    %v2572 = vsel %vm299, %v2563, 0.0
    %v2573 = vsel %vm300, %v2562, 0.0
    %v2574 = vsel %vm301, %v2561, 0.0
    %v2575 = vsel %vm302, %v2560, 0.0
    %v2576 = vadd.f32 %v2479, %v2568
    %v2577 = vadd.f32 %v2480, %v2569
    %v2578 = vadd.f32 %v2481, %v2570
    %v2579 = vadd.f32 %v2482, %v2571
    %v2580 = vadd.f32 %v2483, %v2572
    %v2581 = vadd.f32 %v2484, %v2573
    %v2582 = vadd.f32 %v2485, %v2574
    %v2583 = vadd.f32 %v2486, %v2575
    %v2584 = vsel %vm348, %v2566, 0.0
    %v2585 = vsel %vm349, %v2565, 0.0
    %v2586 = vsel %vm350, %v2564, 0.0
    %v2587 = vsel %vm351, %v2563, 0.0
    %v2588 = vsel %vm352, %v2562, 0.0
    %v2589 = vsel %vm353, %v2561, 0.0
    %v2590 = vsel %vm354, %v2560, 0.0
    %v2591 = vsel %vm355, %v2567, 0.0
    %v2592 = vadd.f32 %v2576, %v2584
    %v2593 = vadd.f32 %v2577, %v2585
    %v2594 = vadd.f32 %v2578, %v2586
    %v2595 = vadd.f32 %v2579, %v2587
    %v2596 = vadd.f32 %v2580, %v2588
    %v2597 = vadd.f32 %v2581, %v2589
    %v2598 = vadd.f32 %v2582, %v2590
    %v2599 = vadd.f32 %v2583, %v2591
    %v2600 = vmul.f32 %v2592, %v364
    %v2601 = vmul.f32 %v2593, %v368
    %v2602 = vmul.f32 %v2594, %v372
    %v2603 = vmul.f32 %v2595, %v376
    %v2604 = vmul.f32 %v2596, %v380
    %v2605 = vmul.f32 %v2597, %v384
    %v2606 = vmul.f32 %v2598, %v388
    %v2607 = vmul.f32 %v2599, %v392
    %s2608 = sld [smem:[#allocation2 + $0x2]]
    %2609 = vmatprep.subr.mxu0 0.0
    %2610 = vmatpush1.msra.mxu0 1.0
    %2611 = vmatprep.subr.mxu0 0.0
    %2612 = vmatpush1.msra.mxu0 1.0
    %2613 = vmatprep.subr.mxu0 0.0
    %2614 = vmatpush1.msra.mxu0 1.0
    %2615 = vmatprep.subr.mxu0 0.0
    %2616 = vmatpush1.msra.mxu0 1.0
    %2617 = vmatprep.subr.mxu0 0.0
    %2618 = vmatpush1.msra.mxu0 1.0
    %2619 = vmatprep.subr.mxu0 0.0
    %2620 = vmatpush1.msra.mxu0 1.0
    %2621 = vmatprep.subr.mxu0 0.0
    %2622 = vmatpush1.msra.mxu0 1.0
    %2623 = vmatprep.subr.mxu0 0.0
    %2624 = vmatpush1.msra.mxu0 1.0
    %2625 = vmatprep.subr.mxu0 0.0
    %2626 = vmatpush1.msra.mxu0 1.0
    %2627 = vmatprep.subr.mxu0 0.0
    %2628 = vmatpush1.msra.mxu0 1.0
    %2629 = vmatprep.subr.mxu0 0.0
    %2630 = vmatpush1.msra.mxu0 1.0
    %2631 = vmatprep.subr.mxu0 0.0
    %2632 = vmatpush1.msra.mxu0 1.0
    %2633 = vmatprep.subr.mxu0 0.0
    %2634 = vmatpush1.msra.mxu0 1.0
    %2635 = vmatprep.subr.mxu0 0.0
    %2636 = vmatpush1.msra.mxu0 1.0
    %2637 = vmatprep.subr.mxu0 0.0
    %2638 = vmatpush1.msra.mxu0 1.0
    %2639 = vmatprep.subr.mxu0 0.0
    %2640 = vmatpush1.msra.mxu0 1.0
    %2641 = vmatprep.subr.mxu0 0.0
    %2642 = vmatpush1.msra.mxu0 1.0
    %2643 = vmatprep.subr.mxu0 0.0
    %2644 = vmatpush1.msra.mxu0 1.0
    %2645 = vmatprep.subr.mxu0 0.0
    %2646 = vmatpush1.msra.mxu0 1.0
    %2647 = vmatprep.subr.mxu0 0.0
    %2648 = vmatpush1.msra.mxu0 1.0
    %2649 = vmatprep.subr.mxu0 0.0
    %2650 = vmatpush1.msra.mxu0 1.0
    %2651 = vmatprep.subr.mxu0 0.0
    %2652 = vmatpush1.msra.mxu0 1.0
    %2653 = vmatprep.subr.mxu0 0.0
    %2654 = vmatpush1.msra.mxu0 1.0
    %2655 = vmatprep.subr.mxu0 0.0
    %2656 = vmatpush1.msra.mxu0 1.0
    %2657 = vmatprep.subr.mxu0 0.0
    %2658 = vmatpush1.msra.mxu0 1.0
    %2659 = vmatprep.subr.mxu0 0.0
    %2660 = vmatpush1.msra.mxu0 1.0
    %2661 = vmatprep.subr.mxu0 0.0
    %2662 = vmatpush1.msra.mxu0 1.0
    %2663 = vmatprep.subr.mxu0 0.0
    %2664 = vmatpush1.msra.mxu0 1.0
    %2665 = vmatprep.subr.mxu0 0.0
    %2666 = vmatpush1.msra.mxu0 1.0
    %2667 = vmatprep.subr.mxu0 0.0
    %2668 = vmatpush1.msra.mxu0 1.0
    %2669 = vmatprep.subr.mxu0 0.0
    %2670 = vmatpush1.msra.mxu0 1.0
    %2671 = vmatprep.subr.mxu0 0.0
    %2672 = vmatpush1.msra.mxu0 1.0
    %2673 = vmatprep.mubr.f32.mxu0 %v2601
    %2674 = vmatmul.mubr.f32.gmra.mrb[0].mxu0 %v2600
    %v2675 = vpop.f32.mrb[0].mxu0
    %v2676 = vadd.f32 0.0, %v2675
    %v2677 = vpop.f32.mrb[0].mxu0
    %2678 = vdwg.mxu0
    %2679 = vmatprep.subr.mxu0 0.0
    %2680 = vmatpush1.msra.mxu0 1.0
    %2681 = vmatprep.subr.mxu0 0.0
    %2682 = vmatpush1.msra.mxu0 1.0
    %2683 = vmatprep.subr.mxu0 0.0
    %2684 = vmatpush1.msra.mxu0 1.0
    %2685 = vmatprep.subr.mxu0 0.0
    %2686 = vmatpush1.msra.mxu0 1.0
    %2687 = vmatprep.subr.mxu0 0.0
    %2688 = vmatpush1.msra.mxu0 1.0
    %2689 = vmatprep.subr.mxu0 0.0
    %2690 = vmatpush1.msra.mxu0 1.0
    %2691 = vmatprep.subr.mxu0 0.0
    %2692 = vmatpush1.msra.mxu0 1.0
    %2693 = vmatprep.subr.mxu0 0.0
    %2694 = vmatpush1.msra.mxu0 1.0
    %2695 = vmatprep.subr.mxu0 0.0
    %2696 = vmatpush1.msra.mxu0 1.0
    %2697 = vmatprep.subr.mxu0 0.0
    %2698 = vmatpush1.msra.mxu0 1.0
    %2699 = vmatprep.subr.mxu0 0.0
    %2700 = vmatpush1.msra.mxu0 1.0
    %2701 = vmatprep.subr.mxu0 0.0
    %2702 = vmatpush1.msra.mxu0 1.0
    %2703 = vmatprep.subr.mxu0 0.0
    %2704 = vmatpush1.msra.mxu0 1.0
    %2705 = vmatprep.subr.mxu0 0.0
    %2706 = vmatpush1.msra.mxu0 1.0
    %2707 = vmatprep.subr.mxu0 0.0
    %2708 = vmatpush1.msra.mxu0 1.0
    %2709 = vmatprep.subr.mxu0 0.0
    %2710 = vmatpush1.msra.mxu0 1.0
    %2711 = vmatprep.subr.mxu0 0.0
    %2712 = vmatpush1.msra.mxu0 1.0
    %2713 = vmatprep.subr.mxu0 0.0
    %2714 = vmatpush1.msra.mxu0 1.0
    %2715 = vmatprep.subr.mxu0 0.0
    %2716 = vmatpush1.msra.mxu0 1.0
    %2717 = vmatprep.subr.mxu0 0.0
    %2718 = vmatpush1.msra.mxu0 1.0
    %2719 = vmatprep.subr.mxu0 0.0
    %2720 = vmatpush1.msra.mxu0 1.0
    %2721 = vmatprep.subr.mxu0 0.0
    %2722 = vmatpush1.msra.mxu0 1.0
    %2723 = vmatprep.subr.mxu0 0.0
    %2724 = vmatpush1.msra.mxu0 1.0
    %2725 = vmatprep.subr.mxu0 0.0
    %2726 = vmatpush1.msra.mxu0 1.0
    %2727 = vmatprep.subr.mxu0 0.0
    %2728 = vmatpush1.msra.mxu0 1.0
    %2729 = vmatprep.subr.mxu0 0.0
    %2730 = vmatpush1.msra.mxu0 1.0
    %2731 = vmatprep.subr.mxu0 0.0
    %2732 = vmatpush1.msra.mxu0 1.0
    %2733 = vmatprep.subr.mxu0 0.0
    %2734 = vmatpush1.msra.mxu0 1.0
    %2735 = vmatprep.subr.mxu0 0.0
    %2736 = vmatpush1.msra.mxu0 1.0
    %2737 = vmatprep.subr.mxu0 0.0
    %2738 = vmatpush1.msra.mxu0 1.0
    %2739 = vmatprep.subr.mxu0 0.0
    %2740 = vmatpush1.msra.mxu0 1.0
    %2741 = vmatprep.subr.mxu0 0.0
    %2742 = vmatpush1.msra.mxu0 1.0
    %2743 = vmatprep.mubr.f32.mxu0 %v2603
    %2744 = vmatmul.mubr.f32.gmra.mrb[0].mxu0 %v2602
    %v2745 = vpop.f32.mrb[0].mxu0
    %v2746 = vadd.f32 %v2676, %v2745
    %v2747 = vpop.f32.mrb[0].mxu0
    %2748 = vdwg.mxu0
    %2749 = vmatprep.subr.mxu0 0.0
    %2750 = vmatpush1.msra.mxu0 1.0
    %2751 = vmatprep.subr.mxu0 0.0
    %2752 = vmatpush1.msra.mxu0 1.0
    %2753 = vmatprep.subr.mxu0 0.0
    %2754 = vmatpush1.msra.mxu0 1.0
    %2755 = vmatprep.subr.mxu0 0.0
    %2756 = vmatpush1.msra.mxu0 1.0
    %2757 = vmatprep.subr.mxu0 0.0
    %2758 = vmatpush1.msra.mxu0 1.0
    %2759 = vmatprep.subr.mxu0 0.0
    %2760 = vmatpush1.msra.mxu0 1.0
    %2761 = vmatprep.subr.mxu0 0.0
    %2762 = vmatpush1.msra.mxu0 1.0
    %2763 = vmatprep.subr.mxu0 0.0
    %2764 = vmatpush1.msra.mxu0 1.0
    %2765 = vmatprep.subr.mxu0 0.0
    %2766 = vmatpush1.msra.mxu0 1.0
    %2767 = vmatprep.subr.mxu0 0.0
    %2768 = vmatpush1.msra.mxu0 1.0
    %2769 = vmatprep.subr.mxu0 0.0
    %2770 = vmatpush1.msra.mxu0 1.0
    %2771 = vmatprep.subr.mxu0 0.0
    %2772 = vmatpush1.msra.mxu0 1.0
    %2773 = vmatprep.subr.mxu0 0.0
    %2774 = vmatpush1.msra.mxu0 1.0
    %2775 = vmatprep.subr.mxu0 0.0
    %2776 = vmatpush1.msra.mxu0 1.0
    %2777 = vmatprep.subr.mxu0 0.0
    %2778 = vmatpush1.msra.mxu0 1.0
    %2779 = vmatprep.subr.mxu0 0.0
    %2780 = vmatpush1.msra.mxu0 1.0
    %2781 = vmatprep.subr.mxu0 0.0
    %2782 = vmatpush1.msra.mxu0 1.0
    %2783 = vmatprep.subr.mxu0 0.0
    %2784 = vmatpush1.msra.mxu0 1.0
    %2785 = vmatprep.subr.mxu0 0.0
    %2786 = vmatpush1.msra.mxu0 1.0
    %2787 = vmatprep.subr.mxu0 0.0
    %2788 = vmatpush1.msra.mxu0 1.0
    %2789 = vmatprep.subr.mxu0 0.0
    %2790 = vmatpush1.msra.mxu0 1.0
    %2791 = vmatprep.subr.mxu0 0.0
    %2792 = vmatpush1.msra.mxu0 1.0
    %2793 = vmatprep.subr.mxu0 0.0
    %2794 = vmatpush1.msra.mxu0 1.0
    %2795 = vmatprep.subr.mxu0 0.0
    %2796 = vmatpush1.msra.mxu0 1.0
    %2797 = vmatprep.subr.mxu0 0.0
    %2798 = vmatpush1.msra.mxu0 1.0
    %2799 = vmatprep.subr.mxu0 0.0
    %2800 = vmatpush1.msra.mxu0 1.0
    %2801 = vmatprep.subr.mxu0 0.0
    %2802 = vmatpush1.msra.mxu0 1.0
    %2803 = vmatprep.subr.mxu0 0.0
    %2804 = vmatpush1.msra.mxu0 1.0
    %2805 = vmatprep.subr.mxu0 0.0
    %2806 = vmatpush1.msra.mxu0 1.0
    %2807 = vmatprep.subr.mxu0 0.0
    %2808 = vmatpush1.msra.mxu0 1.0
    %2809 = vmatprep.subr.mxu0 0.0
    %2810 = vmatpush1.msra.mxu0 1.0
    %2811 = vmatprep.subr.mxu0 0.0
    %2812 = vmatpush1.msra.mxu0 1.0
    %2813 = vmatprep.mubr.f32.mxu0 %v2605
    %2814 = vmatmul.mubr.f32.gmra.mrb[0].mxu0 %v2604
    %v2815 = vpop.f32.mrb[0].mxu0
    %v2816 = vadd.f32 %v2746, %v2815
    %v2817 = vpop.f32.mrb[0].mxu0
    %2818 = vdwg.mxu0
    %2819 = vmatprep.subr.mxu0 0.0
    %2820 = vmatpush1.msra.mxu0 1.0
    %2821 = vmatprep.subr.mxu0 0.0
    %2822 = vmatpush1.msra.mxu0 1.0
    %2823 = vmatprep.subr.mxu0 0.0
    %2824 = vmatpush1.msra.mxu0 1.0
    %2825 = vmatprep.subr.mxu0 0.0
    %2826 = vmatpush1.msra.mxu0 1.0
    %2827 = vmatprep.subr.mxu0 0.0
    %2828 = vmatpush1.msra.mxu0 1.0
    %2829 = vmatprep.subr.mxu0 0.0
    %2830 = vmatpush1.msra.mxu0 1.0
    %2831 = vmatprep.subr.mxu0 0.0
    %2832 = vmatpush1.msra.mxu0 1.0
    %2833 = vmatprep.subr.mxu0 0.0
    %2834 = vmatpush1.msra.mxu0 1.0
    %2835 = vmatprep.subr.mxu0 0.0
    %2836 = vmatpush1.msra.mxu0 1.0
    %2837 = vmatprep.subr.mxu0 0.0
    %2838 = vmatpush1.msra.mxu0 1.0
    %2839 = vmatprep.subr.mxu0 0.0
    %2840 = vmatpush1.msra.mxu0 1.0
    %2841 = vmatprep.subr.mxu0 0.0
    %2842 = vmatpush1.msra.mxu0 1.0
    %2843 = vmatprep.subr.mxu0 0.0
    %2844 = vmatpush1.msra.mxu0 1.0
    %2845 = vmatprep.subr.mxu0 0.0
    %2846 = vmatpush1.msra.mxu0 1.0
    %2847 = vmatprep.subr.mxu0 0.0
    %2848 = vmatpush1.msra.mxu0 1.0
    %2849 = vmatprep.subr.mxu0 0.0
    %2850 = vmatpush1.msra.mxu0 1.0
    %2851 = vmatprep.subr.mxu0 0.0
    %2852 = vmatpush1.msra.mxu0 1.0
    %2853 = vmatprep.subr.mxu0 0.0
    %2854 = vmatpush1.msra.mxu0 1.0
    %2855 = vmatprep.subr.mxu0 0.0
    %2856 = vmatpush1.msra.mxu0 1.0
    %2857 = vmatprep.subr.mxu0 0.0
    %2858 = vmatpush1.msra.mxu0 1.0
    %2859 = vmatprep.subr.mxu0 0.0
    %2860 = vmatpush1.msra.mxu0 1.0
    %2861 = vmatprep.subr.mxu0 0.0
    %2862 = vmatpush1.msra.mxu0 1.0
    %2863 = vmatprep.subr.mxu0 0.0
    %2864 = vmatpush1.msra.mxu0 1.0
    %2865 = vmatprep.subr.mxu0 0.0
    %2866 = vmatpush1.msra.mxu0 1.0
    %2867 = vmatprep.subr.mxu0 0.0
    %2868 = vmatpush1.msra.mxu0 1.0
    %2869 = vmatprep.subr.mxu0 0.0
    %2870 = vmatpush1.msra.mxu0 1.0
    %2871 = vmatprep.subr.mxu0 0.0
    %2872 = vmatpush1.msra.mxu0 1.0
    %2873 = vmatprep.subr.mxu0 0.0
    %2874 = vmatpush1.msra.mxu0 1.0
    %2875 = vmatprep.subr.mxu0 0.0
    %2876 = vmatpush1.msra.mxu0 1.0
    %2877 = vmatprep.subr.mxu0 0.0
    %2878 = vmatpush1.msra.mxu0 1.0
    %2879 = vmatprep.subr.mxu0 0.0
    %2880 = vmatpush1.msra.mxu0 1.0
    %2881 = vmatprep.subr.mxu0 0.0
    %2882 = vmatpush1.msra.mxu0 1.0
    %2883 = vmatprep.mubr.f32.mxu0 %v2607
    %2884 = vmatmul.mubr.f32.gmra.mrb[0].mxu0 %v2606
    %v2885 = vpop.f32.mrb[0].mxu0
    %v2886 = vadd.f32 %v2816, %v2885
    %v2887 = vpop.f32.mrb[0].mxu0
    %2888 = vdwg.mxu0
    %2889 = vadd.xlane.f32.xlu0 %v2886
    %v2890 = vpop.xlane.xlu0 %2889
    %v2891 = vmul.f32 %v2890, %v988
    %v2892 = vmul.f32 %v2891, 0.0009765625
    %v2893 = vsub.f32 %v2600, %v2892
    %v2894 = vsub.f32 %v2601, %v2892
    %v2895 = vsub.f32 %v2602, %v2892
    %v2896 = vsub.f32 %v2603, %v2892
    %v2897 = vsub.f32 %v2604, %v2892
    %v2898 = vsub.f32 %v2605, %v2892
    %v2899 = vsub.f32 %v2606, %v2892
    %v2900 = vsub.f32 %v2607, %v2892
    %v2901 = vmul.f32 %v2893, %v2893
    %v2902 = vmul.f32 %v2894, %v2894
    %v2903 = vmul.f32 %v2895, %v2895
    %v2904 = vmul.f32 %v2896, %v2896
    %v2905 = vmul.f32 %v2897, %v2897
    %v2906 = vmul.f32 %v2898, %v2898
    %v2907 = vmul.f32 %v2899, %v2899
    %v2908 = vmul.f32 %v2900, %v2900
    %2909 = vmatprep.subr.mxu0 0.0
    %2910 = vmatpush1.msra.mxu0 1.0
    %2911 = vmatprep.subr.mxu0 0.0
    %2912 = vmatpush1.msra.mxu0 1.0
    %2913 = vmatprep.subr.mxu0 0.0
    %2914 = vmatpush1.msra.mxu0 1.0
    %2915 = vmatprep.subr.mxu0 0.0
    %2916 = vmatpush1.msra.mxu0 1.0
    %2917 = vmatprep.subr.mxu0 0.0
    %2918 = vmatpush1.msra.mxu0 1.0
    %2919 = vmatprep.subr.mxu0 0.0
    %2920 = vmatpush1.msra.mxu0 1.0
    %2921 = vmatprep.subr.mxu0 0.0
    %2922 = vmatpush1.msra.mxu0 1.0
    %2923 = vmatprep.subr.mxu0 0.0
    %2924 = vmatpush1.msra.mxu0 1.0
    %2925 = vmatprep.subr.mxu0 0.0
    %2926 = vmatpush1.msra.mxu0 1.0
    %2927 = vmatprep.subr.mxu0 0.0
    %2928 = vmatpush1.msra.mxu0 1.0
    %2929 = vmatprep.subr.mxu0 0.0
    %2930 = vmatpush1.msra.mxu0 1.0
    %2931 = vmatprep.subr.mxu0 0.0
    %2932 = vmatpush1.msra.mxu0 1.0
    %2933 = vmatprep.subr.mxu0 0.0
    %2934 = vmatpush1.msra.mxu0 1.0
    %2935 = vmatprep.subr.mxu0 0.0
    %2936 = vmatpush1.msra.mxu0 1.0
    %2937 = vmatprep.subr.mxu0 0.0
    %2938 = vmatpush1.msra.mxu0 1.0
    %2939 = vmatprep.subr.mxu0 0.0
    %2940 = vmatpush1.msra.mxu0 1.0
    %2941 = vmatprep.subr.mxu0 0.0
    %2942 = vmatpush1.msra.mxu0 1.0
    %2943 = vmatprep.subr.mxu0 0.0
    %2944 = vmatpush1.msra.mxu0 1.0
    %2945 = vmatprep.subr.mxu0 0.0
    %2946 = vmatpush1.msra.mxu0 1.0
    %2947 = vmatprep.subr.mxu0 0.0
    %2948 = vmatpush1.msra.mxu0 1.0
    %2949 = vmatprep.subr.mxu0 0.0
    %2950 = vmatpush1.msra.mxu0 1.0
    %2951 = vmatprep.subr.mxu0 0.0
    %2952 = vmatpush1.msra.mxu0 1.0
    %2953 = vmatprep.subr.mxu0 0.0
    %2954 = vmatpush1.msra.mxu0 1.0
    %2955 = vmatprep.subr.mxu0 0.0
    %2956 = vmatpush1.msra.mxu0 1.0
    %2957 = vmatprep.subr.mxu0 0.0
    %2958 = vmatpush1.msra.mxu0 1.0
    %2959 = vmatprep.subr.mxu0 0.0
    %2960 = vmatpush1.msra.mxu0 1.0
    %2961 = vmatprep.subr.mxu0 0.0
    %2962 = vmatpush1.msra.mxu0 1.0
    %2963 = vmatprep.subr.mxu0 0.0
    %2964 = vmatpush1.msra.mxu0 1.0
    %2965 = vmatprep.subr.mxu0 0.0
    %2966 = vmatpush1.msra.mxu0 1.0
    %2967 = vmatprep.subr.mxu0 0.0
    %2968 = vmatpush1.msra.mxu0 1.0
    %2969 = vmatprep.subr.mxu0 0.0
    %2970 = vmatpush1.msra.mxu0 1.0
    %2971 = vmatprep.subr.mxu0 0.0
    %2972 = vmatpush1.msra.mxu0 1.0
    %2973 = vmatprep.mubr.f32.mxu0 %v2902
    %2974 = vmatmul.mubr.f32.gmra.mrb[0].mxu0 %v2901
    %v2975 = vpop.f32.mrb[0].mxu0
    %v2976 = vadd.f32 0.0, %v2975
    %v2977 = vpop.f32.mrb[0].mxu0
    %2978 = vdwg.mxu0
    %2979 = vmatprep.subr.mxu0 0.0
    %2980 = vmatpush1.msra.mxu0 1.0
    %2981 = vmatprep.subr.mxu0 0.0
    %2982 = vmatpush1.msra.mxu0 1.0
    %2983 = vmatprep.subr.mxu0 0.0
    %2984 = vmatpush1.msra.mxu0 1.0
    %2985 = vmatprep.subr.mxu0 0.0
    %2986 = vmatpush1.msra.mxu0 1.0
    %2987 = vmatprep.subr.mxu0 0.0
    %2988 = vmatpush1.msra.mxu0 1.0
    %2989 = vmatprep.subr.mxu0 0.0
    %2990 = vmatpush1.msra.mxu0 1.0
    %2991 = vmatprep.subr.mxu0 0.0
    %2992 = vmatpush1.msra.mxu0 1.0
    %2993 = vmatprep.subr.mxu0 0.0
    %2994 = vmatpush1.msra.mxu0 1.0
    %2995 = vmatprep.subr.mxu0 0.0
    %2996 = vmatpush1.msra.mxu0 1.0
    %2997 = vmatprep.subr.mxu0 0.0
    %2998 = vmatpush1.msra.mxu0 1.0
    %2999 = vmatprep.subr.mxu0 0.0
    %3000 = vmatpush1.msra.mxu0 1.0
    %3001 = vmatprep.subr.mxu0 0.0
    %3002 = vmatpush1.msra.mxu0 1.0
    %3003 = vmatprep.subr.mxu0 0.0
    %3004 = vmatpush1.msra.mxu0 1.0
    %3005 = vmatprep.subr.mxu0 0.0
    %3006 = vmatpush1.msra.mxu0 1.0
    %3007 = vmatprep.subr.mxu0 0.0
    %3008 = vmatpush1.msra.mxu0 1.0
    %3009 = vmatprep.subr.mxu0 0.0
    %3010 = vmatpush1.msra.mxu0 1.0
    %3011 = vmatprep.subr.mxu0 0.0
    %3012 = vmatpush1.msra.mxu0 1.0
    %3013 = vmatprep.subr.mxu0 0.0
    %3014 = vmatpush1.msra.mxu0 1.0
    %3015 = vmatprep.subr.mxu0 0.0
    %3016 = vmatpush1.msra.mxu0 1.0
    %3017 = vmatprep.subr.mxu0 0.0
    %3018 = vmatpush1.msra.mxu0 1.0
    %3019 = vmatprep.subr.mxu0 0.0
    %3020 = vmatpush1.msra.mxu0 1.0
    %3021 = vmatprep.subr.mxu0 0.0
    %3022 = vmatpush1.msra.mxu0 1.0
    %3023 = vmatprep.subr.mxu0 0.0
    %3024 = vmatpush1.msra.mxu0 1.0
    %3025 = vmatprep.subr.mxu0 0.0
    %3026 = vmatpush1.msra.mxu0 1.0
    %3027 = vmatprep.subr.mxu0 0.0
    %3028 = vmatpush1.msra.mxu0 1.0
    %3029 = vmatprep.subr.mxu0 0.0
    %3030 = vmatpush1.msra.mxu0 1.0
    %3031 = vmatprep.subr.mxu0 0.0
    %3032 = vmatpush1.msra.mxu0 1.0
    %3033 = vmatprep.subr.mxu0 0.0
    %3034 = vmatpush1.msra.mxu0 1.0
    %3035 = vmatprep.subr.mxu0 0.0
    %3036 = vmatpush1.msra.mxu0 1.0
    %3037 = vmatprep.subr.mxu0 0.0
    %3038 = vmatpush1.msra.mxu0 1.0
    %3039 = vmatprep.subr.mxu0 0.0
    %3040 = vmatpush1.msra.mxu0 1.0
    %3041 = vmatprep.subr.mxu0 0.0
    %3042 = vmatpush1.msra.mxu0 1.0
    %3043 = vmatprep.mubr.f32.mxu0 %v2904
    %3044 = vmatmul.mubr.f32.gmra.mrb[0].mxu0 %v2903
    %v3045 = vpop.f32.mrb[0].mxu0
    %v3046 = vadd.f32 %v2976, %v3045
    %v3047 = vpop.f32.mrb[0].mxu0
    %3048 = vdwg.mxu0
    %3049 = vmatprep.subr.mxu0 0.0
    %3050 = vmatpush1.msra.mxu0 1.0
    %3051 = vmatprep.subr.mxu0 0.0
    %3052 = vmatpush1.msra.mxu0 1.0
    %3053 = vmatprep.subr.mxu0 0.0
    %3054 = vmatpush1.msra.mxu0 1.0
    %3055 = vmatprep.subr.mxu0 0.0
    %3056 = vmatpush1.msra.mxu0 1.0
    %3057 = vmatprep.subr.mxu0 0.0
    %3058 = vmatpush1.msra.mxu0 1.0
    %3059 = vmatprep.subr.mxu0 0.0
    %3060 = vmatpush1.msra.mxu0 1.0
    %3061 = vmatprep.subr.mxu0 0.0
    %3062 = vmatpush1.msra.mxu0 1.0
    %3063 = vmatprep.subr.mxu0 0.0
    %3064 = vmatpush1.msra.mxu0 1.0
    %3065 = vmatprep.subr.mxu0 0.0
    %3066 = vmatpush1.msra.mxu0 1.0
    %3067 = vmatprep.subr.mxu0 0.0
    %3068 = vmatpush1.msra.mxu0 1.0
    %3069 = vmatprep.subr.mxu0 0.0
    %3070 = vmatpush1.msra.mxu0 1.0
    %3071 = vmatprep.subr.mxu0 0.0
    %3072 = vmatpush1.msra.mxu0 1.0
    %3073 = vmatprep.subr.mxu0 0.0
    %3074 = vmatpush1.msra.mxu0 1.0
    %3075 = vmatprep.subr.mxu0 0.0
    %3076 = vmatpush1.msra.mxu0 1.0
    %3077 = vmatprep.subr.mxu0 0.0
    %3078 = vmatpush1.msra.mxu0 1.0
    %3079 = vmatprep.subr.mxu0 0.0
    %3080 = vmatpush1.msra.mxu0 1.0
    %3081 = vmatprep.subr.mxu0 0.0
    %3082 = vmatpush1.msra.mxu0 1.0
    %3083 = vmatprep.subr.mxu0 0.0
    %3084 = vmatpush1.msra.mxu0 1.0
    %3085 = vmatprep.subr.mxu0 0.0
    %3086 = vmatpush1.msra.mxu0 1.0
    %3087 = vmatprep.subr.mxu0 0.0
    %3088 = vmatpush1.msra.mxu0 1.0
    %3089 = vmatprep.subr.mxu0 0.0
    %3090 = vmatpush1.msra.mxu0 1.0
    %3091 = vmatprep.subr.mxu0 0.0
    %3092 = vmatpush1.msra.mxu0 1.0
    %3093 = vmatprep.subr.mxu0 0.0
    %3094 = vmatpush1.msra.mxu0 1.0
    %3095 = vmatprep.subr.mxu0 0.0
    %3096 = vmatpush1.msra.mxu0 1.0
    %3097 = vmatprep.subr.mxu0 0.0
    %3098 = vmatpush1.msra.mxu0 1.0
    %3099 = vmatprep.subr.mxu0 0.0
    %3100 = vmatpush1.msra.mxu0 1.0
    %3101 = vmatprep.subr.mxu0 0.0
    %3102 = vmatpush1.msra.mxu0 1.0
    %3103 = vmatprep.subr.mxu0 0.0
    %3104 = vmatpush1.msra.mxu0 1.0
    %3105 = vmatprep.subr.mxu0 0.0
    %3106 = vmatpush1.msra.mxu0 1.0
    %3107 = vmatprep.subr.mxu0 0.0
    %3108 = vmatpush1.msra.mxu0 1.0
    %3109 = vmatprep.subr.mxu0 0.0
    %3110 = vmatpush1.msra.mxu0 1.0
    %3111 = vmatprep.subr.mxu0 0.0
    %3112 = vmatpush1.msra.mxu0 1.0
    %3113 = vmatprep.mubr.f32.mxu0 %v2906
    %3114 = vmatmul.mubr.f32.gmra.mrb[0].mxu0 %v2905
    %v3115 = vpop.f32.mrb[0].mxu0
    %v3116 = vadd.f32 %v3046, %v3115
    %v3117 = vpop.f32.mrb[0].mxu0
    %3118 = vdwg.mxu0
    %3119 = vmatprep.subr.mxu0 0.0
    %3120 = vmatpush1.msra.mxu0 1.0
    %3121 = vmatprep.subr.mxu0 0.0
    %3122 = vmatpush1.msra.mxu0 1.0
    %3123 = vmatprep.subr.mxu0 0.0
    %3124 = vmatpush1.msra.mxu0 1.0
    %3125 = vmatprep.subr.mxu0 0.0
    %3126 = vmatpush1.msra.mxu0 1.0
    %3127 = vmatprep.subr.mxu0 0.0
    %3128 = vmatpush1.msra.mxu0 1.0
    %3129 = vmatprep.subr.mxu0 0.0
    %3130 = vmatpush1.msra.mxu0 1.0
    %3131 = vmatprep.subr.mxu0 0.0
    %3132 = vmatpush1.msra.mxu0 1.0
    %3133 = vmatprep.subr.mxu0 0.0
    %3134 = vmatpush1.msra.mxu0 1.0
    %3135 = vmatprep.subr.mxu0 0.0
    %3136 = vmatpush1.msra.mxu0 1.0
    %3137 = vmatprep.subr.mxu0 0.0
    %3138 = vmatpush1.msra.mxu0 1.0
    %3139 = vmatprep.subr.mxu0 0.0
    %3140 = vmatpush1.msra.mxu0 1.0
    %3141 = vmatprep.subr.mxu0 0.0
    %3142 = vmatpush1.msra.mxu0 1.0
    %3143 = vmatprep.subr.mxu0 0.0
    %3144 = vmatpush1.msra.mxu0 1.0
    %3145 = vmatprep.subr.mxu0 0.0
    %3146 = vmatpush1.msra.mxu0 1.0
    %3147 = vmatprep.subr.mxu0 0.0
    %3148 = vmatpush1.msra.mxu0 1.0
    %3149 = vmatprep.subr.mxu0 0.0
    %3150 = vmatpush1.msra.mxu0 1.0
    %3151 = vmatprep.subr.mxu0 0.0
    %3152 = vmatpush1.msra.mxu0 1.0
    %3153 = vmatprep.subr.mxu0 0.0
    %3154 = vmatpush1.msra.mxu0 1.0
    %3155 = vmatprep.subr.mxu0 0.0
    %3156 = vmatpush1.msra.mxu0 1.0
    %3157 = vmatprep.subr.mxu0 0.0
    %3158 = vmatpush1.msra.mxu0 1.0
    %3159 = vmatprep.subr.mxu0 0.0
    %3160 = vmatpush1.msra.mxu0 1.0
    %3161 = vmatprep.subr.mxu0 0.0
    %3162 = vmatpush1.msra.mxu0 1.0
    %3163 = vmatprep.subr.mxu0 0.0
    %3164 = vmatpush1.msra.mxu0 1.0
    %3165 = vmatprep.subr.mxu0 0.0
    %3166 = vmatpush1.msra.mxu0 1.0
    %3167 = vmatprep.subr.mxu0 0.0
    %3168 = vmatpush1.msra.mxu0 1.0
    %3169 = vmatprep.subr.mxu0 0.0
    %3170 = vmatpush1.msra.mxu0 1.0
    %3171 = vmatprep.subr.mxu0 0.0
    %3172 = vmatpush1.msra.mxu0 1.0
    %3173 = vmatprep.subr.mxu0 0.0
    %3174 = vmatpush1.msra.mxu0 1.0
    %3175 = vmatprep.subr.mxu0 0.0
    %3176 = vmatpush1.msra.mxu0 1.0
    %3177 = vmatprep.subr.mxu0 0.0
    %3178 = vmatpush1.msra.mxu0 1.0
    %3179 = vmatprep.subr.mxu0 0.0
    %3180 = vmatpush1.msra.mxu0 1.0
    %3181 = vmatprep.subr.mxu0 0.0
    %3182 = vmatpush1.msra.mxu0 1.0
    %3183 = vmatprep.mubr.f32.mxu0 %v2908
    %3184 = vmatmul.mubr.f32.gmra.mrb[0].mxu0 %v2907
    %v3185 = vpop.f32.mrb[0].mxu0
    %v3186 = vadd.f32 %v3116, %v3185
    %v3187 = vpop.f32.mrb[0].mxu0
    %3188 = vdwg.mxu0
    %3189 = vadd.xlane.f32.xlu0 %v3186
    %v3190 = vpop.xlane.xlu0 %3189
    %v3191 = vmul.f32 %v3190, %v988
    %v3192 = vmul.f32 %v3191, 0.0009765625
    %v3193 = vadd.f32 %v3192, 1e-05
    %v3194 = vrsqrt.pop %v3193
    %v3195 = vmul.f32 %v2893, %v3194
    %v3196 = vmul.f32 %v2894, %v3194
    %v3197 = vmul.f32 %v2895, %v3194
    %v3198 = vmul.f32 %v2896, %v3194
    %v3199 = vmul.f32 %v2897, %v3194
    %v3200 = vmul.f32 %v2898, %v3194
    %v3201 = vmul.f32 %v2899, %v3194
    %v3202 = vmul.f32 %v2900, %v3194
    %v3203 = vstv %s2608
    %v3204 = vmul.f32 %v3203, %v3195
    %v3205 = vmul.f32 %v3203, %v3196
    %v3206 = vmul.f32 %v3203, %v3197
    %v3207 = vmul.f32 %v3203, %v3198
    %v3208 = vmul.f32 %v3203, %v3199
    %v3209 = vmul.f32 %v3203, %v3200
    %v3210 = vmul.f32 %v3203, %v3201
    %v3211 = vmul.f32 %v3203, %v3202
    %v3212 = vadd.f32 %v2201, %v3204
    %v3213 = vadd.f32 %v2202, %v3205
    %v3214 = vadd.f32 %v2203, %v3206
    %v3215 = vadd.f32 %v2204, %v3207
    %v3216 = vadd.f32 %v2205, %v3208
    %v3217 = vadd.f32 %v2206, %v3209
    %v3218 = vadd.f32 %v2207, %v3210
    %v3219 = vadd.f32 %v2208, %v3211
    %s3220 = sld [smem:[#allocation2 + $0x3]]
    %3221 = vmatprep.subr.mxu0 0.0
    %3222 = vmatpush1.msra.mxu0 1.0
    %3223 = vmatprep.subr.mxu0 0.0
    %3224 = vmatpush1.msra.mxu0 1.0
    %3225 = vmatprep.subr.mxu0 0.0
    %3226 = vmatpush1.msra.mxu0 1.0
    %3227 = vmatprep.subr.mxu0 0.0
    %3228 = vmatpush1.msra.mxu0 1.0
    %3229 = vmatprep.subr.mxu0 0.0
    %3230 = vmatpush1.msra.mxu0 1.0
    %3231 = vmatprep.subr.mxu0 0.0
    %3232 = vmatpush1.msra.mxu0 1.0
    %3233 = vmatprep.subr.mxu0 0.0
    %3234 = vmatpush1.msra.mxu0 1.0
    %3235 = vmatprep.subr.mxu0 0.0
    %3236 = vmatpush1.msra.mxu0 1.0
    %3237 = vmatprep.subr.mxu0 0.0
    %3238 = vmatpush1.msra.mxu0 1.0
    %3239 = vmatprep.subr.mxu0 0.0
    %3240 = vmatpush1.msra.mxu0 1.0
    %3241 = vmatprep.subr.mxu0 0.0
    %3242 = vmatpush1.msra.mxu0 1.0
    %3243 = vmatprep.subr.mxu0 0.0
    %3244 = vmatpush1.msra.mxu0 1.0
    %3245 = vmatprep.subr.mxu0 0.0
    %3246 = vmatpush1.msra.mxu0 1.0
    %3247 = vmatprep.subr.mxu0 0.0
    %3248 = vmatpush1.msra.mxu0 1.0
    %3249 = vmatprep.subr.mxu0 0.0
    %3250 = vmatpush1.msra.mxu0 1.0
    %3251 = vmatprep.subr.mxu0 0.0
    %3252 = vmatpush1.msra.mxu0 1.0
    %3253 = vmatprep.subr.mxu0 0.0
    %3254 = vmatpush1.msra.mxu0 1.0
    %3255 = vmatprep.subr.mxu0 0.0
    %3256 = vmatpush1.msra.mxu0 1.0
    %3257 = vmatprep.subr.mxu0 0.0
    %3258 = vmatpush1.msra.mxu0 1.0
    %3259 = vmatprep.subr.mxu0 0.0
    %3260 = vmatpush1.msra.mxu0 1.0
    %3261 = vmatprep.subr.mxu0 0.0
    %3262 = vmatpush1.msra.mxu0 1.0
    %3263 = vmatprep.subr.mxu0 0.0
    %3264 = vmatpush1.msra.mxu0 1.0
    %3265 = vmatprep.subr.mxu0 0.0
    %3266 = vmatpush1.msra.mxu0 1.0
    %3267 = vmatprep.subr.mxu0 0.0
    %3268 = vmatpush1.msra.mxu0 1.0
    %3269 = vmatprep.subr.mxu0 0.0
    %3270 = vmatpush1.msra.mxu0 1.0
    %3271 = vmatprep.subr.mxu0 0.0
    %3272 = vmatpush1.msra.mxu0 1.0
    %3273 = vmatprep.subr.mxu0 0.0
    %3274 = vmatpush1.msra.mxu0 1.0
    %3275 = vmatprep.subr.mxu0 0.0
    %3276 = vmatpush1.msra.mxu0 1.0
    %3277 = vmatprep.subr.mxu0 0.0
    %3278 = vmatpush1.msra.mxu0 1.0
    %3279 = vmatprep.subr.mxu0 0.0
    %3280 = vmatpush1.msra.mxu0 1.0
    %3281 = vmatprep.subr.mxu0 0.0
    %3282 = vmatpush1.msra.mxu0 1.0
    %3283 = vmatprep.subr.mxu0 0.0
    %3284 = vmatpush1.msra.mxu0 1.0
    %3285 = vmatprep.mubr.f32.mxu0 %v2537
    %3286 = vmatmul.mubr.f32.gmra.mrb[0].mxu0 %v2536
    %v3287 = vpop.f32.mrb[0].mxu0
    %v3288 = vadd.f32 0.0, %v3287
    %v3289 = vpop.f32.mrb[0].mxu0
    %3290 = vdwg.mxu0
    %3291 = vmatprep.subr.mxu0 0.0
    %3292 = vmatpush1.msra.mxu0 1.0
    %3293 = vmatprep.subr.mxu0 0.0
    %3294 = vmatpush1.msra.mxu0 1.0
    %3295 = vmatprep.subr.mxu0 0.0
    %3296 = vmatpush1.msra.mxu0 1.0
    %3297 = vmatprep.subr.mxu0 0.0
    %3298 = vmatpush1.msra.mxu0 1.0
    %3299 = vmatprep.subr.mxu0 0.0
    %3300 = vmatpush1.msra.mxu0 1.0
    %3301 = vmatprep.subr.mxu0 0.0
    %3302 = vmatpush1.msra.mxu0 1.0
    %3303 = vmatprep.subr.mxu0 0.0
    %3304 = vmatpush1.msra.mxu0 1.0
    %3305 = vmatprep.subr.mxu0 0.0
    %3306 = vmatpush1.msra.mxu0 1.0
    %3307 = vmatprep.subr.mxu0 0.0
    %3308 = vmatpush1.msra.mxu0 1.0
    %3309 = vmatprep.subr.mxu0 0.0
    %3310 = vmatpush1.msra.mxu0 1.0
    %3311 = vmatprep.subr.mxu0 0.0
    %3312 = vmatpush1.msra.mxu0 1.0
    %3313 = vmatprep.subr.mxu0 0.0
    %3314 = vmatpush1.msra.mxu0 1.0
    %3315 = vmatprep.subr.mxu0 0.0
    %3316 = vmatpush1.msra.mxu0 1.0
    %3317 = vmatprep.subr.mxu0 0.0
    %3318 = vmatpush1.msra.mxu0 1.0
    %3319 = vmatprep.subr.mxu0 0.0
    %3320 = vmatpush1.msra.mxu0 1.0
    %3321 = vmatprep.subr.mxu0 0.0
    %3322 = vmatpush1.msra.mxu0 1.0
    %3323 = vmatprep.subr.mxu0 0.0
    %3324 = vmatpush1.msra.mxu0 1.0
    %3325 = vmatprep.subr.mxu0 0.0
    %3326 = vmatpush1.msra.mxu0 1.0
    %3327 = vmatprep.subr.mxu0 0.0
    %3328 = vmatpush1.msra.mxu0 1.0
    %3329 = vmatprep.subr.mxu0 0.0
    %3330 = vmatpush1.msra.mxu0 1.0
    %3331 = vmatprep.subr.mxu0 0.0
    %3332 = vmatpush1.msra.mxu0 1.0
    %3333 = vmatprep.subr.mxu0 0.0
    %3334 = vmatpush1.msra.mxu0 1.0
    %3335 = vmatprep.subr.mxu0 0.0
    %3336 = vmatpush1.msra.mxu0 1.0
    %3337 = vmatprep.subr.mxu0 0.0
    %3338 = vmatpush1.msra.mxu0 1.0
    %3339 = vmatprep.subr.mxu0 0.0
    %3340 = vmatpush1.msra.mxu0 1.0
    %3341 = vmatprep.subr.mxu0 0.0
    %3342 = vmatpush1.msra.mxu0 1.0
    %3343 = vmatprep.subr.mxu0 0.0
    %3344 = vmatpush1.msra.mxu0 1.0
    %3345 = vmatprep.subr.mxu0 0.0
    %3346 = vmatpush1.msra.mxu0 1.0
    %3347 = vmatprep.subr.mxu0 0.0
    %3348 = vmatpush1.msra.mxu0 1.0
    %3349 = vmatprep.subr.mxu0 0.0
    %3350 = vmatpush1.msra.mxu0 1.0
    %3351 = vmatprep.subr.mxu0 0.0
    %3352 = vmatpush1.msra.mxu0 1.0
    %3353 = vmatprep.subr.mxu0 0.0
    %3354 = vmatpush1.msra.mxu0 1.0
    %3355 = vmatprep.mubr.f32.mxu0 %v2539
    %3356 = vmatmul.mubr.f32.gmra.mrb[0].mxu0 %v2538
    %v3357 = vpop.f32.mrb[0].mxu0
    %v3358 = vadd.f32 %v3288, %v3357
    %v3359 = vpop.f32.mrb[0].mxu0
    %3360 = vdwg.mxu0
    %3361 = vmatprep.subr.mxu0 0.0
    %3362 = vmatpush1.msra.mxu0 1.0
    %3363 = vmatprep.subr.mxu0 0.0
    %3364 = vmatpush1.msra.mxu0 1.0
    %3365 = vmatprep.subr.mxu0 0.0
    %3366 = vmatpush1.msra.mxu0 1.0
    %3367 = vmatprep.subr.mxu0 0.0
    %3368 = vmatpush1.msra.mxu0 1.0
    %3369 = vmatprep.subr.mxu0 0.0
    %3370 = vmatpush1.msra.mxu0 1.0
    %3371 = vmatprep.subr.mxu0 0.0
    %3372 = vmatpush1.msra.mxu0 1.0
    %3373 = vmatprep.subr.mxu0 0.0
    %3374 = vmatpush1.msra.mxu0 1.0
    %3375 = vmatprep.subr.mxu0 0.0
    %3376 = vmatpush1.msra.mxu0 1.0
    %3377 = vmatprep.subr.mxu0 0.0
    %3378 = vmatpush1.msra.mxu0 1.0
    %3379 = vmatprep.subr.mxu0 0.0
    %3380 = vmatpush1.msra.mxu0 1.0
    %3381 = vmatprep.subr.mxu0 0.0
    %3382 = vmatpush1.msra.mxu0 1.0
    %3383 = vmatprep.subr.mxu0 0.0
    %3384 = vmatpush1.msra.mxu0 1.0
    %3385 = vmatprep.subr.mxu0 0.0
    %3386 = vmatpush1.msra.mxu0 1.0
    %3387 = vmatprep.subr.mxu0 0.0
    %3388 = vmatpush1.msra.mxu0 1.0
    %3389 = vmatprep.subr.mxu0 0.0
    %3390 = vmatpush1.msra.mxu0 1.0
    %3391 = vmatprep.subr.mxu0 0.0
    %3392 = vmatpush1.msra.mxu0 1.0
    %3393 = vmatprep.subr.mxu0 0.0
    %3394 = vmatpush1.msra.mxu0 1.0
    %3395 = vmatprep.subr.mxu0 0.0
    %3396 = vmatpush1.msra.mxu0 1.0
    %3397 = vmatprep.subr.mxu0 0.0
    %3398 = vmatpush1.msra.mxu0 1.0
    %3399 = vmatprep.subr.mxu0 0.0
    %3400 = vmatpush1.msra.mxu0 1.0
    %3401 = vmatprep.subr.mxu0 0.0
    %3402 = vmatpush1.msra.mxu0 1.0
    %3403 = vmatprep.subr.mxu0 0.0
    %3404 = vmatpush1.msra.mxu0 1.0
    %3405 = vmatprep.subr.mxu0 0.0
    %3406 = vmatpush1.msra.mxu0 1.0
    %3407 = vmatprep.subr.mxu0 0.0
    %3408 = vmatpush1.msra.mxu0 1.0
    %3409 = vmatprep.subr.mxu0 0.0
    %3410 = vmatpush1.msra.mxu0 1.0
    %3411 = vmatprep.subr.mxu0 0.0
    %3412 = vmatpush1.msra.mxu0 1.0
    %3413 = vmatprep.subr.mxu0 0.0
    %3414 = vmatpush1.msra.mxu0 1.0
    %3415 = vmatprep.subr.mxu0 0.0
    %3416 = vmatpush1.msra.mxu0 1.0
    %3417 = vmatprep.subr.mxu0 0.0
    %3418 = vmatpush1.msra.mxu0 1.0
    %3419 = vmatprep.subr.mxu0 0.0
    %3420 = vmatpush1.msra.mxu0 1.0
    %3421 = vmatprep.subr.mxu0 0.0
    %3422 = vmatpush1.msra.mxu0 1.0
    %3423 = vmatprep.subr.mxu0 0.0
    %3424 = vmatpush1.msra.mxu0 1.0
    %3425 = vmatprep.mubr.f32.mxu0 %v2541
    %3426 = vmatmul.mubr.f32.gmra.mrb[0].mxu0 %v2540
    %v3427 = vpop.f32.mrb[0].mxu0
    %v3428 = vadd.f32 %v3358, %v3427
    %v3429 = vpop.f32.mrb[0].mxu0
    %3430 = vdwg.mxu0
    %3431 = vmatprep.subr.mxu0 0.0
    %3432 = vmatpush1.msra.mxu0 1.0
    %3433 = vmatprep.subr.mxu0 0.0
    %3434 = vmatpush1.msra.mxu0 1.0
    %3435 = vmatprep.subr.mxu0 0.0
    %3436 = vmatpush1.msra.mxu0 1.0
    %3437 = vmatprep.subr.mxu0 0.0
    %3438 = vmatpush1.msra.mxu0 1.0
    %3439 = vmatprep.subr.mxu0 0.0
    %3440 = vmatpush1.msra.mxu0 1.0
    %3441 = vmatprep.subr.mxu0 0.0
    %3442 = vmatpush1.msra.mxu0 1.0
    %3443 = vmatprep.subr.mxu0 0.0
    %3444 = vmatpush1.msra.mxu0 1.0
    %3445 = vmatprep.subr.mxu0 0.0
    %3446 = vmatpush1.msra.mxu0 1.0
    %3447 = vmatprep.subr.mxu0 0.0
    %3448 = vmatpush1.msra.mxu0 1.0
    %3449 = vmatprep.subr.mxu0 0.0
    %3450 = vmatpush1.msra.mxu0 1.0
    %3451 = vmatprep.subr.mxu0 0.0
    %3452 = vmatpush1.msra.mxu0 1.0
    %3453 = vmatprep.subr.mxu0 0.0
    %3454 = vmatpush1.msra.mxu0 1.0
    %3455 = vmatprep.subr.mxu0 0.0
    %3456 = vmatpush1.msra.mxu0 1.0
    %3457 = vmatprep.subr.mxu0 0.0
    %3458 = vmatpush1.msra.mxu0 1.0
    %3459 = vmatprep.subr.mxu0 0.0
    %3460 = vmatpush1.msra.mxu0 1.0
    %3461 = vmatprep.subr.mxu0 0.0
    %3462 = vmatpush1.msra.mxu0 1.0
    %3463 = vmatprep.subr.mxu0 0.0
    %3464 = vmatpush1.msra.mxu0 1.0
    %3465 = vmatprep.subr.mxu0 0.0
    %3466 = vmatpush1.msra.mxu0 1.0
    %3467 = vmatprep.subr.mxu0 0.0
    %3468 = vmatpush1.msra.mxu0 1.0
    %3469 = vmatprep.subr.mxu0 0.0
    %3470 = vmatpush1.msra.mxu0 1.0
    %3471 = vmatprep.subr.mxu0 0.0
    %3472 = vmatpush1.msra.mxu0 1.0
    %3473 = vmatprep.subr.mxu0 0.0
    %3474 = vmatpush1.msra.mxu0 1.0
    %3475 = vmatprep.subr.mxu0 0.0
    %3476 = vmatpush1.msra.mxu0 1.0
    %3477 = vmatprep.subr.mxu0 0.0
    %3478 = vmatpush1.msra.mxu0 1.0
    %3479 = vmatprep.subr.mxu0 0.0
    %3480 = vmatpush1.msra.mxu0 1.0
    %3481 = vmatprep.subr.mxu0 0.0
    %3482 = vmatpush1.msra.mxu0 1.0
    %3483 = vmatprep.subr.mxu0 0.0
    %3484 = vmatpush1.msra.mxu0 1.0
    %3485 = vmatprep.subr.mxu0 0.0
    %3486 = vmatpush1.msra.mxu0 1.0
    %3487 = vmatprep.subr.mxu0 0.0
    %3488 = vmatpush1.msra.mxu0 1.0
    %3489 = vmatprep.subr.mxu0 0.0
    %3490 = vmatpush1.msra.mxu0 1.0
    %3491 = vmatprep.subr.mxu0 0.0
    %3492 = vmatpush1.msra.mxu0 1.0
    %3493 = vmatprep.subr.mxu0 0.0
    %3494 = vmatpush1.msra.mxu0 1.0
    %3495 = vmatprep.mubr.f32.mxu0 %v2543
    %3496 = vmatmul.mubr.f32.gmra.mrb[0].mxu0 %v2542
    %v3497 = vpop.f32.mrb[0].mxu0
    %v3498 = vadd.f32 %v3428, %v3497
    %v3499 = vpop.f32.mrb[0].mxu0
    %3500 = vdwg.mxu0
    %3501 = vadd.xlane.f32.xlu0 %v3498
    %v3502 = vpop.xlane.xlu0 %3501
    %v3503 = vmul.f32 %v3502, %v988
    %v3504 = vmul.f32 %v3503, 0.0009765625
    %v3505 = vsub.f32 %v2536, %v3504
    %v3506 = vsub.f32 %v2537, %v3504
    %v3507 = vsub.f32 %v2538, %v3504
    %v3508 = vsub.f32 %v2539, %v3504
    %v3509 = vsub.f32 %v2540, %v3504
    %v3510 = vsub.f32 %v2541, %v3504
    %v3511 = vsub.f32 %v2542, %v3504
    %v3512 = vsub.f32 %v2543, %v3504
    %v3513 = vmul.f32 %v3505, %v3505
    %v3514 = vmul.f32 %v3506, %v3506
    %v3515 = vmul.f32 %v3507, %v3507
    %v3516 = vmul.f32 %v3508, %v3508
    %v3517 = vmul.f32 %v3509, %v3509
    %v3518 = vmul.f32 %v3510, %v3510
    %v3519 = vmul.f32 %v3511, %v3511
    %v3520 = vmul.f32 %v3512, %v3512
    %3521 = vmatprep.subr.mxu0 0.0
    %3522 = vmatpush1.msra.mxu0 1.0
    %3523 = vmatprep.subr.mxu0 0.0
    %3524 = vmatpush1.msra.mxu0 1.0
    %3525 = vmatprep.subr.mxu0 0.0
    %3526 = vmatpush1.msra.mxu0 1.0
    %3527 = vmatprep.subr.mxu0 0.0
    %3528 = vmatpush1.msra.mxu0 1.0
    %3529 = vmatprep.subr.mxu0 0.0
    %3530 = vmatpush1.msra.mxu0 1.0
    %3531 = vmatprep.subr.mxu0 0.0
    %3532 = vmatpush1.msra.mxu0 1.0
    %3533 = vmatprep.subr.mxu0 0.0
    %3534 = vmatpush1.msra.mxu0 1.0
    %3535 = vmatprep.subr.mxu0 0.0
    %3536 = vmatpush1.msra.mxu0 1.0
    %3537 = vmatprep.subr.mxu0 0.0
    %3538 = vmatpush1.msra.mxu0 1.0
    %3539 = vmatprep.subr.mxu0 0.0
    %3540 = vmatpush1.msra.mxu0 1.0
    %3541 = vmatprep.subr.mxu0 0.0
    %3542 = vmatpush1.msra.mxu0 1.0
    %3543 = vmatprep.subr.mxu0 0.0
    %3544 = vmatpush1.msra.mxu0 1.0
    %3545 = vmatprep.subr.mxu0 0.0
    %3546 = vmatpush1.msra.mxu0 1.0
    %3547 = vmatprep.subr.mxu0 0.0
    %3548 = vmatpush1.msra.mxu0 1.0
    %3549 = vmatprep.subr.mxu0 0.0
    %3550 = vmatpush1.msra.mxu0 1.0
    %3551 = vmatprep.subr.mxu0 0.0
    %3552 = vmatpush1.msra.mxu0 1.0
    %3553 = vmatprep.subr.mxu0 0.0
    %3554 = vmatpush1.msra.mxu0 1.0
    %3555 = vmatprep.subr.mxu0 0.0
    %3556 = vmatpush1.msra.mxu0 1.0
    %3557 = vmatprep.subr.mxu0 0.0
    %3558 = vmatpush1.msra.mxu0 1.0
    %3559 = vmatprep.subr.mxu0 0.0
    %3560 = vmatpush1.msra.mxu0 1.0
    %3561 = vmatprep.subr.mxu0 0.0
    %3562 = vmatpush1.msra.mxu0 1.0
    %3563 = vmatprep.subr.mxu0 0.0
    %3564 = vmatpush1.msra.mxu0 1.0
    %3565 = vmatprep.subr.mxu0 0.0
    %3566 = vmatpush1.msra.mxu0 1.0
    %3567 = vmatprep.subr.mxu0 0.0
    %3568 = vmatpush1.msra.mxu0 1.0
    %3569 = vmatprep.subr.mxu0 0.0
    %3570 = vmatpush1.msra.mxu0 1.0
    %3571 = vmatprep.subr.mxu0 0.0
    %3572 = vmatpush1.msra.mxu0 1.0
    %3573 = vmatprep.subr.mxu0 0.0
    %3574 = vmatpush1.msra.mxu0 1.0
    %3575 = vmatprep.subr.mxu0 0.0
    %3576 = vmatpush1.msra.mxu0 1.0
    %3577 = vmatprep.subr.mxu0 0.0
    %3578 = vmatpush1.msra.mxu0 1.0
    %3579 = vmatprep.subr.mxu0 0.0
    %3580 = vmatpush1.msra.mxu0 1.0
    %3581 = vmatprep.subr.mxu0 0.0
    %3582 = vmatpush1.msra.mxu0 1.0
    %3583 = vmatprep.subr.mxu0 0.0
    %3584 = vmatpush1.msra.mxu0 1.0
    %3585 = vmatprep.mubr.f32.mxu0 %v3514
    %3586 = vmatmul.mubr.f32.gmra.mrb[0].mxu0 %v3513
    %v3587 = vpop.f32.mrb[0].mxu0
    %v3588 = vadd.f32 0.0, %v3587
    %v3589 = vpop.f32.mrb[0].mxu0
    %3590 = vdwg.mxu0
    %3591 = vmatprep.subr.mxu0 0.0
    %3592 = vmatpush1.msra.mxu0 1.0
    %3593 = vmatprep.subr.mxu0 0.0
    %3594 = vmatpush1.msra.mxu0 1.0
    %3595 = vmatprep.subr.mxu0 0.0
    %3596 = vmatpush1.msra.mxu0 1.0
    %3597 = vmatprep.subr.mxu0 0.0
    %3598 = vmatpush1.msra.mxu0 1.0
    %3599 = vmatprep.subr.mxu0 0.0
    %3600 = vmatpush1.msra.mxu0 1.0
    %3601 = vmatprep.subr.mxu0 0.0
    %3602 = vmatpush1.msra.mxu0 1.0
    %3603 = vmatprep.subr.mxu0 0.0
    %3604 = vmatpush1.msra.mxu0 1.0
    %3605 = vmatprep.subr.mxu0 0.0
    %3606 = vmatpush1.msra.mxu0 1.0
    %3607 = vmatprep.subr.mxu0 0.0
    %3608 = vmatpush1.msra.mxu0 1.0
    %3609 = vmatprep.subr.mxu0 0.0
    %3610 = vmatpush1.msra.mxu0 1.0
    %3611 = vmatprep.subr.mxu0 0.0
    %3612 = vmatpush1.msra.mxu0 1.0
    %3613 = vmatprep.subr.mxu0 0.0
    %3614 = vmatpush1.msra.mxu0 1.0
    %3615 = vmatprep.subr.mxu0 0.0
    %3616 = vmatpush1.msra.mxu0 1.0
    %3617 = vmatprep.subr.mxu0 0.0
    %3618 = vmatpush1.msra.mxu0 1.0
    %3619 = vmatprep.subr.mxu0 0.0
    %3620 = vmatpush1.msra.mxu0 1.0
    %3621 = vmatprep.subr.mxu0 0.0
    %3622 = vmatpush1.msra.mxu0 1.0
    %3623 = vmatprep.subr.mxu0 0.0
    %3624 = vmatpush1.msra.mxu0 1.0
    %3625 = vmatprep.subr.mxu0 0.0
    %3626 = vmatpush1.msra.mxu0 1.0
    %3627 = vmatprep.subr.mxu0 0.0
    %3628 = vmatpush1.msra.mxu0 1.0
    %3629 = vmatprep.subr.mxu0 0.0
    %3630 = vmatpush1.msra.mxu0 1.0
    %3631 = vmatprep.subr.mxu0 0.0
    %3632 = vmatpush1.msra.mxu0 1.0
    %3633 = vmatprep.subr.mxu0 0.0
    %3634 = vmatpush1.msra.mxu0 1.0
    %3635 = vmatprep.subr.mxu0 0.0
    %3636 = vmatpush1.msra.mxu0 1.0
    %3637 = vmatprep.subr.mxu0 0.0
    %3638 = vmatpush1.msra.mxu0 1.0
    %3639 = vmatprep.subr.mxu0 0.0
    %3640 = vmatpush1.msra.mxu0 1.0
    %3641 = vmatprep.subr.mxu0 0.0
    %3642 = vmatpush1.msra.mxu0 1.0
    %3643 = vmatprep.subr.mxu0 0.0
    %3644 = vmatpush1.msra.mxu0 1.0
    %3645 = vmatprep.subr.mxu0 0.0
    %3646 = vmatpush1.msra.mxu0 1.0
    %3647 = vmatprep.subr.mxu0 0.0
    %3648 = vmatpush1.msra.mxu0 1.0
    %3649 = vmatprep.subr.mxu0 0.0
    %3650 = vmatpush1.msra.mxu0 1.0
    %3651 = vmatprep.subr.mxu0 0.0
    %3652 = vmatpush1.msra.mxu0 1.0
    %3653 = vmatprep.subr.mxu0 0.0
    %3654 = vmatpush1.msra.mxu0 1.0
    %3655 = vmatprep.mubr.f32.mxu0 %v3516
    %3656 = vmatmul.mubr.f32.gmra.mrb[0].mxu0 %v3515
    %v3657 = vpop.f32.mrb[0].mxu0
    %v3658 = vadd.f32 %v3588, %v3657
    %v3659 = vpop.f32.mrb[0].mxu0
    %3660 = vdwg.mxu0
    %3661 = vmatprep.subr.mxu0 0.0
    %3662 = vmatpush1.msra.mxu0 1.0
    %3663 = vmatprep.subr.mxu0 0.0
    %3664 = vmatpush1.msra.mxu0 1.0
    %3665 = vmatprep.subr.mxu0 0.0
    %3666 = vmatpush1.msra.mxu0 1.0
    %3667 = vmatprep.subr.mxu0 0.0
    %3668 = vmatpush1.msra.mxu0 1.0
    %3669 = vmatprep.subr.mxu0 0.0
    %3670 = vmatpush1.msra.mxu0 1.0
    %3671 = vmatprep.subr.mxu0 0.0
    %3672 = vmatpush1.msra.mxu0 1.0
    %3673 = vmatprep.subr.mxu0 0.0
    %3674 = vmatpush1.msra.mxu0 1.0
    %3675 = vmatprep.subr.mxu0 0.0
    %3676 = vmatpush1.msra.mxu0 1.0
    %3677 = vmatprep.subr.mxu0 0.0
    %3678 = vmatpush1.msra.mxu0 1.0
    %3679 = vmatprep.subr.mxu0 0.0
    %3680 = vmatpush1.msra.mxu0 1.0
    %3681 = vmatprep.subr.mxu0 0.0
    %3682 = vmatpush1.msra.mxu0 1.0
    %3683 = vmatprep.subr.mxu0 0.0
    %3684 = vmatpush1.msra.mxu0 1.0
    %3685 = vmatprep.subr.mxu0 0.0
    %3686 = vmatpush1.msra.mxu0 1.0
    %3687 = vmatprep.subr.mxu0 0.0
    %3688 = vmatpush1.msra.mxu0 1.0
    %3689 = vmatprep.subr.mxu0 0.0
    %3690 = vmatpush1.msra.mxu0 1.0
    %3691 = vmatprep.subr.mxu0 0.0
    %3692 = vmatpush1.msra.mxu0 1.0
    %3693 = vmatprep.subr.mxu0 0.0
    %3694 = vmatpush1.msra.mxu0 1.0
    %3695 = vmatprep.subr.mxu0 0.0
    %3696 = vmatpush1.msra.mxu0 1.0
    %3697 = vmatprep.subr.mxu0 0.0
    %3698 = vmatpush1.msra.mxu0 1.0
    %3699 = vmatprep.subr.mxu0 0.0
    %3700 = vmatpush1.msra.mxu0 1.0
    %3701 = vmatprep.subr.mxu0 0.0
    %3702 = vmatpush1.msra.mxu0 1.0
    %3703 = vmatprep.subr.mxu0 0.0
    %3704 = vmatpush1.msra.mxu0 1.0
    %3705 = vmatprep.subr.mxu0 0.0
    %3706 = vmatpush1.msra.mxu0 1.0
    %3707 = vmatprep.subr.mxu0 0.0
    %3708 = vmatpush1.msra.mxu0 1.0
    %3709 = vmatprep.subr.mxu0 0.0
    %3710 = vmatpush1.msra.mxu0 1.0
    %3711 = vmatprep.subr.mxu0 0.0
    %3712 = vmatpush1.msra.mxu0 1.0
    %3713 = vmatprep.subr.mxu0 0.0
    %3714 = vmatpush1.msra.mxu0 1.0
    %3715 = vmatprep.subr.mxu0 0.0
    %3716 = vmatpush1.msra.mxu0 1.0
    %3717 = vmatprep.subr.mxu0 0.0
    %3718 = vmatpush1.msra.mxu0 1.0
    %3719 = vmatprep.subr.mxu0 0.0
    %3720 = vmatpush1.msra.mxu0 1.0
    %3721 = vmatprep.subr.mxu0 0.0
    %3722 = vmatpush1.msra.mxu0 1.0
    %3723 = vmatprep.subr.mxu0 0.0
    %3724 = vmatpush1.msra.mxu0 1.0
    %3725 = vmatprep.mubr.f32.mxu0 %v3518
    %3726 = vmatmul.mubr.f32.gmra.mrb[0].mxu0 %v3517
    %v3727 = vpop.f32.mrb[0].mxu0
    %v3728 = vadd.f32 %v3658, %v3727
    %v3729 = vpop.f32.mrb[0].mxu0
    %3730 = vdwg.mxu0
    %3731 = vmatprep.subr.mxu0 0.0
    %3732 = vmatpush1.msra.mxu0 1.0
    %3733 = vmatprep.subr.mxu0 0.0
    %3734 = vmatpush1.msra.mxu0 1.0
    %3735 = vmatprep.subr.mxu0 0.0
    %3736 = vmatpush1.msra.mxu0 1.0
    %3737 = vmatprep.subr.mxu0 0.0
    %3738 = vmatpush1.msra.mxu0 1.0
    %3739 = vmatprep.subr.mxu0 0.0
    %3740 = vmatpush1.msra.mxu0 1.0
    %3741 = vmatprep.subr.mxu0 0.0
    %3742 = vmatpush1.msra.mxu0 1.0
    %3743 = vmatprep.subr.mxu0 0.0
    %3744 = vmatpush1.msra.mxu0 1.0
    %3745 = vmatprep.subr.mxu0 0.0
    %3746 = vmatpush1.msra.mxu0 1.0
    %3747 = vmatprep.subr.mxu0 0.0
    %3748 = vmatpush1.msra.mxu0 1.0
    %3749 = vmatprep.subr.mxu0 0.0
    %3750 = vmatpush1.msra.mxu0 1.0
    %3751 = vmatprep.subr.mxu0 0.0
    %3752 = vmatpush1.msra.mxu0 1.0
    %3753 = vmatprep.subr.mxu0 0.0
    %3754 = vmatpush1.msra.mxu0 1.0
    %3755 = vmatprep.subr.mxu0 0.0
    %3756 = vmatpush1.msra.mxu0 1.0
    %3757 = vmatprep.subr.mxu0 0.0
    %3758 = vmatpush1.msra.mxu0 1.0
    %3759 = vmatprep.subr.mxu0 0.0
    %3760 = vmatpush1.msra.mxu0 1.0
    %3761 = vmatprep.subr.mxu0 0.0
    %3762 = vmatpush1.msra.mxu0 1.0
    %3763 = vmatprep.subr.mxu0 0.0
    %3764 = vmatpush1.msra.mxu0 1.0
    %3765 = vmatprep.subr.mxu0 0.0
    %3766 = vmatpush1.msra.mxu0 1.0
    %3767 = vmatprep.subr.mxu0 0.0
    %3768 = vmatpush1.msra.mxu0 1.0
    %3769 = vmatprep.subr.mxu0 0.0
    %3770 = vmatpush1.msra.mxu0 1.0
    %3771 = vmatprep.subr.mxu0 0.0
    %3772 = vmatpush1.msra.mxu0 1.0
    %3773 = vmatprep.subr.mxu0 0.0
    %3774 = vmatpush1.msra.mxu0 1.0
    %3775 = vmatprep.subr.mxu0 0.0
    %3776 = vmatpush1.msra.mxu0 1.0
    %3777 = vmatprep.subr.mxu0 0.0
    %3778 = vmatpush1.msra.mxu0 1.0
    %3779 = vmatprep.subr.mxu0 0.0
    %3780 = vmatpush1.msra.mxu0 1.0
    %3781 = vmatprep.subr.mxu0 0.0
    %3782 = vmatpush1.msra.mxu0 1.0
    %3783 = vmatprep.subr.mxu0 0.0
    %3784 = vmatpush1.msra.mxu0 1.0
    %3785 = vmatprep.subr.mxu0 0.0
    %3786 = vmatpush1.msra.mxu0 1.0
    %3787 = vmatprep.subr.mxu0 0.0
    %3788 = vmatpush1.msra.mxu0 1.0
    %3789 = vmatprep.subr.mxu0 0.0
    %3790 = vmatpush1.msra.mxu0 1.0
    %3791 = vmatprep.subr.mxu0 0.0
    %3792 = vmatpush1.msra.mxu0 1.0
    %3793 = vmatprep.subr.mxu0 0.0
    %3794 = vmatpush1.msra.mxu0 1.0
    %3795 = vmatprep.mubr.f32.mxu0 %v3520
    %3796 = vmatmul.mubr.f32.gmra.mrb[0].mxu0 %v3519
    %v3797 = vpop.f32.mrb[0].mxu0
    %v3798 = vadd.f32 %v3728, %v3797
    %v3799 = vpop.f32.mrb[0].mxu0
    %3800 = vdwg.mxu0
    %3801 = vadd.xlane.f32.xlu0 %v3798
    %v3802 = vpop.xlane.xlu0 %3801
    %v3803 = vmul.f32 %v3802, %v988
    %v3804 = vmul.f32 %v3803, 0.0009765625
    %v3805 = vadd.f32 %v3804, 1e-05
    %v3806 = vrsqrt.pop %v3805
    %v3807 = vmul.f32 %v3505, %v3806
    %v3808 = vmul.f32 %v3506, %v3806
    %v3809 = vmul.f32 %v3507, %v3806
    %v3810 = vmul.f32 %v3508, %v3806
    %v3811 = vmul.f32 %v3509, %v3806
    %v3812 = vmul.f32 %v3510, %v3806
    %v3813 = vmul.f32 %v3511, %v3806
    %v3814 = vmul.f32 %v3512, %v3806
    %v3815 = vstv %s3220
    %v3816 = vmul.f32 %v3815, %v3807
    %v3817 = vmul.f32 %v3815, %v3808
    %v3818 = vmul.f32 %v3815, %v3809
    %v3819 = vmul.f32 %v3815, %v3810
    %v3820 = vmul.f32 %v3815, %v3811
    %v3821 = vmul.f32 %v3815, %v3812
    %v3822 = vmul.f32 %v3815, %v3813
    %v3823 = vmul.f32 %v3815, %v3814
    %v3824 = vadd.f32 %v3212, %v3816
    %v3825 = vadd.f32 %v3213, %v3817
    %v3826 = vadd.f32 %v3214, %v3818
    %v3827 = vadd.f32 %v3215, %v3819
    %v3828 = vadd.f32 %v3216, %v3820
    %v3829 = vadd.f32 %v3217, %v3821
    %v3830 = vadd.f32 %v3218, %v3822
    %v3831 = vadd.f32 %v3219, %v3823
    %s3832 = sld [smem:[#allocation2 + $0x4]]
    %v3833 = vld [vmem:[%s5] sm:$0xff]
    %v3834 = vmax.f32 %v1293, 0.0
    %v3835 = vmax.f32 %v1294, 0.0
    %v3836 = vmax.f32 %v1295, 0.0
    %v3837 = vmax.f32 %v1296, 0.0
    %v3838 = vmax.f32 %v1297, 0.0
    %v3839 = vmax.f32 %v1298, 0.0
    %v3840 = vmax.f32 %v1299, 0.0
    %v3841 = vmax.f32 %v1300, 0.0
    %v3843 = vsel %vm418, %v3833, 0
    %3845 = vmatprep.subr.mxu0 %v3835
    %3846 = vmatpush1.msra.mxu0 %v3834
    %3847 = vmatprep.subr.mxu0 0.0
    %3848 = vmatpush1.msra.mxu0 0.0
    %3849 = vmatprep.subr.mxu0 0.0
    %3850 = vmatpush1.msra.mxu0 0.0
    %3851 = vmatprep.subr.mxu0 0.0
    %3852 = vmatpush1.msra.mxu0 0.0
    %3853 = vmatprep.subr.mxu0 0.0
    %3854 = vmatpush1.msra.mxu0 0.0
    %3855 = vmatprep.subr.mxu0 0.0
    %3856 = vmatpush1.msra.mxu0 0.0
    %3857 = vmatprep.subr.mxu0 0.0
    %3858 = vmatpush1.msra.mxu0 0.0
    %3859 = vmatprep.subr.mxu0 0.0
    %3860 = vmatpush1.msra.mxu0 0.0
    %3861 = vmatprep.subr.mxu0 0.0
    %3862 = vmatpush1.msra.mxu0 0.0
    %3863 = vmatprep.subr.mxu0 0.0
    %3864 = vmatpush1.msra.mxu0 0.0
    %3865 = vmatprep.subr.mxu0 0.0
    %3866 = vmatpush1.msra.mxu0 0.0
    %3867 = vmatprep.subr.mxu0 0.0
    %3868 = vmatpush1.msra.mxu0 0.0
    %3869 = vmatprep.subr.mxu0 0.0
    %3870 = vmatpush1.msra.mxu0 0.0
    %3871 = vmatprep.subr.mxu0 0.0
    %3872 = vmatpush1.msra.mxu0 0.0
    %3873 = vmatprep.subr.mxu0 0.0
    %3874 = vmatpush1.msra.mxu0 0.0
    %3875 = vmatprep.subr.mxu0 0.0
    %3876 = vmatpush1.msra.mxu0 0.0
    %3877 = vmatprep.subr.mxu0 0.0
    %3878 = vmatpush1.msra.mxu0 0.0
    %3879 = vmatprep.subr.mxu0 0.0
    %3880 = vmatpush1.msra.mxu0 0.0
    %3881 = vmatprep.subr.mxu0 0.0
    %3882 = vmatpush1.msra.mxu0 0.0
    %3883 = vmatprep.subr.mxu0 0.0
    %3884 = vmatpush1.msra.mxu0 0.0
    %3885 = vmatprep.subr.mxu0 0.0
    %3886 = vmatpush1.msra.mxu0 0.0
    %3887 = vmatprep.subr.mxu0 0.0
    %3888 = vmatpush1.msra.mxu0 0.0
    %3889 = vmatprep.subr.mxu0 0.0
    %3890 = vmatpush1.msra.mxu0 0.0
    %3891 = vmatprep.subr.mxu0 0.0
    %3892 = vmatpush1.msra.mxu0 0.0
    %3893 = vmatprep.subr.mxu0 0.0
    %3894 = vmatpush1.msra.mxu0 0.0
    %3895 = vmatprep.subr.mxu0 0.0
    %3896 = vmatpush1.msra.mxu0 0.0
    %3897 = vmatprep.subr.mxu0 0.0
    %3898 = vmatpush1.msra.mxu0 0.0
    %3899 = vmatprep.subr.mxu0 0.0
    %3900 = vmatpush1.msra.mxu0 0.0
    %3901 = vmatprep.subr.mxu0 0.0
    %3902 = vmatpush1.msra.mxu0 0.0
    %3903 = vmatprep.subr.mxu0 0.0
    %3904 = vmatpush1.msra.mxu0 0.0
    %3905 = vmatprep.subr.mxu0 0.0
    %3906 = vmatpush1.msra.mxu0 0.0
    %3907 = vmatprep.subr.mxu0 0.0
    %3908 = vmatpush1.msra.mxu0 0.0
    %3909 = vmatprep.mubr.f32.mxu0 0.0
    %3910 = vmatmul.mubr.f32.gmra.mrb[0].mxu0 %v3843
    %v3911 = vpop.f32.mrb[0].mxu0
    %v3912 = vadd.f32 0.0, %v3911
    %v3913 = vpop.f32.mrb[0].mxu0
    %v3914 = vadd.f32 0.0, %v3913
    %3915 = vdwg.mxu0
    %3916 = vmatprep.subr.mxu0 %v3837
    %3917 = vmatpush1.msra.mxu0 %v3836
    %3918 = vmatprep.subr.mxu0 0.0
    %3919 = vmatpush1.msra.mxu0 0.0
    %3920 = vmatprep.subr.mxu0 0.0
    %3921 = vmatpush1.msra.mxu0 0.0
    %3922 = vmatprep.subr.mxu0 0.0
    %3923 = vmatpush1.msra.mxu0 0.0
    %3924 = vmatprep.subr.mxu0 0.0
    %3925 = vmatpush1.msra.mxu0 0.0
    %3926 = vmatprep.subr.mxu0 0.0
    %3927 = vmatpush1.msra.mxu0 0.0
    %3928 = vmatprep.subr.mxu0 0.0
    %3929 = vmatpush1.msra.mxu0 0.0
    %3930 = vmatprep.subr.mxu0 0.0
    %3931 = vmatpush1.msra.mxu0 0.0
    %3932 = vmatprep.subr.mxu0 0.0
    %3933 = vmatpush1.msra.mxu0 0.0
    %3934 = vmatprep.subr.mxu0 0.0
    %3935 = vmatpush1.msra.mxu0 0.0
    %3936 = vmatprep.subr.mxu0 0.0
    %3937 = vmatpush1.msra.mxu0 0.0
    %3938 = vmatprep.subr.mxu0 0.0
    %3939 = vmatpush1.msra.mxu0 0.0
    %3940 = vmatprep.subr.mxu0 0.0
    %3941 = vmatpush1.msra.mxu0 0.0
    %3942 = vmatprep.subr.mxu0 0.0
    %3943 = vmatpush1.msra.mxu0 0.0
    %3944 = vmatprep.subr.mxu0 0.0
    %3945 = vmatpush1.msra.mxu0 0.0
    %3946 = vmatprep.subr.mxu0 0.0
    %3947 = vmatpush1.msra.mxu0 0.0
    %3948 = vmatprep.subr.mxu0 0.0
    %3949 = vmatpush1.msra.mxu0 0.0
    %3950 = vmatprep.subr.mxu0 0.0
    %3951 = vmatpush1.msra.mxu0 0.0
    %3952 = vmatprep.subr.mxu0 0.0
    %3953 = vmatpush1.msra.mxu0 0.0
    %3954 = vmatprep.subr.mxu0 0.0
    %3955 = vmatpush1.msra.mxu0 0.0
    %3956 = vmatprep.subr.mxu0 0.0
    %3957 = vmatpush1.msra.mxu0 0.0
    %3958 = vmatprep.subr.mxu0 0.0
    %3959 = vmatpush1.msra.mxu0 0.0
    %3960 = vmatprep.subr.mxu0 0.0
    %3961 = vmatpush1.msra.mxu0 0.0
    %3962 = vmatprep.subr.mxu0 0.0
    %3963 = vmatpush1.msra.mxu0 0.0
    %3964 = vmatprep.subr.mxu0 0.0
    %3965 = vmatpush1.msra.mxu0 0.0
    %3966 = vmatprep.subr.mxu0 0.0
    %3967 = vmatpush1.msra.mxu0 0.0
    %3968 = vmatprep.subr.mxu0 0.0
    %3969 = vmatpush1.msra.mxu0 0.0
    %3970 = vmatprep.subr.mxu0 0.0
    %3971 = vmatpush1.msra.mxu0 0.0
    %3972 = vmatprep.subr.mxu0 0.0
    %3973 = vmatpush1.msra.mxu0 0.0
    %3974 = vmatprep.subr.mxu0 0.0
    %3975 = vmatpush1.msra.mxu0 0.0
    %3976 = vmatprep.subr.mxu0 0.0
    %3977 = vmatpush1.msra.mxu0 0.0
    %3978 = vmatprep.subr.mxu0 0.0
    %3979 = vmatpush1.msra.mxu0 0.0
    %3980 = vmatprep.mubr.f32.mxu0 0.0
    %3981 = vmatmul.mubr.f32.gmra.mrb[0].mxu0 %v3843
    %v3982 = vpop.f32.mrb[0].mxu0
    %v3983 = vadd.f32 0.0, %v3982
    %v3984 = vpop.f32.mrb[0].mxu0
    %v3985 = vadd.f32 0.0, %v3984
    %3986 = vdwg.mxu0
    %3987 = vmatprep.subr.mxu0 %v3839
    %3988 = vmatpush1.msra.mxu0 %v3838
    %3989 = vmatprep.subr.mxu0 0.0
    %3990 = vmatpush1.msra.mxu0 0.0
    %3991 = vmatprep.subr.mxu0 0.0
    %3992 = vmatpush1.msra.mxu0 0.0
    %3993 = vmatprep.subr.mxu0 0.0
    %3994 = vmatpush1.msra.mxu0 0.0
    %3995 = vmatprep.subr.mxu0 0.0
    %3996 = vmatpush1.msra.mxu0 0.0
    %3997 = vmatprep.subr.mxu0 0.0
    %3998 = vmatpush1.msra.mxu0 0.0
    %3999 = vmatprep.subr.mxu0 0.0
    %4000 = vmatpush1.msra.mxu0 0.0
    %4001 = vmatprep.subr.mxu0 0.0
    %4002 = vmatpush1.msra.mxu0 0.0
    %4003 = vmatprep.subr.mxu0 0.0
    %4004 = vmatpush1.msra.mxu0 0.0
    %4005 = vmatprep.subr.mxu0 0.0
    %4006 = vmatpush1.msra.mxu0 0.0
    %4007 = vmatprep.subr.mxu0 0.0
    %4008 = vmatpush1.msra.mxu0 0.0
    %4009 = vmatprep.subr.mxu0 0.0
    %4010 = vmatpush1.msra.mxu0 0.0
    %4011 = vmatprep.subr.mxu0 0.0
    %4012 = vmatpush1.msra.mxu0 0.0
    %4013 = vmatprep.subr.mxu0 0.0
    %4014 = vmatpush1.msra.mxu0 0.0
    %4015 = vmatprep.subr.mxu0 0.0
    %4016 = vmatpush1.msra.mxu0 0.0
    %4017 = vmatprep.subr.mxu0 0.0
    %4018 = vmatpush1.msra.mxu0 0.0
    %4019 = vmatprep.subr.mxu0 0.0
    %4020 = vmatpush1.msra.mxu0 0.0
    %4021 = vmatprep.subr.mxu0 0.0
    %4022 = vmatpush1.msra.mxu0 0.0
    %4023 = vmatprep.subr.mxu0 0.0
    %4024 = vmatpush1.msra.mxu0 0.0
    %4025 = vmatprep.subr.mxu0 0.0
    %4026 = vmatpush1.msra.mxu0 0.0
    %4027 = vmatprep.subr.mxu0 0.0
    %4028 = vmatpush1.msra.mxu0 0.0
    %4029 = vmatprep.subr.mxu0 0.0
    %4030 = vmatpush1.msra.mxu0 0.0
    %4031 = vmatprep.subr.mxu0 0.0
    %4032 = vmatpush1.msra.mxu0 0.0
    %4033 = vmatprep.subr.mxu0 0.0
    %4034 = vmatpush1.msra.mxu0 0.0
    %4035 = vmatprep.subr.mxu0 0.0
    %4036 = vmatpush1.msra.mxu0 0.0
    %4037 = vmatprep.subr.mxu0 0.0
    %4038 = vmatpush1.msra.mxu0 0.0
    %4039 = vmatprep.subr.mxu0 0.0
    %4040 = vmatpush1.msra.mxu0 0.0
    %4041 = vmatprep.subr.mxu0 0.0
    %4042 = vmatpush1.msra.mxu0 0.0
    %4043 = vmatprep.subr.mxu0 0.0
    %4044 = vmatpush1.msra.mxu0 0.0
    %4045 = vmatprep.subr.mxu0 0.0
    %4046 = vmatpush1.msra.mxu0 0.0
    %4047 = vmatprep.subr.mxu0 0.0
    %4048 = vmatpush1.msra.mxu0 0.0
    %4049 = vmatprep.subr.mxu0 0.0
    %4050 = vmatpush1.msra.mxu0 0.0
    %4051 = vmatprep.mubr.f32.mxu0 0.0
    %4052 = vmatmul.mubr.f32.gmra.mrb[0].mxu0 %v3843
    %v4053 = vpop.f32.mrb[0].mxu0
    %v4054 = vadd.f32 0.0, %v4053
    %v4055 = vpop.f32.mrb[0].mxu0
    %v4056 = vadd.f32 0.0, %v4055
    %4057 = vdwg.mxu0
    %4058 = vmatprep.subr.mxu0 %v3841
    %4059 = vmatpush1.msra.mxu0 %v3840
    %4060 = vmatprep.subr.mxu0 0.0
    %4061 = vmatpush1.msra.mxu0 0.0
    %4062 = vmatprep.subr.mxu0 0.0
    %4063 = vmatpush1.msra.mxu0 0.0
    %4064 = vmatprep.subr.mxu0 0.0
    %4065 = vmatpush1.msra.mxu0 0.0
    %4066 = vmatprep.subr.mxu0 0.0
    %4067 = vmatpush1.msra.mxu0 0.0
    %4068 = vmatprep.subr.mxu0 0.0
    %4069 = vmatpush1.msra.mxu0 0.0
    %4070 = vmatprep.subr.mxu0 0.0
    %4071 = vmatpush1.msra.mxu0 0.0
    %4072 = vmatprep.subr.mxu0 0.0
    %4073 = vmatpush1.msra.mxu0 0.0
    %4074 = vmatprep.subr.mxu0 0.0
    %4075 = vmatpush1.msra.mxu0 0.0
    %4076 = vmatprep.subr.mxu0 0.0
    %4077 = vmatpush1.msra.mxu0 0.0
    %4078 = vmatprep.subr.mxu0 0.0
    %4079 = vmatpush1.msra.mxu0 0.0
    %4080 = vmatprep.subr.mxu0 0.0
    %4081 = vmatpush1.msra.mxu0 0.0
    %4082 = vmatprep.subr.mxu0 0.0
    %4083 = vmatpush1.msra.mxu0 0.0
    %4084 = vmatprep.subr.mxu0 0.0
    %4085 = vmatpush1.msra.mxu0 0.0
    %4086 = vmatprep.subr.mxu0 0.0
    %4087 = vmatpush1.msra.mxu0 0.0
    %4088 = vmatprep.subr.mxu0 0.0
    %4089 = vmatpush1.msra.mxu0 0.0
    %4090 = vmatprep.subr.mxu0 0.0
    %4091 = vmatpush1.msra.mxu0 0.0
    %4092 = vmatprep.subr.mxu0 0.0
    %4093 = vmatpush1.msra.mxu0 0.0
    %4094 = vmatprep.subr.mxu0 0.0
    %4095 = vmatpush1.msra.mxu0 0.0
    %4096 = vmatprep.subr.mxu0 0.0
    %4097 = vmatpush1.msra.mxu0 0.0
    %4098 = vmatprep.subr.mxu0 0.0
    %4099 = vmatpush1.msra.mxu0 0.0
    %4100 = vmatprep.subr.mxu0 0.0
    %4101 = vmatpush1.msra.mxu0 0.0
    %4102 = vmatprep.subr.mxu0 0.0
    %4103 = vmatpush1.msra.mxu0 0.0
    %4104 = vmatprep.subr.mxu0 0.0
    %4105 = vmatpush1.msra.mxu0 0.0
    %4106 = vmatprep.subr.mxu0 0.0
    %4107 = vmatpush1.msra.mxu0 0.0
    %4108 = vmatprep.subr.mxu0 0.0
    %4109 = vmatpush1.msra.mxu0 0.0
    %4110 = vmatprep.subr.mxu0 0.0
    %4111 = vmatpush1.msra.mxu0 0.0
    %4112 = vmatprep.subr.mxu0 0.0
    %4113 = vmatpush1.msra.mxu0 0.0
    %4114 = vmatprep.subr.mxu0 0.0
    %4115 = vmatpush1.msra.mxu0 0.0
    %4116 = vmatprep.subr.mxu0 0.0
    %4117 = vmatpush1.msra.mxu0 0.0
    %4118 = vmatprep.subr.mxu0 0.0
    %4119 = vmatpush1.msra.mxu0 0.0
    %4120 = vmatprep.subr.mxu0 0.0
    %4121 = vmatpush1.msra.mxu0 0.0
    %4122 = vmatprep.mubr.f32.mxu0 0.0
    %4123 = vmatmul.mubr.f32.gmra.mrb[0].mxu0 %v3843
    %v4124 = vpop.f32.mrb[0].mxu0
    %v4125 = vadd.f32 0.0, %v4124
    %v4126 = vpop.f32.mrb[0].mxu0
    %v4127 = vadd.f32 0.0, %v4126
    %4128 = vdwg.mxu0
    %4129 = vmatprep.subr.mxu0 0.0
    %4130 = vmatpush1.msra.mxu0 1.0
    %4131 = vmatprep.subr.mxu0 0.0
    %4132 = vmatpush1.msra.mxu0 1.0
    %4133 = vmatprep.subr.mxu0 0.0
    %4134 = vmatpush1.msra.mxu0 1.0
    %4135 = vmatprep.subr.mxu0 0.0
    %4136 = vmatpush1.msra.mxu0 1.0
    %4137 = vmatprep.subr.mxu0 0.0
    %4138 = vmatpush1.msra.mxu0 1.0
    %4139 = vmatprep.subr.mxu0 0.0
    %4140 = vmatpush1.msra.mxu0 1.0
    %4141 = vmatprep.subr.mxu0 0.0
    %4142 = vmatpush1.msra.mxu0 1.0
    %4143 = vmatprep.subr.mxu0 0.0
    %4144 = vmatpush1.msra.mxu0 1.0
    %4145 = vmatprep.subr.mxu0 0.0
    %4146 = vmatpush1.msra.mxu0 1.0
    %4147 = vmatprep.subr.mxu0 0.0
    %4148 = vmatpush1.msra.mxu0 1.0
    %4149 = vmatprep.subr.mxu0 0.0
    %4150 = vmatpush1.msra.mxu0 1.0
    %4151 = vmatprep.subr.mxu0 0.0
    %4152 = vmatpush1.msra.mxu0 1.0
    %4153 = vmatprep.subr.mxu0 0.0
    %4154 = vmatpush1.msra.mxu0 1.0
    %4155 = vmatprep.subr.mxu0 0.0
    %4156 = vmatpush1.msra.mxu0 1.0
    %4157 = vmatprep.subr.mxu0 0.0
    %4158 = vmatpush1.msra.mxu0 1.0
    %4159 = vmatprep.subr.mxu0 0.0
    %4160 = vmatpush1.msra.mxu0 1.0
    %4161 = vmatprep.subr.mxu0 0.0
    %4162 = vmatpush1.msra.mxu0 1.0
    %4163 = vmatprep.subr.mxu0 0.0
    %4164 = vmatpush1.msra.mxu0 1.0
    %4165 = vmatprep.subr.mxu0 0.0
    %4166 = vmatpush1.msra.mxu0 1.0
    %4167 = vmatprep.subr.mxu0 0.0
    %4168 = vmatpush1.msra.mxu0 1.0
    %4169 = vmatprep.subr.mxu0 0.0
    %4170 = vmatpush1.msra.mxu0 1.0
    %4171 = vmatprep.subr.mxu0 0.0
    %4172 = vmatpush1.msra.mxu0 1.0
    %4173 = vmatprep.subr.mxu0 0.0
    %4174 = vmatpush1.msra.mxu0 1.0
    %4175 = vmatprep.subr.mxu0 0.0
    %4176 = vmatpush1.msra.mxu0 1.0
    %4177 = vmatprep.subr.mxu0 0.0
    %4178 = vmatpush1.msra.mxu0 1.0
    %4179 = vmatprep.subr.mxu0 0.0
    %4180 = vmatpush1.msra.mxu0 1.0
    %4181 = vmatprep.subr.mxu0 0.0
    %4182 = vmatpush1.msra.mxu0 1.0
    %4183 = vmatprep.subr.mxu0 0.0
    %4184 = vmatpush1.msra.mxu0 1.0
    %4185 = vmatprep.subr.mxu0 0.0
    %4186 = vmatpush1.msra.mxu0 1.0
    %4187 = vmatprep.subr.mxu0 0.0
    %4188 = vmatpush1.msra.mxu0 1.0
    %4189 = vmatprep.subr.mxu0 0.0
    %4190 = vmatpush1.msra.mxu0 1.0
    %4191 = vmatprep.subr.mxu0 0.0
    %4192 = vmatpush1.msra.mxu0 1.0
    %4193 = vmatprep.mubr.f32.mxu0 %v3914
    %4194 = vmatmul.mubr.f32.gmra.mrb[0].mxu0 %v3912
    %v4195 = vpop.f32.mrb[0].mxu0
    %v4196 = vadd.f32 0.0, %v4195
    %v4197 = vpop.f32.mrb[0].mxu0
    %4198 = vdwg.mxu0
    %4199 = vmatprep.subr.mxu0 0.0
    %4200 = vmatpush1.msra.mxu0 1.0
    %4201 = vmatprep.subr.mxu0 0.0
    %4202 = vmatpush1.msra.mxu0 1.0
    %4203 = vmatprep.subr.mxu0 0.0
    %4204 = vmatpush1.msra.mxu0 1.0
    %4205 = vmatprep.subr.mxu0 0.0
    %4206 = vmatpush1.msra.mxu0 1.0
    %4207 = vmatprep.subr.mxu0 0.0
    %4208 = vmatpush1.msra.mxu0 1.0
    %4209 = vmatprep.subr.mxu0 0.0
    %4210 = vmatpush1.msra.mxu0 1.0
    %4211 = vmatprep.subr.mxu0 0.0
    %4212 = vmatpush1.msra.mxu0 1.0
    %4213 = vmatprep.subr.mxu0 0.0
    %4214 = vmatpush1.msra.mxu0 1.0
    %4215 = vmatprep.subr.mxu0 0.0
    %4216 = vmatpush1.msra.mxu0 1.0
    %4217 = vmatprep.subr.mxu0 0.0
    %4218 = vmatpush1.msra.mxu0 1.0
    %4219 = vmatprep.subr.mxu0 0.0
    %4220 = vmatpush1.msra.mxu0 1.0
    %4221 = vmatprep.subr.mxu0 0.0
    %4222 = vmatpush1.msra.mxu0 1.0
    %4223 = vmatprep.subr.mxu0 0.0
    %4224 = vmatpush1.msra.mxu0 1.0
    %4225 = vmatprep.subr.mxu0 0.0
    %4226 = vmatpush1.msra.mxu0 1.0
    %4227 = vmatprep.subr.mxu0 0.0
    %4228 = vmatpush1.msra.mxu0 1.0
    %4229 = vmatprep.subr.mxu0 0.0
    %4230 = vmatpush1.msra.mxu0 1.0
    %4231 = vmatprep.subr.mxu0 0.0
    %4232 = vmatpush1.msra.mxu0 1.0
    %4233 = vmatprep.subr.mxu0 0.0
    %4234 = vmatpush1.msra.mxu0 1.0
    %4235 = vmatprep.subr.mxu0 0.0
    %4236 = vmatpush1.msra.mxu0 1.0
    %4237 = vmatprep.subr.mxu0 0.0
    %4238 = vmatpush1.msra.mxu0 1.0
    %4239 = vmatprep.subr.mxu0 0.0
    %4240 = vmatpush1.msra.mxu0 1.0
    %4241 = vmatprep.subr.mxu0 0.0
    %4242 = vmatpush1.msra.mxu0 1.0
    %4243 = vmatprep.subr.mxu0 0.0
    %4244 = vmatpush1.msra.mxu0 1.0
    %4245 = vmatprep.subr.mxu0 0.0
    %4246 = vmatpush1.msra.mxu0 1.0
    %4247 = vmatprep.subr.mxu0 0.0
    %4248 = vmatpush1.msra.mxu0 1.0
    %4249 = vmatprep.subr.mxu0 0.0
    %4250 = vmatpush1.msra.mxu0 1.0
    %4251 = vmatprep.subr.mxu0 0.0
    %4252 = vmatpush1.msra.mxu0 1.0
    %4253 = vmatprep.subr.mxu0 0.0
    %4254 = vmatpush1.msra.mxu0 1.0
    %4255 = vmatprep.subr.mxu0 0.0
    %4256 = vmatpush1.msra.mxu0 1.0
    %4257 = vmatprep.subr.mxu0 0.0
    %4258 = vmatpush1.msra.mxu0 1.0
    %4259 = vmatprep.subr.mxu0 0.0
    %4260 = vmatpush1.msra.mxu0 1.0
    %4261 = vmatprep.subr.mxu0 0.0
    %4262 = vmatpush1.msra.mxu0 1.0
    %4263 = vmatprep.mubr.f32.mxu0 %v3985
    %4264 = vmatmul.mubr.f32.gmra.mrb[0].mxu0 %v3983
    %v4265 = vpop.f32.mrb[0].mxu0
    %v4266 = vadd.f32 %v4196, %v4265
    %v4267 = vpop.f32.mrb[0].mxu0
    %4268 = vdwg.mxu0
    %4269 = vmatprep.subr.mxu0 0.0
    %4270 = vmatpush1.msra.mxu0 1.0
    %4271 = vmatprep.subr.mxu0 0.0
    %4272 = vmatpush1.msra.mxu0 1.0
    %4273 = vmatprep.subr.mxu0 0.0
    %4274 = vmatpush1.msra.mxu0 1.0
    %4275 = vmatprep.subr.mxu0 0.0
    %4276 = vmatpush1.msra.mxu0 1.0
    %4277 = vmatprep.subr.mxu0 0.0
    %4278 = vmatpush1.msra.mxu0 1.0
    %4279 = vmatprep.subr.mxu0 0.0
    %4280 = vmatpush1.msra.mxu0 1.0
    %4281 = vmatprep.subr.mxu0 0.0
    %4282 = vmatpush1.msra.mxu0 1.0
    %4283 = vmatprep.subr.mxu0 0.0
    %4284 = vmatpush1.msra.mxu0 1.0
    %4285 = vmatprep.subr.mxu0 0.0
    %4286 = vmatpush1.msra.mxu0 1.0
    %4287 = vmatprep.subr.mxu0 0.0
    %4288 = vmatpush1.msra.mxu0 1.0
    %4289 = vmatprep.subr.mxu0 0.0
    %4290 = vmatpush1.msra.mxu0 1.0
    %4291 = vmatprep.subr.mxu0 0.0
    %4292 = vmatpush1.msra.mxu0 1.0
    %4293 = vmatprep.subr.mxu0 0.0
    %4294 = vmatpush1.msra.mxu0 1.0
    %4295 = vmatprep.subr.mxu0 0.0
    %4296 = vmatpush1.msra.mxu0 1.0
    %4297 = vmatprep.subr.mxu0 0.0
    %4298 = vmatpush1.msra.mxu0 1.0
    %4299 = vmatprep.subr.mxu0 0.0
    %4300 = vmatpush1.msra.mxu0 1.0
    %4301 = vmatprep.subr.mxu0 0.0
    %4302 = vmatpush1.msra.mxu0 1.0
    %4303 = vmatprep.subr.mxu0 0.0
    %4304 = vmatpush1.msra.mxu0 1.0
    %4305 = vmatprep.subr.mxu0 0.0
    %4306 = vmatpush1.msra.mxu0 1.0
    %4307 = vmatprep.subr.mxu0 0.0
    %4308 = vmatpush1.msra.mxu0 1.0
    %4309 = vmatprep.subr.mxu0 0.0
    %4310 = vmatpush1.msra.mxu0 1.0
    %4311 = vmatprep.subr.mxu0 0.0
    %4312 = vmatpush1.msra.mxu0 1.0
    %4313 = vmatprep.subr.mxu0 0.0
    %4314 = vmatpush1.msra.mxu0 1.0
    %4315 = vmatprep.subr.mxu0 0.0
    %4316 = vmatpush1.msra.mxu0 1.0
    %4317 = vmatprep.subr.mxu0 0.0
    %4318 = vmatpush1.msra.mxu0 1.0
    %4319 = vmatprep.subr.mxu0 0.0
    %4320 = vmatpush1.msra.mxu0 1.0
    %4321 = vmatprep.subr.mxu0 0.0
    %4322 = vmatpush1.msra.mxu0 1.0
    %4323 = vmatprep.subr.mxu0 0.0
    %4324 = vmatpush1.msra.mxu0 1.0
    %4325 = vmatprep.subr.mxu0 0.0
    %4326 = vmatpush1.msra.mxu0 1.0
    %4327 = vmatprep.subr.mxu0 0.0
    %4328 = vmatpush1.msra.mxu0 1.0
    %4329 = vmatprep.subr.mxu0 0.0
    %4330 = vmatpush1.msra.mxu0 1.0
    %4331 = vmatprep.subr.mxu0 0.0
    %4332 = vmatpush1.msra.mxu0 1.0
    %4333 = vmatprep.mubr.f32.mxu0 %v4056
    %4334 = vmatmul.mubr.f32.gmra.mrb[0].mxu0 %v4054
    %v4335 = vpop.f32.mrb[0].mxu0
    %v4336 = vadd.f32 %v4266, %v4335
    %v4337 = vpop.f32.mrb[0].mxu0
    %4338 = vdwg.mxu0
    %4339 = vmatprep.subr.mxu0 0.0
    %4340 = vmatpush1.msra.mxu0 1.0
    %4341 = vmatprep.subr.mxu0 0.0
    %4342 = vmatpush1.msra.mxu0 1.0
    %4343 = vmatprep.subr.mxu0 0.0
    %4344 = vmatpush1.msra.mxu0 1.0
    %4345 = vmatprep.subr.mxu0 0.0
    %4346 = vmatpush1.msra.mxu0 1.0
    %4347 = vmatprep.subr.mxu0 0.0
    %4348 = vmatpush1.msra.mxu0 1.0
    %4349 = vmatprep.subr.mxu0 0.0
    %4350 = vmatpush1.msra.mxu0 1.0
    %4351 = vmatprep.subr.mxu0 0.0
    %4352 = vmatpush1.msra.mxu0 1.0
    %4353 = vmatprep.subr.mxu0 0.0
    %4354 = vmatpush1.msra.mxu0 1.0
    %4355 = vmatprep.subr.mxu0 0.0
    %4356 = vmatpush1.msra.mxu0 1.0
    %4357 = vmatprep.subr.mxu0 0.0
    %4358 = vmatpush1.msra.mxu0 1.0
    %4359 = vmatprep.subr.mxu0 0.0
    %4360 = vmatpush1.msra.mxu0 1.0
    %4361 = vmatprep.subr.mxu0 0.0
    %4362 = vmatpush1.msra.mxu0 1.0
    %4363 = vmatprep.subr.mxu0 0.0
    %4364 = vmatpush1.msra.mxu0 1.0
    %4365 = vmatprep.subr.mxu0 0.0
    %4366 = vmatpush1.msra.mxu0 1.0
    %4367 = vmatprep.subr.mxu0 0.0
    %4368 = vmatpush1.msra.mxu0 1.0
    %4369 = vmatprep.subr.mxu0 0.0
    %4370 = vmatpush1.msra.mxu0 1.0
    %4371 = vmatprep.subr.mxu0 0.0
    %4372 = vmatpush1.msra.mxu0 1.0
    %4373 = vmatprep.subr.mxu0 0.0
    %4374 = vmatpush1.msra.mxu0 1.0
    %4375 = vmatprep.subr.mxu0 0.0
    %4376 = vmatpush1.msra.mxu0 1.0
    %4377 = vmatprep.subr.mxu0 0.0
    %4378 = vmatpush1.msra.mxu0 1.0
    %4379 = vmatprep.subr.mxu0 0.0
    %4380 = vmatpush1.msra.mxu0 1.0
    %4381 = vmatprep.subr.mxu0 0.0
    %4382 = vmatpush1.msra.mxu0 1.0
    %4383 = vmatprep.subr.mxu0 0.0
    %4384 = vmatpush1.msra.mxu0 1.0
    %4385 = vmatprep.subr.mxu0 0.0
    %4386 = vmatpush1.msra.mxu0 1.0
    %4387 = vmatprep.subr.mxu0 0.0
    %4388 = vmatpush1.msra.mxu0 1.0
    %4389 = vmatprep.subr.mxu0 0.0
    %4390 = vmatpush1.msra.mxu0 1.0
    %4391 = vmatprep.subr.mxu0 0.0
    %4392 = vmatpush1.msra.mxu0 1.0
    %4393 = vmatprep.subr.mxu0 0.0
    %4394 = vmatpush1.msra.mxu0 1.0
    %4395 = vmatprep.subr.mxu0 0.0
    %4396 = vmatpush1.msra.mxu0 1.0
    %4397 = vmatprep.subr.mxu0 0.0
    %4398 = vmatpush1.msra.mxu0 1.0
    %4399 = vmatprep.subr.mxu0 0.0
    %4400 = vmatpush1.msra.mxu0 1.0
    %4401 = vmatprep.subr.mxu0 0.0
    %4402 = vmatpush1.msra.mxu0 1.0
    %4403 = vmatprep.mubr.f32.mxu0 %v4127
    %4404 = vmatmul.mubr.f32.gmra.mrb[0].mxu0 %v4125
    %v4405 = vpop.f32.mrb[0].mxu0
    %v4406 = vadd.f32 %v4336, %v4405
    %v4407 = vpop.f32.mrb[0].mxu0
    %4408 = vdwg.mxu0
    %4409 = vadd.xlane.f32.xlu0 %v4406
    %v4410 = vpop.xlane.xlu0 %4409
    %v4411 = vmul.f32 %v4410, %v988
    %v4412 = vmul.f32 %v4411, 0.0009765625
    %v4413 = vsub.f32 %v3912, %v4412
    %v4414 = vsub.f32 %v3914, %v4412
    %v4415 = vsub.f32 %v3983, %v4412
    %v4416 = vsub.f32 %v3985, %v4412
    %v4417 = vsub.f32 %v4054, %v4412
    %v4418 = vsub.f32 %v4056, %v4412
    %v4419 = vsub.f32 %v4125, %v4412
    %v4420 = vsub.f32 %v4127, %v4412
    %v4421 = vmul.f32 %v4413, %v4413
    %v4422 = vmul.f32 %v4414, %v4414
    %v4423 = vmul.f32 %v4415, %v4415
    %v4424 = vmul.f32 %v4416, %v4416
    %v4425 = vmul.f32 %v4417, %v4417
    %v4426 = vmul.f32 %v4418, %v4418
    %v4427 = vmul.f32 %v4419, %v4419
    %v4428 = vmul.f32 %v4420, %v4420
    %4429 = vmatprep.subr.mxu0 0.0
    %4430 = vmatpush1.msra.mxu0 1.0
    %4431 = vmatprep.subr.mxu0 0.0
    %4432 = vmatpush1.msra.mxu0 1.0
    %4433 = vmatprep.subr.mxu0 0.0
    %4434 = vmatpush1.msra.mxu0 1.0
    %4435 = vmatprep.subr.mxu0 0.0
    %4436 = vmatpush1.msra.mxu0 1.0
    %4437 = vmatprep.subr.mxu0 0.0
    %4438 = vmatpush1.msra.mxu0 1.0
    %4439 = vmatprep.subr.mxu0 0.0
    %4440 = vmatpush1.msra.mxu0 1.0
    %4441 = vmatprep.subr.mxu0 0.0
    %4442 = vmatpush1.msra.mxu0 1.0
    %4443 = vmatprep.subr.mxu0 0.0
    %4444 = vmatpush1.msra.mxu0 1.0
    %4445 = vmatprep.subr.mxu0 0.0
    %4446 = vmatpush1.msra.mxu0 1.0
    %4447 = vmatprep.subr.mxu0 0.0
    %4448 = vmatpush1.msra.mxu0 1.0
    %4449 = vmatprep.subr.mxu0 0.0
    %4450 = vmatpush1.msra.mxu0 1.0
    %4451 = vmatprep.subr.mxu0 0.0
    %4452 = vmatpush1.msra.mxu0 1.0
    %4453 = vmatprep.subr.mxu0 0.0
    %4454 = vmatpush1.msra.mxu0 1.0
    %4455 = vmatprep.subr.mxu0 0.0
    %4456 = vmatpush1.msra.mxu0 1.0
    %4457 = vmatprep.subr.mxu0 0.0
    %4458 = vmatpush1.msra.mxu0 1.0
    %4459 = vmatprep.subr.mxu0 0.0
    %4460 = vmatpush1.msra.mxu0 1.0
    %4461 = vmatprep.subr.mxu0 0.0
    %4462 = vmatpush1.msra.mxu0 1.0
    %4463 = vmatprep.subr.mxu0 0.0
    %4464 = vmatpush1.msra.mxu0 1.0
    %4465 = vmatprep.subr.mxu0 0.0
    %4466 = vmatpush1.msra.mxu0 1.0
    %4467 = vmatprep.subr.mxu0 0.0
    %4468 = vmatpush1.msra.mxu0 1.0
    %4469 = vmatprep.subr.mxu0 0.0
    %4470 = vmatpush1.msra.mxu0 1.0
    %4471 = vmatprep.subr.mxu0 0.0
    %4472 = vmatpush1.msra.mxu0 1.0
    %4473 = vmatprep.subr.mxu0 0.0
    %4474 = vmatpush1.msra.mxu0 1.0
    %4475 = vmatprep.subr.mxu0 0.0
    %4476 = vmatpush1.msra.mxu0 1.0
    %4477 = vmatprep.subr.mxu0 0.0
    %4478 = vmatpush1.msra.mxu0 1.0
    %4479 = vmatprep.subr.mxu0 0.0
    %4480 = vmatpush1.msra.mxu0 1.0
    %4481 = vmatprep.subr.mxu0 0.0
    %4482 = vmatpush1.msra.mxu0 1.0
    %4483 = vmatprep.subr.mxu0 0.0
    %4484 = vmatpush1.msra.mxu0 1.0
    %4485 = vmatprep.subr.mxu0 0.0
    %4486 = vmatpush1.msra.mxu0 1.0
    %4487 = vmatprep.subr.mxu0 0.0
    %4488 = vmatpush1.msra.mxu0 1.0
    %4489 = vmatprep.subr.mxu0 0.0
    %4490 = vmatpush1.msra.mxu0 1.0
    %4491 = vmatprep.subr.mxu0 0.0
    %4492 = vmatpush1.msra.mxu0 1.0
    %4493 = vmatprep.mubr.f32.mxu0 %v4422
    %4494 = vmatmul.mubr.f32.gmra.mrb[0].mxu0 %v4421
    %v4495 = vpop.f32.mrb[0].mxu0
    %v4496 = vadd.f32 0.0, %v4495
    %v4497 = vpop.f32.mrb[0].mxu0
    %4498 = vdwg.mxu0
    %4499 = vmatprep.subr.mxu0 0.0
    %4500 = vmatpush1.msra.mxu0 1.0
    %4501 = vmatprep.subr.mxu0 0.0
    %4502 = vmatpush1.msra.mxu0 1.0
    %4503 = vmatprep.subr.mxu0 0.0
    %4504 = vmatpush1.msra.mxu0 1.0
    %4505 = vmatprep.subr.mxu0 0.0
    %4506 = vmatpush1.msra.mxu0 1.0
    %4507 = vmatprep.subr.mxu0 0.0
    %4508 = vmatpush1.msra.mxu0 1.0
    %4509 = vmatprep.subr.mxu0 0.0
    %4510 = vmatpush1.msra.mxu0 1.0
    %4511 = vmatprep.subr.mxu0 0.0
    %4512 = vmatpush1.msra.mxu0 1.0
    %4513 = vmatprep.subr.mxu0 0.0
    %4514 = vmatpush1.msra.mxu0 1.0
    %4515 = vmatprep.subr.mxu0 0.0
    %4516 = vmatpush1.msra.mxu0 1.0
    %4517 = vmatprep.subr.mxu0 0.0
    %4518 = vmatpush1.msra.mxu0 1.0
    %4519 = vmatprep.subr.mxu0 0.0
    %4520 = vmatpush1.msra.mxu0 1.0
    %4521 = vmatprep.subr.mxu0 0.0
    %4522 = vmatpush1.msra.mxu0 1.0
    %4523 = vmatprep.subr.mxu0 0.0
    %4524 = vmatpush1.msra.mxu0 1.0
    %4525 = vmatprep.subr.mxu0 0.0
    %4526 = vmatpush1.msra.mxu0 1.0
    %4527 = vmatprep.subr.mxu0 0.0
    %4528 = vmatpush1.msra.mxu0 1.0
    %4529 = vmatprep.subr.mxu0 0.0
    %4530 = vmatpush1.msra.mxu0 1.0
    %4531 = vmatprep.subr.mxu0 0.0
    %4532 = vmatpush1.msra.mxu0 1.0
    %4533 = vmatprep.subr.mxu0 0.0
    %4534 = vmatpush1.msra.mxu0 1.0
    %4535 = vmatprep.subr.mxu0 0.0
    %4536 = vmatpush1.msra.mxu0 1.0
    %4537 = vmatprep.subr.mxu0 0.0
    %4538 = vmatpush1.msra.mxu0 1.0
    %4539 = vmatprep.subr.mxu0 0.0
    %4540 = vmatpush1.msra.mxu0 1.0
    %4541 = vmatprep.subr.mxu0 0.0
    %4542 = vmatpush1.msra.mxu0 1.0
    %4543 = vmatprep.subr.mxu0 0.0
    %4544 = vmatpush1.msra.mxu0 1.0
    %4545 = vmatprep.subr.mxu0 0.0
    %4546 = vmatpush1.msra.mxu0 1.0
    %4547 = vmatprep.subr.mxu0 0.0
    %4548 = vmatpush1.msra.mxu0 1.0
    %4549 = vmatprep.subr.mxu0 0.0
    %4550 = vmatpush1.msra.mxu0 1.0
    %4551 = vmatprep.subr.mxu0 0.0
    %4552 = vmatpush1.msra.mxu0 1.0
    %4553 = vmatprep.subr.mxu0 0.0
    %4554 = vmatpush1.msra.mxu0 1.0
    %4555 = vmatprep.subr.mxu0 0.0
    %4556 = vmatpush1.msra.mxu0 1.0
    %4557 = vmatprep.subr.mxu0 0.0
    %4558 = vmatpush1.msra.mxu0 1.0
    %4559 = vmatprep.subr.mxu0 0.0
    %4560 = vmatpush1.msra.mxu0 1.0
    %4561 = vmatprep.subr.mxu0 0.0
    %4562 = vmatpush1.msra.mxu0 1.0
    %4563 = vmatprep.mubr.f32.mxu0 %v4424
    %4564 = vmatmul.mubr.f32.gmra.mrb[0].mxu0 %v4423
    %v4565 = vpop.f32.mrb[0].mxu0
    %v4566 = vadd.f32 %v4496, %v4565
    %v4567 = vpop.f32.mrb[0].mxu0
    %4568 = vdwg.mxu0
    %4569 = vmatprep.subr.mxu0 0.0
    %4570 = vmatpush1.msra.mxu0 1.0
    %4571 = vmatprep.subr.mxu0 0.0
    %4572 = vmatpush1.msra.mxu0 1.0
    %4573 = vmatprep.subr.mxu0 0.0
    %4574 = vmatpush1.msra.mxu0 1.0
    %4575 = vmatprep.subr.mxu0 0.0
    %4576 = vmatpush1.msra.mxu0 1.0
    %4577 = vmatprep.subr.mxu0 0.0
    %4578 = vmatpush1.msra.mxu0 1.0
    %4579 = vmatprep.subr.mxu0 0.0
    %4580 = vmatpush1.msra.mxu0 1.0
    %4581 = vmatprep.subr.mxu0 0.0
    %4582 = vmatpush1.msra.mxu0 1.0
    %4583 = vmatprep.subr.mxu0 0.0
    %4584 = vmatpush1.msra.mxu0 1.0
    %4585 = vmatprep.subr.mxu0 0.0
    %4586 = vmatpush1.msra.mxu0 1.0
    %4587 = vmatprep.subr.mxu0 0.0
    %4588 = vmatpush1.msra.mxu0 1.0
    %4589 = vmatprep.subr.mxu0 0.0
    %4590 = vmatpush1.msra.mxu0 1.0
    %4591 = vmatprep.subr.mxu0 0.0
    %4592 = vmatpush1.msra.mxu0 1.0
    %4593 = vmatprep.subr.mxu0 0.0
    %4594 = vmatpush1.msra.mxu0 1.0
    %4595 = vmatprep.subr.mxu0 0.0
    %4596 = vmatpush1.msra.mxu0 1.0
    %4597 = vmatprep.subr.mxu0 0.0
    %4598 = vmatpush1.msra.mxu0 1.0
    %4599 = vmatprep.subr.mxu0 0.0
    %4600 = vmatpush1.msra.mxu0 1.0
    %4601 = vmatprep.subr.mxu0 0.0
    %4602 = vmatpush1.msra.mxu0 1.0
    %4603 = vmatprep.subr.mxu0 0.0
    %4604 = vmatpush1.msra.mxu0 1.0
    %4605 = vmatprep.subr.mxu0 0.0
    %4606 = vmatpush1.msra.mxu0 1.0
    %4607 = vmatprep.subr.mxu0 0.0
    %4608 = vmatpush1.msra.mxu0 1.0
    %4609 = vmatprep.subr.mxu0 0.0
    %4610 = vmatpush1.msra.mxu0 1.0
    %4611 = vmatprep.subr.mxu0 0.0
    %4612 = vmatpush1.msra.mxu0 1.0
    %4613 = vmatprep.subr.mxu0 0.0
    %4614 = vmatpush1.msra.mxu0 1.0
    %4615 = vmatprep.subr.mxu0 0.0
    %4616 = vmatpush1.msra.mxu0 1.0
    %4617 = vmatprep.subr.mxu0 0.0
    %4618 = vmatpush1.msra.mxu0 1.0
    %4619 = vmatprep.subr.mxu0 0.0
    %4620 = vmatpush1.msra.mxu0 1.0
    %4621 = vmatprep.subr.mxu0 0.0
    %4622 = vmatpush1.msra.mxu0 1.0
    %4623 = vmatprep.subr.mxu0 0.0
    %4624 = vmatpush1.msra.mxu0 1.0
    %4625 = vmatprep.subr.mxu0 0.0
    %4626 = vmatpush1.msra.mxu0 1.0
    %4627 = vmatprep.subr.mxu0 0.0
    %4628 = vmatpush1.msra.mxu0 1.0
    %4629 = vmatprep.subr.mxu0 0.0
    %4630 = vmatpush1.msra.mxu0 1.0
    %4631 = vmatprep.subr.mxu0 0.0
    %4632 = vmatpush1.msra.mxu0 1.0
    %4633 = vmatprep.mubr.f32.mxu0 %v4426
    %4634 = vmatmul.mubr.f32.gmra.mrb[0].mxu0 %v4425
    %v4635 = vpop.f32.mrb[0].mxu0
    %v4636 = vadd.f32 %v4566, %v4635
    %v4637 = vpop.f32.mrb[0].mxu0
    %4638 = vdwg.mxu0
    %4639 = vmatprep.subr.mxu0 0.0
    %4640 = vmatpush1.msra.mxu0 1.0
    %4641 = vmatprep.subr.mxu0 0.0
    %4642 = vmatpush1.msra.mxu0 1.0
    %4643 = vmatprep.subr.mxu0 0.0
    %4644 = vmatpush1.msra.mxu0 1.0
    %4645 = vmatprep.subr.mxu0 0.0
    %4646 = vmatpush1.msra.mxu0 1.0
    %4647 = vmatprep.subr.mxu0 0.0
    %4648 = vmatpush1.msra.mxu0 1.0
    %4649 = vmatprep.subr.mxu0 0.0
    %4650 = vmatpush1.msra.mxu0 1.0
    %4651 = vmatprep.subr.mxu0 0.0
    %4652 = vmatpush1.msra.mxu0 1.0
    %4653 = vmatprep.subr.mxu0 0.0
    %4654 = vmatpush1.msra.mxu0 1.0
    %4655 = vmatprep.subr.mxu0 0.0
    %4656 = vmatpush1.msra.mxu0 1.0
    %4657 = vmatprep.subr.mxu0 0.0
    %4658 = vmatpush1.msra.mxu0 1.0
    %4659 = vmatprep.subr.mxu0 0.0
    %4660 = vmatpush1.msra.mxu0 1.0
    %4661 = vmatprep.subr.mxu0 0.0
    %4662 = vmatpush1.msra.mxu0 1.0
    %4663 = vmatprep.subr.mxu0 0.0
    %4664 = vmatpush1.msra.mxu0 1.0
    %4665 = vmatprep.subr.mxu0 0.0
    %4666 = vmatpush1.msra.mxu0 1.0
    %4667 = vmatprep.subr.mxu0 0.0
    %4668 = vmatpush1.msra.mxu0 1.0
    %4669 = vmatprep.subr.mxu0 0.0
    %4670 = vmatpush1.msra.mxu0 1.0
    %4671 = vmatprep.subr.mxu0 0.0
    %4672 = vmatpush1.msra.mxu0 1.0
    %4673 = vmatprep.subr.mxu0 0.0
    %4674 = vmatpush1.msra.mxu0 1.0
    %4675 = vmatprep.subr.mxu0 0.0
    %4676 = vmatpush1.msra.mxu0 1.0
    %4677 = vmatprep.subr.mxu0 0.0
    %4678 = vmatpush1.msra.mxu0 1.0
    %4679 = vmatprep.subr.mxu0 0.0
    %4680 = vmatpush1.msra.mxu0 1.0
    %4681 = vmatprep.subr.mxu0 0.0
    %4682 = vmatpush1.msra.mxu0 1.0
    %4683 = vmatprep.subr.mxu0 0.0
    %4684 = vmatpush1.msra.mxu0 1.0
    %4685 = vmatprep.subr.mxu0 0.0
    %4686 = vmatpush1.msra.mxu0 1.0
    %4687 = vmatprep.subr.mxu0 0.0
    %4688 = vmatpush1.msra.mxu0 1.0
    %4689 = vmatprep.subr.mxu0 0.0
    %4690 = vmatpush1.msra.mxu0 1.0
    %4691 = vmatprep.subr.mxu0 0.0
    %4692 = vmatpush1.msra.mxu0 1.0
    %4693 = vmatprep.subr.mxu0 0.0
    %4694 = vmatpush1.msra.mxu0 1.0
    %4695 = vmatprep.subr.mxu0 0.0
    %4696 = vmatpush1.msra.mxu0 1.0
    %4697 = vmatprep.subr.mxu0 0.0
    %4698 = vmatpush1.msra.mxu0 1.0
    %4699 = vmatprep.subr.mxu0 0.0
    %4700 = vmatpush1.msra.mxu0 1.0
    %4701 = vmatprep.subr.mxu0 0.0
    %4702 = vmatpush1.msra.mxu0 1.0
    %4703 = vmatprep.mubr.f32.mxu0 %v4428
    %4704 = vmatmul.mubr.f32.gmra.mrb[0].mxu0 %v4427
    %v4705 = vpop.f32.mrb[0].mxu0
    %v4706 = vadd.f32 %v4636, %v4705
    %v4707 = vpop.f32.mrb[0].mxu0
    %4708 = vdwg.mxu0
    %4709 = vadd.xlane.f32.xlu0 %v4706
    %v4710 = vpop.xlane.xlu0 %4709
    %v4711 = vmul.f32 %v4710, %v988
    %v4712 = vmul.f32 %v4711, 0.0009765625
    %v4713 = vadd.f32 %v4712, 1e-05
    %v4714 = vrsqrt.pop %v4713
    %v4715 = vmul.f32 %v4413, %v4714
    %v4716 = vmul.f32 %v4414, %v4714
    %v4717 = vmul.f32 %v4415, %v4714
    %v4718 = vmul.f32 %v4416, %v4714
    %v4719 = vmul.f32 %v4417, %v4714
    %v4720 = vmul.f32 %v4418, %v4714
    %v4721 = vmul.f32 %v4419, %v4714
    %v4722 = vmul.f32 %v4420, %v4714
    %v4723 = vstv %s3832
    %v4724 = vmul.f32 %v4723, %v4715
    %v4725 = vmul.f32 %v4723, %v4716
    %v4726 = vmul.f32 %v4723, %v4717
    %v4727 = vmul.f32 %v4723, %v4718
    %v4728 = vmul.f32 %v4723, %v4719
    %v4729 = vmul.f32 %v4723, %v4720
    %v4730 = vmul.f32 %v4723, %v4721
    %v4731 = vmul.f32 %v4723, %v4722
    %v4732 = vadd.f32 %v3824, %v4724
    %v4733 = vadd.f32 %v3825, %v4725
    %v4734 = vadd.f32 %v3826, %v4726
    %v4735 = vadd.f32 %v3827, %v4727
    %v4736 = vadd.f32 %v3828, %v4728
    %v4737 = vadd.f32 %v3829, %v4729
    %v4738 = vadd.f32 %v3830, %v4730
    %v4739 = vadd.f32 %v3831, %v4731
    %s4740 = sld [smem:[#allocation2 + $0x181]]
    %v4741 = vstv %s4740
    %v4742 = vmul.f32 %v4741, %v2191
    %v4743 = vmul.f32 %v4741, %v2192
    %v4744 = vmul.f32 %v4741, %v2193
    %v4745 = vmul.f32 %v4741, %v2194
    %v4746 = vmul.f32 %v4741, %v2195
    %v4747 = vmul.f32 %v4741, %v2196
    %v4748 = vmul.f32 %v4741, %v2197
    %v4749 = vmul.f32 %v4741, %v2198
    %4750 = vrot.lane.b32.xlu0 %v2191, 1
    %v4751 = vpop.permute.xlu0 %4750
    %4752 = vrot.lane.b32.xlu0 %v2192, 1
    %v4753 = vpop.permute.xlu0 %4752
    %4754 = vrot.lane.b32.xlu0 %v2193, 1
    %v4755 = vpop.permute.xlu0 %4754
    %4756 = vrot.lane.b32.xlu0 %v2194, 1
    %v4757 = vpop.permute.xlu0 %4756
    %4758 = vrot.lane.b32.xlu0 %v2195, 1
    %v4759 = vpop.permute.xlu0 %4758
    %4760 = vrot.lane.b32.xlu0 %v2196, 1
    %v4761 = vpop.permute.xlu0 %4760
    %4762 = vrot.lane.b32.xlu0 %v2197, 1
    %v4763 = vpop.permute.xlu0 %4762
    %4764 = vrot.lane.b32.xlu0 %v2198, 1
    %v4765 = vpop.permute.xlu0 %4764
    %v4766 = vsel %vm2227, %v4763, %v4765
    %v4767 = vsel %vm2227, %v4761, %v4763
    %v4768 = vsel %vm2227, %v4759, %v4761
    %v4769 = vsel %vm2227, %v4757, %v4759
    %v4770 = vsel %vm2227, %v4755, %v4757
    %v4771 = vsel %vm2227, %v4753, %v4755
    %v4772 = vsel %vm2227, %v4751, %v4753
    %v4773 = vsel %vm2227, %v4765, %v4751
    %4774 = vrot.lane.b32.xlu0 %v2191, 127
    %v4775 = vpop.permute.xlu0 %4774
    %4776 = vrot.lane.b32.xlu0 %v2192, 127
    %v4777 = vpop.permute.xlu0 %4776
    %4778 = vrot.lane.b32.xlu0 %v2193, 127
    %v4779 = vpop.permute.xlu0 %4778
    %4780 = vrot.lane.b32.xlu0 %v2194, 127
    %v4781 = vpop.permute.xlu0 %4780
    %4782 = vrot.lane.b32.xlu0 %v2195, 127
    %v4783 = vpop.permute.xlu0 %4782
    %4784 = vrot.lane.b32.xlu0 %v2196, 127
    %v4785 = vpop.permute.xlu0 %4784
    %4786 = vrot.lane.b32.xlu0 %v2197, 127
    %v4787 = vpop.permute.xlu0 %4786
    %4788 = vrot.lane.b32.xlu0 %v2198, 127
    %v4789 = vpop.permute.xlu0 %4788
    %v4790 = vsel %vm2252, %v4787, %v4789
    %v4791 = vsel %vm2252, %v4785, %v4787
    %v4792 = vsel %vm2252, %v4783, %v4785
    %v4793 = vsel %vm2252, %v4781, %v4783
    %v4794 = vsel %vm2252, %v4779, %v4781
    %v4795 = vsel %vm2252, %v4777, %v4779
    %v4796 = vsel %vm2252, %v4775, %v4777
    %v4797 = vsel %vm2252, %v4789, %v4775
    %v4798 = vsel %vm83, %v4773, -3e+38
    %v4799 = vsel %vm84, %v4772, -3e+38
    %v4800 = vsel %vm85, %v4771, -3e+38
    %v4801 = vsel %vm86, %v4770, -3e+38
    %v4802 = vsel %vm87, %v4769, -3e+38
    %v4803 = vsel %vm88, %v4768, -3e+38
    %v4804 = vsel %vm89, %v4767, -3e+38
    %v4805 = vsel %vm90, %v4766, -3e+38
    %v4806 = vsel %vm136, %v4796, -3e+38
    %v4807 = vsel %vm137, %v4795, -3e+38
    %v4808 = vsel %vm138, %v4794, -3e+38
    %v4809 = vsel %vm139, %v4793, -3e+38
    %v4810 = vsel %vm140, %v4792, -3e+38
    %v4811 = vsel %vm141, %v4791, -3e+38
    %v4812 = vsel %vm142, %v4790, -3e+38
    %v4813 = vsel %vm143, %v4797, -3e+38
    %v4814 = vmax.f32 %v4798, %v4806
    %v4815 = vmax.f32 %v4799, %v4807
    %v4816 = vmax.f32 %v4800, %v4808
    %v4817 = vmax.f32 %v4801, %v4809
    %v4818 = vmax.f32 %v4802, %v4810
    %v4819 = vmax.f32 %v4803, %v4811
    %v4820 = vmax.f32 %v4804, %v4812
    %v4821 = vmax.f32 %v4805, %v4813
    %v4822 = vmax.f32 %v2191, %v4814
    %v4823 = vmax.f32 %v2192, %v4815
    %v4824 = vmax.f32 %v2193, %v4816
    %v4825 = vmax.f32 %v2194, %v4817
    %v4826 = vmax.f32 %v2195, %v4818
    %v4827 = vmax.f32 %v2196, %v4819
    %v4828 = vmax.f32 %v2197, %v4820
    %v4829 = vmax.f32 %v2198, %v4821
    %v4830 = vsel %vm83, %v4773, 0.0
    %v4831 = vsel %vm84, %v4772, 0.0
    %v4832 = vsel %vm85, %v4771, 0.0
    %v4833 = vsel %vm86, %v4770, 0.0
    %v4834 = vsel %vm87, %v4769, 0.0
    %v4835 = vsel %vm88, %v4768, 0.0
    %v4836 = vsel %vm89, %v4767, 0.0
    %v4837 = vsel %vm90, %v4766, 0.0
    %v4838 = vadd.f32 %v2191, %v4830
    %v4839 = vadd.f32 %v2192, %v4831
    %v4840 = vadd.f32 %v2193, %v4832
    %v4841 = vadd.f32 %v2194, %v4833
    %v4842 = vadd.f32 %v2195, %v4834
    %v4843 = vadd.f32 %v2196, %v4835
    %v4844 = vadd.f32 %v2197, %v4836
    %v4845 = vadd.f32 %v2198, %v4837
    %v4846 = vsel %vm136, %v4796, 0.0
    %v4847 = vsel %vm137, %v4795, 0.0
    %v4848 = vsel %vm138, %v4794, 0.0
    %v4849 = vsel %vm139, %v4793, 0.0
    %v4850 = vsel %vm140, %v4792, 0.0
    %v4851 = vsel %vm141, %v4791, 0.0
    %v4852 = vsel %vm142, %v4790, 0.0
    %v4853 = vsel %vm143, %v4797, 0.0
    %v4854 = vadd.f32 %v4838, %v4846
    %v4855 = vadd.f32 %v4839, %v4847
    %v4856 = vadd.f32 %v4840, %v4848
    %v4857 = vadd.f32 %v4841, %v4849
    %v4858 = vadd.f32 %v4842, %v4850
    %v4859 = vadd.f32 %v4843, %v4851
    %v4860 = vadd.f32 %v4844, %v4852
    %v4861 = vadd.f32 %v4845, %v4853
    %4862 = vrot.lane.b32.xlu0 %v4822, 8
    %v4863 = vpop.permute.xlu0 %4862
    %4864 = vrot.lane.b32.xlu0 %v4823, 8
    %v4865 = vpop.permute.xlu0 %4864
    %4866 = vrot.lane.b32.xlu0 %v4824, 8
    %v4867 = vpop.permute.xlu0 %4866
    %4868 = vrot.lane.b32.xlu0 %v4825, 8
    %v4869 = vpop.permute.xlu0 %4868
    %4870 = vrot.lane.b32.xlu0 %v4826, 8
    %v4871 = vpop.permute.xlu0 %4870
    %4872 = vrot.lane.b32.xlu0 %v4827, 8
    %v4873 = vpop.permute.xlu0 %4872
    %4874 = vrot.lane.b32.xlu0 %v4828, 8
    %v4875 = vpop.permute.xlu0 %4874
    %4876 = vrot.lane.b32.xlu0 %v4829, 8
    %v4877 = vpop.permute.xlu0 %4876
    %v4878 = vsel %vm2341, %v4875, %v4877
    %v4879 = vsel %vm2341, %v4873, %v4875
    %v4880 = vsel %vm2341, %v4871, %v4873
    %v4881 = vsel %vm2341, %v4869, %v4871
    %v4882 = vsel %vm2341, %v4867, %v4869
    %v4883 = vsel %vm2341, %v4865, %v4867
    %v4884 = vsel %vm2341, %v4863, %v4865
    %v4885 = vsel %vm2341, %v4877, %v4863
    %4886 = vrot.lane.b32.xlu0 %v4822, 120
    %v4887 = vpop.permute.xlu0 %4886
    %4888 = vrot.lane.b32.xlu0 %v4823, 120
    %v4889 = vpop.permute.xlu0 %4888
    %4890 = vrot.lane.b32.xlu0 %v4824, 120
    %v4891 = vpop.permute.xlu0 %4890
    %4892 = vrot.lane.b32.xlu0 %v4825, 120
    %v4893 = vpop.permute.xlu0 %4892
    %4894 = vrot.lane.b32.xlu0 %v4826, 120
    %v4895 = vpop.permute.xlu0 %4894
    %4896 = vrot.lane.b32.xlu0 %v4827, 120
    %v4897 = vpop.permute.xlu0 %4896
    %4898 = vrot.lane.b32.xlu0 %v4828, 120
    %v4899 = vpop.permute.xlu0 %4898
    %4900 = vrot.lane.b32.xlu0 %v4829, 120
    %v4901 = vpop.permute.xlu0 %4900
    %v4902 = vsel %vm2366, %v4899, %v4901
    %v4903 = vsel %vm2366, %v4897, %v4899
    %v4904 = vsel %vm2366, %v4895, %v4897
    %v4905 = vsel %vm2366, %v4893, %v4895
    %v4906 = vsel %vm2366, %v4891, %v4893
    %v4907 = vsel %vm2366, %v4889, %v4891
    %v4908 = vsel %vm2366, %v4887, %v4889
    %v4909 = vsel %vm2366, %v4901, %v4887
    %v4910 = vsel %vm189, %v4885, -3e+38
    %v4911 = vsel %vm190, %v4884, -3e+38
    %v4912 = vsel %vm191, %v4883, -3e+38
    %v4913 = vsel %vm192, %v4882, -3e+38
    %v4914 = vsel %vm193, %v4881, -3e+38
    %v4915 = vsel %vm194, %v4880, -3e+38
    %v4916 = vsel %vm195, %v4879, -3e+38
    %v4917 = vsel %vm196, %v4878, -3e+38
    %v4918 = vsel %vm242, %v4908, -3e+38
    %v4919 = vsel %vm243, %v4907, -3e+38
    %v4920 = vsel %vm244, %v4906, -3e+38
    %v4921 = vsel %vm245, %v4905, -3e+38
    %v4922 = vsel %vm246, %v4904, -3e+38
    %v4923 = vsel %vm247, %v4903, -3e+38
    %v4924 = vsel %vm248, %v4902, -3e+38
    %v4925 = vsel %vm249, %v4909, -3e+38
    %v4926 = vmax.f32 %v4910, %v4918
    %v4927 = vmax.f32 %v4911, %v4919
    %v4928 = vmax.f32 %v4912, %v4920
    %v4929 = vmax.f32 %v4913, %v4921
    %v4930 = vmax.f32 %v4914, %v4922
    %v4931 = vmax.f32 %v4915, %v4923
    %v4932 = vmax.f32 %v4916, %v4924
    %v4933 = vmax.f32 %v4917, %v4925
    %v4934 = vmax.f32 %v4822, %v4926
    %v4935 = vmax.f32 %v4823, %v4927
    %v4936 = vmax.f32 %v4824, %v4928
    %v4937 = vmax.f32 %v4825, %v4929
    %v4938 = vmax.f32 %v4826, %v4930
    %v4939 = vmax.f32 %v4827, %v4931
    %v4940 = vmax.f32 %v4828, %v4932
    %v4941 = vmax.f32 %v4829, %v4933
    %4942 = vrot.lane.b32.xlu0 %v4854, 8
    %v4943 = vpop.permute.xlu0 %4942
    %4944 = vrot.lane.b32.xlu0 %v4855, 8
    %v4945 = vpop.permute.xlu0 %4944
    %4946 = vrot.lane.b32.xlu0 %v4856, 8
    %v4947 = vpop.permute.xlu0 %4946
    %4948 = vrot.lane.b32.xlu0 %v4857, 8
    %v4949 = vpop.permute.xlu0 %4948
    %4950 = vrot.lane.b32.xlu0 %v4858, 8
    %v4951 = vpop.permute.xlu0 %4950
    %4952 = vrot.lane.b32.xlu0 %v4859, 8
    %v4953 = vpop.permute.xlu0 %4952
    %4954 = vrot.lane.b32.xlu0 %v4860, 8
    %v4955 = vpop.permute.xlu0 %4954
    %4956 = vrot.lane.b32.xlu0 %v4861, 8
    %v4957 = vpop.permute.xlu0 %4956
    %v4958 = vsel %vm2341, %v4955, %v4957
    %v4959 = vsel %vm2341, %v4953, %v4955
    %v4960 = vsel %vm2341, %v4951, %v4953
    %v4961 = vsel %vm2341, %v4949, %v4951
    %v4962 = vsel %vm2341, %v4947, %v4949
    %v4963 = vsel %vm2341, %v4945, %v4947
    %v4964 = vsel %vm2341, %v4943, %v4945
    %v4965 = vsel %vm2341, %v4957, %v4943
    %4966 = vrot.lane.b32.xlu0 %v4854, 120
    %v4967 = vpop.permute.xlu0 %4966
    %4968 = vrot.lane.b32.xlu0 %v4855, 120
    %v4969 = vpop.permute.xlu0 %4968
    %4970 = vrot.lane.b32.xlu0 %v4856, 120
    %v4971 = vpop.permute.xlu0 %4970
    %4972 = vrot.lane.b32.xlu0 %v4857, 120
    %v4973 = vpop.permute.xlu0 %4972
    %4974 = vrot.lane.b32.xlu0 %v4858, 120
    %v4975 = vpop.permute.xlu0 %4974
    %4976 = vrot.lane.b32.xlu0 %v4859, 120
    %v4977 = vpop.permute.xlu0 %4976
    %4978 = vrot.lane.b32.xlu0 %v4860, 120
    %v4979 = vpop.permute.xlu0 %4978
    %4980 = vrot.lane.b32.xlu0 %v4861, 120
    %v4981 = vpop.permute.xlu0 %4980
    %v4982 = vsel %vm2366, %v4979, %v4981
    %v4983 = vsel %vm2366, %v4977, %v4979
    %v4984 = vsel %vm2366, %v4975, %v4977
    %v4985 = vsel %vm2366, %v4973, %v4975
    %v4986 = vsel %vm2366, %v4971, %v4973
    %v4987 = vsel %vm2366, %v4969, %v4971
    %v4988 = vsel %vm2366, %v4967, %v4969
    %v4989 = vsel %vm2366, %v4981, %v4967
    %v4990 = vsel %vm189, %v4965, 0.0
    %v4991 = vsel %vm190, %v4964, 0.0
    %v4992 = vsel %vm191, %v4963, 0.0
    %v4993 = vsel %vm192, %v4962, 0.0
    %v4994 = vsel %vm193, %v4961, 0.0
    %v4995 = vsel %vm194, %v4960, 0.0
    %v4996 = vsel %vm195, %v4959, 0.0
    %v4997 = vsel %vm196, %v4958, 0.0
    %v4998 = vadd.f32 %v4854, %v4990
    %v4999 = vadd.f32 %v4855, %v4991
    %v5000 = vadd.f32 %v4856, %v4992
    %v5001 = vadd.f32 %v4857, %v4993
    %v5002 = vadd.f32 %v4858, %v4994
    %v5003 = vadd.f32 %v4859, %v4995
    %v5004 = vadd.f32 %v4860, %v4996
    %v5005 = vadd.f32 %v4861, %v4997
    %v5006 = vsel %vm242, %v4988, 0.0
    %v5007 = vsel %vm243, %v4987, 0.0
    %v5008 = vsel %vm244, %v4986, 0.0
    %v5009 = vsel %vm245, %v4985, 0.0
    %v5010 = vsel %vm246, %v4984, 0.0
    %v5011 = vsel %vm247, %v4983, 0.0
    %v5012 = vsel %vm248, %v4982, 0.0
    %v5013 = vsel %vm249, %v4989, 0.0
    %v5014 = vadd.f32 %v4998, %v5006
    %v5015 = vadd.f32 %v4999, %v5007
    %v5016 = vadd.f32 %v5000, %v5008
    %v5017 = vadd.f32 %v5001, %v5009
    %v5018 = vadd.f32 %v5002, %v5010
    %v5019 = vadd.f32 %v5003, %v5011
    %v5020 = vadd.f32 %v5004, %v5012
    %v5021 = vadd.f32 %v5005, %v5013
    %5022 = vrot.lane.b32.xlu0 %v4934, 64
    %v5023 = vpop.permute.xlu0 %5022
    %5024 = vrot.lane.b32.xlu0 %v4935, 64
    %v5025 = vpop.permute.xlu0 %5024
    %5026 = vrot.lane.b32.xlu0 %v4936, 64
    %v5027 = vpop.permute.xlu0 %5026
    %5028 = vrot.lane.b32.xlu0 %v4937, 64
    %v5029 = vpop.permute.xlu0 %5028
    %5030 = vrot.lane.b32.xlu0 %v4938, 64
    %v5031 = vpop.permute.xlu0 %5030
    %5032 = vrot.lane.b32.xlu0 %v4939, 64
    %v5033 = vpop.permute.xlu0 %5032
    %5034 = vrot.lane.b32.xlu0 %v4940, 64
    %v5035 = vpop.permute.xlu0 %5034
    %5036 = vrot.lane.b32.xlu0 %v4941, 64
    %v5037 = vpop.permute.xlu0 %5036
    %v5038 = vsel %vm2503, %v5035, %v5037
    %v5039 = vsel %vm2503, %v5033, %v5035
    %v5040 = vsel %vm2503, %v5031, %v5033
    %v5041 = vsel %vm2503, %v5029, %v5031
    %v5042 = vsel %vm2503, %v5027, %v5029
    %v5043 = vsel %vm2503, %v5025, %v5027
    %v5044 = vsel %vm2503, %v5023, %v5025
    %v5045 = vsel %vm2503, %v5037, %v5023
    %v5046 = vsel %vm295, %v5045, -3e+38
    %v5047 = vsel %vm296, %v5044, -3e+38
    %v5048 = vsel %vm297, %v5043, -3e+38
    %v5049 = vsel %vm298, %v5042, -3e+38
    %v5050 = vsel %vm299, %v5041, -3e+38
    %v5051 = vsel %vm300, %v5040, -3e+38
    %v5052 = vsel %vm301, %v5039, -3e+38
    %v5053 = vsel %vm302, %v5038, -3e+38
    %v5054 = vsel %vm348, %v5044, -3e+38
    %v5055 = vsel %vm349, %v5043, -3e+38
    %v5056 = vsel %vm350, %v5042, -3e+38
    %v5057 = vsel %vm351, %v5041, -3e+38
    %v5058 = vsel %vm352, %v5040, -3e+38
    %v5059 = vsel %vm353, %v5039, -3e+38
    %v5060 = vsel %vm354, %v5038, -3e+38
    %v5061 = vsel %vm355, %v5045, -3e+38
    %v5062 = vmax.f32 %v5046, %v5054
    %v5063 = vmax.f32 %v5047, %v5055
    %v5064 = vmax.f32 %v5048, %v5056
    %v5065 = vmax.f32 %v5049, %v5057
    %v5066 = vmax.f32 %v5050, %v5058
    %v5067 = vmax.f32 %v5051, %v5059
    %v5068 = vmax.f32 %v5052, %v5060
    %v5069 = vmax.f32 %v5053, %v5061
    %v5070 = vmax.f32 %v4934, %v5062
    %v5071 = vmax.f32 %v4935, %v5063
    %v5072 = vmax.f32 %v4936, %v5064
    %v5073 = vmax.f32 %v4937, %v5065
    %v5074 = vmax.f32 %v4938, %v5066
    %v5075 = vmax.f32 %v4939, %v5067
    %v5076 = vmax.f32 %v4940, %v5068
    %v5077 = vmax.f32 %v4941, %v5069
    %5078 = vrot.lane.b32.xlu0 %v5014, 64
    %v5079 = vpop.permute.xlu0 %5078
    %5080 = vrot.lane.b32.xlu0 %v5015, 64
    %v5081 = vpop.permute.xlu0 %5080
    %5082 = vrot.lane.b32.xlu0 %v5016, 64
    %v5083 = vpop.permute.xlu0 %5082
    %5084 = vrot.lane.b32.xlu0 %v5017, 64
    %v5085 = vpop.permute.xlu0 %5084
    %5086 = vrot.lane.b32.xlu0 %v5018, 64
    %v5087 = vpop.permute.xlu0 %5086
    %5088 = vrot.lane.b32.xlu0 %v5019, 64
    %v5089 = vpop.permute.xlu0 %5088
    %5090 = vrot.lane.b32.xlu0 %v5020, 64
    %v5091 = vpop.permute.xlu0 %5090
    %5092 = vrot.lane.b32.xlu0 %v5021, 64
    %v5093 = vpop.permute.xlu0 %5092
    %v5094 = vsel %vm2503, %v5091, %v5093
    %v5095 = vsel %vm2503, %v5089, %v5091
    %v5096 = vsel %vm2503, %v5087, %v5089
    %v5097 = vsel %vm2503, %v5085, %v5087
    %v5098 = vsel %vm2503, %v5083, %v5085
    %v5099 = vsel %vm2503, %v5081, %v5083
    %v5100 = vsel %vm2503, %v5079, %v5081
    %v5101 = vsel %vm2503, %v5093, %v5079
    %v5102 = vsel %vm295, %v5101, 0.0
    %v5103 = vsel %vm296, %v5100, 0.0
    %v5104 = vsel %vm297, %v5099, 0.0
    %v5105 = vsel %vm298, %v5098, 0.0
    %v5106 = vsel %vm299, %v5097, 0.0
    %v5107 = vsel %vm300, %v5096, 0.0
    %v5108 = vsel %vm301, %v5095, 0.0
    %v5109 = vsel %vm302, %v5094, 0.0
    %v5110 = vadd.f32 %v5014, %v5102
    %v5111 = vadd.f32 %v5015, %v5103
    %v5112 = vadd.f32 %v5016, %v5104
    %v5113 = vadd.f32 %v5017, %v5105
    %v5114 = vadd.f32 %v5018, %v5106
    %v5115 = vadd.f32 %v5019, %v5107
    %v5116 = vadd.f32 %v5020, %v5108
    %v5117 = vadd.f32 %v5021, %v5109
    %v5118 = vsel %vm348, %v5100, 0.0
    %v5119 = vsel %vm349, %v5099, 0.0
    %v5120 = vsel %vm350, %v5098, 0.0
    %v5121 = vsel %vm351, %v5097, 0.0
    %v5122 = vsel %vm352, %v5096, 0.0
    %v5123 = vsel %vm353, %v5095, 0.0
    %v5124 = vsel %vm354, %v5094, 0.0
    %v5125 = vsel %vm355, %v5101, 0.0
    %v5126 = vadd.f32 %v5110, %v5118
    %v5127 = vadd.f32 %v5111, %v5119
    %v5128 = vadd.f32 %v5112, %v5120
    %v5129 = vadd.f32 %v5113, %v5121
    %v5130 = vadd.f32 %v5114, %v5122
    %v5131 = vadd.f32 %v5115, %v5123
    %v5132 = vadd.f32 %v5116, %v5124
    %v5133 = vadd.f32 %v5117, %v5125
    %v5134 = vmul.f32 %v5126, %v364
    %v5135 = vmul.f32 %v5127, %v368
    %v5136 = vmul.f32 %v5128, %v372
    %v5137 = vmul.f32 %v5129, %v376
    %v5138 = vmul.f32 %v5130, %v380
    %v5139 = vmul.f32 %v5131, %v384
    %v5140 = vmul.f32 %v5132, %v388
    %v5141 = vmul.f32 %v5133, %v392
    %s5142 = sld [smem:[#allocation2 + $0x182]]
    %5143 = vmatprep.subr.mxu0 0.0
    %5144 = vmatpush1.msra.mxu0 1.0
    %5145 = vmatprep.subr.mxu0 0.0
    %5146 = vmatpush1.msra.mxu0 1.0
    %5147 = vmatprep.subr.mxu0 0.0
    %5148 = vmatpush1.msra.mxu0 1.0
    %5149 = vmatprep.subr.mxu0 0.0
    %5150 = vmatpush1.msra.mxu0 1.0
    %5151 = vmatprep.subr.mxu0 0.0
    %5152 = vmatpush1.msra.mxu0 1.0
    %5153 = vmatprep.subr.mxu0 0.0
    %5154 = vmatpush1.msra.mxu0 1.0
    %5155 = vmatprep.subr.mxu0 0.0
    %5156 = vmatpush1.msra.mxu0 1.0
    %5157 = vmatprep.subr.mxu0 0.0
    %5158 = vmatpush1.msra.mxu0 1.0
    %5159 = vmatprep.subr.mxu0 0.0
    %5160 = vmatpush1.msra.mxu0 1.0
    %5161 = vmatprep.subr.mxu0 0.0
    %5162 = vmatpush1.msra.mxu0 1.0
    %5163 = vmatprep.subr.mxu0 0.0
    %5164 = vmatpush1.msra.mxu0 1.0
    %5165 = vmatprep.subr.mxu0 0.0
    %5166 = vmatpush1.msra.mxu0 1.0
    %5167 = vmatprep.subr.mxu0 0.0
    %5168 = vmatpush1.msra.mxu0 1.0
    %5169 = vmatprep.subr.mxu0 0.0
    %5170 = vmatpush1.msra.mxu0 1.0
    %5171 = vmatprep.subr.mxu0 0.0
    %5172 = vmatpush1.msra.mxu0 1.0
    %5173 = vmatprep.subr.mxu0 0.0
    %5174 = vmatpush1.msra.mxu0 1.0
    %5175 = vmatprep.subr.mxu0 0.0
    %5176 = vmatpush1.msra.mxu0 1.0
    %5177 = vmatprep.subr.mxu0 0.0
    %5178 = vmatpush1.msra.mxu0 1.0
    %5179 = vmatprep.subr.mxu0 0.0
    %5180 = vmatpush1.msra.mxu0 1.0
    %5181 = vmatprep.subr.mxu0 0.0
    %5182 = vmatpush1.msra.mxu0 1.0
    %5183 = vmatprep.subr.mxu0 0.0
    %5184 = vmatpush1.msra.mxu0 1.0
    %5185 = vmatprep.subr.mxu0 0.0
    %5186 = vmatpush1.msra.mxu0 1.0
    %5187 = vmatprep.subr.mxu0 0.0
    %5188 = vmatpush1.msra.mxu0 1.0
    %5189 = vmatprep.subr.mxu0 0.0
    %5190 = vmatpush1.msra.mxu0 1.0
    %5191 = vmatprep.subr.mxu0 0.0
    %5192 = vmatpush1.msra.mxu0 1.0
    %5193 = vmatprep.subr.mxu0 0.0
    %5194 = vmatpush1.msra.mxu0 1.0
    %5195 = vmatprep.subr.mxu0 0.0
    %5196 = vmatpush1.msra.mxu0 1.0
    %5197 = vmatprep.subr.mxu0 0.0
    %5198 = vmatpush1.msra.mxu0 1.0
    %5199 = vmatprep.subr.mxu0 0.0
    %5200 = vmatpush1.msra.mxu0 1.0
    %5201 = vmatprep.subr.mxu0 0.0
    %5202 = vmatpush1.msra.mxu0 1.0
    %5203 = vmatprep.subr.mxu0 0.0
    %5204 = vmatpush1.msra.mxu0 1.0
    %5205 = vmatprep.subr.mxu0 0.0
    %5206 = vmatpush1.msra.mxu0 1.0
    %5207 = vmatprep.mubr.f32.mxu0 %v5135
    %5208 = vmatmul.mubr.f32.gmra.mrb[0].mxu0 %v5134
    %v5209 = vpop.f32.mrb[0].mxu0
    %v5210 = vadd.f32 0.0, %v5209
    %v5211 = vpop.f32.mrb[0].mxu0
    %5212 = vdwg.mxu0
    %5213 = vmatprep.subr.mxu0 0.0
    %5214 = vmatpush1.msra.mxu0 1.0
    %5215 = vmatprep.subr.mxu0 0.0
    %5216 = vmatpush1.msra.mxu0 1.0
    %5217 = vmatprep.subr.mxu0 0.0
    %5218 = vmatpush1.msra.mxu0 1.0
    %5219 = vmatprep.subr.mxu0 0.0
    %5220 = vmatpush1.msra.mxu0 1.0
    %5221 = vmatprep.subr.mxu0 0.0
    %5222 = vmatpush1.msra.mxu0 1.0
    %5223 = vmatprep.subr.mxu0 0.0
    %5224 = vmatpush1.msra.mxu0 1.0
    %5225 = vmatprep.subr.mxu0 0.0
    %5226 = vmatpush1.msra.mxu0 1.0
    %5227 = vmatprep.subr.mxu0 0.0
    %5228 = vmatpush1.msra.mxu0 1.0
    %5229 = vmatprep.subr.mxu0 0.0
    %5230 = vmatpush1.msra.mxu0 1.0
    %5231 = vmatprep.subr.mxu0 0.0
    %5232 = vmatpush1.msra.mxu0 1.0
    %5233 = vmatprep.subr.mxu0 0.0
    %5234 = vmatpush1.msra.mxu0 1.0
    %5235 = vmatprep.subr.mxu0 0.0
    %5236 = vmatpush1.msra.mxu0 1.0
    %5237 = vmatprep.subr.mxu0 0.0
    %5238 = vmatpush1.msra.mxu0 1.0
    %5239 = vmatprep.subr.mxu0 0.0
    %5240 = vmatpush1.msra.mxu0 1.0
    %5241 = vmatprep.subr.mxu0 0.0
    %5242 = vmatpush1.msra.mxu0 1.0
    %5243 = vmatprep.subr.mxu0 0.0
    %5244 = vmatpush1.msra.mxu0 1.0
    %5245 = vmatprep.subr.mxu0 0.0
    %5246 = vmatpush1.msra.mxu0 1.0
    %5247 = vmatprep.subr.mxu0 0.0
    %5248 = vmatpush1.msra.mxu0 1.0
    %5249 = vmatprep.subr.mxu0 0.0
    %5250 = vmatpush1.msra.mxu0 1.0
    %5251 = vmatprep.subr.mxu0 0.0
    %5252 = vmatpush1.msra.mxu0 1.0
    %5253 = vmatprep.subr.mxu0 0.0
    %5254 = vmatpush1.msra.mxu0 1.0
    %5255 = vmatprep.subr.mxu0 0.0
    %5256 = vmatpush1.msra.mxu0 1.0
    %5257 = vmatprep.subr.mxu0 0.0
    %5258 = vmatpush1.msra.mxu0 1.0
    %5259 = vmatprep.subr.mxu0 0.0
    %5260 = vmatpush1.msra.mxu0 1.0
    %5261 = vmatprep.subr.mxu0 0.0
    %5262 = vmatpush1.msra.mxu0 1.0
    %5263 = vmatprep.subr.mxu0 0.0
    %5264 = vmatpush1.msra.mxu0 1.0
    %5265 = vmatprep.subr.mxu0 0.0
    %5266 = vmatpush1.msra.mxu0 1.0
    %5267 = vmatprep.subr.mxu0 0.0
    %5268 = vmatpush1.msra.mxu0 1.0
    %5269 = vmatprep.subr.mxu0 0.0
    %5270 = vmatpush1.msra.mxu0 1.0
    %5271 = vmatprep.subr.mxu0 0.0
    %5272 = vmatpush1.msra.mxu0 1.0
    %5273 = vmatprep.subr.mxu0 0.0
    %5274 = vmatpush1.msra.mxu0 1.0
    %5275 = vmatprep.subr.mxu0 0.0
    %5276 = vmatpush1.msra.mxu0 1.0
    %5277 = vmatprep.mubr.f32.mxu0 %v5137
    %5278 = vmatmul.mubr.f32.gmra.mrb[0].mxu0 %v5136
    %v5279 = vpop.f32.mrb[0].mxu0
    %v5280 = vadd.f32 %v5210, %v5279
    %v5281 = vpop.f32.mrb[0].mxu0
    %5282 = vdwg.mxu0
    %5283 = vmatprep.subr.mxu0 0.0
    %5284 = vmatpush1.msra.mxu0 1.0
    %5285 = vmatprep.subr.mxu0 0.0
    %5286 = vmatpush1.msra.mxu0 1.0
    %5287 = vmatprep.subr.mxu0 0.0
    %5288 = vmatpush1.msra.mxu0 1.0
    %5289 = vmatprep.subr.mxu0 0.0
    %5290 = vmatpush1.msra.mxu0 1.0
    %5291 = vmatprep.subr.mxu0 0.0
    %5292 = vmatpush1.msra.mxu0 1.0
    %5293 = vmatprep.subr.mxu0 0.0
    %5294 = vmatpush1.msra.mxu0 1.0
    %5295 = vmatprep.subr.mxu0 0.0
    %5296 = vmatpush1.msra.mxu0 1.0
    %5297 = vmatprep.subr.mxu0 0.0
    %5298 = vmatpush1.msra.mxu0 1.0
    %5299 = vmatprep.subr.mxu0 0.0
    %5300 = vmatpush1.msra.mxu0 1.0
    %5301 = vmatprep.subr.mxu0 0.0
    %5302 = vmatpush1.msra.mxu0 1.0
    %5303 = vmatprep.subr.mxu0 0.0
    %5304 = vmatpush1.msra.mxu0 1.0
    %5305 = vmatprep.subr.mxu0 0.0
    %5306 = vmatpush1.msra.mxu0 1.0
    %5307 = vmatprep.subr.mxu0 0.0
    %5308 = vmatpush1.msra.mxu0 1.0
    %5309 = vmatprep.subr.mxu0 0.0
    %5310 = vmatpush1.msra.mxu0 1.0
    %5311 = vmatprep.subr.mxu0 0.0
    %5312 = vmatpush1.msra.mxu0 1.0
    %5313 = vmatprep.subr.mxu0 0.0
    %5314 = vmatpush1.msra.mxu0 1.0
    %5315 = vmatprep.subr.mxu0 0.0
    %5316 = vmatpush1.msra.mxu0 1.0
    %5317 = vmatprep.subr.mxu0 0.0
    %5318 = vmatpush1.msra.mxu0 1.0
    %5319 = vmatprep.subr.mxu0 0.0
    %5320 = vmatpush1.msra.mxu0 1.0
    %5321 = vmatprep.subr.mxu0 0.0
    %5322 = vmatpush1.msra.mxu0 1.0
    %5323 = vmatprep.subr.mxu0 0.0
    %5324 = vmatpush1.msra.mxu0 1.0
    %5325 = vmatprep.subr.mxu0 0.0
    %5326 = vmatpush1.msra.mxu0 1.0
    %5327 = vmatprep.subr.mxu0 0.0
    %5328 = vmatpush1.msra.mxu0 1.0
    %5329 = vmatprep.subr.mxu0 0.0
    %5330 = vmatpush1.msra.mxu0 1.0
    %5331 = vmatprep.subr.mxu0 0.0
    %5332 = vmatpush1.msra.mxu0 1.0
    %5333 = vmatprep.subr.mxu0 0.0
    %5334 = vmatpush1.msra.mxu0 1.0
    %5335 = vmatprep.subr.mxu0 0.0
    %5336 = vmatpush1.msra.mxu0 1.0
    %5337 = vmatprep.subr.mxu0 0.0
    %5338 = vmatpush1.msra.mxu0 1.0
    %5339 = vmatprep.subr.mxu0 0.0
    %5340 = vmatpush1.msra.mxu0 1.0
    %5341 = vmatprep.subr.mxu0 0.0
    %5342 = vmatpush1.msra.mxu0 1.0
    %5343 = vmatprep.subr.mxu0 0.0
    %5344 = vmatpush1.msra.mxu0 1.0
    %5345 = vmatprep.subr.mxu0 0.0
    %5346 = vmatpush1.msra.mxu0 1.0
    %5347 = vmatprep.mubr.f32.mxu0 %v5139
    %5348 = vmatmul.mubr.f32.gmra.mrb[0].mxu0 %v5138
    %v5349 = vpop.f32.mrb[0].mxu0
    %v5350 = vadd.f32 %v5280, %v5349
    %v5351 = vpop.f32.mrb[0].mxu0
    %5352 = vdwg.mxu0
    %5353 = vmatprep.subr.mxu0 0.0
    %5354 = vmatpush1.msra.mxu0 1.0
    %5355 = vmatprep.subr.mxu0 0.0
    %5356 = vmatpush1.msra.mxu0 1.0
    %5357 = vmatprep.subr.mxu0 0.0
    %5358 = vmatpush1.msra.mxu0 1.0
    %5359 = vmatprep.subr.mxu0 0.0
    %5360 = vmatpush1.msra.mxu0 1.0
    %5361 = vmatprep.subr.mxu0 0.0
    %5362 = vmatpush1.msra.mxu0 1.0
    %5363 = vmatprep.subr.mxu0 0.0
    %5364 = vmatpush1.msra.mxu0 1.0
    %5365 = vmatprep.subr.mxu0 0.0
    %5366 = vmatpush1.msra.mxu0 1.0
    %5367 = vmatprep.subr.mxu0 0.0
    %5368 = vmatpush1.msra.mxu0 1.0
    %5369 = vmatprep.subr.mxu0 0.0
    %5370 = vmatpush1.msra.mxu0 1.0
    %5371 = vmatprep.subr.mxu0 0.0
    %5372 = vmatpush1.msra.mxu0 1.0
    %5373 = vmatprep.subr.mxu0 0.0
    %5374 = vmatpush1.msra.mxu0 1.0
    %5375 = vmatprep.subr.mxu0 0.0
    %5376 = vmatpush1.msra.mxu0 1.0
    %5377 = vmatprep.subr.mxu0 0.0
    %5378 = vmatpush1.msra.mxu0 1.0
    %5379 = vmatprep.subr.mxu0 0.0
    %5380 = vmatpush1.msra.mxu0 1.0
    %5381 = vmatprep.subr.mxu0 0.0
    %5382 = vmatpush1.msra.mxu0 1.0
    %5383 = vmatprep.subr.mxu0 0.0
    %5384 = vmatpush1.msra.mxu0 1.0
    %5385 = vmatprep.subr.mxu0 0.0
    %5386 = vmatpush1.msra.mxu0 1.0
    %5387 = vmatprep.subr.mxu0 0.0
    %5388 = vmatpush1.msra.mxu0 1.0
    %5389 = vmatprep.subr.mxu0 0.0
    %5390 = vmatpush1.msra.mxu0 1.0
    %5391 = vmatprep.subr.mxu0 0.0
    %5392 = vmatpush1.msra.mxu0 1.0
    %5393 = vmatprep.subr.mxu0 0.0
    %5394 = vmatpush1.msra.mxu0 1.0
    %5395 = vmatprep.subr.mxu0 0.0
    %5396 = vmatpush1.msra.mxu0 1.0
    %5397 = vmatprep.subr.mxu0 0.0
    %5398 = vmatpush1.msra.mxu0 1.0
    %5399 = vmatprep.subr.mxu0 0.0
    %5400 = vmatpush1.msra.mxu0 1.0
    %5401 = vmatprep.subr.mxu0 0.0
    %5402 = vmatpush1.msra.mxu0 1.0
    %5403 = vmatprep.subr.mxu0 0.0
    %5404 = vmatpush1.msra.mxu0 1.0
    %5405 = vmatprep.subr.mxu0 0.0
    %5406 = vmatpush1.msra.mxu0 1.0
    %5407 = vmatprep.subr.mxu0 0.0
    %5408 = vmatpush1.msra.mxu0 1.0
    %5409 = vmatprep.subr.mxu0 0.0
    %5410 = vmatpush1.msra.mxu0 1.0
    %5411 = vmatprep.subr.mxu0 0.0
    %5412 = vmatpush1.msra.mxu0 1.0
    %5413 = vmatprep.subr.mxu0 0.0
    %5414 = vmatpush1.msra.mxu0 1.0
    %5415 = vmatprep.subr.mxu0 0.0
    %5416 = vmatpush1.msra.mxu0 1.0
    %5417 = vmatprep.mubr.f32.mxu0 %v5141
    %5418 = vmatmul.mubr.f32.gmra.mrb[0].mxu0 %v5140
    %v5419 = vpop.f32.mrb[0].mxu0
    %v5420 = vadd.f32 %v5350, %v5419
    %v5421 = vpop.f32.mrb[0].mxu0
    %5422 = vdwg.mxu0
    %5423 = vadd.xlane.f32.xlu0 %v5420
    %v5424 = vpop.xlane.xlu0 %5423
    %v5425 = vmul.f32 %v5424, %v988
    %v5426 = vmul.f32 %v5425, 0.0009765625
    %v5427 = vsub.f32 %v5134, %v5426
    %v5428 = vsub.f32 %v5135, %v5426
    %v5429 = vsub.f32 %v5136, %v5426
    %v5430 = vsub.f32 %v5137, %v5426
    %v5431 = vsub.f32 %v5138, %v5426
    %v5432 = vsub.f32 %v5139, %v5426
    %v5433 = vsub.f32 %v5140, %v5426
    %v5434 = vsub.f32 %v5141, %v5426
    %v5435 = vmul.f32 %v5427, %v5427
    %v5436 = vmul.f32 %v5428, %v5428
    %v5437 = vmul.f32 %v5429, %v5429
    %v5438 = vmul.f32 %v5430, %v5430
    %v5439 = vmul.f32 %v5431, %v5431
    %v5440 = vmul.f32 %v5432, %v5432
    %v5441 = vmul.f32 %v5433, %v5433
    %v5442 = vmul.f32 %v5434, %v5434
    %5443 = vmatprep.subr.mxu0 0.0
    %5444 = vmatpush1.msra.mxu0 1.0
    %5445 = vmatprep.subr.mxu0 0.0
    %5446 = vmatpush1.msra.mxu0 1.0
    %5447 = vmatprep.subr.mxu0 0.0
    %5448 = vmatpush1.msra.mxu0 1.0
    %5449 = vmatprep.subr.mxu0 0.0
    %5450 = vmatpush1.msra.mxu0 1.0
    %5451 = vmatprep.subr.mxu0 0.0
    %5452 = vmatpush1.msra.mxu0 1.0
    %5453 = vmatprep.subr.mxu0 0.0
    %5454 = vmatpush1.msra.mxu0 1.0
    %5455 = vmatprep.subr.mxu0 0.0
    %5456 = vmatpush1.msra.mxu0 1.0
    %5457 = vmatprep.subr.mxu0 0.0
    %5458 = vmatpush1.msra.mxu0 1.0
    %5459 = vmatprep.subr.mxu0 0.0
    %5460 = vmatpush1.msra.mxu0 1.0
    %5461 = vmatprep.subr.mxu0 0.0
    %5462 = vmatpush1.msra.mxu0 1.0
    %5463 = vmatprep.subr.mxu0 0.0
    %5464 = vmatpush1.msra.mxu0 1.0
    %5465 = vmatprep.subr.mxu0 0.0
    %5466 = vmatpush1.msra.mxu0 1.0
    %5467 = vmatprep.subr.mxu0 0.0
    %5468 = vmatpush1.msra.mxu0 1.0
    %5469 = vmatprep.subr.mxu0 0.0
    %5470 = vmatpush1.msra.mxu0 1.0
    %5471 = vmatprep.subr.mxu0 0.0
    %5472 = vmatpush1.msra.mxu0 1.0
    %5473 = vmatprep.subr.mxu0 0.0
    %5474 = vmatpush1.msra.mxu0 1.0
    %5475 = vmatprep.subr.mxu0 0.0
    %5476 = vmatpush1.msra.mxu0 1.0
    %5477 = vmatprep.subr.mxu0 0.0
    %5478 = vmatpush1.msra.mxu0 1.0
    %5479 = vmatprep.subr.mxu0 0.0
    %5480 = vmatpush1.msra.mxu0 1.0
    %5481 = vmatprep.subr.mxu0 0.0
    %5482 = vmatpush1.msra.mxu0 1.0
    %5483 = vmatprep.subr.mxu0 0.0
    %5484 = vmatpush1.msra.mxu0 1.0
    %5485 = vmatprep.subr.mxu0 0.0
    %5486 = vmatpush1.msra.mxu0 1.0
    %5487 = vmatprep.subr.mxu0 0.0
    %5488 = vmatpush1.msra.mxu0 1.0
    %5489 = vmatprep.subr.mxu0 0.0
    %5490 = vmatpush1.msra.mxu0 1.0
    %5491 = vmatprep.subr.mxu0 0.0
    %5492 = vmatpush1.msra.mxu0 1.0
    %5493 = vmatprep.subr.mxu0 0.0
    %5494 = vmatpush1.msra.mxu0 1.0
    %5495 = vmatprep.subr.mxu0 0.0
    %5496 = vmatpush1.msra.mxu0 1.0
    %5497 = vmatprep.subr.mxu0 0.0
    %5498 = vmatpush1.msra.mxu0 1.0
    %5499 = vmatprep.subr.mxu0 0.0
    %5500 = vmatpush1.msra.mxu0 1.0
    %5501 = vmatprep.subr.mxu0 0.0
    %5502 = vmatpush1.msra.mxu0 1.0
    %5503 = vmatprep.subr.mxu0 0.0
    %5504 = vmatpush1.msra.mxu0 1.0
    %5505 = vmatprep.subr.mxu0 0.0
    %5506 = vmatpush1.msra.mxu0 1.0
    %5507 = vmatprep.mubr.f32.mxu0 %v5436
    %5508 = vmatmul.mubr.f32.gmra.mrb[0].mxu0 %v5435
    %v5509 = vpop.f32.mrb[0].mxu0
    %v5510 = vadd.f32 0.0, %v5509
    %v5511 = vpop.f32.mrb[0].mxu0
    %5512 = vdwg.mxu0
    %5513 = vmatprep.subr.mxu0 0.0
    %5514 = vmatpush1.msra.mxu0 1.0
    %5515 = vmatprep.subr.mxu0 0.0
    %5516 = vmatpush1.msra.mxu0 1.0
    %5517 = vmatprep.subr.mxu0 0.0
    %5518 = vmatpush1.msra.mxu0 1.0
    %5519 = vmatprep.subr.mxu0 0.0
    %5520 = vmatpush1.msra.mxu0 1.0
    %5521 = vmatprep.subr.mxu0 0.0
    %5522 = vmatpush1.msra.mxu0 1.0
    %5523 = vmatprep.subr.mxu0 0.0
    %5524 = vmatpush1.msra.mxu0 1.0
    %5525 = vmatprep.subr.mxu0 0.0
    %5526 = vmatpush1.msra.mxu0 1.0
    %5527 = vmatprep.subr.mxu0 0.0
    %5528 = vmatpush1.msra.mxu0 1.0
    %5529 = vmatprep.subr.mxu0 0.0
    %5530 = vmatpush1.msra.mxu0 1.0
    %5531 = vmatprep.subr.mxu0 0.0
    %5532 = vmatpush1.msra.mxu0 1.0
    %5533 = vmatprep.subr.mxu0 0.0
    %5534 = vmatpush1.msra.mxu0 1.0
    %5535 = vmatprep.subr.mxu0 0.0
    %5536 = vmatpush1.msra.mxu0 1.0
    %5537 = vmatprep.subr.mxu0 0.0
    %5538 = vmatpush1.msra.mxu0 1.0
    %5539 = vmatprep.subr.mxu0 0.0
    %5540 = vmatpush1.msra.mxu0 1.0
    %5541 = vmatprep.subr.mxu0 0.0
    %5542 = vmatpush1.msra.mxu0 1.0
    %5543 = vmatprep.subr.mxu0 0.0
    %5544 = vmatpush1.msra.mxu0 1.0
    %5545 = vmatprep.subr.mxu0 0.0
    %5546 = vmatpush1.msra.mxu0 1.0
    %5547 = vmatprep.subr.mxu0 0.0
    %5548 = vmatpush1.msra.mxu0 1.0
    %5549 = vmatprep.subr.mxu0 0.0
    %5550 = vmatpush1.msra.mxu0 1.0
    %5551 = vmatprep.subr.mxu0 0.0
    %5552 = vmatpush1.msra.mxu0 1.0
    %5553 = vmatprep.subr.mxu0 0.0
    %5554 = vmatpush1.msra.mxu0 1.0
    %5555 = vmatprep.subr.mxu0 0.0
    %5556 = vmatpush1.msra.mxu0 1.0
    %5557 = vmatprep.subr.mxu0 0.0
    %5558 = vmatpush1.msra.mxu0 1.0
    %5559 = vmatprep.subr.mxu0 0.0
    %5560 = vmatpush1.msra.mxu0 1.0
    %5561 = vmatprep.subr.mxu0 0.0
    %5562 = vmatpush1.msra.mxu0 1.0
    %5563 = vmatprep.subr.mxu0 0.0
    %5564 = vmatpush1.msra.mxu0 1.0
    %5565 = vmatprep.subr.mxu0 0.0
    %5566 = vmatpush1.msra.mxu0 1.0
    %5567 = vmatprep.subr.mxu0 0.0
    %5568 = vmatpush1.msra.mxu0 1.0
    %5569 = vmatprep.subr.mxu0 0.0
    %5570 = vmatpush1.msra.mxu0 1.0
    %5571 = vmatprep.subr.mxu0 0.0
    %5572 = vmatpush1.msra.mxu0 1.0
    %5573 = vmatprep.subr.mxu0 0.0
    %5574 = vmatpush1.msra.mxu0 1.0
    %5575 = vmatprep.subr.mxu0 0.0
    %5576 = vmatpush1.msra.mxu0 1.0
    %5577 = vmatprep.mubr.f32.mxu0 %v5438
    %5578 = vmatmul.mubr.f32.gmra.mrb[0].mxu0 %v5437
    %v5579 = vpop.f32.mrb[0].mxu0
    %v5580 = vadd.f32 %v5510, %v5579
    %v5581 = vpop.f32.mrb[0].mxu0
    %5582 = vdwg.mxu0
    %5583 = vmatprep.subr.mxu0 0.0
    %5584 = vmatpush1.msra.mxu0 1.0
    %5585 = vmatprep.subr.mxu0 0.0
    %5586 = vmatpush1.msra.mxu0 1.0
    %5587 = vmatprep.subr.mxu0 0.0
    %5588 = vmatpush1.msra.mxu0 1.0
    %5589 = vmatprep.subr.mxu0 0.0
    %5590 = vmatpush1.msra.mxu0 1.0
    %5591 = vmatprep.subr.mxu0 0.0
    %5592 = vmatpush1.msra.mxu0 1.0
    %5593 = vmatprep.subr.mxu0 0.0
    %5594 = vmatpush1.msra.mxu0 1.0
    %5595 = vmatprep.subr.mxu0 0.0
    %5596 = vmatpush1.msra.mxu0 1.0
    %5597 = vmatprep.subr.mxu0 0.0
    %5598 = vmatpush1.msra.mxu0 1.0
    %5599 = vmatprep.subr.mxu0 0.0
    %5600 = vmatpush1.msra.mxu0 1.0
    %5601 = vmatprep.subr.mxu0 0.0
    %5602 = vmatpush1.msra.mxu0 1.0
    %5603 = vmatprep.subr.mxu0 0.0
    %5604 = vmatpush1.msra.mxu0 1.0
    %5605 = vmatprep.subr.mxu0 0.0
    %5606 = vmatpush1.msra.mxu0 1.0
    %5607 = vmatprep.subr.mxu0 0.0
    %5608 = vmatpush1.msra.mxu0 1.0
    %5609 = vmatprep.subr.mxu0 0.0
    %5610 = vmatpush1.msra.mxu0 1.0
    %5611 = vmatprep.subr.mxu0 0.0
    %5612 = vmatpush1.msra.mxu0 1.0
    %5613 = vmatprep.subr.mxu0 0.0
    %5614 = vmatpush1.msra.mxu0 1.0
    %5615 = vmatprep.subr.mxu0 0.0
    %5616 = vmatpush1.msra.mxu0 1.0
    %5617 = vmatprep.subr.mxu0 0.0
    %5618 = vmatpush1.msra.mxu0 1.0
    %5619 = vmatprep.subr.mxu0 0.0
    %5620 = vmatpush1.msra.mxu0 1.0
    %5621 = vmatprep.subr.mxu0 0.0
    %5622 = vmatpush1.msra.mxu0 1.0
    %5623 = vmatprep.subr.mxu0 0.0
    %5624 = vmatpush1.msra.mxu0 1.0
    %5625 = vmatprep.subr.mxu0 0.0
    %5626 = vmatpush1.msra.mxu0 1.0
    %5627 = vmatprep.subr.mxu0 0.0
    %5628 = vmatpush1.msra.mxu0 1.0
    %5629 = vmatprep.subr.mxu0 0.0
    %5630 = vmatpush1.msra.mxu0 1.0
    %5631 = vmatprep.subr.mxu0 0.0
    %5632 = vmatpush1.msra.mxu0 1.0
    %5633 = vmatprep.subr.mxu0 0.0
    %5634 = vmatpush1.msra.mxu0 1.0
    %5635 = vmatprep.subr.mxu0 0.0
    %5636 = vmatpush1.msra.mxu0 1.0
    %5637 = vmatprep.subr.mxu0 0.0
    %5638 = vmatpush1.msra.mxu0 1.0
    %5639 = vmatprep.subr.mxu0 0.0
    %5640 = vmatpush1.msra.mxu0 1.0
    %5641 = vmatprep.subr.mxu0 0.0
    %5642 = vmatpush1.msra.mxu0 1.0
    %5643 = vmatprep.subr.mxu0 0.0
    %5644 = vmatpush1.msra.mxu0 1.0
    %5645 = vmatprep.subr.mxu0 0.0
    %5646 = vmatpush1.msra.mxu0 1.0
    %5647 = vmatprep.mubr.f32.mxu0 %v5440
    %5648 = vmatmul.mubr.f32.gmra.mrb[0].mxu0 %v5439
    %v5649 = vpop.f32.mrb[0].mxu0
    %v5650 = vadd.f32 %v5580, %v5649
    %v5651 = vpop.f32.mrb[0].mxu0
    %5652 = vdwg.mxu0
    %5653 = vmatprep.subr.mxu0 0.0
    %5654 = vmatpush1.msra.mxu0 1.0
    %5655 = vmatprep.subr.mxu0 0.0
    %5656 = vmatpush1.msra.mxu0 1.0
    %5657 = vmatprep.subr.mxu0 0.0
    %5658 = vmatpush1.msra.mxu0 1.0
    %5659 = vmatprep.subr.mxu0 0.0
    %5660 = vmatpush1.msra.mxu0 1.0
    %5661 = vmatprep.subr.mxu0 0.0
    %5662 = vmatpush1.msra.mxu0 1.0
    %5663 = vmatprep.subr.mxu0 0.0
    %5664 = vmatpush1.msra.mxu0 1.0
    %5665 = vmatprep.subr.mxu0 0.0
    %5666 = vmatpush1.msra.mxu0 1.0
    %5667 = vmatprep.subr.mxu0 0.0
    %5668 = vmatpush1.msra.mxu0 1.0
    %5669 = vmatprep.subr.mxu0 0.0
    %5670 = vmatpush1.msra.mxu0 1.0
    %5671 = vmatprep.subr.mxu0 0.0
    %5672 = vmatpush1.msra.mxu0 1.0
    %5673 = vmatprep.subr.mxu0 0.0
    %5674 = vmatpush1.msra.mxu0 1.0
    %5675 = vmatprep.subr.mxu0 0.0
    %5676 = vmatpush1.msra.mxu0 1.0
    %5677 = vmatprep.subr.mxu0 0.0
    %5678 = vmatpush1.msra.mxu0 1.0
    %5679 = vmatprep.subr.mxu0 0.0
    %5680 = vmatpush1.msra.mxu0 1.0
    %5681 = vmatprep.subr.mxu0 0.0
    %5682 = vmatpush1.msra.mxu0 1.0
    %5683 = vmatprep.subr.mxu0 0.0
    %5684 = vmatpush1.msra.mxu0 1.0
    %5685 = vmatprep.subr.mxu0 0.0
    %5686 = vmatpush1.msra.mxu0 1.0
    %5687 = vmatprep.subr.mxu0 0.0
    %5688 = vmatpush1.msra.mxu0 1.0
    %5689 = vmatprep.subr.mxu0 0.0
    %5690 = vmatpush1.msra.mxu0 1.0
    %5691 = vmatprep.subr.mxu0 0.0
    %5692 = vmatpush1.msra.mxu0 1.0
    %5693 = vmatprep.subr.mxu0 0.0
    %5694 = vmatpush1.msra.mxu0 1.0
    %5695 = vmatprep.subr.mxu0 0.0
    %5696 = vmatpush1.msra.mxu0 1.0
    %5697 = vmatprep.subr.mxu0 0.0
    %5698 = vmatpush1.msra.mxu0 1.0
    %5699 = vmatprep.subr.mxu0 0.0
    %5700 = vmatpush1.msra.mxu0 1.0
    %5701 = vmatprep.subr.mxu0 0.0
    %5702 = vmatpush1.msra.mxu0 1.0
    %5703 = vmatprep.subr.mxu0 0.0
    %5704 = vmatpush1.msra.mxu0 1.0
    %5705 = vmatprep.subr.mxu0 0.0
    %5706 = vmatpush1.msra.mxu0 1.0
    %5707 = vmatprep.subr.mxu0 0.0
    %5708 = vmatpush1.msra.mxu0 1.0
    %5709 = vmatprep.subr.mxu0 0.0
    %5710 = vmatpush1.msra.mxu0 1.0
    %5711 = vmatprep.subr.mxu0 0.0
    %5712 = vmatpush1.msra.mxu0 1.0
    %5713 = vmatprep.subr.mxu0 0.0
    %5714 = vmatpush1.msra.mxu0 1.0
    %5715 = vmatprep.subr.mxu0 0.0
    %5716 = vmatpush1.msra.mxu0 1.0
    %5717 = vmatprep.mubr.f32.mxu0 %v5442
    %5718 = vmatmul.mubr.f32.gmra.mrb[0].mxu0 %v5441
    %v5719 = vpop.f32.mrb[0].mxu0
    %v5720 = vadd.f32 %v5650, %v5719
    %v5721 = vpop.f32.mrb[0].mxu0
    %5722 = vdwg.mxu0
    %5723 = vadd.xlane.f32.xlu0 %v5720
    %v5724 = vpop.xlane.xlu0 %5723
    %v5725 = vmul.f32 %v5724, %v988
    %v5726 = vmul.f32 %v5725, 0.0009765625
    %v5727 = vadd.f32 %v5726, 1e-05
    %v5728 = vrsqrt.pop %v5727
    %v5729 = vmul.f32 %v5427, %v5728
    %v5730 = vmul.f32 %v5428, %v5728
    %v5731 = vmul.f32 %v5429, %v5728
    %v5732 = vmul.f32 %v5430, %v5728
    %v5733 = vmul.f32 %v5431, %v5728
    %v5734 = vmul.f32 %v5432, %v5728
    %v5735 = vmul.f32 %v5433, %v5728
    %v5736 = vmul.f32 %v5434, %v5728
    %v5737 = vstv %s5142
    %v5738 = vmul.f32 %v5737, %v5729
    %v5739 = vmul.f32 %v5737, %v5730
    %v5740 = vmul.f32 %v5737, %v5731
    %v5741 = vmul.f32 %v5737, %v5732
    %v5742 = vmul.f32 %v5737, %v5733
    %v5743 = vmul.f32 %v5737, %v5734
    %v5744 = vmul.f32 %v5737, %v5735
    %v5745 = vmul.f32 %v5737, %v5736
    %v5746 = vadd.f32 %v4742, %v5738
    %v5747 = vadd.f32 %v4743, %v5739
    %v5748 = vadd.f32 %v4744, %v5740
    %v5749 = vadd.f32 %v4745, %v5741
    %v5750 = vadd.f32 %v4746, %v5742
    %v5751 = vadd.f32 %v4747, %v5743
    %v5752 = vadd.f32 %v4748, %v5744
    %v5753 = vadd.f32 %v4749, %v5745
    %s5754 = sld [smem:[#allocation2 + $0x183]]
    %5755 = vmatprep.subr.mxu0 0.0
    %5756 = vmatpush1.msra.mxu0 1.0
    %5757 = vmatprep.subr.mxu0 0.0
    %5758 = vmatpush1.msra.mxu0 1.0
    %5759 = vmatprep.subr.mxu0 0.0
    %5760 = vmatpush1.msra.mxu0 1.0
    %5761 = vmatprep.subr.mxu0 0.0
    %5762 = vmatpush1.msra.mxu0 1.0
    %5763 = vmatprep.subr.mxu0 0.0
    %5764 = vmatpush1.msra.mxu0 1.0
    %5765 = vmatprep.subr.mxu0 0.0
    %5766 = vmatpush1.msra.mxu0 1.0
    %5767 = vmatprep.subr.mxu0 0.0
    %5768 = vmatpush1.msra.mxu0 1.0
    %5769 = vmatprep.subr.mxu0 0.0
    %5770 = vmatpush1.msra.mxu0 1.0
    %5771 = vmatprep.subr.mxu0 0.0
    %5772 = vmatpush1.msra.mxu0 1.0
    %5773 = vmatprep.subr.mxu0 0.0
    %5774 = vmatpush1.msra.mxu0 1.0
    %5775 = vmatprep.subr.mxu0 0.0
    %5776 = vmatpush1.msra.mxu0 1.0
    %5777 = vmatprep.subr.mxu0 0.0
    %5778 = vmatpush1.msra.mxu0 1.0
    %5779 = vmatprep.subr.mxu0 0.0
    %5780 = vmatpush1.msra.mxu0 1.0
    %5781 = vmatprep.subr.mxu0 0.0
    %5782 = vmatpush1.msra.mxu0 1.0
    %5783 = vmatprep.subr.mxu0 0.0
    %5784 = vmatpush1.msra.mxu0 1.0
    %5785 = vmatprep.subr.mxu0 0.0
    %5786 = vmatpush1.msra.mxu0 1.0
    %5787 = vmatprep.subr.mxu0 0.0
    %5788 = vmatpush1.msra.mxu0 1.0
    %5789 = vmatprep.subr.mxu0 0.0
    %5790 = vmatpush1.msra.mxu0 1.0
    %5791 = vmatprep.subr.mxu0 0.0
    %5792 = vmatpush1.msra.mxu0 1.0
    %5793 = vmatprep.subr.mxu0 0.0
    %5794 = vmatpush1.msra.mxu0 1.0
    %5795 = vmatprep.subr.mxu0 0.0
    %5796 = vmatpush1.msra.mxu0 1.0
    %5797 = vmatprep.subr.mxu0 0.0
    %5798 = vmatpush1.msra.mxu0 1.0
    %5799 = vmatprep.subr.mxu0 0.0
    %5800 = vmatpush1.msra.mxu0 1.0
    %5801 = vmatprep.subr.mxu0 0.0
    %5802 = vmatpush1.msra.mxu0 1.0
    %5803 = vmatprep.subr.mxu0 0.0
    %5804 = vmatpush1.msra.mxu0 1.0
    %5805 = vmatprep.subr.mxu0 0.0
    %5806 = vmatpush1.msra.mxu0 1.0
    %5807 = vmatprep.subr.mxu0 0.0
    %5808 = vmatpush1.msra.mxu0 1.0
    %5809 = vmatprep.subr.mxu0 0.0
    %5810 = vmatpush1.msra.mxu0 1.0
    %5811 = vmatprep.subr.mxu0 0.0
    %5812 = vmatpush1.msra.mxu0 1.0
    %5813 = vmatprep.subr.mxu0 0.0
    %5814 = vmatpush1.msra.mxu0 1.0
    %5815 = vmatprep.subr.mxu0 0.0
    %5816 = vmatpush1.msra.mxu0 1.0
    %5817 = vmatprep.subr.mxu0 0.0
    %5818 = vmatpush1.msra.mxu0 1.0
    %5819 = vmatprep.mubr.f32.mxu0 %v5071
    %5820 = vmatmul.mubr.f32.gmra.mrb[0].mxu0 %v5070
    %v5821 = vpop.f32.mrb[0].mxu0
    %v5822 = vadd.f32 0.0, %v5821
    %v5823 = vpop.f32.mrb[0].mxu0
    %5824 = vdwg.mxu0
    %5825 = vmatprep.subr.mxu0 0.0
    %5826 = vmatpush1.msra.mxu0 1.0
    %5827 = vmatprep.subr.mxu0 0.0
    %5828 = vmatpush1.msra.mxu0 1.0
    %5829 = vmatprep.subr.mxu0 0.0
    %5830 = vmatpush1.msra.mxu0 1.0
    %5831 = vmatprep.subr.mxu0 0.0
    %5832 = vmatpush1.msra.mxu0 1.0
    %5833 = vmatprep.subr.mxu0 0.0
    %5834 = vmatpush1.msra.mxu0 1.0
    %5835 = vmatprep.subr.mxu0 0.0
    %5836 = vmatpush1.msra.mxu0 1.0
    %5837 = vmatprep.subr.mxu0 0.0
    %5838 = vmatpush1.msra.mxu0 1.0
    %5839 = vmatprep.subr.mxu0 0.0
    %5840 = vmatpush1.msra.mxu0 1.0
    %5841 = vmatprep.subr.mxu0 0.0
    %5842 = vmatpush1.msra.mxu0 1.0
    %5843 = vmatprep.subr.mxu0 0.0
    %5844 = vmatpush1.msra.mxu0 1.0
    %5845 = vmatprep.subr.mxu0 0.0
    %5846 = vmatpush1.msra.mxu0 1.0
    %5847 = vmatprep.subr.mxu0 0.0
    %5848 = vmatpush1.msra.mxu0 1.0
    %5849 = vmatprep.subr.mxu0 0.0
    %5850 = vmatpush1.msra.mxu0 1.0
    %5851 = vmatprep.subr.mxu0 0.0
    %5852 = vmatpush1.msra.mxu0 1.0
    %5853 = vmatprep.subr.mxu0 0.0
    %5854 = vmatpush1.msra.mxu0 1.0
    %5855 = vmatprep.subr.mxu0 0.0
    %5856 = vmatpush1.msra.mxu0 1.0
    %5857 = vmatprep.subr.mxu0 0.0
    %5858 = vmatpush1.msra.mxu0 1.0
    %5859 = vmatprep.subr.mxu0 0.0
    %5860 = vmatpush1.msra.mxu0 1.0
    %5861 = vmatprep.subr.mxu0 0.0
    %5862 = vmatpush1.msra.mxu0 1.0
    %5863 = vmatprep.subr.mxu0 0.0
    %5864 = vmatpush1.msra.mxu0 1.0
    %5865 = vmatprep.subr.mxu0 0.0
    %5866 = vmatpush1.msra.mxu0 1.0
    %5867 = vmatprep.subr.mxu0 0.0
    %5868 = vmatpush1.msra.mxu0 1.0
    %5869 = vmatprep.subr.mxu0 0.0
    %5870 = vmatpush1.msra.mxu0 1.0
    %5871 = vmatprep.subr.mxu0 0.0
    %5872 = vmatpush1.msra.mxu0 1.0
    %5873 = vmatprep.subr.mxu0 0.0
    %5874 = vmatpush1.msra.mxu0 1.0
    %5875 = vmatprep.subr.mxu0 0.0
    %5876 = vmatpush1.msra.mxu0 1.0
    %5877 = vmatprep.subr.mxu0 0.0
    %5878 = vmatpush1.msra.mxu0 1.0
    %5879 = vmatprep.subr.mxu0 0.0
    %5880 = vmatpush1.msra.mxu0 1.0
    %5881 = vmatprep.subr.mxu0 0.0
    %5882 = vmatpush1.msra.mxu0 1.0
    %5883 = vmatprep.subr.mxu0 0.0
    %5884 = vmatpush1.msra.mxu0 1.0
    %5885 = vmatprep.subr.mxu0 0.0
    %5886 = vmatpush1.msra.mxu0 1.0
    %5887 = vmatprep.subr.mxu0 0.0
    %5888 = vmatpush1.msra.mxu0 1.0
    %5889 = vmatprep.mubr.f32.mxu0 %v5073
    %5890 = vmatmul.mubr.f32.gmra.mrb[0].mxu0 %v5072
    %v5891 = vpop.f32.mrb[0].mxu0
    %v5892 = vadd.f32 %v5822, %v5891
    %v5893 = vpop.f32.mrb[0].mxu0
    %5894 = vdwg.mxu0
    %5895 = vmatprep.subr.mxu0 0.0
    %5896 = vmatpush1.msra.mxu0 1.0
    %5897 = vmatprep.subr.mxu0 0.0
    %5898 = vmatpush1.msra.mxu0 1.0
    %5899 = vmatprep.subr.mxu0 0.0
    %5900 = vmatpush1.msra.mxu0 1.0
    %5901 = vmatprep.subr.mxu0 0.0
    %5902 = vmatpush1.msra.mxu0 1.0
    %5903 = vmatprep.subr.mxu0 0.0
    %5904 = vmatpush1.msra.mxu0 1.0
    %5905 = vmatprep.subr.mxu0 0.0
    %5906 = vmatpush1.msra.mxu0 1.0
    %5907 = vmatprep.subr.mxu0 0.0
    %5908 = vmatpush1.msra.mxu0 1.0
    %5909 = vmatprep.subr.mxu0 0.0
    %5910 = vmatpush1.msra.mxu0 1.0
    %5911 = vmatprep.subr.mxu0 0.0
    %5912 = vmatpush1.msra.mxu0 1.0
    %5913 = vmatprep.subr.mxu0 0.0
    %5914 = vmatpush1.msra.mxu0 1.0
    %5915 = vmatprep.subr.mxu0 0.0
    %5916 = vmatpush1.msra.mxu0 1.0
    %5917 = vmatprep.subr.mxu0 0.0
    %5918 = vmatpush1.msra.mxu0 1.0
    %5919 = vmatprep.subr.mxu0 0.0
    %5920 = vmatpush1.msra.mxu0 1.0
    %5921 = vmatprep.subr.mxu0 0.0
    %5922 = vmatpush1.msra.mxu0 1.0
    %5923 = vmatprep.subr.mxu0 0.0
    %5924 = vmatpush1.msra.mxu0 1.0
    %5925 = vmatprep.subr.mxu0 0.0
    %5926 = vmatpush1.msra.mxu0 1.0
    %5927 = vmatprep.subr.mxu0 0.0
    %5928 = vmatpush1.msra.mxu0 1.0
    %5929 = vmatprep.subr.mxu0 0.0
    %5930 = vmatpush1.msra.mxu0 1.0
    %5931 = vmatprep.subr.mxu0 0.0
    %5932 = vmatpush1.msra.mxu0 1.0
    %5933 = vmatprep.subr.mxu0 0.0
    %5934 = vmatpush1.msra.mxu0 1.0
    %5935 = vmatprep.subr.mxu0 0.0
    %5936 = vmatpush1.msra.mxu0 1.0
    %5937 = vmatprep.subr.mxu0 0.0
    %5938 = vmatpush1.msra.mxu0 1.0
    %5939 = vmatprep.subr.mxu0 0.0
    %5940 = vmatpush1.msra.mxu0 1.0
    %5941 = vmatprep.subr.mxu0 0.0
    %5942 = vmatpush1.msra.mxu0 1.0
    %5943 = vmatprep.subr.mxu0 0.0
    %5944 = vmatpush1.msra.mxu0 1.0
    %5945 = vmatprep.subr.mxu0 0.0
    %5946 = vmatpush1.msra.mxu0 1.0
    %5947 = vmatprep.subr.mxu0 0.0
    %5948 = vmatpush1.msra.mxu0 1.0
    %5949 = vmatprep.subr.mxu0 0.0
    %5950 = vmatpush1.msra.mxu0 1.0
    %5951 = vmatprep.subr.mxu0 0.0
    %5952 = vmatpush1.msra.mxu0 1.0
    %5953 = vmatprep.subr.mxu0 0.0
    %5954 = vmatpush1.msra.mxu0 1.0
    %5955 = vmatprep.subr.mxu0 0.0
    %5956 = vmatpush1.msra.mxu0 1.0
    %5957 = vmatprep.subr.mxu0 0.0
    %5958 = vmatpush1.msra.mxu0 1.0
    %5959 = vmatprep.mubr.f32.mxu0 %v5075
    %5960 = vmatmul.mubr.f32.gmra.mrb[0].mxu0 %v5074
    %v5961 = vpop.f32.mrb[0].mxu0
    %v5962 = vadd.f32 %v5892, %v5961
    %v5963 = vpop.f32.mrb[0].mxu0
    %5964 = vdwg.mxu0
    %5965 = vmatprep.subr.mxu0 0.0
    %5966 = vmatpush1.msra.mxu0 1.0
    %5967 = vmatprep.subr.mxu0 0.0
    %5968 = vmatpush1.msra.mxu0 1.0
    %5969 = vmatprep.subr.mxu0 0.0
    %5970 = vmatpush1.msra.mxu0 1.0
    %5971 = vmatprep.subr.mxu0 0.0
    %5972 = vmatpush1.msra.mxu0 1.0
    %5973 = vmatprep.subr.mxu0 0.0
    %5974 = vmatpush1.msra.mxu0 1.0
    %5975 = vmatprep.subr.mxu0 0.0
    %5976 = vmatpush1.msra.mxu0 1.0
    %5977 = vmatprep.subr.mxu0 0.0
    %5978 = vmatpush1.msra.mxu0 1.0
    %5979 = vmatprep.subr.mxu0 0.0
    %5980 = vmatpush1.msra.mxu0 1.0
    %5981 = vmatprep.subr.mxu0 0.0
    %5982 = vmatpush1.msra.mxu0 1.0
    %5983 = vmatprep.subr.mxu0 0.0
    %5984 = vmatpush1.msra.mxu0 1.0
    %5985 = vmatprep.subr.mxu0 0.0
    %5986 = vmatpush1.msra.mxu0 1.0
    %5987 = vmatprep.subr.mxu0 0.0
    %5988 = vmatpush1.msra.mxu0 1.0
    %5989 = vmatprep.subr.mxu0 0.0
    %5990 = vmatpush1.msra.mxu0 1.0
    %5991 = vmatprep.subr.mxu0 0.0
    %5992 = vmatpush1.msra.mxu0 1.0
    %5993 = vmatprep.subr.mxu0 0.0
    %5994 = vmatpush1.msra.mxu0 1.0
    %5995 = vmatprep.subr.mxu0 0.0
    %5996 = vmatpush1.msra.mxu0 1.0
    %5997 = vmatprep.subr.mxu0 0.0
    %5998 = vmatpush1.msra.mxu0 1.0
    %5999 = vmatprep.subr.mxu0 0.0
    %6000 = vmatpush1.msra.mxu0 1.0
    %6001 = vmatprep.subr.mxu0 0.0
    %6002 = vmatpush1.msra.mxu0 1.0
    %6003 = vmatprep.subr.mxu0 0.0
    %6004 = vmatpush1.msra.mxu0 1.0
    %6005 = vmatprep.subr.mxu0 0.0
    %6006 = vmatpush1.msra.mxu0 1.0
    %6007 = vmatprep.subr.mxu0 0.0
    %6008 = vmatpush1.msra.mxu0 1.0
    %6009 = vmatprep.subr.mxu0 0.0
    %6010 = vmatpush1.msra.mxu0 1.0
    %6011 = vmatprep.subr.mxu0 0.0
    %6012 = vmatpush1.msra.mxu0 1.0
    %6013 = vmatprep.subr.mxu0 0.0
    %6014 = vmatpush1.msra.mxu0 1.0
    %6015 = vmatprep.subr.mxu0 0.0
    %6016 = vmatpush1.msra.mxu0 1.0
    %6017 = vmatprep.subr.mxu0 0.0
    %6018 = vmatpush1.msra.mxu0 1.0
    %6019 = vmatprep.subr.mxu0 0.0
    %6020 = vmatpush1.msra.mxu0 1.0
    %6021 = vmatprep.subr.mxu0 0.0
    %6022 = vmatpush1.msra.mxu0 1.0
    %6023 = vmatprep.subr.mxu0 0.0
    %6024 = vmatpush1.msra.mxu0 1.0
    %6025 = vmatprep.subr.mxu0 0.0
    %6026 = vmatpush1.msra.mxu0 1.0
    %6027 = vmatprep.subr.mxu0 0.0
    %6028 = vmatpush1.msra.mxu0 1.0
    %6029 = vmatprep.mubr.f32.mxu0 %v5077
    %6030 = vmatmul.mubr.f32.gmra.mrb[0].mxu0 %v5076
    %v6031 = vpop.f32.mrb[0].mxu0
    %v6032 = vadd.f32 %v5962, %v6031
    %v6033 = vpop.f32.mrb[0].mxu0
    %6034 = vdwg.mxu0
    %6035 = vadd.xlane.f32.xlu0 %v6032
    %v6036 = vpop.xlane.xlu0 %6035
    %v6037 = vmul.f32 %v6036, %v988
    %v6038 = vmul.f32 %v6037, 0.0009765625
    %v6039 = vsub.f32 %v5070, %v6038
    %v6040 = vsub.f32 %v5071, %v6038
    %v6041 = vsub.f32 %v5072, %v6038
    %v6042 = vsub.f32 %v5073, %v6038
    %v6043 = vsub.f32 %v5074, %v6038
    %v6044 = vsub.f32 %v5075, %v6038
    %v6045 = vsub.f32 %v5076, %v6038
    %v6046 = vsub.f32 %v5077, %v6038
    %v6047 = vmul.f32 %v6039, %v6039
    %v6048 = vmul.f32 %v6040, %v6040
    %v6049 = vmul.f32 %v6041, %v6041
    %v6050 = vmul.f32 %v6042, %v6042
    %v6051 = vmul.f32 %v6043, %v6043
    %v6052 = vmul.f32 %v6044, %v6044
    %v6053 = vmul.f32 %v6045, %v6045
    %v6054 = vmul.f32 %v6046, %v6046
    %6055 = vmatprep.subr.mxu0 0.0
    %6056 = vmatpush1.msra.mxu0 1.0
    %6057 = vmatprep.subr.mxu0 0.0
    %6058 = vmatpush1.msra.mxu0 1.0
    %6059 = vmatprep.subr.mxu0 0.0
    %6060 = vmatpush1.msra.mxu0 1.0
    %6061 = vmatprep.subr.mxu0 0.0
    %6062 = vmatpush1.msra.mxu0 1.0
    %6063 = vmatprep.subr.mxu0 0.0
    %6064 = vmatpush1.msra.mxu0 1.0
    %6065 = vmatprep.subr.mxu0 0.0
    %6066 = vmatpush1.msra.mxu0 1.0
    %6067 = vmatprep.subr.mxu0 0.0
    %6068 = vmatpush1.msra.mxu0 1.0
    %6069 = vmatprep.subr.mxu0 0.0
    %6070 = vmatpush1.msra.mxu0 1.0
    %6071 = vmatprep.subr.mxu0 0.0
    %6072 = vmatpush1.msra.mxu0 1.0
    %6073 = vmatprep.subr.mxu0 0.0
    %6074 = vmatpush1.msra.mxu0 1.0
    %6075 = vmatprep.subr.mxu0 0.0
    %6076 = vmatpush1.msra.mxu0 1.0
    %6077 = vmatprep.subr.mxu0 0.0
    %6078 = vmatpush1.msra.mxu0 1.0
    %6079 = vmatprep.subr.mxu0 0.0
    %6080 = vmatpush1.msra.mxu0 1.0
    %6081 = vmatprep.subr.mxu0 0.0
    %6082 = vmatpush1.msra.mxu0 1.0
    %6083 = vmatprep.subr.mxu0 0.0
    %6084 = vmatpush1.msra.mxu0 1.0
    %6085 = vmatprep.subr.mxu0 0.0
    %6086 = vmatpush1.msra.mxu0 1.0
    %6087 = vmatprep.subr.mxu0 0.0
    %6088 = vmatpush1.msra.mxu0 1.0
    %6089 = vmatprep.subr.mxu0 0.0
    %6090 = vmatpush1.msra.mxu0 1.0
    %6091 = vmatprep.subr.mxu0 0.0
    %6092 = vmatpush1.msra.mxu0 1.0
    %6093 = vmatprep.subr.mxu0 0.0
    %6094 = vmatpush1.msra.mxu0 1.0
    %6095 = vmatprep.subr.mxu0 0.0
    %6096 = vmatpush1.msra.mxu0 1.0
    %6097 = vmatprep.subr.mxu0 0.0
    %6098 = vmatpush1.msra.mxu0 1.0
    %6099 = vmatprep.subr.mxu0 0.0
    %6100 = vmatpush1.msra.mxu0 1.0
    %6101 = vmatprep.subr.mxu0 0.0
    %6102 = vmatpush1.msra.mxu0 1.0
    %6103 = vmatprep.subr.mxu0 0.0
    %6104 = vmatpush1.msra.mxu0 1.0
    %6105 = vmatprep.subr.mxu0 0.0
    %6106 = vmatpush1.msra.mxu0 1.0
    %6107 = vmatprep.subr.mxu0 0.0
    %6108 = vmatpush1.msra.mxu0 1.0
    %6109 = vmatprep.subr.mxu0 0.0
    %6110 = vmatpush1.msra.mxu0 1.0
    %6111 = vmatprep.subr.mxu0 0.0
    %6112 = vmatpush1.msra.mxu0 1.0
    %6113 = vmatprep.subr.mxu0 0.0
    %6114 = vmatpush1.msra.mxu0 1.0
    %6115 = vmatprep.subr.mxu0 0.0
    %6116 = vmatpush1.msra.mxu0 1.0
    %6117 = vmatprep.subr.mxu0 0.0
    %6118 = vmatpush1.msra.mxu0 1.0
    %6119 = vmatprep.mubr.f32.mxu0 %v6048
    %6120 = vmatmul.mubr.f32.gmra.mrb[0].mxu0 %v6047
    %v6121 = vpop.f32.mrb[0].mxu0
    %v6122 = vadd.f32 0.0, %v6121
    %v6123 = vpop.f32.mrb[0].mxu0
    %6124 = vdwg.mxu0
    %6125 = vmatprep.subr.mxu0 0.0
    %6126 = vmatpush1.msra.mxu0 1.0
    %6127 = vmatprep.subr.mxu0 0.0
    %6128 = vmatpush1.msra.mxu0 1.0
    %6129 = vmatprep.subr.mxu0 0.0
    %6130 = vmatpush1.msra.mxu0 1.0
    %6131 = vmatprep.subr.mxu0 0.0
    %6132 = vmatpush1.msra.mxu0 1.0
    %6133 = vmatprep.subr.mxu0 0.0
    %6134 = vmatpush1.msra.mxu0 1.0
    %6135 = vmatprep.subr.mxu0 0.0
    %6136 = vmatpush1.msra.mxu0 1.0
    %6137 = vmatprep.subr.mxu0 0.0
    %6138 = vmatpush1.msra.mxu0 1.0
    %6139 = vmatprep.subr.mxu0 0.0
    %6140 = vmatpush1.msra.mxu0 1.0
    %6141 = vmatprep.subr.mxu0 0.0
    %6142 = vmatpush1.msra.mxu0 1.0
    %6143 = vmatprep.subr.mxu0 0.0
    %6144 = vmatpush1.msra.mxu0 1.0
    %6145 = vmatprep.subr.mxu0 0.0
    %6146 = vmatpush1.msra.mxu0 1.0
    %6147 = vmatprep.subr.mxu0 0.0
    %6148 = vmatpush1.msra.mxu0 1.0
    %6149 = vmatprep.subr.mxu0 0.0
    %6150 = vmatpush1.msra.mxu0 1.0
    %6151 = vmatprep.subr.mxu0 0.0
    %6152 = vmatpush1.msra.mxu0 1.0
    %6153 = vmatprep.subr.mxu0 0.0
    %6154 = vmatpush1.msra.mxu0 1.0
    %6155 = vmatprep.subr.mxu0 0.0
    %6156 = vmatpush1.msra.mxu0 1.0
    %6157 = vmatprep.subr.mxu0 0.0
    %6158 = vmatpush1.msra.mxu0 1.0
    %6159 = vmatprep.subr.mxu0 0.0
    %6160 = vmatpush1.msra.mxu0 1.0
    %6161 = vmatprep.subr.mxu0 0.0
    %6162 = vmatpush1.msra.mxu0 1.0
    %6163 = vmatprep.subr.mxu0 0.0
    %6164 = vmatpush1.msra.mxu0 1.0
    %6165 = vmatprep.subr.mxu0 0.0
    %6166 = vmatpush1.msra.mxu0 1.0
    %6167 = vmatprep.subr.mxu0 0.0
    %6168 = vmatpush1.msra.mxu0 1.0
    %6169 = vmatprep.subr.mxu0 0.0
    %6170 = vmatpush1.msra.mxu0 1.0
    %6171 = vmatprep.subr.mxu0 0.0
    %6172 = vmatpush1.msra.mxu0 1.0
    %6173 = vmatprep.subr.mxu0 0.0
    %6174 = vmatpush1.msra.mxu0 1.0
    %6175 = vmatprep.subr.mxu0 0.0
    %6176 = vmatpush1.msra.mxu0 1.0
    %6177 = vmatprep.subr.mxu0 0.0
    %6178 = vmatpush1.msra.mxu0 1.0
    %6179 = vmatprep.subr.mxu0 0.0
    %6180 = vmatpush1.msra.mxu0 1.0
    %6181 = vmatprep.subr.mxu0 0.0
    %6182 = vmatpush1.msra.mxu0 1.0
    %6183 = vmatprep.subr.mxu0 0.0
    %6184 = vmatpush1.msra.mxu0 1.0
    %6185 = vmatprep.subr.mxu0 0.0
    %6186 = vmatpush1.msra.mxu0 1.0
    %6187 = vmatprep.subr.mxu0 0.0
    %6188 = vmatpush1.msra.mxu0 1.0
    %6189 = vmatprep.mubr.f32.mxu0 %v6050
    %6190 = vmatmul.mubr.f32.gmra.mrb[0].mxu0 %v6049
    %v6191 = vpop.f32.mrb[0].mxu0
    %v6192 = vadd.f32 %v6122, %v6191
    %v6193 = vpop.f32.mrb[0].mxu0
    %6194 = vdwg.mxu0
    %6195 = vmatprep.subr.mxu0 0.0
    %6196 = vmatpush1.msra.mxu0 1.0
    %6197 = vmatprep.subr.mxu0 0.0
    %6198 = vmatpush1.msra.mxu0 1.0
    %6199 = vmatprep.subr.mxu0 0.0
    %6200 = vmatpush1.msra.mxu0 1.0
    %6201 = vmatprep.subr.mxu0 0.0
    %6202 = vmatpush1.msra.mxu0 1.0
    %6203 = vmatprep.subr.mxu0 0.0
    %6204 = vmatpush1.msra.mxu0 1.0
    %6205 = vmatprep.subr.mxu0 0.0
    %6206 = vmatpush1.msra.mxu0 1.0
    %6207 = vmatprep.subr.mxu0 0.0
    %6208 = vmatpush1.msra.mxu0 1.0
    %6209 = vmatprep.subr.mxu0 0.0
    %6210 = vmatpush1.msra.mxu0 1.0
    %6211 = vmatprep.subr.mxu0 0.0
    %6212 = vmatpush1.msra.mxu0 1.0
    %6213 = vmatprep.subr.mxu0 0.0
    %6214 = vmatpush1.msra.mxu0 1.0
    %6215 = vmatprep.subr.mxu0 0.0
    %6216 = vmatpush1.msra.mxu0 1.0
    %6217 = vmatprep.subr.mxu0 0.0
    %6218 = vmatpush1.msra.mxu0 1.0
    %6219 = vmatprep.subr.mxu0 0.0
    %6220 = vmatpush1.msra.mxu0 1.0
    %6221 = vmatprep.subr.mxu0 0.0
    %6222 = vmatpush1.msra.mxu0 1.0
    %6223 = vmatprep.subr.mxu0 0.0
    %6224 = vmatpush1.msra.mxu0 1.0
    %6225 = vmatprep.subr.mxu0 0.0
    %6226 = vmatpush1.msra.mxu0 1.0
    %6227 = vmatprep.subr.mxu0 0.0
    %6228 = vmatpush1.msra.mxu0 1.0
    %6229 = vmatprep.subr.mxu0 0.0
    %6230 = vmatpush1.msra.mxu0 1.0
    %6231 = vmatprep.subr.mxu0 0.0
    %6232 = vmatpush1.msra.mxu0 1.0
    %6233 = vmatprep.subr.mxu0 0.0
    %6234 = vmatpush1.msra.mxu0 1.0
    %6235 = vmatprep.subr.mxu0 0.0
    %6236 = vmatpush1.msra.mxu0 1.0
    %6237 = vmatprep.subr.mxu0 0.0
    %6238 = vmatpush1.msra.mxu0 1.0
    %6239 = vmatprep.subr.mxu0 0.0
    %6240 = vmatpush1.msra.mxu0 1.0
    %6241 = vmatprep.subr.mxu0 0.0
    %6242 = vmatpush1.msra.mxu0 1.0
    %6243 = vmatprep.subr.mxu0 0.0
    %6244 = vmatpush1.msra.mxu0 1.0
    %6245 = vmatprep.subr.mxu0 0.0
    %6246 = vmatpush1.msra.mxu0 1.0
    %6247 = vmatprep.subr.mxu0 0.0
    %6248 = vmatpush1.msra.mxu0 1.0
    %6249 = vmatprep.subr.mxu0 0.0
    %6250 = vmatpush1.msra.mxu0 1.0
    %6251 = vmatprep.subr.mxu0 0.0
    %6252 = vmatpush1.msra.mxu0 1.0
    %6253 = vmatprep.subr.mxu0 0.0
    %6254 = vmatpush1.msra.mxu0 1.0
    %6255 = vmatprep.subr.mxu0 0.0
    %6256 = vmatpush1.msra.mxu0 1.0
    %6257 = vmatprep.subr.mxu0 0.0
    %6258 = vmatpush1.msra.mxu0 1.0
    %6259 = vmatprep.mubr.f32.mxu0 %v6052
    %6260 = vmatmul.mubr.f32.gmra.mrb[0].mxu0 %v6051
    %v6261 = vpop.f32.mrb[0].mxu0
    %v6262 = vadd.f32 %v6192, %v6261
    %v6263 = vpop.f32.mrb[0].mxu0
    %6264 = vdwg.mxu0
    %6265 = vmatprep.subr.mxu0 0.0
    %6266 = vmatpush1.msra.mxu0 1.0
    %6267 = vmatprep.subr.mxu0 0.0
    %6268 = vmatpush1.msra.mxu0 1.0
    %6269 = vmatprep.subr.mxu0 0.0
    %6270 = vmatpush1.msra.mxu0 1.0
    %6271 = vmatprep.subr.mxu0 0.0
    %6272 = vmatpush1.msra.mxu0 1.0
    %6273 = vmatprep.subr.mxu0 0.0
    %6274 = vmatpush1.msra.mxu0 1.0
    %6275 = vmatprep.subr.mxu0 0.0
    %6276 = vmatpush1.msra.mxu0 1.0
    %6277 = vmatprep.subr.mxu0 0.0
    %6278 = vmatpush1.msra.mxu0 1.0
    %6279 = vmatprep.subr.mxu0 0.0
    %6280 = vmatpush1.msra.mxu0 1.0
    %6281 = vmatprep.subr.mxu0 0.0
    %6282 = vmatpush1.msra.mxu0 1.0
    %6283 = vmatprep.subr.mxu0 0.0
    %6284 = vmatpush1.msra.mxu0 1.0
    %6285 = vmatprep.subr.mxu0 0.0
    %6286 = vmatpush1.msra.mxu0 1.0
    %6287 = vmatprep.subr.mxu0 0.0
    %6288 = vmatpush1.msra.mxu0 1.0
    %6289 = vmatprep.subr.mxu0 0.0
    %6290 = vmatpush1.msra.mxu0 1.0
    %6291 = vmatprep.subr.mxu0 0.0
    %6292 = vmatpush1.msra.mxu0 1.0
    %6293 = vmatprep.subr.mxu0 0.0
    %6294 = vmatpush1.msra.mxu0 1.0
    %6295 = vmatprep.subr.mxu0 0.0
    %6296 = vmatpush1.msra.mxu0 1.0
    %6297 = vmatprep.subr.mxu0 0.0
    %6298 = vmatpush1.msra.mxu0 1.0
    %6299 = vmatprep.subr.mxu0 0.0
    %6300 = vmatpush1.msra.mxu0 1.0
    %6301 = vmatprep.subr.mxu0 0.0
    %6302 = vmatpush1.msra.mxu0 1.0
    %6303 = vmatprep.subr.mxu0 0.0
    %6304 = vmatpush1.msra.mxu0 1.0
    %6305 = vmatprep.subr.mxu0 0.0
    %6306 = vmatpush1.msra.mxu0 1.0
    %6307 = vmatprep.subr.mxu0 0.0
    %6308 = vmatpush1.msra.mxu0 1.0
    %6309 = vmatprep.subr.mxu0 0.0
    %6310 = vmatpush1.msra.mxu0 1.0
    %6311 = vmatprep.subr.mxu0 0.0
    %6312 = vmatpush1.msra.mxu0 1.0
    %6313 = vmatprep.subr.mxu0 0.0
    %6314 = vmatpush1.msra.mxu0 1.0
    %6315 = vmatprep.subr.mxu0 0.0
    %6316 = vmatpush1.msra.mxu0 1.0
    %6317 = vmatprep.subr.mxu0 0.0
    %6318 = vmatpush1.msra.mxu0 1.0
    %6319 = vmatprep.subr.mxu0 0.0
    %6320 = vmatpush1.msra.mxu0 1.0
    %6321 = vmatprep.subr.mxu0 0.0
    %6322 = vmatpush1.msra.mxu0 1.0
    %6323 = vmatprep.subr.mxu0 0.0
    %6324 = vmatpush1.msra.mxu0 1.0
    %6325 = vmatprep.subr.mxu0 0.0
    %6326 = vmatpush1.msra.mxu0 1.0
    %6327 = vmatprep.subr.mxu0 0.0
    %6328 = vmatpush1.msra.mxu0 1.0
    %6329 = vmatprep.mubr.f32.mxu0 %v6054
    %6330 = vmatmul.mubr.f32.gmra.mrb[0].mxu0 %v6053
    %v6331 = vpop.f32.mrb[0].mxu0
    %v6332 = vadd.f32 %v6262, %v6331
    %v6333 = vpop.f32.mrb[0].mxu0
    %6334 = vdwg.mxu0
    %6335 = vadd.xlane.f32.xlu0 %v6332
    %v6336 = vpop.xlane.xlu0 %6335
    %v6337 = vmul.f32 %v6336, %v988
    %v6338 = vmul.f32 %v6337, 0.0009765625
    %v6339 = vadd.f32 %v6338, 1e-05
    %v6340 = vrsqrt.pop %v6339
    %v6341 = vmul.f32 %v6039, %v6340
    %v6342 = vmul.f32 %v6040, %v6340
    %v6343 = vmul.f32 %v6041, %v6340
    %v6344 = vmul.f32 %v6042, %v6340
    %v6345 = vmul.f32 %v6043, %v6340
    %v6346 = vmul.f32 %v6044, %v6340
    %v6347 = vmul.f32 %v6045, %v6340
    %v6348 = vmul.f32 %v6046, %v6340
    %v6349 = vstv %s5754
    %v6350 = vmul.f32 %v6349, %v6341
    %v6351 = vmul.f32 %v6349, %v6342
    %v6352 = vmul.f32 %v6349, %v6343
    %v6353 = vmul.f32 %v6349, %v6344
    %v6354 = vmul.f32 %v6349, %v6345
    %v6355 = vmul.f32 %v6349, %v6346
    %v6356 = vmul.f32 %v6349, %v6347
    %v6357 = vmul.f32 %v6349, %v6348
    %v6358 = vadd.f32 %v5746, %v6350
    %v6359 = vadd.f32 %v5747, %v6351
    %v6360 = vadd.f32 %v5748, %v6352
    %v6361 = vadd.f32 %v5749, %v6353
    %v6362 = vadd.f32 %v5750, %v6354
    %v6363 = vadd.f32 %v5751, %v6355
    %v6364 = vadd.f32 %v5752, %v6356
    %v6365 = vadd.f32 %v5753, %v6357
    %s6366 = sld [smem:[#allocation2 + $0x184]]
    %s6367 = scalar_lea.vmem %s5, 24
    %v6368 = vld [vmem:[%s6367] sm:$0xff]
    %v6369 = vmax.f32 %v2191, 0.0
    %v6370 = vmax.f32 %v2192, 0.0
    %v6371 = vmax.f32 %v2193, 0.0
    %v6372 = vmax.f32 %v2194, 0.0
    %v6373 = vmax.f32 %v2195, 0.0
    %v6374 = vmax.f32 %v2196, 0.0
    %v6375 = vmax.f32 %v2197, 0.0
    %v6376 = vmax.f32 %v2198, 0.0
    %v6378 = vsel %vm418, %v6368, 0
    %6380 = vmatprep.subr.mxu0 %v6370
    %6381 = vmatpush1.msra.mxu0 %v6369
    %6382 = vmatprep.subr.mxu0 0.0
    %6383 = vmatpush1.msra.mxu0 0.0
    %6384 = vmatprep.subr.mxu0 0.0
    %6385 = vmatpush1.msra.mxu0 0.0
    %6386 = vmatprep.subr.mxu0 0.0
    %6387 = vmatpush1.msra.mxu0 0.0
    %6388 = vmatprep.subr.mxu0 0.0
    %6389 = vmatpush1.msra.mxu0 0.0
    %6390 = vmatprep.subr.mxu0 0.0
    %6391 = vmatpush1.msra.mxu0 0.0
    %6392 = vmatprep.subr.mxu0 0.0
    %6393 = vmatpush1.msra.mxu0 0.0
    %6394 = vmatprep.subr.mxu0 0.0
    %6395 = vmatpush1.msra.mxu0 0.0
    %6396 = vmatprep.subr.mxu0 0.0
    %6397 = vmatpush1.msra.mxu0 0.0
    %6398 = vmatprep.subr.mxu0 0.0
    %6399 = vmatpush1.msra.mxu0 0.0
    %6400 = vmatprep.subr.mxu0 0.0
    %6401 = vmatpush1.msra.mxu0 0.0
    %6402 = vmatprep.subr.mxu0 0.0
    %6403 = vmatpush1.msra.mxu0 0.0
    %6404 = vmatprep.subr.mxu0 0.0
    %6405 = vmatpush1.msra.mxu0 0.0
    %6406 = vmatprep.subr.mxu0 0.0
    %6407 = vmatpush1.msra.mxu0 0.0
    %6408 = vmatprep.subr.mxu0 0.0
    %6409 = vmatpush1.msra.mxu0 0.0
    %6410 = vmatprep.subr.mxu0 0.0
    %6411 = vmatpush1.msra.mxu0 0.0
    %6412 = vmatprep.subr.mxu0 0.0
    %6413 = vmatpush1.msra.mxu0 0.0
    %6414 = vmatprep.subr.mxu0 0.0
    %6415 = vmatpush1.msra.mxu0 0.0
    %6416 = vmatprep.subr.mxu0 0.0
    %6417 = vmatpush1.msra.mxu0 0.0
    %6418 = vmatprep.subr.mxu0 0.0
    %6419 = vmatpush1.msra.mxu0 0.0
    %6420 = vmatprep.subr.mxu0 0.0
    %6421 = vmatpush1.msra.mxu0 0.0
    %6422 = vmatprep.subr.mxu0 0.0
    %6423 = vmatpush1.msra.mxu0 0.0
    %6424 = vmatprep.subr.mxu0 0.0
    %6425 = vmatpush1.msra.mxu0 0.0
    %6426 = vmatprep.subr.mxu0 0.0
    %6427 = vmatpush1.msra.mxu0 0.0
    %6428 = vmatprep.subr.mxu0 0.0
    %6429 = vmatpush1.msra.mxu0 0.0
    %6430 = vmatprep.subr.mxu0 0.0
    %6431 = vmatpush1.msra.mxu0 0.0
    %6432 = vmatprep.subr.mxu0 0.0
    %6433 = vmatpush1.msra.mxu0 0.0
    %6434 = vmatprep.subr.mxu0 0.0
    %6435 = vmatpush1.msra.mxu0 0.0
    %6436 = vmatprep.subr.mxu0 0.0
    %6437 = vmatpush1.msra.mxu0 0.0
    %6438 = vmatprep.subr.mxu0 0.0
    %6439 = vmatpush1.msra.mxu0 0.0
    %6440 = vmatprep.subr.mxu0 0.0
    %6441 = vmatpush1.msra.mxu0 0.0
    %6442 = vmatprep.subr.mxu0 0.0
    %6443 = vmatpush1.msra.mxu0 0.0
    %6444 = vmatprep.mubr.f32.mxu0 0.0
    %6445 = vmatmul.mubr.f32.gmra.mrb[0].mxu0 %v6378
    %v6446 = vpop.f32.mrb[0].mxu0
    %v6447 = vadd.f32 0.0, %v6446
    %v6448 = vpop.f32.mrb[0].mxu0
    %v6449 = vadd.f32 0.0, %v6448
    %6450 = vdwg.mxu0
    %6451 = vmatprep.subr.mxu0 %v6372
    %6452 = vmatpush1.msra.mxu0 %v6371
    %6453 = vmatprep.subr.mxu0 0.0
    %6454 = vmatpush1.msra.mxu0 0.0
    %6455 = vmatprep.subr.mxu0 0.0
    %6456 = vmatpush1.msra.mxu0 0.0
    %6457 = vmatprep.subr.mxu0 0.0
    %6458 = vmatpush1.msra.mxu0 0.0
    %6459 = vmatprep.subr.mxu0 0.0
    %6460 = vmatpush1.msra.mxu0 0.0
    %6461 = vmatprep.subr.mxu0 0.0
    %6462 = vmatpush1.msra.mxu0 0.0
    %6463 = vmatprep.subr.mxu0 0.0
    %6464 = vmatpush1.msra.mxu0 0.0
    %6465 = vmatprep.subr.mxu0 0.0
    %6466 = vmatpush1.msra.mxu0 0.0
    %6467 = vmatprep.subr.mxu0 0.0
    %6468 = vmatpush1.msra.mxu0 0.0
    %6469 = vmatprep.subr.mxu0 0.0
    %6470 = vmatpush1.msra.mxu0 0.0
    %6471 = vmatprep.subr.mxu0 0.0
    %6472 = vmatpush1.msra.mxu0 0.0
    %6473 = vmatprep.subr.mxu0 0.0
    %6474 = vmatpush1.msra.mxu0 0.0
    %6475 = vmatprep.subr.mxu0 0.0
    %6476 = vmatpush1.msra.mxu0 0.0
    %6477 = vmatprep.subr.mxu0 0.0
    %6478 = vmatpush1.msra.mxu0 0.0
    %6479 = vmatprep.subr.mxu0 0.0
    %6480 = vmatpush1.msra.mxu0 0.0
    %6481 = vmatprep.subr.mxu0 0.0
    %6482 = vmatpush1.msra.mxu0 0.0
    %6483 = vmatprep.subr.mxu0 0.0
    %6484 = vmatpush1.msra.mxu0 0.0
    %6485 = vmatprep.subr.mxu0 0.0
    %6486 = vmatpush1.msra.mxu0 0.0
    %6487 = vmatprep.subr.mxu0 0.0
    %6488 = vmatpush1.msra.mxu0 0.0
    %6489 = vmatprep.subr.mxu0 0.0
    %6490 = vmatpush1.msra.mxu0 0.0
    %6491 = vmatprep.subr.mxu0 0.0
    %6492 = vmatpush1.msra.mxu0 0.0
    %6493 = vmatprep.subr.mxu0 0.0
    %6494 = vmatpush1.msra.mxu0 0.0
    %6495 = vmatprep.subr.mxu0 0.0
    %6496 = vmatpush1.msra.mxu0 0.0
    %6497 = vmatprep.subr.mxu0 0.0
    %6498 = vmatpush1.msra.mxu0 0.0
    %6499 = vmatprep.subr.mxu0 0.0
    %6500 = vmatpush1.msra.mxu0 0.0
    %6501 = vmatprep.subr.mxu0 0.0
    %6502 = vmatpush1.msra.mxu0 0.0
    %6503 = vmatprep.subr.mxu0 0.0
    %6504 = vmatpush1.msra.mxu0 0.0
    %6505 = vmatprep.subr.mxu0 0.0
    %6506 = vmatpush1.msra.mxu0 0.0
    %6507 = vmatprep.subr.mxu0 0.0
    %6508 = vmatpush1.msra.mxu0 0.0
    %6509 = vmatprep.subr.mxu0 0.0
    %6510 = vmatpush1.msra.mxu0 0.0
    %6511 = vmatprep.subr.mxu0 0.0
    %6512 = vmatpush1.msra.mxu0 0.0
    %6513 = vmatprep.subr.mxu0 0.0
    %6514 = vmatpush1.msra.mxu0 0.0
    %6515 = vmatprep.mubr.f32.mxu0 0.0
    %6516 = vmatmul.mubr.f32.gmra.mrb[0].mxu0 %v6378
    %v6517 = vpop.f32.mrb[0].mxu0
    %v6518 = vadd.f32 0.0, %v6517
    %v6519 = vpop.f32.mrb[0].mxu0
    %v6520 = vadd.f32 0.0, %v6519
    %6521 = vdwg.mxu0
    %6522 = vmatprep.subr.mxu0 %v6374
    %6523 = vmatpush1.msra.mxu0 %v6373
    %6524 = vmatprep.subr.mxu0 0.0
    %6525 = vmatpush1.msra.mxu0 0.0
    %6526 = vmatprep.subr.mxu0 0.0
    %6527 = vmatpush1.msra.mxu0 0.0
    %6528 = vmatprep.subr.mxu0 0.0
    %6529 = vmatpush1.msra.mxu0 0.0
    %6530 = vmatprep.subr.mxu0 0.0
    %6531 = vmatpush1.msra.mxu0 0.0
    %6532 = vmatprep.subr.mxu0 0.0
    %6533 = vmatpush1.msra.mxu0 0.0
    %6534 = vmatprep.subr.mxu0 0.0
    %6535 = vmatpush1.msra.mxu0 0.0
    %6536 = vmatprep.subr.mxu0 0.0
    %6537 = vmatpush1.msra.mxu0 0.0
    %6538 = vmatprep.subr.mxu0 0.0
    %6539 = vmatpush1.msra.mxu0 0.0
    %6540 = vmatprep.subr.mxu0 0.0
    %6541 = vmatpush1.msra.mxu0 0.0
    %6542 = vmatprep.subr.mxu0 0.0
    %6543 = vmatpush1.msra.mxu0 0.0
    %6544 = vmatprep.subr.mxu0 0.0
    %6545 = vmatpush1.msra.mxu0 0.0
    %6546 = vmatprep.subr.mxu0 0.0
    %6547 = vmatpush1.msra.mxu0 0.0
    %6548 = vmatprep.subr.mxu0 0.0
    %6549 = vmatpush1.msra.mxu0 0.0
    %6550 = vmatprep.subr.mxu0 0.0
    %6551 = vmatpush1.msra.mxu0 0.0
    %6552 = vmatprep.subr.mxu0 0.0
    %6553 = vmatpush1.msra.mxu0 0.0
    %6554 = vmatprep.subr.mxu0 0.0
    %6555 = vmatpush1.msra.mxu0 0.0
    %6556 = vmatprep.subr.mxu0 0.0
    %6557 = vmatpush1.msra.mxu0 0.0
    %6558 = vmatprep.subr.mxu0 0.0
    %6559 = vmatpush1.msra.mxu0 0.0
    %6560 = vmatprep.subr.mxu0 0.0
    %6561 = vmatpush1.msra.mxu0 0.0
    %6562 = vmatprep.subr.mxu0 0.0
    %6563 = vmatpush1.msra.mxu0 0.0
    %6564 = vmatprep.subr.mxu0 0.0
    %6565 = vmatpush1.msra.mxu0 0.0
    %6566 = vmatprep.subr.mxu0 0.0
    %6567 = vmatpush1.msra.mxu0 0.0
    %6568 = vmatprep.subr.mxu0 0.0
    %6569 = vmatpush1.msra.mxu0 0.0
    %6570 = vmatprep.subr.mxu0 0.0
    %6571 = vmatpush1.msra.mxu0 0.0
    %6572 = vmatprep.subr.mxu0 0.0
    %6573 = vmatpush1.msra.mxu0 0.0
    %6574 = vmatprep.subr.mxu0 0.0
    %6575 = vmatpush1.msra.mxu0 0.0
    %6576 = vmatprep.subr.mxu0 0.0
    %6577 = vmatpush1.msra.mxu0 0.0
    %6578 = vmatprep.subr.mxu0 0.0
    %6579 = vmatpush1.msra.mxu0 0.0
    %6580 = vmatprep.subr.mxu0 0.0
    %6581 = vmatpush1.msra.mxu0 0.0
    %6582 = vmatprep.subr.mxu0 0.0
    %6583 = vmatpush1.msra.mxu0 0.0
    %6584 = vmatprep.subr.mxu0 0.0
    %6585 = vmatpush1.msra.mxu0 0.0
    %6586 = vmatprep.mubr.f32.mxu0 0.0
    %6587 = vmatmul.mubr.f32.gmra.mrb[0].mxu0 %v6378
    %v6588 = vpop.f32.mrb[0].mxu0
    %v6589 = vadd.f32 0.0, %v6588
    %v6590 = vpop.f32.mrb[0].mxu0
    %v6591 = vadd.f32 0.0, %v6590
    %6592 = vdwg.mxu0
    %6593 = vmatprep.subr.mxu0 %v6376
    %6594 = vmatpush1.msra.mxu0 %v6375
    %6595 = vmatprep.subr.mxu0 0.0
    %6596 = vmatpush1.msra.mxu0 0.0
    %6597 = vmatprep.subr.mxu0 0.0
    %6598 = vmatpush1.msra.mxu0 0.0
    %6599 = vmatprep.subr.mxu0 0.0
    %6600 = vmatpush1.msra.mxu0 0.0
    %6601 = vmatprep.subr.mxu0 0.0
    %6602 = vmatpush1.msra.mxu0 0.0
    %6603 = vmatprep.subr.mxu0 0.0
    %6604 = vmatpush1.msra.mxu0 0.0
    %6605 = vmatprep.subr.mxu0 0.0
    %6606 = vmatpush1.msra.mxu0 0.0
    %6607 = vmatprep.subr.mxu0 0.0
    %6608 = vmatpush1.msra.mxu0 0.0
    %6609 = vmatprep.subr.mxu0 0.0
    %6610 = vmatpush1.msra.mxu0 0.0
    %6611 = vmatprep.subr.mxu0 0.0
    %6612 = vmatpush1.msra.mxu0 0.0
    %6613 = vmatprep.subr.mxu0 0.0
    %6614 = vmatpush1.msra.mxu0 0.0
    %6615 = vmatprep.subr.mxu0 0.0
    %6616 = vmatpush1.msra.mxu0 0.0
    %6617 = vmatprep.subr.mxu0 0.0
    %6618 = vmatpush1.msra.mxu0 0.0
    %6619 = vmatprep.subr.mxu0 0.0
    %6620 = vmatpush1.msra.mxu0 0.0
    %6621 = vmatprep.subr.mxu0 0.0
    %6622 = vmatpush1.msra.mxu0 0.0
    %6623 = vmatprep.subr.mxu0 0.0
    %6624 = vmatpush1.msra.mxu0 0.0
    %6625 = vmatprep.subr.mxu0 0.0
    %6626 = vmatpush1.msra.mxu0 0.0
    %6627 = vmatprep.subr.mxu0 0.0
    %6628 = vmatpush1.msra.mxu0 0.0
    %6629 = vmatprep.subr.mxu0 0.0
    %6630 = vmatpush1.msra.mxu0 0.0
    %6631 = vmatprep.subr.mxu0 0.0
    %6632 = vmatpush1.msra.mxu0 0.0
    %6633 = vmatprep.subr.mxu0 0.0
    %6634 = vmatpush1.msra.mxu0 0.0
    %6635 = vmatprep.subr.mxu0 0.0
    %6636 = vmatpush1.msra.mxu0 0.0
    %6637 = vmatprep.subr.mxu0 0.0
    %6638 = vmatpush1.msra.mxu0 0.0
    %6639 = vmatprep.subr.mxu0 0.0
    %6640 = vmatpush1.msra.mxu0 0.0
    %6641 = vmatprep.subr.mxu0 0.0
    %6642 = vmatpush1.msra.mxu0 0.0
    %6643 = vmatprep.subr.mxu0 0.0
    %6644 = vmatpush1.msra.mxu0 0.0
    %6645 = vmatprep.subr.mxu0 0.0
    %6646 = vmatpush1.msra.mxu0 0.0
    %6647 = vmatprep.subr.mxu0 0.0
    %6648 = vmatpush1.msra.mxu0 0.0
    %6649 = vmatprep.subr.mxu0 0.0
    %6650 = vmatpush1.msra.mxu0 0.0
    %6651 = vmatprep.subr.mxu0 0.0
    %6652 = vmatpush1.msra.mxu0 0.0
    %6653 = vmatprep.subr.mxu0 0.0
    %6654 = vmatpush1.msra.mxu0 0.0
    %6655 = vmatprep.subr.mxu0 0.0
    %6656 = vmatpush1.msra.mxu0 0.0
    %6657 = vmatprep.mubr.f32.mxu0 0.0
    %6658 = vmatmul.mubr.f32.gmra.mrb[0].mxu0 %v6378
    %v6659 = vpop.f32.mrb[0].mxu0
    %v6660 = vadd.f32 0.0, %v6659
    %v6661 = vpop.f32.mrb[0].mxu0
    %v6662 = vadd.f32 0.0, %v6661
    %6663 = vdwg.mxu0
    %6664 = vmatprep.subr.mxu0 0.0
    %6665 = vmatpush1.msra.mxu0 1.0
    %6666 = vmatprep.subr.mxu0 0.0
    %6667 = vmatpush1.msra.mxu0 1.0
    %6668 = vmatprep.subr.mxu0 0.0
    %6669 = vmatpush1.msra.mxu0 1.0
    %6670 = vmatprep.subr.mxu0 0.0
    %6671 = vmatpush1.msra.mxu0 1.0
    %6672 = vmatprep.subr.mxu0 0.0
    %6673 = vmatpush1.msra.mxu0 1.0
    %6674 = vmatprep.subr.mxu0 0.0
    %6675 = vmatpush1.msra.mxu0 1.0
    %6676 = vmatprep.subr.mxu0 0.0
    %6677 = vmatpush1.msra.mxu0 1.0
    %6678 = vmatprep.subr.mxu0 0.0
    %6679 = vmatpush1.msra.mxu0 1.0
    %6680 = vmatprep.subr.mxu0 0.0
    %6681 = vmatpush1.msra.mxu0 1.0
    %6682 = vmatprep.subr.mxu0 0.0
    %6683 = vmatpush1.msra.mxu0 1.0
    %6684 = vmatprep.subr.mxu0 0.0
    %6685 = vmatpush1.msra.mxu0 1.0
    %6686 = vmatprep.subr.mxu0 0.0
    %6687 = vmatpush1.msra.mxu0 1.0
    %6688 = vmatprep.subr.mxu0 0.0
    %6689 = vmatpush1.msra.mxu0 1.0
    %6690 = vmatprep.subr.mxu0 0.0
    %6691 = vmatpush1.msra.mxu0 1.0
    %6692 = vmatprep.subr.mxu0 0.0
    %6693 = vmatpush1.msra.mxu0 1.0
    %6694 = vmatprep.subr.mxu0 0.0
    %6695 = vmatpush1.msra.mxu0 1.0
    %6696 = vmatprep.subr.mxu0 0.0
    %6697 = vmatpush1.msra.mxu0 1.0
    %6698 = vmatprep.subr.mxu0 0.0
    %6699 = vmatpush1.msra.mxu0 1.0
    %6700 = vmatprep.subr.mxu0 0.0
    %6701 = vmatpush1.msra.mxu0 1.0
    %6702 = vmatprep.subr.mxu0 0.0
    %6703 = vmatpush1.msra.mxu0 1.0
    %6704 = vmatprep.subr.mxu0 0.0
    %6705 = vmatpush1.msra.mxu0 1.0
    %6706 = vmatprep.subr.mxu0 0.0
    %6707 = vmatpush1.msra.mxu0 1.0
    %6708 = vmatprep.subr.mxu0 0.0
    %6709 = vmatpush1.msra.mxu0 1.0
    %6710 = vmatprep.subr.mxu0 0.0
    %6711 = vmatpush1.msra.mxu0 1.0
    %6712 = vmatprep.subr.mxu0 0.0
    %6713 = vmatpush1.msra.mxu0 1.0
    %6714 = vmatprep.subr.mxu0 0.0
    %6715 = vmatpush1.msra.mxu0 1.0
    %6716 = vmatprep.subr.mxu0 0.0
    %6717 = vmatpush1.msra.mxu0 1.0
    %6718 = vmatprep.subr.mxu0 0.0
    %6719 = vmatpush1.msra.mxu0 1.0
    %6720 = vmatprep.subr.mxu0 0.0
    %6721 = vmatpush1.msra.mxu0 1.0
    %6722 = vmatprep.subr.mxu0 0.0
    %6723 = vmatpush1.msra.mxu0 1.0
    %6724 = vmatprep.subr.mxu0 0.0
    %6725 = vmatpush1.msra.mxu0 1.0
    %6726 = vmatprep.subr.mxu0 0.0
    %6727 = vmatpush1.msra.mxu0 1.0
    %6728 = vmatprep.mubr.f32.mxu0 %v6449
    %6729 = vmatmul.mubr.f32.gmra.mrb[0].mxu0 %v6447
    %v6730 = vpop.f32.mrb[0].mxu0
    %v6731 = vadd.f32 0.0, %v6730
    %v6732 = vpop.f32.mrb[0].mxu0
    %6733 = vdwg.mxu0
    %6734 = vmatprep.subr.mxu0 0.0
    %6735 = vmatpush1.msra.mxu0 1.0
    %6736 = vmatprep.subr.mxu0 0.0
    %6737 = vmatpush1.msra.mxu0 1.0
    %6738 = vmatprep.subr.mxu0 0.0
    %6739 = vmatpush1.msra.mxu0 1.0
    %6740 = vmatprep.subr.mxu0 0.0
    %6741 = vmatpush1.msra.mxu0 1.0
    %6742 = vmatprep.subr.mxu0 0.0
    %6743 = vmatpush1.msra.mxu0 1.0
    %6744 = vmatprep.subr.mxu0 0.0
    %6745 = vmatpush1.msra.mxu0 1.0
    %6746 = vmatprep.subr.mxu0 0.0
    %6747 = vmatpush1.msra.mxu0 1.0
    %6748 = vmatprep.subr.mxu0 0.0
    %6749 = vmatpush1.msra.mxu0 1.0
    %6750 = vmatprep.subr.mxu0 0.0
    %6751 = vmatpush1.msra.mxu0 1.0
    %6752 = vmatprep.subr.mxu0 0.0
    %6753 = vmatpush1.msra.mxu0 1.0
    %6754 = vmatprep.subr.mxu0 0.0
    %6755 = vmatpush1.msra.mxu0 1.0
    %6756 = vmatprep.subr.mxu0 0.0
    %6757 = vmatpush1.msra.mxu0 1.0
    %6758 = vmatprep.subr.mxu0 0.0
    %6759 = vmatpush1.msra.mxu0 1.0
    %6760 = vmatprep.subr.mxu0 0.0
    %6761 = vmatpush1.msra.mxu0 1.0
    %6762 = vmatprep.subr.mxu0 0.0
    %6763 = vmatpush1.msra.mxu0 1.0
    %6764 = vmatprep.subr.mxu0 0.0
    %6765 = vmatpush1.msra.mxu0 1.0
    %6766 = vmatprep.subr.mxu0 0.0
    %6767 = vmatpush1.msra.mxu0 1.0
    %6768 = vmatprep.subr.mxu0 0.0
    %6769 = vmatpush1.msra.mxu0 1.0
    %6770 = vmatprep.subr.mxu0 0.0
    %6771 = vmatpush1.msra.mxu0 1.0
    %6772 = vmatprep.subr.mxu0 0.0
    %6773 = vmatpush1.msra.mxu0 1.0
    %6774 = vmatprep.subr.mxu0 0.0
    %6775 = vmatpush1.msra.mxu0 1.0
    %6776 = vmatprep.subr.mxu0 0.0
    %6777 = vmatpush1.msra.mxu0 1.0
    %6778 = vmatprep.subr.mxu0 0.0
    %6779 = vmatpush1.msra.mxu0 1.0
    %6780 = vmatprep.subr.mxu0 0.0
    %6781 = vmatpush1.msra.mxu0 1.0
    %6782 = vmatprep.subr.mxu0 0.0
    %6783 = vmatpush1.msra.mxu0 1.0
    %6784 = vmatprep.subr.mxu0 0.0
    %6785 = vmatpush1.msra.mxu0 1.0
    %6786 = vmatprep.subr.mxu0 0.0
    %6787 = vmatpush1.msra.mxu0 1.0
    %6788 = vmatprep.subr.mxu0 0.0
    %6789 = vmatpush1.msra.mxu0 1.0
    %6790 = vmatprep.subr.mxu0 0.0
    %6791 = vmatpush1.msra.mxu0 1.0
    %6792 = vmatprep.subr.mxu0 0.0
    %6793 = vmatpush1.msra.mxu0 1.0
    %6794 = vmatprep.subr.mxu0 0.0
    %6795 = vmatpush1.msra.mxu0 1.0
    %6796 = vmatprep.subr.mxu0 0.0
    %6797 = vmatpush1.msra.mxu0 1.0
    %6798 = vmatprep.mubr.f32.mxu0 %v6520
    %6799 = vmatmul.mubr.f32.gmra.mrb[0].mxu0 %v6518
    %v6800 = vpop.f32.mrb[0].mxu0
    %v6801 = vadd.f32 %v6731, %v6800
    %v6802 = vpop.f32.mrb[0].mxu0
    %6803 = vdwg.mxu0
    %6804 = vmatprep.subr.mxu0 0.0
    %6805 = vmatpush1.msra.mxu0 1.0
    %6806 = vmatprep.subr.mxu0 0.0
    %6807 = vmatpush1.msra.mxu0 1.0
    %6808 = vmatprep.subr.mxu0 0.0
    %6809 = vmatpush1.msra.mxu0 1.0
    %6810 = vmatprep.subr.mxu0 0.0
    %6811 = vmatpush1.msra.mxu0 1.0
    %6812 = vmatprep.subr.mxu0 0.0
    %6813 = vmatpush1.msra.mxu0 1.0
    %6814 = vmatprep.subr.mxu0 0.0
    %6815 = vmatpush1.msra.mxu0 1.0
    %6816 = vmatprep.subr.mxu0 0.0
    %6817 = vmatpush1.msra.mxu0 1.0
    %6818 = vmatprep.subr.mxu0 0.0
    %6819 = vmatpush1.msra.mxu0 1.0
    %6820 = vmatprep.subr.mxu0 0.0
    %6821 = vmatpush1.msra.mxu0 1.0
    %6822 = vmatprep.subr.mxu0 0.0
    %6823 = vmatpush1.msra.mxu0 1.0
    %6824 = vmatprep.subr.mxu0 0.0
    %6825 = vmatpush1.msra.mxu0 1.0
    %6826 = vmatprep.subr.mxu0 0.0
    %6827 = vmatpush1.msra.mxu0 1.0
    %6828 = vmatprep.subr.mxu0 0.0
    %6829 = vmatpush1.msra.mxu0 1.0
    %6830 = vmatprep.subr.mxu0 0.0
    %6831 = vmatpush1.msra.mxu0 1.0
    %6832 = vmatprep.subr.mxu0 0.0
    %6833 = vmatpush1.msra.mxu0 1.0
    %6834 = vmatprep.subr.mxu0 0.0
    %6835 = vmatpush1.msra.mxu0 1.0
    %6836 = vmatprep.subr.mxu0 0.0
    %6837 = vmatpush1.msra.mxu0 1.0
    %6838 = vmatprep.subr.mxu0 0.0
    %6839 = vmatpush1.msra.mxu0 1.0
    %6840 = vmatprep.subr.mxu0 0.0
    %6841 = vmatpush1.msra.mxu0 1.0
    %6842 = vmatprep.subr.mxu0 0.0
    %6843 = vmatpush1.msra.mxu0 1.0
    %6844 = vmatprep.subr.mxu0 0.0
    %6845 = vmatpush1.msra.mxu0 1.0
    %6846 = vmatprep.subr.mxu0 0.0
    %6847 = vmatpush1.msra.mxu0 1.0
    %6848 = vmatprep.subr.mxu0 0.0
    %6849 = vmatpush1.msra.mxu0 1.0
    %6850 = vmatprep.subr.mxu0 0.0
    %6851 = vmatpush1.msra.mxu0 1.0
    %6852 = vmatprep.subr.mxu0 0.0
    %6853 = vmatpush1.msra.mxu0 1.0
    %6854 = vmatprep.subr.mxu0 0.0
    %6855 = vmatpush1.msra.mxu0 1.0
    %6856 = vmatprep.subr.mxu0 0.0
    %6857 = vmatpush1.msra.mxu0 1.0
    %6858 = vmatprep.subr.mxu0 0.0
    %6859 = vmatpush1.msra.mxu0 1.0
    %6860 = vmatprep.subr.mxu0 0.0
    %6861 = vmatpush1.msra.mxu0 1.0
    %6862 = vmatprep.subr.mxu0 0.0
    %6863 = vmatpush1.msra.mxu0 1.0
    %6864 = vmatprep.subr.mxu0 0.0
    %6865 = vmatpush1.msra.mxu0 1.0
    %6866 = vmatprep.subr.mxu0 0.0
    %6867 = vmatpush1.msra.mxu0 1.0
    %6868 = vmatprep.mubr.f32.mxu0 %v6591
    %6869 = vmatmul.mubr.f32.gmra.mrb[0].mxu0 %v6589
    %v6870 = vpop.f32.mrb[0].mxu0
    %v6871 = vadd.f32 %v6801, %v6870
    %v6872 = vpop.f32.mrb[0].mxu0
    %6873 = vdwg.mxu0
    %6874 = vmatprep.subr.mxu0 0.0
    %6875 = vmatpush1.msra.mxu0 1.0
    %6876 = vmatprep.subr.mxu0 0.0
    %6877 = vmatpush1.msra.mxu0 1.0
    %6878 = vmatprep.subr.mxu0 0.0
    %6879 = vmatpush1.msra.mxu0 1.0
    %6880 = vmatprep.subr.mxu0 0.0
    %6881 = vmatpush1.msra.mxu0 1.0
    %6882 = vmatprep.subr.mxu0 0.0
    %6883 = vmatpush1.msra.mxu0 1.0
    %6884 = vmatprep.subr.mxu0 0.0
    %6885 = vmatpush1.msra.mxu0 1.0
    %6886 = vmatprep.subr.mxu0 0.0
    %6887 = vmatpush1.msra.mxu0 1.0
    %6888 = vmatprep.subr.mxu0 0.0
    %6889 = vmatpush1.msra.mxu0 1.0
    %6890 = vmatprep.subr.mxu0 0.0
    %6891 = vmatpush1.msra.mxu0 1.0
    %6892 = vmatprep.subr.mxu0 0.0
    %6893 = vmatpush1.msra.mxu0 1.0
    %6894 = vmatprep.subr.mxu0 0.0
    %6895 = vmatpush1.msra.mxu0 1.0
    %6896 = vmatprep.subr.mxu0 0.0
    %6897 = vmatpush1.msra.mxu0 1.0
    %6898 = vmatprep.subr.mxu0 0.0
    %6899 = vmatpush1.msra.mxu0 1.0
    %6900 = vmatprep.subr.mxu0 0.0
    %6901 = vmatpush1.msra.mxu0 1.0
    %6902 = vmatprep.subr.mxu0 0.0
    %6903 = vmatpush1.msra.mxu0 1.0
    %6904 = vmatprep.subr.mxu0 0.0
    %6905 = vmatpush1.msra.mxu0 1.0
    %6906 = vmatprep.subr.mxu0 0.0
    %6907 = vmatpush1.msra.mxu0 1.0
    %6908 = vmatprep.subr.mxu0 0.0
    %6909 = vmatpush1.msra.mxu0 1.0
    %6910 = vmatprep.subr.mxu0 0.0
    %6911 = vmatpush1.msra.mxu0 1.0
    %6912 = vmatprep.subr.mxu0 0.0
    %6913 = vmatpush1.msra.mxu0 1.0
    %6914 = vmatprep.subr.mxu0 0.0
    %6915 = vmatpush1.msra.mxu0 1.0
    %6916 = vmatprep.subr.mxu0 0.0
    %6917 = vmatpush1.msra.mxu0 1.0
    %6918 = vmatprep.subr.mxu0 0.0
    %6919 = vmatpush1.msra.mxu0 1.0
    %6920 = vmatprep.subr.mxu0 0.0
    %6921 = vmatpush1.msra.mxu0 1.0
    %6922 = vmatprep.subr.mxu0 0.0
    %6923 = vmatpush1.msra.mxu0 1.0
    %6924 = vmatprep.subr.mxu0 0.0
    %6925 = vmatpush1.msra.mxu0 1.0
    %6926 = vmatprep.subr.mxu0 0.0
    %6927 = vmatpush1.msra.mxu0 1.0
    %6928 = vmatprep.subr.mxu0 0.0
    %6929 = vmatpush1.msra.mxu0 1.0
    %6930 = vmatprep.subr.mxu0 0.0
    %6931 = vmatpush1.msra.mxu0 1.0
    %6932 = vmatprep.subr.mxu0 0.0
    %6933 = vmatpush1.msra.mxu0 1.0
    %6934 = vmatprep.subr.mxu0 0.0
    %6935 = vmatpush1.msra.mxu0 1.0
    %6936 = vmatprep.subr.mxu0 0.0
    %6937 = vmatpush1.msra.mxu0 1.0
    %6938 = vmatprep.mubr.f32.mxu0 %v6662
    %6939 = vmatmul.mubr.f32.gmra.mrb[0].mxu0 %v6660
    %v6940 = vpop.f32.mrb[0].mxu0
    %v6941 = vadd.f32 %v6871, %v6940
    %v6942 = vpop.f32.mrb[0].mxu0
    %6943 = vdwg.mxu0
    %6944 = vadd.xlane.f32.xlu0 %v6941
    %v6945 = vpop.xlane.xlu0 %6944
    %v6946 = vmul.f32 %v6945, %v988
    %v6947 = vmul.f32 %v6946, 0.0009765625
    %v6948 = vsub.f32 %v6447, %v6947
    %v6949 = vsub.f32 %v6449, %v6947
    %v6950 = vsub.f32 %v6518, %v6947
    %v6951 = vsub.f32 %v6520, %v6947
    %v6952 = vsub.f32 %v6589, %v6947
    %v6953 = vsub.f32 %v6591, %v6947
    %v6954 = vsub.f32 %v6660, %v6947
    %v6955 = vsub.f32 %v6662, %v6947
    %v6956 = vmul.f32 %v6948, %v6948
    %v6957 = vmul.f32 %v6949, %v6949
    %v6958 = vmul.f32 %v6950, %v6950
    %v6959 = vmul.f32 %v6951, %v6951
    %v6960 = vmul.f32 %v6952, %v6952
    %v6961 = vmul.f32 %v6953, %v6953
    %v6962 = vmul.f32 %v6954, %v6954
    %v6963 = vmul.f32 %v6955, %v6955
    %6964 = vmatprep.subr.mxu0 0.0
    %6965 = vmatpush1.msra.mxu0 1.0
    %6966 = vmatprep.subr.mxu0 0.0
    %6967 = vmatpush1.msra.mxu0 1.0
    %6968 = vmatprep.subr.mxu0 0.0
    %6969 = vmatpush1.msra.mxu0 1.0
    %6970 = vmatprep.subr.mxu0 0.0
    %6971 = vmatpush1.msra.mxu0 1.0
    %6972 = vmatprep.subr.mxu0 0.0
    %6973 = vmatpush1.msra.mxu0 1.0
    %6974 = vmatprep.subr.mxu0 0.0
    %6975 = vmatpush1.msra.mxu0 1.0
    %6976 = vmatprep.subr.mxu0 0.0
    %6977 = vmatpush1.msra.mxu0 1.0
    %6978 = vmatprep.subr.mxu0 0.0
    %6979 = vmatpush1.msra.mxu0 1.0
    %6980 = vmatprep.subr.mxu0 0.0
    %6981 = vmatpush1.msra.mxu0 1.0
    %6982 = vmatprep.subr.mxu0 0.0
    %6983 = vmatpush1.msra.mxu0 1.0
    %6984 = vmatprep.subr.mxu0 0.0
    %6985 = vmatpush1.msra.mxu0 1.0
    %6986 = vmatprep.subr.mxu0 0.0
    %6987 = vmatpush1.msra.mxu0 1.0
    %6988 = vmatprep.subr.mxu0 0.0
    %6989 = vmatpush1.msra.mxu0 1.0
    %6990 = vmatprep.subr.mxu0 0.0
    %6991 = vmatpush1.msra.mxu0 1.0
    %6992 = vmatprep.subr.mxu0 0.0
    %6993 = vmatpush1.msra.mxu0 1.0
    %6994 = vmatprep.subr.mxu0 0.0
    %6995 = vmatpush1.msra.mxu0 1.0
    %6996 = vmatprep.subr.mxu0 0.0
    %6997 = vmatpush1.msra.mxu0 1.0
    %6998 = vmatprep.subr.mxu0 0.0
    %6999 = vmatpush1.msra.mxu0 1.0
    %7000 = vmatprep.subr.mxu0 0.0
    %7001 = vmatpush1.msra.mxu0 1.0
    %7002 = vmatprep.subr.mxu0 0.0
    %7003 = vmatpush1.msra.mxu0 1.0
    %7004 = vmatprep.subr.mxu0 0.0
    %7005 = vmatpush1.msra.mxu0 1.0
    %7006 = vmatprep.subr.mxu0 0.0
    %7007 = vmatpush1.msra.mxu0 1.0
    %7008 = vmatprep.subr.mxu0 0.0
    %7009 = vmatpush1.msra.mxu0 1.0
    %7010 = vmatprep.subr.mxu0 0.0
    %7011 = vmatpush1.msra.mxu0 1.0
    %7012 = vmatprep.subr.mxu0 0.0
    %7013 = vmatpush1.msra.mxu0 1.0
    %7014 = vmatprep.subr.mxu0 0.0
    %7015 = vmatpush1.msra.mxu0 1.0
    %7016 = vmatprep.subr.mxu0 0.0
    %7017 = vmatpush1.msra.mxu0 1.0
    %7018 = vmatprep.subr.mxu0 0.0
    %7019 = vmatpush1.msra.mxu0 1.0
    %7020 = vmatprep.subr.mxu0 0.0
    %7021 = vmatpush1.msra.mxu0 1.0
    %7022 = vmatprep.subr.mxu0 0.0
    %7023 = vmatpush1.msra.mxu0 1.0
    %7024 = vmatprep.subr.mxu0 0.0
    %7025 = vmatpush1.msra.mxu0 1.0
    %7026 = vmatprep.subr.mxu0 0.0
    %7027 = vmatpush1.msra.mxu0 1.0
    %7028 = vmatprep.mubr.f32.mxu0 %v6957
    %7029 = vmatmul.mubr.f32.gmra.mrb[0].mxu0 %v6956
    %v7030 = vpop.f32.mrb[0].mxu0
    %v7031 = vadd.f32 0.0, %v7030
    %v7032 = vpop.f32.mrb[0].mxu0
    %7033 = vdwg.mxu0
    %7034 = vmatprep.subr.mxu0 0.0
    %7035 = vmatpush1.msra.mxu0 1.0
    %7036 = vmatprep.subr.mxu0 0.0
    %7037 = vmatpush1.msra.mxu0 1.0
    %7038 = vmatprep.subr.mxu0 0.0
    %7039 = vmatpush1.msra.mxu0 1.0
    %7040 = vmatprep.subr.mxu0 0.0
    %7041 = vmatpush1.msra.mxu0 1.0
    %7042 = vmatprep.subr.mxu0 0.0
    %7043 = vmatpush1.msra.mxu0 1.0
    %7044 = vmatprep.subr.mxu0 0.0
    %7045 = vmatpush1.msra.mxu0 1.0
    %7046 = vmatprep.subr.mxu0 0.0
    %7047 = vmatpush1.msra.mxu0 1.0
    %7048 = vmatprep.subr.mxu0 0.0
    %7049 = vmatpush1.msra.mxu0 1.0
    %7050 = vmatprep.subr.mxu0 0.0
    %7051 = vmatpush1.msra.mxu0 1.0
    %7052 = vmatprep.subr.mxu0 0.0
    %7053 = vmatpush1.msra.mxu0 1.0
    %7054 = vmatprep.subr.mxu0 0.0
    %7055 = vmatpush1.msra.mxu0 1.0
    %7056 = vmatprep.subr.mxu0 0.0
    %7057 = vmatpush1.msra.mxu0 1.0
    %7058 = vmatprep.subr.mxu0 0.0
    %7059 = vmatpush1.msra.mxu0 1.0
    %7060 = vmatprep.subr.mxu0 0.0
    %7061 = vmatpush1.msra.mxu0 1.0
    %7062 = vmatprep.subr.mxu0 0.0
    %7063 = vmatpush1.msra.mxu0 1.0
    %7064 = vmatprep.subr.mxu0 0.0
    %7065 = vmatpush1.msra.mxu0 1.0
    %7066 = vmatprep.subr.mxu0 0.0
    %7067 = vmatpush1.msra.mxu0 1.0
    %7068 = vmatprep.subr.mxu0 0.0
    %7069 = vmatpush1.msra.mxu0 1.0
    %7070 = vmatprep.subr.mxu0 0.0
    %7071 = vmatpush1.msra.mxu0 1.0
    %7072 = vmatprep.subr.mxu0 0.0
    %7073 = vmatpush1.msra.mxu0 1.0
    %7074 = vmatprep.subr.mxu0 0.0
    %7075 = vmatpush1.msra.mxu0 1.0
    %7076 = vmatprep.subr.mxu0 0.0
    %7077 = vmatpush1.msra.mxu0 1.0
    %7078 = vmatprep.subr.mxu0 0.0
    %7079 = vmatpush1.msra.mxu0 1.0
    %7080 = vmatprep.subr.mxu0 0.0
    %7081 = vmatpush1.msra.mxu0 1.0
    %7082 = vmatprep.subr.mxu0 0.0
    %7083 = vmatpush1.msra.mxu0 1.0
    %7084 = vmatprep.subr.mxu0 0.0
    %7085 = vmatpush1.msra.mxu0 1.0
    %7086 = vmatprep.subr.mxu0 0.0
    %7087 = vmatpush1.msra.mxu0 1.0
    %7088 = vmatprep.subr.mxu0 0.0
    %7089 = vmatpush1.msra.mxu0 1.0
    %7090 = vmatprep.subr.mxu0 0.0
    %7091 = vmatpush1.msra.mxu0 1.0
    %7092 = vmatprep.subr.mxu0 0.0
    %7093 = vmatpush1.msra.mxu0 1.0
    %7094 = vmatprep.subr.mxu0 0.0
    %7095 = vmatpush1.msra.mxu0 1.0
    %7096 = vmatprep.subr.mxu0 0.0
    %7097 = vmatpush1.msra.mxu0 1.0
    %7098 = vmatprep.mubr.f32.mxu0 %v6959
    %7099 = vmatmul.mubr.f32.gmra.mrb[0].mxu0 %v6958
    %v7100 = vpop.f32.mrb[0].mxu0
    %v7101 = vadd.f32 %v7031, %v7100
    %v7102 = vpop.f32.mrb[0].mxu0
    %7103 = vdwg.mxu0
    %7104 = vmatprep.subr.mxu0 0.0
    %7105 = vmatpush1.msra.mxu0 1.0
    %7106 = vmatprep.subr.mxu0 0.0
    %7107 = vmatpush1.msra.mxu0 1.0
    %7108 = vmatprep.subr.mxu0 0.0
    %7109 = vmatpush1.msra.mxu0 1.0
    %7110 = vmatprep.subr.mxu0 0.0
    %7111 = vmatpush1.msra.mxu0 1.0
    %7112 = vmatprep.subr.mxu0 0.0
    %7113 = vmatpush1.msra.mxu0 1.0
    %7114 = vmatprep.subr.mxu0 0.0
    %7115 = vmatpush1.msra.mxu0 1.0
    %7116 = vmatprep.subr.mxu0 0.0
    %7117 = vmatpush1.msra.mxu0 1.0
    %7118 = vmatprep.subr.mxu0 0.0
    %7119 = vmatpush1.msra.mxu0 1.0
    %7120 = vmatprep.subr.mxu0 0.0
    %7121 = vmatpush1.msra.mxu0 1.0
    %7122 = vmatprep.subr.mxu0 0.0
    %7123 = vmatpush1.msra.mxu0 1.0
    %7124 = vmatprep.subr.mxu0 0.0
    %7125 = vmatpush1.msra.mxu0 1.0
    %7126 = vmatprep.subr.mxu0 0.0
    %7127 = vmatpush1.msra.mxu0 1.0
    %7128 = vmatprep.subr.mxu0 0.0
    %7129 = vmatpush1.msra.mxu0 1.0
    %7130 = vmatprep.subr.mxu0 0.0
    %7131 = vmatpush1.msra.mxu0 1.0
    %7132 = vmatprep.subr.mxu0 0.0
    %7133 = vmatpush1.msra.mxu0 1.0
    %7134 = vmatprep.subr.mxu0 0.0
    %7135 = vmatpush1.msra.mxu0 1.0
    %7136 = vmatprep.subr.mxu0 0.0
    %7137 = vmatpush1.msra.mxu0 1.0
    %7138 = vmatprep.subr.mxu0 0.0
    %7139 = vmatpush1.msra.mxu0 1.0
    %7140 = vmatprep.subr.mxu0 0.0
    %7141 = vmatpush1.msra.mxu0 1.0
    %7142 = vmatprep.subr.mxu0 0.0
    %7143 = vmatpush1.msra.mxu0 1.0
    %7144 = vmatprep.subr.mxu0 0.0
    %7145 = vmatpush1.msra.mxu0 1.0
    %7146 = vmatprep.subr.mxu0 0.0
    %7147 = vmatpush1.msra.mxu0 1.0
    %7148 = vmatprep.subr.mxu0 0.0
    %7149 = vmatpush1.msra.mxu0 1.0
    %7150 = vmatprep.subr.mxu0 0.0
    %7151 = vmatpush1.msra.mxu0 1.0
    %7152 = vmatprep.subr.mxu0 0.0
    %7153 = vmatpush1.msra.mxu0 1.0
    %7154 = vmatprep.subr.mxu0 0.0
    %7155 = vmatpush1.msra.mxu0 1.0
    %7156 = vmatprep.subr.mxu0 0.0
    %7157 = vmatpush1.msra.mxu0 1.0
    %7158 = vmatprep.subr.mxu0 0.0
    %7159 = vmatpush1.msra.mxu0 1.0
    %7160 = vmatprep.subr.mxu0 0.0
    %7161 = vmatpush1.msra.mxu0 1.0
    %7162 = vmatprep.subr.mxu0 0.0
    %7163 = vmatpush1.msra.mxu0 1.0
    %7164 = vmatprep.subr.mxu0 0.0
    %7165 = vmatpush1.msra.mxu0 1.0
    %7166 = vmatprep.subr.mxu0 0.0
    %7167 = vmatpush1.msra.mxu0 1.0
    %7168 = vmatprep.mubr.f32.mxu0 %v6961
    %7169 = vmatmul.mubr.f32.gmra.mrb[0].mxu0 %v6960
    %v7170 = vpop.f32.mrb[0].mxu0
    %v7171 = vadd.f32 %v7101, %v7170
    %v7172 = vpop.f32.mrb[0].mxu0
    %7173 = vdwg.mxu0
    %7174 = vmatprep.subr.mxu0 0.0
    %7175 = vmatpush1.msra.mxu0 1.0
    %7176 = vmatprep.subr.mxu0 0.0
    %7177 = vmatpush1.msra.mxu0 1.0
    %7178 = vmatprep.subr.mxu0 0.0
    %7179 = vmatpush1.msra.mxu0 1.0
    %7180 = vmatprep.subr.mxu0 0.0
    %7181 = vmatpush1.msra.mxu0 1.0
    %7182 = vmatprep.subr.mxu0 0.0
    %7183 = vmatpush1.msra.mxu0 1.0
    %7184 = vmatprep.subr.mxu0 0.0
    %7185 = vmatpush1.msra.mxu0 1.0
    %7186 = vmatprep.subr.mxu0 0.0
    %7187 = vmatpush1.msra.mxu0 1.0
    %7188 = vmatprep.subr.mxu0 0.0
    %7189 = vmatpush1.msra.mxu0 1.0
    %7190 = vmatprep.subr.mxu0 0.0
    %7191 = vmatpush1.msra.mxu0 1.0
    %7192 = vmatprep.subr.mxu0 0.0
    %7193 = vmatpush1.msra.mxu0 1.0
    %7194 = vmatprep.subr.mxu0 0.0
    %7195 = vmatpush1.msra.mxu0 1.0
    %7196 = vmatprep.subr.mxu0 0.0
    %7197 = vmatpush1.msra.mxu0 1.0
    %7198 = vmatprep.subr.mxu0 0.0
    %7199 = vmatpush1.msra.mxu0 1.0
    %7200 = vmatprep.subr.mxu0 0.0
    %7201 = vmatpush1.msra.mxu0 1.0
    %7202 = vmatprep.subr.mxu0 0.0
    %7203 = vmatpush1.msra.mxu0 1.0
    %7204 = vmatprep.subr.mxu0 0.0
    %7205 = vmatpush1.msra.mxu0 1.0
    %7206 = vmatprep.subr.mxu0 0.0
    %7207 = vmatpush1.msra.mxu0 1.0
    %7208 = vmatprep.subr.mxu0 0.0
    %7209 = vmatpush1.msra.mxu0 1.0
    %7210 = vmatprep.subr.mxu0 0.0
    %7211 = vmatpush1.msra.mxu0 1.0
    %7212 = vmatprep.subr.mxu0 0.0
    %7213 = vmatpush1.msra.mxu0 1.0
    %7214 = vmatprep.subr.mxu0 0.0
    %7215 = vmatpush1.msra.mxu0 1.0
    %7216 = vmatprep.subr.mxu0 0.0
    %7217 = vmatpush1.msra.mxu0 1.0
    %7218 = vmatprep.subr.mxu0 0.0
    %7219 = vmatpush1.msra.mxu0 1.0
    %7220 = vmatprep.subr.mxu0 0.0
    %7221 = vmatpush1.msra.mxu0 1.0
    %7222 = vmatprep.subr.mxu0 0.0
    %7223 = vmatpush1.msra.mxu0 1.0
    %7224 = vmatprep.subr.mxu0 0.0
    %7225 = vmatpush1.msra.mxu0 1.0
    %7226 = vmatprep.subr.mxu0 0.0
    %7227 = vmatpush1.msra.mxu0 1.0
    %7228 = vmatprep.subr.mxu0 0.0
    %7229 = vmatpush1.msra.mxu0 1.0
    %7230 = vmatprep.subr.mxu0 0.0
    %7231 = vmatpush1.msra.mxu0 1.0
    %7232 = vmatprep.subr.mxu0 0.0
    %7233 = vmatpush1.msra.mxu0 1.0
    %7234 = vmatprep.subr.mxu0 0.0
    %7235 = vmatpush1.msra.mxu0 1.0
    %7236 = vmatprep.subr.mxu0 0.0
    %7237 = vmatpush1.msra.mxu0 1.0
    %7238 = vmatprep.mubr.f32.mxu0 %v6963
    %7239 = vmatmul.mubr.f32.gmra.mrb[0].mxu0 %v6962
    %v7240 = vpop.f32.mrb[0].mxu0
    %v7241 = vadd.f32 %v7171, %v7240
    %v7242 = vpop.f32.mrb[0].mxu0
    %7243 = vdwg.mxu0
    %7244 = vadd.xlane.f32.xlu0 %v7241
    %v7245 = vpop.xlane.xlu0 %7244
    %v7246 = vmul.f32 %v7245, %v988
    %v7247 = vmul.f32 %v7246, 0.0009765625
    %v7248 = vadd.f32 %v7247, 1e-05
    %v7249 = vrsqrt.pop %v7248
    %v7250 = vmul.f32 %v6948, %v7249
    %v7251 = vmul.f32 %v6949, %v7249
    %v7252 = vmul.f32 %v6950, %v7249
    %v7253 = vmul.f32 %v6951, %v7249
    %v7254 = vmul.f32 %v6952, %v7249
    %v7255 = vmul.f32 %v6953, %v7249
    %v7256 = vmul.f32 %v6954, %v7249
    %v7257 = vmul.f32 %v6955, %v7249
    %v7258 = vstv %s6366
    %v7259 = vmul.f32 %v7258, %v7250
    %v7260 = vmul.f32 %v7258, %v7251
    %v7261 = vmul.f32 %v7258, %v7252
    %v7262 = vmul.f32 %v7258, %v7253
    %v7263 = vmul.f32 %v7258, %v7254
    %v7264 = vmul.f32 %v7258, %v7255
    %v7265 = vmul.f32 %v7258, %v7256
    %v7266 = vmul.f32 %v7258, %v7257
    %v7267 = vadd.f32 %v6358, %v7259
    %v7268 = vadd.f32 %v6359, %v7260
    %v7269 = vadd.f32 %v6360, %v7261
    %v7270 = vadd.f32 %v6361, %v7262
    %v7271 = vadd.f32 %v6362, %v7263
    %v7272 = vadd.f32 %v6363, %v7264
    %v7273 = vadd.f32 %v6364, %v7265
    %v7274 = vadd.f32 %v6365, %v7266
    %s7275 = sld [smem:[#allocation2 + $0x201]]
    %v7276 = vstv %s7275
    %v7277 = vmul.f32 %v7276, %v4732
    %v7278 = vmul.f32 %v7276, %v4733
    %v7279 = vmul.f32 %v7276, %v4734
    %v7280 = vmul.f32 %v7276, %v4735
    %v7281 = vmul.f32 %v7276, %v4736
    %v7282 = vmul.f32 %v7276, %v4737
    %v7283 = vmul.f32 %v7276, %v4738
    %v7284 = vmul.f32 %v7276, %v4739
    %7285 = vrot.lane.b32.xlu0 %v4732, 1
    %v7286 = vpop.permute.xlu0 %7285
    %7287 = vrot.lane.b32.xlu0 %v4733, 1
    %v7288 = vpop.permute.xlu0 %7287
    %7289 = vrot.lane.b32.xlu0 %v4734, 1
    %v7290 = vpop.permute.xlu0 %7289
    %7291 = vrot.lane.b32.xlu0 %v4735, 1
    %v7292 = vpop.permute.xlu0 %7291
    %7293 = vrot.lane.b32.xlu0 %v4736, 1
    %v7294 = vpop.permute.xlu0 %7293
    %7295 = vrot.lane.b32.xlu0 %v4737, 1
    %v7296 = vpop.permute.xlu0 %7295
    %7297 = vrot.lane.b32.xlu0 %v4738, 1
    %v7298 = vpop.permute.xlu0 %7297
    %7299 = vrot.lane.b32.xlu0 %v4739, 1
    %v7300 = vpop.permute.xlu0 %7299
    %v7301 = vsel %vm2227, %v7298, %v7300
    %v7302 = vsel %vm2227, %v7296, %v7298
    %v7303 = vsel %vm2227, %v7294, %v7296
    %v7304 = vsel %vm2227, %v7292, %v7294
    %v7305 = vsel %vm2227, %v7290, %v7292
    %v7306 = vsel %vm2227, %v7288, %v7290
    %v7307 = vsel %vm2227, %v7286, %v7288
    %v7308 = vsel %vm2227, %v7300, %v7286
    %7309 = vrot.lane.b32.xlu0 %v4732, 127
    %v7310 = vpop.permute.xlu0 %7309
    %7311 = vrot.lane.b32.xlu0 %v4733, 127
    %v7312 = vpop.permute.xlu0 %7311
    %7313 = vrot.lane.b32.xlu0 %v4734, 127
    %v7314 = vpop.permute.xlu0 %7313
    %7315 = vrot.lane.b32.xlu0 %v4735, 127
    %v7316 = vpop.permute.xlu0 %7315
    %7317 = vrot.lane.b32.xlu0 %v4736, 127
    %v7318 = vpop.permute.xlu0 %7317
    %7319 = vrot.lane.b32.xlu0 %v4737, 127
    %v7320 = vpop.permute.xlu0 %7319
    %7321 = vrot.lane.b32.xlu0 %v4738, 127
    %v7322 = vpop.permute.xlu0 %7321
    %7323 = vrot.lane.b32.xlu0 %v4739, 127
    %v7324 = vpop.permute.xlu0 %7323
    %v7325 = vsel %vm2252, %v7322, %v7324
    %v7326 = vsel %vm2252, %v7320, %v7322
    %v7327 = vsel %vm2252, %v7318, %v7320
    %v7328 = vsel %vm2252, %v7316, %v7318
    %v7329 = vsel %vm2252, %v7314, %v7316
    %v7330 = vsel %vm2252, %v7312, %v7314
    %v7331 = vsel %vm2252, %v7310, %v7312
    %v7332 = vsel %vm2252, %v7324, %v7310
    %v7333 = vsel %vm83, %v7308, -3e+38
    %v7334 = vsel %vm84, %v7307, -3e+38
    %v7335 = vsel %vm85, %v7306, -3e+38
    %v7336 = vsel %vm86, %v7305, -3e+38
    %v7337 = vsel %vm87, %v7304, -3e+38
    %v7338 = vsel %vm88, %v7303, -3e+38
    %v7339 = vsel %vm89, %v7302, -3e+38
    %v7340 = vsel %vm90, %v7301, -3e+38
    %v7341 = vsel %vm136, %v7331, -3e+38
    %v7342 = vsel %vm137, %v7330, -3e+38
    %v7343 = vsel %vm138, %v7329, -3e+38
    %v7344 = vsel %vm139, %v7328, -3e+38
    %v7345 = vsel %vm140, %v7327, -3e+38
    %v7346 = vsel %vm141, %v7326, -3e+38
    %v7347 = vsel %vm142, %v7325, -3e+38
    %v7348 = vsel %vm143, %v7332, -3e+38
    %v7349 = vmax.f32 %v7333, %v7341
    %v7350 = vmax.f32 %v7334, %v7342
    %v7351 = vmax.f32 %v7335, %v7343
    %v7352 = vmax.f32 %v7336, %v7344
    %v7353 = vmax.f32 %v7337, %v7345
    %v7354 = vmax.f32 %v7338, %v7346
    %v7355 = vmax.f32 %v7339, %v7347
    %v7356 = vmax.f32 %v7340, %v7348
    %v7357 = vmax.f32 %v4732, %v7349
    %v7358 = vmax.f32 %v4733, %v7350
    %v7359 = vmax.f32 %v4734, %v7351
    %v7360 = vmax.f32 %v4735, %v7352
    %v7361 = vmax.f32 %v4736, %v7353
    %v7362 = vmax.f32 %v4737, %v7354
    %v7363 = vmax.f32 %v4738, %v7355
    %v7364 = vmax.f32 %v4739, %v7356
    %v7365 = vsel %vm83, %v7308, 0.0
    %v7366 = vsel %vm84, %v7307, 0.0
    %v7367 = vsel %vm85, %v7306, 0.0
    %v7368 = vsel %vm86, %v7305, 0.0
    %v7369 = vsel %vm87, %v7304, 0.0
    %v7370 = vsel %vm88, %v7303, 0.0
    %v7371 = vsel %vm89, %v7302, 0.0
    %v7372 = vsel %vm90, %v7301, 0.0
    %v7373 = vadd.f32 %v4732, %v7365
    %v7374 = vadd.f32 %v4733, %v7366
    %v7375 = vadd.f32 %v4734, %v7367
    %v7376 = vadd.f32 %v4735, %v7368
    %v7377 = vadd.f32 %v4736, %v7369
    %v7378 = vadd.f32 %v4737, %v7370
    %v7379 = vadd.f32 %v4738, %v7371
    %v7380 = vadd.f32 %v4739, %v7372
    %v7381 = vsel %vm136, %v7331, 0.0
    %v7382 = vsel %vm137, %v7330, 0.0
    %v7383 = vsel %vm138, %v7329, 0.0
    %v7384 = vsel %vm139, %v7328, 0.0
    %v7385 = vsel %vm140, %v7327, 0.0
    %v7386 = vsel %vm141, %v7326, 0.0
    %v7387 = vsel %vm142, %v7325, 0.0
    %v7388 = vsel %vm143, %v7332, 0.0
    %v7389 = vadd.f32 %v7373, %v7381
    %v7390 = vadd.f32 %v7374, %v7382
    %v7391 = vadd.f32 %v7375, %v7383
    %v7392 = vadd.f32 %v7376, %v7384
    %v7393 = vadd.f32 %v7377, %v7385
    %v7394 = vadd.f32 %v7378, %v7386
    %v7395 = vadd.f32 %v7379, %v7387
    %v7396 = vadd.f32 %v7380, %v7388
    %7397 = vrot.lane.b32.xlu0 %v7357, 8
    %v7398 = vpop.permute.xlu0 %7397
    %7399 = vrot.lane.b32.xlu0 %v7358, 8
    %v7400 = vpop.permute.xlu0 %7399
    %7401 = vrot.lane.b32.xlu0 %v7359, 8
    %v7402 = vpop.permute.xlu0 %7401
    %7403 = vrot.lane.b32.xlu0 %v7360, 8
    %v7404 = vpop.permute.xlu0 %7403
    %7405 = vrot.lane.b32.xlu0 %v7361, 8
    %v7406 = vpop.permute.xlu0 %7405
    %7407 = vrot.lane.b32.xlu0 %v7362, 8
    %v7408 = vpop.permute.xlu0 %7407
    %7409 = vrot.lane.b32.xlu0 %v7363, 8
    %v7410 = vpop.permute.xlu0 %7409
    %7411 = vrot.lane.b32.xlu0 %v7364, 8
    %v7412 = vpop.permute.xlu0 %7411
    %v7413 = vsel %vm2341, %v7410, %v7412
    %v7414 = vsel %vm2341, %v7408, %v7410
    %v7415 = vsel %vm2341, %v7406, %v7408
    %v7416 = vsel %vm2341, %v7404, %v7406
    %v7417 = vsel %vm2341, %v7402, %v7404
    %v7418 = vsel %vm2341, %v7400, %v7402
    %v7419 = vsel %vm2341, %v7398, %v7400
    %v7420 = vsel %vm2341, %v7412, %v7398
    %7421 = vrot.lane.b32.xlu0 %v7357, 120
    %v7422 = vpop.permute.xlu0 %7421
    %7423 = vrot.lane.b32.xlu0 %v7358, 120
    %v7424 = vpop.permute.xlu0 %7423
    %7425 = vrot.lane.b32.xlu0 %v7359, 120
    %v7426 = vpop.permute.xlu0 %7425
    %7427 = vrot.lane.b32.xlu0 %v7360, 120
    %v7428 = vpop.permute.xlu0 %7427
    %7429 = vrot.lane.b32.xlu0 %v7361, 120
    %v7430 = vpop.permute.xlu0 %7429
    %7431 = vrot.lane.b32.xlu0 %v7362, 120
    %v7432 = vpop.permute.xlu0 %7431
    %7433 = vrot.lane.b32.xlu0 %v7363, 120
    %v7434 = vpop.permute.xlu0 %7433
    %7435 = vrot.lane.b32.xlu0 %v7364, 120
    %v7436 = vpop.permute.xlu0 %7435
    %v7437 = vsel %vm2366, %v7434, %v7436
    %v7438 = vsel %vm2366, %v7432, %v7434
    %v7439 = vsel %vm2366, %v7430, %v7432
    %v7440 = vsel %vm2366, %v7428, %v7430
    %v7441 = vsel %vm2366, %v7426, %v7428
    %v7442 = vsel %vm2366, %v7424, %v7426
    %v7443 = vsel %vm2366, %v7422, %v7424
    %v7444 = vsel %vm2366, %v7436, %v7422
    %v7445 = vsel %vm189, %v7420, -3e+38
    %v7446 = vsel %vm190, %v7419, -3e+38
    %v7447 = vsel %vm191, %v7418, -3e+38
    %v7448 = vsel %vm192, %v7417, -3e+38
    %v7449 = vsel %vm193, %v7416, -3e+38
    %v7450 = vsel %vm194, %v7415, -3e+38
    %v7451 = vsel %vm195, %v7414, -3e+38
    %v7452 = vsel %vm196, %v7413, -3e+38
    %v7453 = vsel %vm242, %v7443, -3e+38
    %v7454 = vsel %vm243, %v7442, -3e+38
    %v7455 = vsel %vm244, %v7441, -3e+38
    %v7456 = vsel %vm245, %v7440, -3e+38
    %v7457 = vsel %vm246, %v7439, -3e+38
    %v7458 = vsel %vm247, %v7438, -3e+38
    %v7459 = vsel %vm248, %v7437, -3e+38
    %v7460 = vsel %vm249, %v7444, -3e+38
    %v7461 = vmax.f32 %v7445, %v7453
    %v7462 = vmax.f32 %v7446, %v7454
    %v7463 = vmax.f32 %v7447, %v7455
    %v7464 = vmax.f32 %v7448, %v7456
    %v7465 = vmax.f32 %v7449, %v7457
    %v7466 = vmax.f32 %v7450, %v7458
    %v7467 = vmax.f32 %v7451, %v7459
    %v7468 = vmax.f32 %v7452, %v7460
    %v7469 = vmax.f32 %v7357, %v7461
    %v7470 = vmax.f32 %v7358, %v7462
    %v7471 = vmax.f32 %v7359, %v7463
    %v7472 = vmax.f32 %v7360, %v7464
    %v7473 = vmax.f32 %v7361, %v7465
    %v7474 = vmax.f32 %v7362, %v7466
    %v7475 = vmax.f32 %v7363, %v7467
    %v7476 = vmax.f32 %v7364, %v7468
    %7477 = vrot.lane.b32.xlu0 %v7389, 8
    %v7478 = vpop.permute.xlu0 %7477
    %7479 = vrot.lane.b32.xlu0 %v7390, 8
    %v7480 = vpop.permute.xlu0 %7479
    %7481 = vrot.lane.b32.xlu0 %v7391, 8
    %v7482 = vpop.permute.xlu0 %7481
    %7483 = vrot.lane.b32.xlu0 %v7392, 8
    %v7484 = vpop.permute.xlu0 %7483
    %7485 = vrot.lane.b32.xlu0 %v7393, 8
    %v7486 = vpop.permute.xlu0 %7485
    %7487 = vrot.lane.b32.xlu0 %v7394, 8
    %v7488 = vpop.permute.xlu0 %7487
    %7489 = vrot.lane.b32.xlu0 %v7395, 8
    %v7490 = vpop.permute.xlu0 %7489
    %7491 = vrot.lane.b32.xlu0 %v7396, 8
    %v7492 = vpop.permute.xlu0 %7491
    %v7493 = vsel %vm2341, %v7490, %v7492
    %v7494 = vsel %vm2341, %v7488, %v7490
    %v7495 = vsel %vm2341, %v7486, %v7488
    %v7496 = vsel %vm2341, %v7484, %v7486
    %v7497 = vsel %vm2341, %v7482, %v7484
    %v7498 = vsel %vm2341, %v7480, %v7482
    %v7499 = vsel %vm2341, %v7478, %v7480
    %v7500 = vsel %vm2341, %v7492, %v7478
    %7501 = vrot.lane.b32.xlu0 %v7389, 120
    %v7502 = vpop.permute.xlu0 %7501
    %7503 = vrot.lane.b32.xlu0 %v7390, 120
    %v7504 = vpop.permute.xlu0 %7503
    %7505 = vrot.lane.b32.xlu0 %v7391, 120
    %v7506 = vpop.permute.xlu0 %7505
    %7507 = vrot.lane.b32.xlu0 %v7392, 120
    %v7508 = vpop.permute.xlu0 %7507
    %7509 = vrot.lane.b32.xlu0 %v7393, 120
    %v7510 = vpop.permute.xlu0 %7509
    %7511 = vrot.lane.b32.xlu0 %v7394, 120
    %v7512 = vpop.permute.xlu0 %7511
    %7513 = vrot.lane.b32.xlu0 %v7395, 120
    %v7514 = vpop.permute.xlu0 %7513
    %7515 = vrot.lane.b32.xlu0 %v7396, 120
    %v7516 = vpop.permute.xlu0 %7515
    %v7517 = vsel %vm2366, %v7514, %v7516
    %v7518 = vsel %vm2366, %v7512, %v7514
    %v7519 = vsel %vm2366, %v7510, %v7512
    %v7520 = vsel %vm2366, %v7508, %v7510
    %v7521 = vsel %vm2366, %v7506, %v7508
    %v7522 = vsel %vm2366, %v7504, %v7506
    %v7523 = vsel %vm2366, %v7502, %v7504
    %v7524 = vsel %vm2366, %v7516, %v7502
    %v7525 = vsel %vm189, %v7500, 0.0
    %v7526 = vsel %vm190, %v7499, 0.0
    %v7527 = vsel %vm191, %v7498, 0.0
    %v7528 = vsel %vm192, %v7497, 0.0
    %v7529 = vsel %vm193, %v7496, 0.0
    %v7530 = vsel %vm194, %v7495, 0.0
    %v7531 = vsel %vm195, %v7494, 0.0
    %v7532 = vsel %vm196, %v7493, 0.0
    %v7533 = vadd.f32 %v7389, %v7525
    %v7534 = vadd.f32 %v7390, %v7526
    %v7535 = vadd.f32 %v7391, %v7527
    %v7536 = vadd.f32 %v7392, %v7528
    %v7537 = vadd.f32 %v7393, %v7529
    %v7538 = vadd.f32 %v7394, %v7530
    %v7539 = vadd.f32 %v7395, %v7531
    %v7540 = vadd.f32 %v7396, %v7532
    %v7541 = vsel %vm242, %v7523, 0.0
    %v7542 = vsel %vm243, %v7522, 0.0
    %v7543 = vsel %vm244, %v7521, 0.0
    %v7544 = vsel %vm245, %v7520, 0.0
    %v7545 = vsel %vm246, %v7519, 0.0
    %v7546 = vsel %vm247, %v7518, 0.0
    %v7547 = vsel %vm248, %v7517, 0.0
    %v7548 = vsel %vm249, %v7524, 0.0
    %v7549 = vadd.f32 %v7533, %v7541
    %v7550 = vadd.f32 %v7534, %v7542
    %v7551 = vadd.f32 %v7535, %v7543
    %v7552 = vadd.f32 %v7536, %v7544
    %v7553 = vadd.f32 %v7537, %v7545
    %v7554 = vadd.f32 %v7538, %v7546
    %v7555 = vadd.f32 %v7539, %v7547
    %v7556 = vadd.f32 %v7540, %v7548
    %7557 = vrot.lane.b32.xlu0 %v7469, 64
    %v7558 = vpop.permute.xlu0 %7557
    %7559 = vrot.lane.b32.xlu0 %v7470, 64
    %v7560 = vpop.permute.xlu0 %7559
    %7561 = vrot.lane.b32.xlu0 %v7471, 64
    %v7562 = vpop.permute.xlu0 %7561
    %7563 = vrot.lane.b32.xlu0 %v7472, 64
    %v7564 = vpop.permute.xlu0 %7563
    %7565 = vrot.lane.b32.xlu0 %v7473, 64
    %v7566 = vpop.permute.xlu0 %7565
    %7567 = vrot.lane.b32.xlu0 %v7474, 64
    %v7568 = vpop.permute.xlu0 %7567
    %7569 = vrot.lane.b32.xlu0 %v7475, 64
    %v7570 = vpop.permute.xlu0 %7569
    %7571 = vrot.lane.b32.xlu0 %v7476, 64
    %v7572 = vpop.permute.xlu0 %7571
    %v7573 = vsel %vm2503, %v7570, %v7572
    %v7574 = vsel %vm2503, %v7568, %v7570
    %v7575 = vsel %vm2503, %v7566, %v7568
    %v7576 = vsel %vm2503, %v7564, %v7566
    %v7577 = vsel %vm2503, %v7562, %v7564
    %v7578 = vsel %vm2503, %v7560, %v7562
    %v7579 = vsel %vm2503, %v7558, %v7560
    %v7580 = vsel %vm2503, %v7572, %v7558
    %v7581 = vsel %vm295, %v7580, -3e+38
    %v7582 = vsel %vm296, %v7579, -3e+38
    %v7583 = vsel %vm297, %v7578, -3e+38
    %v7584 = vsel %vm298, %v7577, -3e+38
    %v7585 = vsel %vm299, %v7576, -3e+38
    %v7586 = vsel %vm300, %v7575, -3e+38
    %v7587 = vsel %vm301, %v7574, -3e+38
    %v7588 = vsel %vm302, %v7573, -3e+38
    %v7589 = vsel %vm348, %v7579, -3e+38
    %v7590 = vsel %vm349, %v7578, -3e+38
    %v7591 = vsel %vm350, %v7577, -3e+38
    %v7592 = vsel %vm351, %v7576, -3e+38
    %v7593 = vsel %vm352, %v7575, -3e+38
    %v7594 = vsel %vm353, %v7574, -3e+38
    %v7595 = vsel %vm354, %v7573, -3e+38
    %v7596 = vsel %vm355, %v7580, -3e+38
    %v7597 = vmax.f32 %v7581, %v7589
    %v7598 = vmax.f32 %v7582, %v7590
    %v7599 = vmax.f32 %v7583, %v7591
    %v7600 = vmax.f32 %v7584, %v7592
    %v7601 = vmax.f32 %v7585, %v7593
    %v7602 = vmax.f32 %v7586, %v7594
    %v7603 = vmax.f32 %v7587, %v7595
    %v7604 = vmax.f32 %v7588, %v7596
    %v7605 = vmax.f32 %v7469, %v7597
    %v7606 = vmax.f32 %v7470, %v7598
    %v7607 = vmax.f32 %v7471, %v7599
    %v7608 = vmax.f32 %v7472, %v7600
    %v7609 = vmax.f32 %v7473, %v7601
    %v7610 = vmax.f32 %v7474, %v7602
    %v7611 = vmax.f32 %v7475, %v7603
    %v7612 = vmax.f32 %v7476, %v7604
    %7613 = vrot.lane.b32.xlu0 %v7549, 64
    %v7614 = vpop.permute.xlu0 %7613
    %7615 = vrot.lane.b32.xlu0 %v7550, 64
    %v7616 = vpop.permute.xlu0 %7615
    %7617 = vrot.lane.b32.xlu0 %v7551, 64
    %v7618 = vpop.permute.xlu0 %7617
    %7619 = vrot.lane.b32.xlu0 %v7552, 64
    %v7620 = vpop.permute.xlu0 %7619
    %7621 = vrot.lane.b32.xlu0 %v7553, 64
    %v7622 = vpop.permute.xlu0 %7621
    %7623 = vrot.lane.b32.xlu0 %v7554, 64
    %v7624 = vpop.permute.xlu0 %7623
    %7625 = vrot.lane.b32.xlu0 %v7555, 64
    %v7626 = vpop.permute.xlu0 %7625
    %7627 = vrot.lane.b32.xlu0 %v7556, 64
    %v7628 = vpop.permute.xlu0 %7627
    %v7629 = vsel %vm2503, %v7626, %v7628
    %v7630 = vsel %vm2503, %v7624, %v7626
    %v7631 = vsel %vm2503, %v7622, %v7624
    %v7632 = vsel %vm2503, %v7620, %v7622
    %v7633 = vsel %vm2503, %v7618, %v7620
    %v7634 = vsel %vm2503, %v7616, %v7618
    %v7635 = vsel %vm2503, %v7614, %v7616
    %v7636 = vsel %vm2503, %v7628, %v7614
    %v7637 = vsel %vm295, %v7636, 0.0
    %v7638 = vsel %vm296, %v7635, 0.0
    %v7639 = vsel %vm297, %v7634, 0.0
    %v7640 = vsel %vm298, %v7633, 0.0
    %v7641 = vsel %vm299, %v7632, 0.0
    %v7642 = vsel %vm300, %v7631, 0.0
    %v7643 = vsel %vm301, %v7630, 0.0
    %v7644 = vsel %vm302, %v7629, 0.0
    %v7645 = vadd.f32 %v7549, %v7637
    %v7646 = vadd.f32 %v7550, %v7638
    %v7647 = vadd.f32 %v7551, %v7639
    %v7648 = vadd.f32 %v7552, %v7640
    %v7649 = vadd.f32 %v7553, %v7641
    %v7650 = vadd.f32 %v7554, %v7642
    %v7651 = vadd.f32 %v7555, %v7643
    %v7652 = vadd.f32 %v7556, %v7644
    %v7653 = vsel %vm348, %v7635, 0.0
    %v7654 = vsel %vm349, %v7634, 0.0
    %v7655 = vsel %vm350, %v7633, 0.0
    %v7656 = vsel %vm351, %v7632, 0.0
    %v7657 = vsel %vm352, %v7631, 0.0
    %v7658 = vsel %vm353, %v7630, 0.0
    %v7659 = vsel %vm354, %v7629, 0.0
    %v7660 = vsel %vm355, %v7636, 0.0
    %v7661 = vadd.f32 %v7645, %v7653
    %v7662 = vadd.f32 %v7646, %v7654
    %v7663 = vadd.f32 %v7647, %v7655
    %v7664 = vadd.f32 %v7648, %v7656
    %v7665 = vadd.f32 %v7649, %v7657
    %v7666 = vadd.f32 %v7650, %v7658
    %v7667 = vadd.f32 %v7651, %v7659
    %v7668 = vadd.f32 %v7652, %v7660
    %v7669 = vmul.f32 %v7661, %v364
    %v7670 = vmul.f32 %v7662, %v368
    %v7671 = vmul.f32 %v7663, %v372
    %v7672 = vmul.f32 %v7664, %v376
    %v7673 = vmul.f32 %v7665, %v380
    %v7674 = vmul.f32 %v7666, %v384
    %v7675 = vmul.f32 %v7667, %v388
    %v7676 = vmul.f32 %v7668, %v392
    %s7677 = sld [smem:[#allocation2 + $0x202]]
    %7678 = vmatprep.subr.mxu0 0.0
    %7679 = vmatpush1.msra.mxu0 1.0
    %7680 = vmatprep.subr.mxu0 0.0
    %7681 = vmatpush1.msra.mxu0 1.0
    %7682 = vmatprep.subr.mxu0 0.0
    %7683 = vmatpush1.msra.mxu0 1.0
    %7684 = vmatprep.subr.mxu0 0.0
    %7685 = vmatpush1.msra.mxu0 1.0
    %7686 = vmatprep.subr.mxu0 0.0
    %7687 = vmatpush1.msra.mxu0 1.0
    %7688 = vmatprep.subr.mxu0 0.0
    %7689 = vmatpush1.msra.mxu0 1.0
    %7690 = vmatprep.subr.mxu0 0.0
    %7691 = vmatpush1.msra.mxu0 1.0
    %7692 = vmatprep.subr.mxu0 0.0
    %7693 = vmatpush1.msra.mxu0 1.0
    %7694 = vmatprep.subr.mxu0 0.0
    %7695 = vmatpush1.msra.mxu0 1.0
    %7696 = vmatprep.subr.mxu0 0.0
    %7697 = vmatpush1.msra.mxu0 1.0
    %7698 = vmatprep.subr.mxu0 0.0
    %7699 = vmatpush1.msra.mxu0 1.0
    %7700 = vmatprep.subr.mxu0 0.0
    %7701 = vmatpush1.msra.mxu0 1.0
    %7702 = vmatprep.subr.mxu0 0.0
    %7703 = vmatpush1.msra.mxu0 1.0
    %7704 = vmatprep.subr.mxu0 0.0
    %7705 = vmatpush1.msra.mxu0 1.0
    %7706 = vmatprep.subr.mxu0 0.0
    %7707 = vmatpush1.msra.mxu0 1.0
    %7708 = vmatprep.subr.mxu0 0.0
    %7709 = vmatpush1.msra.mxu0 1.0
    %7710 = vmatprep.subr.mxu0 0.0
    %7711 = vmatpush1.msra.mxu0 1.0
    %7712 = vmatprep.subr.mxu0 0.0
    %7713 = vmatpush1.msra.mxu0 1.0
    %7714 = vmatprep.subr.mxu0 0.0
    %7715 = vmatpush1.msra.mxu0 1.0
    %7716 = vmatprep.subr.mxu0 0.0
    %7717 = vmatpush1.msra.mxu0 1.0
    %7718 = vmatprep.subr.mxu0 0.0
    %7719 = vmatpush1.msra.mxu0 1.0
    %7720 = vmatprep.subr.mxu0 0.0
    %7721 = vmatpush1.msra.mxu0 1.0
    %7722 = vmatprep.subr.mxu0 0.0
    %7723 = vmatpush1.msra.mxu0 1.0
    %7724 = vmatprep.subr.mxu0 0.0
    %7725 = vmatpush1.msra.mxu0 1.0
    %7726 = vmatprep.subr.mxu0 0.0
    %7727 = vmatpush1.msra.mxu0 1.0
    %7728 = vmatprep.subr.mxu0 0.0
    %7729 = vmatpush1.msra.mxu0 1.0
    %7730 = vmatprep.subr.mxu0 0.0
    %7731 = vmatpush1.msra.mxu0 1.0
    %7732 = vmatprep.subr.mxu0 0.0
    %7733 = vmatpush1.msra.mxu0 1.0
    %7734 = vmatprep.subr.mxu0 0.0
    %7735 = vmatpush1.msra.mxu0 1.0
    %7736 = vmatprep.subr.mxu0 0.0
    %7737 = vmatpush1.msra.mxu0 1.0
    %7738 = vmatprep.subr.mxu0 0.0
    %7739 = vmatpush1.msra.mxu0 1.0
    %7740 = vmatprep.subr.mxu0 0.0
    %7741 = vmatpush1.msra.mxu0 1.0
    %7742 = vmatprep.mubr.f32.mxu0 %v7670
    %7743 = vmatmul.mubr.f32.gmra.mrb[0].mxu0 %v7669
    %v7744 = vpop.f32.mrb[0].mxu0
    %v7745 = vadd.f32 0.0, %v7744
    %v7746 = vpop.f32.mrb[0].mxu0
    %7747 = vdwg.mxu0
    %7748 = vmatprep.subr.mxu0 0.0
    %7749 = vmatpush1.msra.mxu0 1.0
    %7750 = vmatprep.subr.mxu0 0.0
    %7751 = vmatpush1.msra.mxu0 1.0
    %7752 = vmatprep.subr.mxu0 0.0
    %7753 = vmatpush1.msra.mxu0 1.0
    %7754 = vmatprep.subr.mxu0 0.0
    %7755 = vmatpush1.msra.mxu0 1.0
    %7756 = vmatprep.subr.mxu0 0.0
    %7757 = vmatpush1.msra.mxu0 1.0
    %7758 = vmatprep.subr.mxu0 0.0
    %7759 = vmatpush1.msra.mxu0 1.0
    %7760 = vmatprep.subr.mxu0 0.0
    %7761 = vmatpush1.msra.mxu0 1.0
    %7762 = vmatprep.subr.mxu0 0.0
    %7763 = vmatpush1.msra.mxu0 1.0
    %7764 = vmatprep.subr.mxu0 0.0
    %7765 = vmatpush1.msra.mxu0 1.0
    %7766 = vmatprep.subr.mxu0 0.0
    %7767 = vmatpush1.msra.mxu0 1.0
    %7768 = vmatprep.subr.mxu0 0.0
    %7769 = vmatpush1.msra.mxu0 1.0
    %7770 = vmatprep.subr.mxu0 0.0
    %7771 = vmatpush1.msra.mxu0 1.0
    %7772 = vmatprep.subr.mxu0 0.0
    %7773 = vmatpush1.msra.mxu0 1.0
    %7774 = vmatprep.subr.mxu0 0.0
    %7775 = vmatpush1.msra.mxu0 1.0
    %7776 = vmatprep.subr.mxu0 0.0
    %7777 = vmatpush1.msra.mxu0 1.0
    %7778 = vmatprep.subr.mxu0 0.0
    %7779 = vmatpush1.msra.mxu0 1.0
    %7780 = vmatprep.subr.mxu0 0.0
    %7781 = vmatpush1.msra.mxu0 1.0
    %7782 = vmatprep.subr.mxu0 0.0
    %7783 = vmatpush1.msra.mxu0 1.0
    %7784 = vmatprep.subr.mxu0 0.0
    %7785 = vmatpush1.msra.mxu0 1.0
    %7786 = vmatprep.subr.mxu0 0.0
    %7787 = vmatpush1.msra.mxu0 1.0
    %7788 = vmatprep.subr.mxu0 0.0
    %7789 = vmatpush1.msra.mxu0 1.0
    %7790 = vmatprep.subr.mxu0 0.0
    %7791 = vmatpush1.msra.mxu0 1.0
    %7792 = vmatprep.subr.mxu0 0.0
    %7793 = vmatpush1.msra.mxu0 1.0
    %7794 = vmatprep.subr.mxu0 0.0
    %7795 = vmatpush1.msra.mxu0 1.0
    %7796 = vmatprep.subr.mxu0 0.0
    %7797 = vmatpush1.msra.mxu0 1.0
    %7798 = vmatprep.subr.mxu0 0.0
    %7799 = vmatpush1.msra.mxu0 1.0
    %7800 = vmatprep.subr.mxu0 0.0
    %7801 = vmatpush1.msra.mxu0 1.0
    %7802 = vmatprep.subr.mxu0 0.0
    %7803 = vmatpush1.msra.mxu0 1.0
    %7804 = vmatprep.subr.mxu0 0.0
    %7805 = vmatpush1.msra.mxu0 1.0
    %7806 = vmatprep.subr.mxu0 0.0
    %7807 = vmatpush1.msra.mxu0 1.0
    %7808 = vmatprep.subr.mxu0 0.0
    %7809 = vmatpush1.msra.mxu0 1.0
    %7810 = vmatprep.subr.mxu0 0.0
    %7811 = vmatpush1.msra.mxu0 1.0
    %7812 = vmatprep.mubr.f32.mxu0 %v7672
    %7813 = vmatmul.mubr.f32.gmra.mrb[0].mxu0 %v7671
    %v7814 = vpop.f32.mrb[0].mxu0
    %v7815 = vadd.f32 %v7745, %v7814
    %v7816 = vpop.f32.mrb[0].mxu0
    %7817 = vdwg.mxu0
    %7818 = vmatprep.subr.mxu0 0.0
    %7819 = vmatpush1.msra.mxu0 1.0
    %7820 = vmatprep.subr.mxu0 0.0
    %7821 = vmatpush1.msra.mxu0 1.0
    %7822 = vmatprep.subr.mxu0 0.0
    %7823 = vmatpush1.msra.mxu0 1.0
    %7824 = vmatprep.subr.mxu0 0.0
    %7825 = vmatpush1.msra.mxu0 1.0
    %7826 = vmatprep.subr.mxu0 0.0
    %7827 = vmatpush1.msra.mxu0 1.0
    %7828 = vmatprep.subr.mxu0 0.0
    %7829 = vmatpush1.msra.mxu0 1.0
    %7830 = vmatprep.subr.mxu0 0.0
    %7831 = vmatpush1.msra.mxu0 1.0
    %7832 = vmatprep.subr.mxu0 0.0
    %7833 = vmatpush1.msra.mxu0 1.0
    %7834 = vmatprep.subr.mxu0 0.0
    %7835 = vmatpush1.msra.mxu0 1.0
    %7836 = vmatprep.subr.mxu0 0.0
    %7837 = vmatpush1.msra.mxu0 1.0
    %7838 = vmatprep.subr.mxu0 0.0
    %7839 = vmatpush1.msra.mxu0 1.0
    %7840 = vmatprep.subr.mxu0 0.0
    %7841 = vmatpush1.msra.mxu0 1.0
    %7842 = vmatprep.subr.mxu0 0.0
    %7843 = vmatpush1.msra.mxu0 1.0
    %7844 = vmatprep.subr.mxu0 0.0
    %7845 = vmatpush1.msra.mxu0 1.0
    %7846 = vmatprep.subr.mxu0 0.0
    %7847 = vmatpush1.msra.mxu0 1.0
    %7848 = vmatprep.subr.mxu0 0.0
    %7849 = vmatpush1.msra.mxu0 1.0
    %7850 = vmatprep.subr.mxu0 0.0
    %7851 = vmatpush1.msra.mxu0 1.0
    %7852 = vmatprep.subr.mxu0 0.0
    %7853 = vmatpush1.msra.mxu0 1.0
    %7854 = vmatprep.subr.mxu0 0.0
    %7855 = vmatpush1.msra.mxu0 1.0
    %7856 = vmatprep.subr.mxu0 0.0
    %7857 = vmatpush1.msra.mxu0 1.0
    %7858 = vmatprep.subr.mxu0 0.0
    %7859 = vmatpush1.msra.mxu0 1.0
    %7860 = vmatprep.subr.mxu0 0.0
    %7861 = vmatpush1.msra.mxu0 1.0
    %7862 = vmatprep.subr.mxu0 0.0
    %7863 = vmatpush1.msra.mxu0 1.0
    %7864 = vmatprep.subr.mxu0 0.0
    %7865 = vmatpush1.msra.mxu0 1.0
    %7866 = vmatprep.subr.mxu0 0.0
    %7867 = vmatpush1.msra.mxu0 1.0
    %7868 = vmatprep.subr.mxu0 0.0
    %7869 = vmatpush1.msra.mxu0 1.0
    %7870 = vmatprep.subr.mxu0 0.0
    %7871 = vmatpush1.msra.mxu0 1.0
    %7872 = vmatprep.subr.mxu0 0.0
    %7873 = vmatpush1.msra.mxu0 1.0
    %7874 = vmatprep.subr.mxu0 0.0
    %7875 = vmatpush1.msra.mxu0 1.0
    %7876 = vmatprep.subr.mxu0 0.0
    %7877 = vmatpush1.msra.mxu0 1.0
    %7878 = vmatprep.subr.mxu0 0.0
    %7879 = vmatpush1.msra.mxu0 1.0
    %7880 = vmatprep.subr.mxu0 0.0
    %7881 = vmatpush1.msra.mxu0 1.0
    %7882 = vmatprep.mubr.f32.mxu0 %v7674
    %7883 = vmatmul.mubr.f32.gmra.mrb[0].mxu0 %v7673
    %v7884 = vpop.f32.mrb[0].mxu0
    %v7885 = vadd.f32 %v7815, %v7884
    %v7886 = vpop.f32.mrb[0].mxu0
    %7887 = vdwg.mxu0
    %7888 = vmatprep.subr.mxu0 0.0
    %7889 = vmatpush1.msra.mxu0 1.0
    %7890 = vmatprep.subr.mxu0 0.0
    %7891 = vmatpush1.msra.mxu0 1.0
    %7892 = vmatprep.subr.mxu0 0.0
    %7893 = vmatpush1.msra.mxu0 1.0
    %7894 = vmatprep.subr.mxu0 0.0
    %7895 = vmatpush1.msra.mxu0 1.0
    %7896 = vmatprep.subr.mxu0 0.0
    %7897 = vmatpush1.msra.mxu0 1.0
    %7898 = vmatprep.subr.mxu0 0.0
    %7899 = vmatpush1.msra.mxu0 1.0
    %7900 = vmatprep.subr.mxu0 0.0
    %7901 = vmatpush1.msra.mxu0 1.0
    %7902 = vmatprep.subr.mxu0 0.0
    %7903 = vmatpush1.msra.mxu0 1.0
    %7904 = vmatprep.subr.mxu0 0.0
    %7905 = vmatpush1.msra.mxu0 1.0
    %7906 = vmatprep.subr.mxu0 0.0
    %7907 = vmatpush1.msra.mxu0 1.0
    %7908 = vmatprep.subr.mxu0 0.0
    %7909 = vmatpush1.msra.mxu0 1.0
    %7910 = vmatprep.subr.mxu0 0.0
    %7911 = vmatpush1.msra.mxu0 1.0
    %7912 = vmatprep.subr.mxu0 0.0
    %7913 = vmatpush1.msra.mxu0 1.0
    %7914 = vmatprep.subr.mxu0 0.0
    %7915 = vmatpush1.msra.mxu0 1.0
    %7916 = vmatprep.subr.mxu0 0.0
    %7917 = vmatpush1.msra.mxu0 1.0
    %7918 = vmatprep.subr.mxu0 0.0
    %7919 = vmatpush1.msra.mxu0 1.0
    %7920 = vmatprep.subr.mxu0 0.0
    %7921 = vmatpush1.msra.mxu0 1.0
    %7922 = vmatprep.subr.mxu0 0.0
    %7923 = vmatpush1.msra.mxu0 1.0
    %7924 = vmatprep.subr.mxu0 0.0
    %7925 = vmatpush1.msra.mxu0 1.0
    %7926 = vmatprep.subr.mxu0 0.0
    %7927 = vmatpush1.msra.mxu0 1.0
    %7928 = vmatprep.subr.mxu0 0.0
    %7929 = vmatpush1.msra.mxu0 1.0
    %7930 = vmatprep.subr.mxu0 0.0
    %7931 = vmatpush1.msra.mxu0 1.0
    %7932 = vmatprep.subr.mxu0 0.0
    %7933 = vmatpush1.msra.mxu0 1.0
    %7934 = vmatprep.subr.mxu0 0.0
    %7935 = vmatpush1.msra.mxu0 1.0
    %7936 = vmatprep.subr.mxu0 0.0
    %7937 = vmatpush1.msra.mxu0 1.0
    %7938 = vmatprep.subr.mxu0 0.0
    %7939 = vmatpush1.msra.mxu0 1.0
    %7940 = vmatprep.subr.mxu0 0.0
    %7941 = vmatpush1.msra.mxu0 1.0
    %7942 = vmatprep.subr.mxu0 0.0
    %7943 = vmatpush1.msra.mxu0 1.0
    %7944 = vmatprep.subr.mxu0 0.0
    %7945 = vmatpush1.msra.mxu0 1.0
    %7946 = vmatprep.subr.mxu0 0.0
    %7947 = vmatpush1.msra.mxu0 1.0
    %7948 = vmatprep.subr.mxu0 0.0
    %7949 = vmatpush1.msra.mxu0 1.0
    %7950 = vmatprep.subr.mxu0 0.0
    %7951 = vmatpush1.msra.mxu0 1.0
    %7952 = vmatprep.mubr.f32.mxu0 %v7676
    %7953 = vmatmul.mubr.f32.gmra.mrb[0].mxu0 %v7675
    %v7954 = vpop.f32.mrb[0].mxu0
    %v7955 = vadd.f32 %v7885, %v7954
    %v7956 = vpop.f32.mrb[0].mxu0
    %7957 = vdwg.mxu0
    %7958 = vadd.xlane.f32.xlu0 %v7955
    %v7959 = vpop.xlane.xlu0 %7958
    %v7960 = vmul.f32 %v7959, %v988
    %v7961 = vmul.f32 %v7960, 0.0009765625
    %v7962 = vsub.f32 %v7669, %v7961
    %v7963 = vsub.f32 %v7670, %v7961
    %v7964 = vsub.f32 %v7671, %v7961
    %v7965 = vsub.f32 %v7672, %v7961
    %v7966 = vsub.f32 %v7673, %v7961
    %v7967 = vsub.f32 %v7674, %v7961
    %v7968 = vsub.f32 %v7675, %v7961
    %v7969 = vsub.f32 %v7676, %v7961
    %v7970 = vmul.f32 %v7962, %v7962
    %v7971 = vmul.f32 %v7963, %v7963
    %v7972 = vmul.f32 %v7964, %v7964
    %v7973 = vmul.f32 %v7965, %v7965
    %v7974 = vmul.f32 %v7966, %v7966
    %v7975 = vmul.f32 %v7967, %v7967
    %v7976 = vmul.f32 %v7968, %v7968
    %v7977 = vmul.f32 %v7969, %v7969
    %7978 = vmatprep.subr.mxu0 0.0
    %7979 = vmatpush1.msra.mxu0 1.0
    %7980 = vmatprep.subr.mxu0 0.0
    %7981 = vmatpush1.msra.mxu0 1.0
    %7982 = vmatprep.subr.mxu0 0.0
    %7983 = vmatpush1.msra.mxu0 1.0
    %7984 = vmatprep.subr.mxu0 0.0
    %7985 = vmatpush1.msra.mxu0 1.0
    %7986 = vmatprep.subr.mxu0 0.0
    %7987 = vmatpush1.msra.mxu0 1.0
    %7988 = vmatprep.subr.mxu0 0.0
    %7989 = vmatpush1.msra.mxu0 1.0
    %7990 = vmatprep.subr.mxu0 0.0
    %7991 = vmatpush1.msra.mxu0 1.0
    %7992 = vmatprep.subr.mxu0 0.0
    %7993 = vmatpush1.msra.mxu0 1.0
    %7994 = vmatprep.subr.mxu0 0.0
    %7995 = vmatpush1.msra.mxu0 1.0
    %7996 = vmatprep.subr.mxu0 0.0
    %7997 = vmatpush1.msra.mxu0 1.0
    %7998 = vmatprep.subr.mxu0 0.0
    %7999 = vmatpush1.msra.mxu0 1.0
    %8000 = vmatprep.subr.mxu0 0.0
    %8001 = vmatpush1.msra.mxu0 1.0
    %8002 = vmatprep.subr.mxu0 0.0
    %8003 = vmatpush1.msra.mxu0 1.0
    %8004 = vmatprep.subr.mxu0 0.0
    %8005 = vmatpush1.msra.mxu0 1.0
    %8006 = vmatprep.subr.mxu0 0.0
    %8007 = vmatpush1.msra.mxu0 1.0
    %8008 = vmatprep.subr.mxu0 0.0
    %8009 = vmatpush1.msra.mxu0 1.0
    %8010 = vmatprep.subr.mxu0 0.0
    %8011 = vmatpush1.msra.mxu0 1.0
    %8012 = vmatprep.subr.mxu0 0.0
    %8013 = vmatpush1.msra.mxu0 1.0
    %8014 = vmatprep.subr.mxu0 0.0
    %8015 = vmatpush1.msra.mxu0 1.0
    %8016 = vmatprep.subr.mxu0 0.0
    %8017 = vmatpush1.msra.mxu0 1.0
    %8018 = vmatprep.subr.mxu0 0.0
    %8019 = vmatpush1.msra.mxu0 1.0
    %8020 = vmatprep.subr.mxu0 0.0
    %8021 = vmatpush1.msra.mxu0 1.0
    %8022 = vmatprep.subr.mxu0 0.0
    %8023 = vmatpush1.msra.mxu0 1.0
    %8024 = vmatprep.subr.mxu0 0.0
    %8025 = vmatpush1.msra.mxu0 1.0
    %8026 = vmatprep.subr.mxu0 0.0
    %8027 = vmatpush1.msra.mxu0 1.0
    %8028 = vmatprep.subr.mxu0 0.0
    %8029 = vmatpush1.msra.mxu0 1.0
    %8030 = vmatprep.subr.mxu0 0.0
    %8031 = vmatpush1.msra.mxu0 1.0
    %8032 = vmatprep.subr.mxu0 0.0
    %8033 = vmatpush1.msra.mxu0 1.0
    %8034 = vmatprep.subr.mxu0 0.0
    %8035 = vmatpush1.msra.mxu0 1.0
    %8036 = vmatprep.subr.mxu0 0.0
    %8037 = vmatpush1.msra.mxu0 1.0
    %8038 = vmatprep.subr.mxu0 0.0
    %8039 = vmatpush1.msra.mxu0 1.0
    %8040 = vmatprep.subr.mxu0 0.0
    %8041 = vmatpush1.msra.mxu0 1.0
    %8042 = vmatprep.mubr.f32.mxu0 %v7971
    %8043 = vmatmul.mubr.f32.gmra.mrb[0].mxu0 %v7970
    %v8044 = vpop.f32.mrb[0].mxu0
    %v8045 = vadd.f32 0.0, %v8044
    %v8046 = vpop.f32.mrb[0].mxu0
    %8047 = vdwg.mxu0
    %8048 = vmatprep.subr.mxu0 0.0
    %8049 = vmatpush1.msra.mxu0 1.0
    %8050 = vmatprep.subr.mxu0 0.0
    %8051 = vmatpush1.msra.mxu0 1.0
    %8052 = vmatprep.subr.mxu0 0.0
    %8053 = vmatpush1.msra.mxu0 1.0
    %8054 = vmatprep.subr.mxu0 0.0
    %8055 = vmatpush1.msra.mxu0 1.0
    %8056 = vmatprep.subr.mxu0 0.0
    %8057 = vmatpush1.msra.mxu0 1.0
    %8058 = vmatprep.subr.mxu0 0.0
    %8059 = vmatpush1.msra.mxu0 1.0
    %8060 = vmatprep.subr.mxu0 0.0
    %8061 = vmatpush1.msra.mxu0 1.0
    %8062 = vmatprep.subr.mxu0 0.0
    %8063 = vmatpush1.msra.mxu0 1.0
    %8064 = vmatprep.subr.mxu0 0.0
    %8065 = vmatpush1.msra.mxu0 1.0
    %8066 = vmatprep.subr.mxu0 0.0
    %8067 = vmatpush1.msra.mxu0 1.0
    %8068 = vmatprep.subr.mxu0 0.0
    %8069 = vmatpush1.msra.mxu0 1.0
    %8070 = vmatprep.subr.mxu0 0.0
    %8071 = vmatpush1.msra.mxu0 1.0
    %8072 = vmatprep.subr.mxu0 0.0
    %8073 = vmatpush1.msra.mxu0 1.0
    %8074 = vmatprep.subr.mxu0 0.0
    %8075 = vmatpush1.msra.mxu0 1.0
    %8076 = vmatprep.subr.mxu0 0.0
    %8077 = vmatpush1.msra.mxu0 1.0
    %8078 = vmatprep.subr.mxu0 0.0
    %8079 = vmatpush1.msra.mxu0 1.0
    %8080 = vmatprep.subr.mxu0 0.0
    %8081 = vmatpush1.msra.mxu0 1.0
    %8082 = vmatprep.subr.mxu0 0.0
    %8083 = vmatpush1.msra.mxu0 1.0
    %8084 = vmatprep.subr.mxu0 0.0
    %8085 = vmatpush1.msra.mxu0 1.0
    %8086 = vmatprep.subr.mxu0 0.0
    %8087 = vmatpush1.msra.mxu0 1.0
    %8088 = vmatprep.subr.mxu0 0.0
    %8089 = vmatpush1.msra.mxu0 1.0
    %8090 = vmatprep.subr.mxu0 0.0
    %8091 = vmatpush1.msra.mxu0 1.0
    %8092 = vmatprep.subr.mxu0 0.0
    %8093 = vmatpush1.msra.mxu0 1.0
    %8094 = vmatprep.subr.mxu0 0.0
    %8095 = vmatpush1.msra.mxu0 1.0
    %8096 = vmatprep.subr.mxu0 0.0
    %8097 = vmatpush1.msra.mxu0 1.0
    %8098 = vmatprep.subr.mxu0 0.0
    %8099 = vmatpush1.msra.mxu0 1.0
    %8100 = vmatprep.subr.mxu0 0.0
    %8101 = vmatpush1.msra.mxu0 1.0
    %8102 = vmatprep.subr.mxu0 0.0
    %8103 = vmatpush1.msra.mxu0 1.0
    %8104 = vmatprep.subr.mxu0 0.0
    %8105 = vmatpush1.msra.mxu0 1.0
    %8106 = vmatprep.subr.mxu0 0.0
    %8107 = vmatpush1.msra.mxu0 1.0
    %8108 = vmatprep.subr.mxu0 0.0
    %8109 = vmatpush1.msra.mxu0 1.0
    %8110 = vmatprep.subr.mxu0 0.0
    %8111 = vmatpush1.msra.mxu0 1.0
    %8112 = vmatprep.mubr.f32.mxu0 %v7973
    %8113 = vmatmul.mubr.f32.gmra.mrb[0].mxu0 %v7972
    %v8114 = vpop.f32.mrb[0].mxu0
    %v8115 = vadd.f32 %v8045, %v8114
    %v8116 = vpop.f32.mrb[0].mxu0
    %8117 = vdwg.mxu0
    %8118 = vmatprep.subr.mxu0 0.0
    %8119 = vmatpush1.msra.mxu0 1.0
    %8120 = vmatprep.subr.mxu0 0.0
    %8121 = vmatpush1.msra.mxu0 1.0
    %8122 = vmatprep.subr.mxu0 0.0
    %8123 = vmatpush1.msra.mxu0 1.0
    %8124 = vmatprep.subr.mxu0 0.0
    %8125 = vmatpush1.msra.mxu0 1.0
    %8126 = vmatprep.subr.mxu0 0.0
    %8127 = vmatpush1.msra.mxu0 1.0
    %8128 = vmatprep.subr.mxu0 0.0
    %8129 = vmatpush1.msra.mxu0 1.0
    %8130 = vmatprep.subr.mxu0 0.0
    %8131 = vmatpush1.msra.mxu0 1.0
    %8132 = vmatprep.subr.mxu0 0.0
    %8133 = vmatpush1.msra.mxu0 1.0
    %8134 = vmatprep.subr.mxu0 0.0
    %8135 = vmatpush1.msra.mxu0 1.0
    %8136 = vmatprep.subr.mxu0 0.0
    %8137 = vmatpush1.msra.mxu0 1.0
    %8138 = vmatprep.subr.mxu0 0.0
    %8139 = vmatpush1.msra.mxu0 1.0
    %8140 = vmatprep.subr.mxu0 0.0
    %8141 = vmatpush1.msra.mxu0 1.0
    %8142 = vmatprep.subr.mxu0 0.0
    %8143 = vmatpush1.msra.mxu0 1.0
    %8144 = vmatprep.subr.mxu0 0.0
    %8145 = vmatpush1.msra.mxu0 1.0
    %8146 = vmatprep.subr.mxu0 0.0
    %8147 = vmatpush1.msra.mxu0 1.0
    %8148 = vmatprep.subr.mxu0 0.0
    %8149 = vmatpush1.msra.mxu0 1.0
    %8150 = vmatprep.subr.mxu0 0.0
    %8151 = vmatpush1.msra.mxu0 1.0
    %8152 = vmatprep.subr.mxu0 0.0
    %8153 = vmatpush1.msra.mxu0 1.0
    %8154 = vmatprep.subr.mxu0 0.0
    %8155 = vmatpush1.msra.mxu0 1.0
    %8156 = vmatprep.subr.mxu0 0.0
    %8157 = vmatpush1.msra.mxu0 1.0
    %8158 = vmatprep.subr.mxu0 0.0
    %8159 = vmatpush1.msra.mxu0 1.0
    %8160 = vmatprep.subr.mxu0 0.0
    %8161 = vmatpush1.msra.mxu0 1.0
    %8162 = vmatprep.subr.mxu0 0.0
    %8163 = vmatpush1.msra.mxu0 1.0
    %8164 = vmatprep.subr.mxu0 0.0
    %8165 = vmatpush1.msra.mxu0 1.0
    %8166 = vmatprep.subr.mxu0 0.0
    %8167 = vmatpush1.msra.mxu0 1.0
    %8168 = vmatprep.subr.mxu0 0.0
    %8169 = vmatpush1.msra.mxu0 1.0
    %8170 = vmatprep.subr.mxu0 0.0
    %8171 = vmatpush1.msra.mxu0 1.0
    %8172 = vmatprep.subr.mxu0 0.0
    %8173 = vmatpush1.msra.mxu0 1.0
    %8174 = vmatprep.subr.mxu0 0.0
    %8175 = vmatpush1.msra.mxu0 1.0
    %8176 = vmatprep.subr.mxu0 0.0
    %8177 = vmatpush1.msra.mxu0 1.0
    %8178 = vmatprep.subr.mxu0 0.0
    %8179 = vmatpush1.msra.mxu0 1.0
    %8180 = vmatprep.subr.mxu0 0.0
    %8181 = vmatpush1.msra.mxu0 1.0
    %8182 = vmatprep.mubr.f32.mxu0 %v7975
    %8183 = vmatmul.mubr.f32.gmra.mrb[0].mxu0 %v7974
    %v8184 = vpop.f32.mrb[0].mxu0
    %v8185 = vadd.f32 %v8115, %v8184
    %v8186 = vpop.f32.mrb[0].mxu0
    %8187 = vdwg.mxu0
    %8188 = vmatprep.subr.mxu0 0.0
    %8189 = vmatpush1.msra.mxu0 1.0
    %8190 = vmatprep.subr.mxu0 0.0
    %8191 = vmatpush1.msra.mxu0 1.0
    %8192 = vmatprep.subr.mxu0 0.0
    %8193 = vmatpush1.msra.mxu0 1.0
    %8194 = vmatprep.subr.mxu0 0.0
    %8195 = vmatpush1.msra.mxu0 1.0
    %8196 = vmatprep.subr.mxu0 0.0
    %8197 = vmatpush1.msra.mxu0 1.0
    %8198 = vmatprep.subr.mxu0 0.0
    %8199 = vmatpush1.msra.mxu0 1.0
    %8200 = vmatprep.subr.mxu0 0.0
    %8201 = vmatpush1.msra.mxu0 1.0
    %8202 = vmatprep.subr.mxu0 0.0
    %8203 = vmatpush1.msra.mxu0 1.0
    %8204 = vmatprep.subr.mxu0 0.0
    %8205 = vmatpush1.msra.mxu0 1.0
    %8206 = vmatprep.subr.mxu0 0.0
    %8207 = vmatpush1.msra.mxu0 1.0
    %8208 = vmatprep.subr.mxu0 0.0
    %8209 = vmatpush1.msra.mxu0 1.0
    %8210 = vmatprep.subr.mxu0 0.0
    %8211 = vmatpush1.msra.mxu0 1.0
    %8212 = vmatprep.subr.mxu0 0.0
    %8213 = vmatpush1.msra.mxu0 1.0
    %8214 = vmatprep.subr.mxu0 0.0
    %8215 = vmatpush1.msra.mxu0 1.0
    %8216 = vmatprep.subr.mxu0 0.0
    %8217 = vmatpush1.msra.mxu0 1.0
    %8218 = vmatprep.subr.mxu0 0.0
    %8219 = vmatpush1.msra.mxu0 1.0
    %8220 = vmatprep.subr.mxu0 0.0
    %8221 = vmatpush1.msra.mxu0 1.0
    %8222 = vmatprep.subr.mxu0 0.0
    %8223 = vmatpush1.msra.mxu0 1.0
    %8224 = vmatprep.subr.mxu0 0.0
    %8225 = vmatpush1.msra.mxu0 1.0
    %8226 = vmatprep.subr.mxu0 0.0
    %8227 = vmatpush1.msra.mxu0 1.0
    %8228 = vmatprep.subr.mxu0 0.0
    %8229 = vmatpush1.msra.mxu0 1.0
    %8230 = vmatprep.subr.mxu0 0.0
    %8231 = vmatpush1.msra.mxu0 1.0
    %8232 = vmatprep.subr.mxu0 0.0
    %8233 = vmatpush1.msra.mxu0 1.0
    %8234 = vmatprep.subr.mxu0 0.0
    %8235 = vmatpush1.msra.mxu0 1.0
    %8236 = vmatprep.subr.mxu0 0.0
    %8237 = vmatpush1.msra.mxu0 1.0
    %8238 = vmatprep.subr.mxu0 0.0
    %8239 = vmatpush1.msra.mxu0 1.0
    %8240 = vmatprep.subr.mxu0 0.0
    %8241 = vmatpush1.msra.mxu0 1.0
    %8242 = vmatprep.subr.mxu0 0.0
    %8243 = vmatpush1.msra.mxu0 1.0
    %8244 = vmatprep.subr.mxu0 0.0
    %8245 = vmatpush1.msra.mxu0 1.0
    %8246 = vmatprep.subr.mxu0 0.0
    %8247 = vmatpush1.msra.mxu0 1.0
    %8248 = vmatprep.subr.mxu0 0.0
    %8249 = vmatpush1.msra.mxu0 1.0
    %8250 = vmatprep.subr.mxu0 0.0
    %8251 = vmatpush1.msra.mxu0 1.0
    %8252 = vmatprep.mubr.f32.mxu0 %v7977
    %8253 = vmatmul.mubr.f32.gmra.mrb[0].mxu0 %v7976
    %v8254 = vpop.f32.mrb[0].mxu0
    %v8255 = vadd.f32 %v8185, %v8254
    %v8256 = vpop.f32.mrb[0].mxu0
    %8257 = vdwg.mxu0
    %8258 = vadd.xlane.f32.xlu0 %v8255
    %v8259 = vpop.xlane.xlu0 %8258
    %v8260 = vmul.f32 %v8259, %v988
    %v8261 = vmul.f32 %v8260, 0.0009765625
    %v8262 = vadd.f32 %v8261, 1e-05
    %v8263 = vrsqrt.pop %v8262
    %v8264 = vmul.f32 %v7962, %v8263
    %v8265 = vmul.f32 %v7963, %v8263
    %v8266 = vmul.f32 %v7964, %v8263
    %v8267 = vmul.f32 %v7965, %v8263
    %v8268 = vmul.f32 %v7966, %v8263
    %v8269 = vmul.f32 %v7967, %v8263
    %v8270 = vmul.f32 %v7968, %v8263
    %v8271 = vmul.f32 %v7969, %v8263
    %v8272 = vstv %s7677
    %v8273 = vmul.f32 %v8272, %v8264
    %v8274 = vmul.f32 %v8272, %v8265
    %v8275 = vmul.f32 %v8272, %v8266
    %v8276 = vmul.f32 %v8272, %v8267
    %v8277 = vmul.f32 %v8272, %v8268
    %v8278 = vmul.f32 %v8272, %v8269
    %v8279 = vmul.f32 %v8272, %v8270
    %v8280 = vmul.f32 %v8272, %v8271
    %v8281 = vadd.f32 %v7277, %v8273
    %v8282 = vadd.f32 %v7278, %v8274
    %v8283 = vadd.f32 %v7279, %v8275
    %v8284 = vadd.f32 %v7280, %v8276
    %v8285 = vadd.f32 %v7281, %v8277
    %v8286 = vadd.f32 %v7282, %v8278
    %v8287 = vadd.f32 %v7283, %v8279
    %v8288 = vadd.f32 %v7284, %v8280
    %s8289 = sld [smem:[#allocation2 + $0x203]]
    %8290 = vmatprep.subr.mxu0 0.0
    %8291 = vmatpush1.msra.mxu0 1.0
    %8292 = vmatprep.subr.mxu0 0.0
    %8293 = vmatpush1.msra.mxu0 1.0
    %8294 = vmatprep.subr.mxu0 0.0
    %8295 = vmatpush1.msra.mxu0 1.0
    %8296 = vmatprep.subr.mxu0 0.0
    %8297 = vmatpush1.msra.mxu0 1.0
    %8298 = vmatprep.subr.mxu0 0.0
    %8299 = vmatpush1.msra.mxu0 1.0
    %8300 = vmatprep.subr.mxu0 0.0
    %8301 = vmatpush1.msra.mxu0 1.0
    %8302 = vmatprep.subr.mxu0 0.0
    %8303 = vmatpush1.msra.mxu0 1.0
    %8304 = vmatprep.subr.mxu0 0.0
    %8305 = vmatpush1.msra.mxu0 1.0
    %8306 = vmatprep.subr.mxu0 0.0
    %8307 = vmatpush1.msra.mxu0 1.0
    %8308 = vmatprep.subr.mxu0 0.0
    %8309 = vmatpush1.msra.mxu0 1.0
    %8310 = vmatprep.subr.mxu0 0.0
    %8311 = vmatpush1.msra.mxu0 1.0
    %8312 = vmatprep.subr.mxu0 0.0
    %8313 = vmatpush1.msra.mxu0 1.0
    %8314 = vmatprep.subr.mxu0 0.0
    %8315 = vmatpush1.msra.mxu0 1.0
    %8316 = vmatprep.subr.mxu0 0.0
    %8317 = vmatpush1.msra.mxu0 1.0
    %8318 = vmatprep.subr.mxu0 0.0
    %8319 = vmatpush1.msra.mxu0 1.0
    %8320 = vmatprep.subr.mxu0 0.0
    %8321 = vmatpush1.msra.mxu0 1.0
    %8322 = vmatprep.subr.mxu0 0.0
    %8323 = vmatpush1.msra.mxu0 1.0
    %8324 = vmatprep.subr.mxu0 0.0
    %8325 = vmatpush1.msra.mxu0 1.0
    %8326 = vmatprep.subr.mxu0 0.0
    %8327 = vmatpush1.msra.mxu0 1.0
    %8328 = vmatprep.subr.mxu0 0.0
    %8329 = vmatpush1.msra.mxu0 1.0
    %8330 = vmatprep.subr.mxu0 0.0
    %8331 = vmatpush1.msra.mxu0 1.0
    %8332 = vmatprep.subr.mxu0 0.0
    %8333 = vmatpush1.msra.mxu0 1.0
    %8334 = vmatprep.subr.mxu0 0.0
    %8335 = vmatpush1.msra.mxu0 1.0
    %8336 = vmatprep.subr.mxu0 0.0
    %8337 = vmatpush1.msra.mxu0 1.0
    %8338 = vmatprep.subr.mxu0 0.0
    %8339 = vmatpush1.msra.mxu0 1.0
    %8340 = vmatprep.subr.mxu0 0.0
    %8341 = vmatpush1.msra.mxu0 1.0
    %8342 = vmatprep.subr.mxu0 0.0
    %8343 = vmatpush1.msra.mxu0 1.0
    %8344 = vmatprep.subr.mxu0 0.0
    %8345 = vmatpush1.msra.mxu0 1.0
    %8346 = vmatprep.subr.mxu0 0.0
    %8347 = vmatpush1.msra.mxu0 1.0
    %8348 = vmatprep.subr.mxu0 0.0
    %8349 = vmatpush1.msra.mxu0 1.0
    %8350 = vmatprep.subr.mxu0 0.0
    %8351 = vmatpush1.msra.mxu0 1.0
    %8352 = vmatprep.subr.mxu0 0.0
    %8353 = vmatpush1.msra.mxu0 1.0
    %8354 = vmatprep.mubr.f32.mxu0 %v7606
    %8355 = vmatmul.mubr.f32.gmra.mrb[0].mxu0 %v7605
    %v8356 = vpop.f32.mrb[0].mxu0
    %v8357 = vadd.f32 0.0, %v8356
    %v8358 = vpop.f32.mrb[0].mxu0
    %8359 = vdwg.mxu0
    %8360 = vmatprep.subr.mxu0 0.0
    %8361 = vmatpush1.msra.mxu0 1.0
    %8362 = vmatprep.subr.mxu0 0.0
    %8363 = vmatpush1.msra.mxu0 1.0
    %8364 = vmatprep.subr.mxu0 0.0
    %8365 = vmatpush1.msra.mxu0 1.0
    %8366 = vmatprep.subr.mxu0 0.0
    %8367 = vmatpush1.msra.mxu0 1.0
    %8368 = vmatprep.subr.mxu0 0.0
    %8369 = vmatpush1.msra.mxu0 1.0
    %8370 = vmatprep.subr.mxu0 0.0
    %8371 = vmatpush1.msra.mxu0 1.0
    %8372 = vmatprep.subr.mxu0 0.0
    %8373 = vmatpush1.msra.mxu0 1.0
    %8374 = vmatprep.subr.mxu0 0.0
    %8375 = vmatpush1.msra.mxu0 1.0
    %8376 = vmatprep.subr.mxu0 0.0
    %8377 = vmatpush1.msra.mxu0 1.0
    %8378 = vmatprep.subr.mxu0 0.0
    %8379 = vmatpush1.msra.mxu0 1.0
    %8380 = vmatprep.subr.mxu0 0.0
    %8381 = vmatpush1.msra.mxu0 1.0
    %8382 = vmatprep.subr.mxu0 0.0
    %8383 = vmatpush1.msra.mxu0 1.0
    %8384 = vmatprep.subr.mxu0 0.0
    %8385 = vmatpush1.msra.mxu0 1.0
    %8386 = vmatprep.subr.mxu0 0.0
    %8387 = vmatpush1.msra.mxu0 1.0
    %8388 = vmatprep.subr.mxu0 0.0
    %8389 = vmatpush1.msra.mxu0 1.0
    %8390 = vmatprep.subr.mxu0 0.0
    %8391 = vmatpush1.msra.mxu0 1.0
    %8392 = vmatprep.subr.mxu0 0.0
    %8393 = vmatpush1.msra.mxu0 1.0
    %8394 = vmatprep.subr.mxu0 0.0
    %8395 = vmatpush1.msra.mxu0 1.0
    %8396 = vmatprep.subr.mxu0 0.0
    %8397 = vmatpush1.msra.mxu0 1.0
    %8398 = vmatprep.subr.mxu0 0.0
    %8399 = vmatpush1.msra.mxu0 1.0
    %8400 = vmatprep.subr.mxu0 0.0
    %8401 = vmatpush1.msra.mxu0 1.0
    %8402 = vmatprep.subr.mxu0 0.0
    %8403 = vmatpush1.msra.mxu0 1.0
    %8404 = vmatprep.subr.mxu0 0.0
    %8405 = vmatpush1.msra.mxu0 1.0
    %8406 = vmatprep.subr.mxu0 0.0
    %8407 = vmatpush1.msra.mxu0 1.0
    %8408 = vmatprep.subr.mxu0 0.0
    %8409 = vmatpush1.msra.mxu0 1.0
    %8410 = vmatprep.subr.mxu0 0.0
    %8411 = vmatpush1.msra.mxu0 1.0
    %8412 = vmatprep.subr.mxu0 0.0
    %8413 = vmatpush1.msra.mxu0 1.0
    %8414 = vmatprep.subr.mxu0 0.0
    %8415 = vmatpush1.msra.mxu0 1.0
    %8416 = vmatprep.subr.mxu0 0.0
    %8417 = vmatpush1.msra.mxu0 1.0
    %8418 = vmatprep.subr.mxu0 0.0
    %8419 = vmatpush1.msra.mxu0 1.0
    %8420 = vmatprep.subr.mxu0 0.0
    %8421 = vmatpush1.msra.mxu0 1.0
    %8422 = vmatprep.subr.mxu0 0.0
    %8423 = vmatpush1.msra.mxu0 1.0
    %8424 = vmatprep.mubr.f32.mxu0 %v7608
    %8425 = vmatmul.mubr.f32.gmra.mrb[0].mxu0 %v7607
    %v8426 = vpop.f32.mrb[0].mxu0
    %v8427 = vadd.f32 %v8357, %v8426
    %v8428 = vpop.f32.mrb[0].mxu0
    %8429 = vdwg.mxu0
    %8430 = vmatprep.subr.mxu0 0.0
    %8431 = vmatpush1.msra.mxu0 1.0
    %8432 = vmatprep.subr.mxu0 0.0
    %8433 = vmatpush1.msra.mxu0 1.0
    %8434 = vmatprep.subr.mxu0 0.0
    %8435 = vmatpush1.msra.mxu0 1.0
    %8436 = vmatprep.subr.mxu0 0.0
    %8437 = vmatpush1.msra.mxu0 1.0
    %8438 = vmatprep.subr.mxu0 0.0
    %8439 = vmatpush1.msra.mxu0 1.0
    %8440 = vmatprep.subr.mxu0 0.0
    %8441 = vmatpush1.msra.mxu0 1.0
    %8442 = vmatprep.subr.mxu0 0.0
    %8443 = vmatpush1.msra.mxu0 1.0
    %8444 = vmatprep.subr.mxu0 0.0
    %8445 = vmatpush1.msra.mxu0 1.0
    %8446 = vmatprep.subr.mxu0 0.0
    %8447 = vmatpush1.msra.mxu0 1.0
    %8448 = vmatprep.subr.mxu0 0.0
    %8449 = vmatpush1.msra.mxu0 1.0
    %8450 = vmatprep.subr.mxu0 0.0
    %8451 = vmatpush1.msra.mxu0 1.0
    %8452 = vmatprep.subr.mxu0 0.0
    %8453 = vmatpush1.msra.mxu0 1.0
    %8454 = vmatprep.subr.mxu0 0.0
    %8455 = vmatpush1.msra.mxu0 1.0
    %8456 = vmatprep.subr.mxu0 0.0
    %8457 = vmatpush1.msra.mxu0 1.0
    %8458 = vmatprep.subr.mxu0 0.0
    %8459 = vmatpush1.msra.mxu0 1.0
    %8460 = vmatprep.subr.mxu0 0.0
    %8461 = vmatpush1.msra.mxu0 1.0
    %8462 = vmatprep.subr.mxu0 0.0
    %8463 = vmatpush1.msra.mxu0 1.0
    %8464 = vmatprep.subr.mxu0 0.0
    %8465 = vmatpush1.msra.mxu0 1.0
    %8466 = vmatprep.subr.mxu0 0.0
    %8467 = vmatpush1.msra.mxu0 1.0
    %8468 = vmatprep.subr.mxu0 0.0
    %8469 = vmatpush1.msra.mxu0 1.0
    %8470 = vmatprep.subr.mxu0 0.0
    %8471 = vmatpush1.msra.mxu0 1.0
    %8472 = vmatprep.subr.mxu0 0.0
    %8473 = vmatpush1.msra.mxu0 1.0
    %8474 = vmatprep.subr.mxu0 0.0
    %8475 = vmatpush1.msra.mxu0 1.0
    %8476 = vmatprep.subr.mxu0 0.0
    %8477 = vmatpush1.msra.mxu0 1.0
    %8478 = vmatprep.subr.mxu0 0.0
    %8479 = vmatpush1.msra.mxu0 1.0
    %8480 = vmatprep.subr.mxu0 0.0
    %8481 = vmatpush1.msra.mxu0 1.0
    %8482 = vmatprep.subr.mxu0 0.0
    %8483 = vmatpush1.msra.mxu0 1.0
    %8484 = vmatprep.subr.mxu0 0.0
    %8485 = vmatpush1.msra.mxu0 1.0
    %8486 = vmatprep.subr.mxu0 0.0
    %8487 = vmatpush1.msra.mxu0 1.0
    %8488 = vmatprep.subr.mxu0 0.0
    %8489 = vmatpush1.msra.mxu0 1.0
    %8490 = vmatprep.subr.mxu0 0.0
    %8491 = vmatpush1.msra.mxu0 1.0
    %8492 = vmatprep.subr.mxu0 0.0
    %8493 = vmatpush1.msra.mxu0 1.0
    %8494 = vmatprep.mubr.f32.mxu0 %v7610
    %8495 = vmatmul.mubr.f32.gmra.mrb[0].mxu0 %v7609
    %v8496 = vpop.f32.mrb[0].mxu0
    %v8497 = vadd.f32 %v8427, %v8496
    %v8498 = vpop.f32.mrb[0].mxu0
    %8499 = vdwg.mxu0
    %8500 = vmatprep.subr.mxu0 0.0
    %8501 = vmatpush1.msra.mxu0 1.0
    %8502 = vmatprep.subr.mxu0 0.0
    %8503 = vmatpush1.msra.mxu0 1.0
    %8504 = vmatprep.subr.mxu0 0.0
    %8505 = vmatpush1.msra.mxu0 1.0
    %8506 = vmatprep.subr.mxu0 0.0
    %8507 = vmatpush1.msra.mxu0 1.0
    %8508 = vmatprep.subr.mxu0 0.0
    %8509 = vmatpush1.msra.mxu0 1.0
    %8510 = vmatprep.subr.mxu0 0.0
    %8511 = vmatpush1.msra.mxu0 1.0
    %8512 = vmatprep.subr.mxu0 0.0
    %8513 = vmatpush1.msra.mxu0 1.0
    %8514 = vmatprep.subr.mxu0 0.0
    %8515 = vmatpush1.msra.mxu0 1.0
    %8516 = vmatprep.subr.mxu0 0.0
    %8517 = vmatpush1.msra.mxu0 1.0
    %8518 = vmatprep.subr.mxu0 0.0
    %8519 = vmatpush1.msra.mxu0 1.0
    %8520 = vmatprep.subr.mxu0 0.0
    %8521 = vmatpush1.msra.mxu0 1.0
    %8522 = vmatprep.subr.mxu0 0.0
    %8523 = vmatpush1.msra.mxu0 1.0
    %8524 = vmatprep.subr.mxu0 0.0
    %8525 = vmatpush1.msra.mxu0 1.0
    %8526 = vmatprep.subr.mxu0 0.0
    %8527 = vmatpush1.msra.mxu0 1.0
    %8528 = vmatprep.subr.mxu0 0.0
    %8529 = vmatpush1.msra.mxu0 1.0
    %8530 = vmatprep.subr.mxu0 0.0
    %8531 = vmatpush1.msra.mxu0 1.0
    %8532 = vmatprep.subr.mxu0 0.0
    %8533 = vmatpush1.msra.mxu0 1.0
    %8534 = vmatprep.subr.mxu0 0.0
    %8535 = vmatpush1.msra.mxu0 1.0
    %8536 = vmatprep.subr.mxu0 0.0
    %8537 = vmatpush1.msra.mxu0 1.0
    %8538 = vmatprep.subr.mxu0 0.0
    %8539 = vmatpush1.msra.mxu0 1.0
    %8540 = vmatprep.subr.mxu0 0.0
    %8541 = vmatpush1.msra.mxu0 1.0
    %8542 = vmatprep.subr.mxu0 0.0
    %8543 = vmatpush1.msra.mxu0 1.0
    %8544 = vmatprep.subr.mxu0 0.0
    %8545 = vmatpush1.msra.mxu0 1.0
    %8546 = vmatprep.subr.mxu0 0.0
    %8547 = vmatpush1.msra.mxu0 1.0
    %8548 = vmatprep.subr.mxu0 0.0
    %8549 = vmatpush1.msra.mxu0 1.0
    %8550 = vmatprep.subr.mxu0 0.0
    %8551 = vmatpush1.msra.mxu0 1.0
    %8552 = vmatprep.subr.mxu0 0.0
    %8553 = vmatpush1.msra.mxu0 1.0
    %8554 = vmatprep.subr.mxu0 0.0
    %8555 = vmatpush1.msra.mxu0 1.0
    %8556 = vmatprep.subr.mxu0 0.0
    %8557 = vmatpush1.msra.mxu0 1.0
    %8558 = vmatprep.subr.mxu0 0.0
    %8559 = vmatpush1.msra.mxu0 1.0
    %8560 = vmatprep.subr.mxu0 0.0
    %8561 = vmatpush1.msra.mxu0 1.0
    %8562 = vmatprep.subr.mxu0 0.0
    %8563 = vmatpush1.msra.mxu0 1.0
    %8564 = vmatprep.mubr.f32.mxu0 %v7612
    %8565 = vmatmul.mubr.f32.gmra.mrb[0].mxu0 %v7611
    %v8566 = vpop.f32.mrb[0].mxu0
    %v8567 = vadd.f32 %v8497, %v8566
    %v8568 = vpop.f32.mrb[0].mxu0
    %8569 = vdwg.mxu0
    %8570 = vadd.xlane.f32.xlu0 %v8567
    %v8571 = vpop.xlane.xlu0 %8570
    %v8572 = vmul.f32 %v8571, %v988
    %v8573 = vmul.f32 %v8572, 0.0009765625
    %v8574 = vsub.f32 %v7605, %v8573
    %v8575 = vsub.f32 %v7606, %v8573
    %v8576 = vsub.f32 %v7607, %v8573
    %v8577 = vsub.f32 %v7608, %v8573
    %v8578 = vsub.f32 %v7609, %v8573
    %v8579 = vsub.f32 %v7610, %v8573
    %v8580 = vsub.f32 %v7611, %v8573
    %v8581 = vsub.f32 %v7612, %v8573
    %v8582 = vmul.f32 %v8574, %v8574
    %v8583 = vmul.f32 %v8575, %v8575
    %v8584 = vmul.f32 %v8576, %v8576
    %v8585 = vmul.f32 %v8577, %v8577
    %v8586 = vmul.f32 %v8578, %v8578
    %v8587 = vmul.f32 %v8579, %v8579
    %v8588 = vmul.f32 %v8580, %v8580
    %v8589 = vmul.f32 %v8581, %v8581
    %8590 = vmatprep.subr.mxu0 0.0
    %8591 = vmatpush1.msra.mxu0 1.0
    %8592 = vmatprep.subr.mxu0 0.0
    %8593 = vmatpush1.msra.mxu0 1.0
    %8594 = vmatprep.subr.mxu0 0.0
    %8595 = vmatpush1.msra.mxu0 1.0
    %8596 = vmatprep.subr.mxu0 0.0
    %8597 = vmatpush1.msra.mxu0 1.0
    %8598 = vmatprep.subr.mxu0 0.0
    %8599 = vmatpush1.msra.mxu0 1.0
    %8600 = vmatprep.subr.mxu0 0.0
    %8601 = vmatpush1.msra.mxu0 1.0
    %8602 = vmatprep.subr.mxu0 0.0
    %8603 = vmatpush1.msra.mxu0 1.0
    %8604 = vmatprep.subr.mxu0 0.0
    %8605 = vmatpush1.msra.mxu0 1.0
    %8606 = vmatprep.subr.mxu0 0.0
    %8607 = vmatpush1.msra.mxu0 1.0
    %8608 = vmatprep.subr.mxu0 0.0
    %8609 = vmatpush1.msra.mxu0 1.0
    %8610 = vmatprep.subr.mxu0 0.0
    %8611 = vmatpush1.msra.mxu0 1.0
    %8612 = vmatprep.subr.mxu0 0.0
    %8613 = vmatpush1.msra.mxu0 1.0
    %8614 = vmatprep.subr.mxu0 0.0
    %8615 = vmatpush1.msra.mxu0 1.0
    %8616 = vmatprep.subr.mxu0 0.0
    %8617 = vmatpush1.msra.mxu0 1.0
    %8618 = vmatprep.subr.mxu0 0.0
    %8619 = vmatpush1.msra.mxu0 1.0
    %8620 = vmatprep.subr.mxu0 0.0
    %8621 = vmatpush1.msra.mxu0 1.0
    %8622 = vmatprep.subr.mxu0 0.0
    %8623 = vmatpush1.msra.mxu0 1.0
    %8624 = vmatprep.subr.mxu0 0.0
    %8625 = vmatpush1.msra.mxu0 1.0
    %8626 = vmatprep.subr.mxu0 0.0
    %8627 = vmatpush1.msra.mxu0 1.0
    %8628 = vmatprep.subr.mxu0 0.0
    %8629 = vmatpush1.msra.mxu0 1.0
    %8630 = vmatprep.subr.mxu0 0.0
    %8631 = vmatpush1.msra.mxu0 1.0
    %8632 = vmatprep.subr.mxu0 0.0
    %8633 = vmatpush1.msra.mxu0 1.0
    %8634 = vmatprep.subr.mxu0 0.0
    %8635 = vmatpush1.msra.mxu0 1.0
    %8636 = vmatprep.subr.mxu0 0.0
    %8637 = vmatpush1.msra.mxu0 1.0
    %8638 = vmatprep.subr.mxu0 0.0
    %8639 = vmatpush1.msra.mxu0 1.0
    %8640 = vmatprep.subr.mxu0 0.0
    %8641 = vmatpush1.msra.mxu0 1.0
    %8642 = vmatprep.subr.mxu0 0.0
    %8643 = vmatpush1.msra.mxu0 1.0
    %8644 = vmatprep.subr.mxu0 0.0
    %8645 = vmatpush1.msra.mxu0 1.0
    %8646 = vmatprep.subr.mxu0 0.0
    %8647 = vmatpush1.msra.mxu0 1.0
    %8648 = vmatprep.subr.mxu0 0.0
    %8649 = vmatpush1.msra.mxu0 1.0
    %8650 = vmatprep.subr.mxu0 0.0
    %8651 = vmatpush1.msra.mxu0 1.0
    %8652 = vmatprep.subr.mxu0 0.0
    %8653 = vmatpush1.msra.mxu0 1.0
    %8654 = vmatprep.mubr.f32.mxu0 %v8583
    %8655 = vmatmul.mubr.f32.gmra.mrb[0].mxu0 %v8582
    %v8656 = vpop.f32.mrb[0].mxu0
    %v8657 = vadd.f32 0.0, %v8656
    %v8658 = vpop.f32.mrb[0].mxu0
    %8659 = vdwg.mxu0
    %8660 = vmatprep.subr.mxu0 0.0
    %8661 = vmatpush1.msra.mxu0 1.0
    %8662 = vmatprep.subr.mxu0 0.0
    %8663 = vmatpush1.msra.mxu0 1.0
    %8664 = vmatprep.subr.mxu0 0.0
    %8665 = vmatpush1.msra.mxu0 1.0
    %8666 = vmatprep.subr.mxu0 0.0
    %8667 = vmatpush1.msra.mxu0 1.0
    %8668 = vmatprep.subr.mxu0 0.0
    %8669 = vmatpush1.msra.mxu0 1.0
    %8670 = vmatprep.subr.mxu0 0.0
    %8671 = vmatpush1.msra.mxu0 1.0
    %8672 = vmatprep.subr.mxu0 0.0
    %8673 = vmatpush1.msra.mxu0 1.0
    %8674 = vmatprep.subr.mxu0 0.0
    %8675 = vmatpush1.msra.mxu0 1.0
    %8676 = vmatprep.subr.mxu0 0.0
    %8677 = vmatpush1.msra.mxu0 1.0
    %8678 = vmatprep.subr.mxu0 0.0
    %8679 = vmatpush1.msra.mxu0 1.0
    %8680 = vmatprep.subr.mxu0 0.0
    %8681 = vmatpush1.msra.mxu0 1.0
    %8682 = vmatprep.subr.mxu0 0.0
    %8683 = vmatpush1.msra.mxu0 1.0
    %8684 = vmatprep.subr.mxu0 0.0
    %8685 = vmatpush1.msra.mxu0 1.0
    %8686 = vmatprep.subr.mxu0 0.0
    %8687 = vmatpush1.msra.mxu0 1.0
    %8688 = vmatprep.subr.mxu0 0.0
    %8689 = vmatpush1.msra.mxu0 1.0
    %8690 = vmatprep.subr.mxu0 0.0
    %8691 = vmatpush1.msra.mxu0 1.0
    %8692 = vmatprep.subr.mxu0 0.0
    %8693 = vmatpush1.msra.mxu0 1.0
    %8694 = vmatprep.subr.mxu0 0.0
    %8695 = vmatpush1.msra.mxu0 1.0
    %8696 = vmatprep.subr.mxu0 0.0
    %8697 = vmatpush1.msra.mxu0 1.0
    %8698 = vmatprep.subr.mxu0 0.0
    %8699 = vmatpush1.msra.mxu0 1.0
    %8700 = vmatprep.subr.mxu0 0.0
    %8701 = vmatpush1.msra.mxu0 1.0
    %8702 = vmatprep.subr.mxu0 0.0
    %8703 = vmatpush1.msra.mxu0 1.0
    %8704 = vmatprep.subr.mxu0 0.0
    %8705 = vmatpush1.msra.mxu0 1.0
    %8706 = vmatprep.subr.mxu0 0.0
    %8707 = vmatpush1.msra.mxu0 1.0
    %8708 = vmatprep.subr.mxu0 0.0
    %8709 = vmatpush1.msra.mxu0 1.0
    %8710 = vmatprep.subr.mxu0 0.0
    %8711 = vmatpush1.msra.mxu0 1.0
    %8712 = vmatprep.subr.mxu0 0.0
    %8713 = vmatpush1.msra.mxu0 1.0
    %8714 = vmatprep.subr.mxu0 0.0
    %8715 = vmatpush1.msra.mxu0 1.0
    %8716 = vmatprep.subr.mxu0 0.0
    %8717 = vmatpush1.msra.mxu0 1.0
    %8718 = vmatprep.subr.mxu0 0.0
    %8719 = vmatpush1.msra.mxu0 1.0
    %8720 = vmatprep.subr.mxu0 0.0
    %8721 = vmatpush1.msra.mxu0 1.0
    %8722 = vmatprep.subr.mxu0 0.0
    %8723 = vmatpush1.msra.mxu0 1.0
    %8724 = vmatprep.mubr.f32.mxu0 %v8585
    %8725 = vmatmul.mubr.f32.gmra.mrb[0].mxu0 %v8584
    %v8726 = vpop.f32.mrb[0].mxu0
    %v8727 = vadd.f32 %v8657, %v8726
    %v8728 = vpop.f32.mrb[0].mxu0
    %8729 = vdwg.mxu0
    %8730 = vmatprep.subr.mxu0 0.0
    %8731 = vmatpush1.msra.mxu0 1.0
    %8732 = vmatprep.subr.mxu0 0.0
    %8733 = vmatpush1.msra.mxu0 1.0
    %8734 = vmatprep.subr.mxu0 0.0
    %8735 = vmatpush1.msra.mxu0 1.0
    %8736 = vmatprep.subr.mxu0 0.0
    %8737 = vmatpush1.msra.mxu0 1.0
    %8738 = vmatprep.subr.mxu0 0.0
    %8739 = vmatpush1.msra.mxu0 1.0
    %8740 = vmatprep.subr.mxu0 0.0
    %8741 = vmatpush1.msra.mxu0 1.0
    %8742 = vmatprep.subr.mxu0 0.0
    %8743 = vmatpush1.msra.mxu0 1.0
    %8744 = vmatprep.subr.mxu0 0.0
    %8745 = vmatpush1.msra.mxu0 1.0
    %8746 = vmatprep.subr.mxu0 0.0
    %8747 = vmatpush1.msra.mxu0 1.0
    %8748 = vmatprep.subr.mxu0 0.0
    %8749 = vmatpush1.msra.mxu0 1.0
    %8750 = vmatprep.subr.mxu0 0.0
    %8751 = vmatpush1.msra.mxu0 1.0
    %8752 = vmatprep.subr.mxu0 0.0
    %8753 = vmatpush1.msra.mxu0 1.0
    %8754 = vmatprep.subr.mxu0 0.0
    %8755 = vmatpush1.msra.mxu0 1.0
    %8756 = vmatprep.subr.mxu0 0.0
    %8757 = vmatpush1.msra.mxu0 1.0
    %8758 = vmatprep.subr.mxu0 0.0
    %8759 = vmatpush1.msra.mxu0 1.0
    %8760 = vmatprep.subr.mxu0 0.0
    %8761 = vmatpush1.msra.mxu0 1.0
    %8762 = vmatprep.subr.mxu0 0.0
    %8763 = vmatpush1.msra.mxu0 1.0
    %8764 = vmatprep.subr.mxu0 0.0
    %8765 = vmatpush1.msra.mxu0 1.0
    %8766 = vmatprep.subr.mxu0 0.0
    %8767 = vmatpush1.msra.mxu0 1.0
    %8768 = vmatprep.subr.mxu0 0.0
    %8769 = vmatpush1.msra.mxu0 1.0
    %8770 = vmatprep.subr.mxu0 0.0
    %8771 = vmatpush1.msra.mxu0 1.0
    %8772 = vmatprep.subr.mxu0 0.0
    %8773 = vmatpush1.msra.mxu0 1.0
    %8774 = vmatprep.subr.mxu0 0.0
    %8775 = vmatpush1.msra.mxu0 1.0
    %8776 = vmatprep.subr.mxu0 0.0
    %8777 = vmatpush1.msra.mxu0 1.0
    %8778 = vmatprep.subr.mxu0 0.0
    %8779 = vmatpush1.msra.mxu0 1.0
    %8780 = vmatprep.subr.mxu0 0.0
    %8781 = vmatpush1.msra.mxu0 1.0
    %8782 = vmatprep.subr.mxu0 0.0
    %8783 = vmatpush1.msra.mxu0 1.0
    %8784 = vmatprep.subr.mxu0 0.0
    %8785 = vmatpush1.msra.mxu0 1.0
    %8786 = vmatprep.subr.mxu0 0.0
    %8787 = vmatpush1.msra.mxu0 1.0
    %8788 = vmatprep.subr.mxu0 0.0
    %8789 = vmatpush1.msra.mxu0 1.0
    %8790 = vmatprep.subr.mxu0 0.0
    %8791 = vmatpush1.msra.mxu0 1.0
    %8792 = vmatprep.subr.mxu0 0.0
    %8793 = vmatpush1.msra.mxu0 1.0
    %8794 = vmatprep.mubr.f32.mxu0 %v8587
    %8795 = vmatmul.mubr.f32.gmra.mrb[0].mxu0 %v8586
    %v8796 = vpop.f32.mrb[0].mxu0
    %v8797 = vadd.f32 %v8727, %v8796
    %v8798 = vpop.f32.mrb[0].mxu0
    %8799 = vdwg.mxu0
    %8800 = vmatprep.subr.mxu0 0.0
    %8801 = vmatpush1.msra.mxu0 1.0
    %8802 = vmatprep.subr.mxu0 0.0
    %8803 = vmatpush1.msra.mxu0 1.0
    %8804 = vmatprep.subr.mxu0 0.0
    %8805 = vmatpush1.msra.mxu0 1.0
    %8806 = vmatprep.subr.mxu0 0.0
    %8807 = vmatpush1.msra.mxu0 1.0
    %8808 = vmatprep.subr.mxu0 0.0
    %8809 = vmatpush1.msra.mxu0 1.0
    %8810 = vmatprep.subr.mxu0 0.0
    %8811 = vmatpush1.msra.mxu0 1.0
    %8812 = vmatprep.subr.mxu0 0.0
    %8813 = vmatpush1.msra.mxu0 1.0
    %8814 = vmatprep.subr.mxu0 0.0
    %8815 = vmatpush1.msra.mxu0 1.0
    %8816 = vmatprep.subr.mxu0 0.0
    %8817 = vmatpush1.msra.mxu0 1.0
    %8818 = vmatprep.subr.mxu0 0.0
    %8819 = vmatpush1.msra.mxu0 1.0
    %8820 = vmatprep.subr.mxu0 0.0
    %8821 = vmatpush1.msra.mxu0 1.0
    %8822 = vmatprep.subr.mxu0 0.0
    %8823 = vmatpush1.msra.mxu0 1.0
    %8824 = vmatprep.subr.mxu0 0.0
    %8825 = vmatpush1.msra.mxu0 1.0
    %8826 = vmatprep.subr.mxu0 0.0
    %8827 = vmatpush1.msra.mxu0 1.0
    %8828 = vmatprep.subr.mxu0 0.0
    %8829 = vmatpush1.msra.mxu0 1.0
    %8830 = vmatprep.subr.mxu0 0.0
    %8831 = vmatpush1.msra.mxu0 1.0
    %8832 = vmatprep.subr.mxu0 0.0
    %8833 = vmatpush1.msra.mxu0 1.0
    %8834 = vmatprep.subr.mxu0 0.0
    %8835 = vmatpush1.msra.mxu0 1.0
    %8836 = vmatprep.subr.mxu0 0.0
    %8837 = vmatpush1.msra.mxu0 1.0
    %8838 = vmatprep.subr.mxu0 0.0
    %8839 = vmatpush1.msra.mxu0 1.0
    %8840 = vmatprep.subr.mxu0 0.0
    %8841 = vmatpush1.msra.mxu0 1.0
    %8842 = vmatprep.subr.mxu0 0.0
    %8843 = vmatpush1.msra.mxu0 1.0
    %8844 = vmatprep.subr.mxu0 0.0
    %8845 = vmatpush1.msra.mxu0 1.0
    %8846 = vmatprep.subr.mxu0 0.0
    %8847 = vmatpush1.msra.mxu0 1.0
    %8848 = vmatprep.subr.mxu0 0.0
    %8849 = vmatpush1.msra.mxu0 1.0
    %8850 = vmatprep.subr.mxu0 0.0
    %8851 = vmatpush1.msra.mxu0 1.0
    %8852 = vmatprep.subr.mxu0 0.0
    %8853 = vmatpush1.msra.mxu0 1.0
    %8854 = vmatprep.subr.mxu0 0.0
    %8855 = vmatpush1.msra.mxu0 1.0
    %8856 = vmatprep.subr.mxu0 0.0
    %8857 = vmatpush1.msra.mxu0 1.0
    %8858 = vmatprep.subr.mxu0 0.0
    %8859 = vmatpush1.msra.mxu0 1.0
    %8860 = vmatprep.subr.mxu0 0.0
    %8861 = vmatpush1.msra.mxu0 1.0
    %8862 = vmatprep.subr.mxu0 0.0
    %8863 = vmatpush1.msra.mxu0 1.0
    %8864 = vmatprep.mubr.f32.mxu0 %v8589
    %8865 = vmatmul.mubr.f32.gmra.mrb[0].mxu0 %v8588
    %v8866 = vpop.f32.mrb[0].mxu0
    %v8867 = vadd.f32 %v8797, %v8866
    %v8868 = vpop.f32.mrb[0].mxu0
    %8869 = vdwg.mxu0
    %8870 = vadd.xlane.f32.xlu0 %v8867
    %v8871 = vpop.xlane.xlu0 %8870
    %v8872 = vmul.f32 %v8871, %v988
    %v8873 = vmul.f32 %v8872, 0.0009765625
    %v8874 = vadd.f32 %v8873, 1e-05
    %v8875 = vrsqrt.pop %v8874
    %v8876 = vmul.f32 %v8574, %v8875
    %v8877 = vmul.f32 %v8575, %v8875
    %v8878 = vmul.f32 %v8576, %v8875
    %v8879 = vmul.f32 %v8577, %v8875
    %v8880 = vmul.f32 %v8578, %v8875
    %v8881 = vmul.f32 %v8579, %v8875
    %v8882 = vmul.f32 %v8580, %v8875
    %v8883 = vmul.f32 %v8581, %v8875
    %v8884 = vstv %s8289
    %v8885 = vmul.f32 %v8884, %v8876
    %v8886 = vmul.f32 %v8884, %v8877
    %v8887 = vmul.f32 %v8884, %v8878
    %v8888 = vmul.f32 %v8884, %v8879
    %v8889 = vmul.f32 %v8884, %v8880
    %v8890 = vmul.f32 %v8884, %v8881
    %v8891 = vmul.f32 %v8884, %v8882
    %v8892 = vmul.f32 %v8884, %v8883
    %v8893 = vadd.f32 %v8281, %v8885
    %v8894 = vadd.f32 %v8282, %v8886
    %v8895 = vadd.f32 %v8283, %v8887
    %v8896 = vadd.f32 %v8284, %v8888
    %v8897 = vadd.f32 %v8285, %v8889
    %v8898 = vadd.f32 %v8286, %v8890
    %v8899 = vadd.f32 %v8287, %v8891
    %v8900 = vadd.f32 %v8288, %v8892
    %s8901 = sld [smem:[#allocation2 + $0x204]]
    %s8902 = scalar_lea.vmem %s5, 32
    %v8903 = vld [vmem:[%s8902] sm:$0xff]
    %v8904 = vmax.f32 %v4732, 0.0
    %v8905 = vmax.f32 %v4733, 0.0
    %v8906 = vmax.f32 %v4734, 0.0
    %v8907 = vmax.f32 %v4735, 0.0
    %v8908 = vmax.f32 %v4736, 0.0
    %v8909 = vmax.f32 %v4737, 0.0
    %v8910 = vmax.f32 %v4738, 0.0
    %v8911 = vmax.f32 %v4739, 0.0
    %v8913 = vsel %vm418, %v8903, 0
    %8915 = vmatprep.subr.mxu0 %v8905
    %8916 = vmatpush1.msra.mxu0 %v8904
    %8917 = vmatprep.subr.mxu0 0.0
    %8918 = vmatpush1.msra.mxu0 0.0
    %8919 = vmatprep.subr.mxu0 0.0
    %8920 = vmatpush1.msra.mxu0 0.0
    %8921 = vmatprep.subr.mxu0 0.0
    %8922 = vmatpush1.msra.mxu0 0.0
    %8923 = vmatprep.subr.mxu0 0.0
    %8924 = vmatpush1.msra.mxu0 0.0
    %8925 = vmatprep.subr.mxu0 0.0
    %8926 = vmatpush1.msra.mxu0 0.0
    %8927 = vmatprep.subr.mxu0 0.0
    %8928 = vmatpush1.msra.mxu0 0.0
    %8929 = vmatprep.subr.mxu0 0.0
    %8930 = vmatpush1.msra.mxu0 0.0
    %8931 = vmatprep.subr.mxu0 0.0
    %8932 = vmatpush1.msra.mxu0 0.0
    %8933 = vmatprep.subr.mxu0 0.0
    %8934 = vmatpush1.msra.mxu0 0.0
    %8935 = vmatprep.subr.mxu0 0.0
    %8936 = vmatpush1.msra.mxu0 0.0
    %8937 = vmatprep.subr.mxu0 0.0
    %8938 = vmatpush1.msra.mxu0 0.0
    %8939 = vmatprep.subr.mxu0 0.0
    %8940 = vmatpush1.msra.mxu0 0.0
    %8941 = vmatprep.subr.mxu0 0.0
    %8942 = vmatpush1.msra.mxu0 0.0
    %8943 = vmatprep.subr.mxu0 0.0
    %8944 = vmatpush1.msra.mxu0 0.0
    %8945 = vmatprep.subr.mxu0 0.0
    %8946 = vmatpush1.msra.mxu0 0.0
    %8947 = vmatprep.subr.mxu0 0.0
    %8948 = vmatpush1.msra.mxu0 0.0
    %8949 = vmatprep.subr.mxu0 0.0
    %8950 = vmatpush1.msra.mxu0 0.0
    %8951 = vmatprep.subr.mxu0 0.0
    %8952 = vmatpush1.msra.mxu0 0.0
    %8953 = vmatprep.subr.mxu0 0.0
    %8954 = vmatpush1.msra.mxu0 0.0
    %8955 = vmatprep.subr.mxu0 0.0
    %8956 = vmatpush1.msra.mxu0 0.0
    %8957 = vmatprep.subr.mxu0 0.0
    %8958 = vmatpush1.msra.mxu0 0.0
    %8959 = vmatprep.subr.mxu0 0.0
    %8960 = vmatpush1.msra.mxu0 0.0
    %8961 = vmatprep.subr.mxu0 0.0
    %8962 = vmatpush1.msra.mxu0 0.0
    %8963 = vmatprep.subr.mxu0 0.0
    %8964 = vmatpush1.msra.mxu0 0.0
    %8965 = vmatprep.subr.mxu0 0.0
    %8966 = vmatpush1.msra.mxu0 0.0
    %8967 = vmatprep.subr.mxu0 0.0
    %8968 = vmatpush1.msra.mxu0 0.0
    %8969 = vmatprep.subr.mxu0 0.0
    %8970 = vmatpush1.msra.mxu0 0.0
    %8971 = vmatprep.subr.mxu0 0.0
    %8972 = vmatpush1.msra.mxu0 0.0
    %8973 = vmatprep.subr.mxu0 0.0
    %8974 = vmatpush1.msra.mxu0 0.0
    %8975 = vmatprep.subr.mxu0 0.0
    %8976 = vmatpush1.msra.mxu0 0.0
    %8977 = vmatprep.subr.mxu0 0.0
    %8978 = vmatpush1.msra.mxu0 0.0
    %8979 = vmatprep.mubr.f32.mxu0 0.0
    %8980 = vmatmul.mubr.f32.gmra.mrb[0].mxu0 %v8913
    %v8981 = vpop.f32.mrb[0].mxu0
    %v8982 = vadd.f32 0.0, %v8981
    %v8983 = vpop.f32.mrb[0].mxu0
    %v8984 = vadd.f32 0.0, %v8983
    %8985 = vdwg.mxu0
    %8986 = vmatprep.subr.mxu0 %v8907
    %8987 = vmatpush1.msra.mxu0 %v8906
    %8988 = vmatprep.subr.mxu0 0.0
    %8989 = vmatpush1.msra.mxu0 0.0
    %8990 = vmatprep.subr.mxu0 0.0
    %8991 = vmatpush1.msra.mxu0 0.0
    %8992 = vmatprep.subr.mxu0 0.0
    %8993 = vmatpush1.msra.mxu0 0.0
    %8994 = vmatprep.subr.mxu0 0.0
    %8995 = vmatpush1.msra.mxu0 0.0
    %8996 = vmatprep.subr.mxu0 0.0
    %8997 = vmatpush1.msra.mxu0 0.0
    %8998 = vmatprep.subr.mxu0 0.0
    %8999 = vmatpush1.msra.mxu0 0.0
    %9000 = vmatprep.subr.mxu0 0.0
    %9001 = vmatpush1.msra.mxu0 0.0
    %9002 = vmatprep.subr.mxu0 0.0
    %9003 = vmatpush1.msra.mxu0 0.0
    %9004 = vmatprep.subr.mxu0 0.0
    %9005 = vmatpush1.msra.mxu0 0.0
    %9006 = vmatprep.subr.mxu0 0.0
    %9007 = vmatpush1.msra.mxu0 0.0
    %9008 = vmatprep.subr.mxu0 0.0
    %9009 = vmatpush1.msra.mxu0 0.0
    %9010 = vmatprep.subr.mxu0 0.0
    %9011 = vmatpush1.msra.mxu0 0.0
    %9012 = vmatprep.subr.mxu0 0.0
    %9013 = vmatpush1.msra.mxu0 0.0
    %9014 = vmatprep.subr.mxu0 0.0
    %9015 = vmatpush1.msra.mxu0 0.0
    %9016 = vmatprep.subr.mxu0 0.0
    %9017 = vmatpush1.msra.mxu0 0.0
    %9018 = vmatprep.subr.mxu0 0.0
    %9019 = vmatpush1.msra.mxu0 0.0
    %9020 = vmatprep.subr.mxu0 0.0
    %9021 = vmatpush1.msra.mxu0 0.0
    %9022 = vmatprep.subr.mxu0 0.0
    %9023 = vmatpush1.msra.mxu0 0.0
    %9024 = vmatprep.subr.mxu0 0.0
    %9025 = vmatpush1.msra.mxu0 0.0
    %9026 = vmatprep.subr.mxu0 0.0
    %9027 = vmatpush1.msra.mxu0 0.0
    %9028 = vmatprep.subr.mxu0 0.0
    %9029 = vmatpush1.msra.mxu0 0.0
    %9030 = vmatprep.subr.mxu0 0.0
    %9031 = vmatpush1.msra.mxu0 0.0
    %9032 = vmatprep.subr.mxu0 0.0
    %9033 = vmatpush1.msra.mxu0 0.0
    %9034 = vmatprep.subr.mxu0 0.0
    %9035 = vmatpush1.msra.mxu0 0.0
    %9036 = vmatprep.subr.mxu0 0.0
    %9037 = vmatpush1.msra.mxu0 0.0
    %9038 = vmatprep.subr.mxu0 0.0
    %9039 = vmatpush1.msra.mxu0 0.0
    %9040 = vmatprep.subr.mxu0 0.0
    %9041 = vmatpush1.msra.mxu0 0.0
    %9042 = vmatprep.subr.mxu0 0.0
    %9043 = vmatpush1.msra.mxu0 0.0
    %9044 = vmatprep.subr.mxu0 0.0
    %9045 = vmatpush1.msra.mxu0 0.0
    %9046 = vmatprep.subr.mxu0 0.0
    %9047 = vmatpush1.msra.mxu0 0.0
    %9048 = vmatprep.subr.mxu0 0.0
    %9049 = vmatpush1.msra.mxu0 0.0
    %9050 = vmatprep.mubr.f32.mxu0 0.0
    %9051 = vmatmul.mubr.f32.gmra.mrb[0].mxu0 %v8913
    %v9052 = vpop.f32.mrb[0].mxu0
    %v9053 = vadd.f32 0.0, %v9052
    %v9054 = vpop.f32.mrb[0].mxu0
    %v9055 = vadd.f32 0.0, %v9054
    %9056 = vdwg.mxu0
    %9057 = vmatprep.subr.mxu0 %v8909
    %9058 = vmatpush1.msra.mxu0 %v8908
    %9059 = vmatprep.subr.mxu0 0.0
    %9060 = vmatpush1.msra.mxu0 0.0
    %9061 = vmatprep.subr.mxu0 0.0
    %9062 = vmatpush1.msra.mxu0 0.0
    %9063 = vmatprep.subr.mxu0 0.0
    %9064 = vmatpush1.msra.mxu0 0.0
    %9065 = vmatprep.subr.mxu0 0.0
    %9066 = vmatpush1.msra.mxu0 0.0
    %9067 = vmatprep.subr.mxu0 0.0
    %9068 = vmatpush1.msra.mxu0 0.0
    %9069 = vmatprep.subr.mxu0 0.0
    %9070 = vmatpush1.msra.mxu0 0.0
    %9071 = vmatprep.subr.mxu0 0.0
    %9072 = vmatpush1.msra.mxu0 0.0
    %9073 = vmatprep.subr.mxu0 0.0
    %9074 = vmatpush1.msra.mxu0 0.0
    %9075 = vmatprep.subr.mxu0 0.0
    %9076 = vmatpush1.msra.mxu0 0.0
    %9077 = vmatprep.subr.mxu0 0.0
    %9078 = vmatpush1.msra.mxu0 0.0
    %9079 = vmatprep.subr.mxu0 0.0
    %9080 = vmatpush1.msra.mxu0 0.0
    %9081 = vmatprep.subr.mxu0 0.0
    %9082 = vmatpush1.msra.mxu0 0.0
    %9083 = vmatprep.subr.mxu0 0.0
    %9084 = vmatpush1.msra.mxu0 0.0
    %9085 = vmatprep.subr.mxu0 0.0
    %9086 = vmatpush1.msra.mxu0 0.0
    %9087 = vmatprep.subr.mxu0 0.0
    %9088 = vmatpush1.msra.mxu0 0.0
    %9089 = vmatprep.subr.mxu0 0.0
    %9090 = vmatpush1.msra.mxu0 0.0
    %9091 = vmatprep.subr.mxu0 0.0
    %9092 = vmatpush1.msra.mxu0 0.0
    %9093 = vmatprep.subr.mxu0 0.0
    %9094 = vmatpush1.msra.mxu0 0.0
    %9095 = vmatprep.subr.mxu0 0.0
    %9096 = vmatpush1.msra.mxu0 0.0
    %9097 = vmatprep.subr.mxu0 0.0
    %9098 = vmatpush1.msra.mxu0 0.0
    %9099 = vmatprep.subr.mxu0 0.0
    %9100 = vmatpush1.msra.mxu0 0.0
    %9101 = vmatprep.subr.mxu0 0.0
    %9102 = vmatpush1.msra.mxu0 0.0
    %9103 = vmatprep.subr.mxu0 0.0
    %9104 = vmatpush1.msra.mxu0 0.0
    %9105 = vmatprep.subr.mxu0 0.0
    %9106 = vmatpush1.msra.mxu0 0.0
    %9107 = vmatprep.subr.mxu0 0.0
    %9108 = vmatpush1.msra.mxu0 0.0
    %9109 = vmatprep.subr.mxu0 0.0
    %9110 = vmatpush1.msra.mxu0 0.0
    %9111 = vmatprep.subr.mxu0 0.0
    %9112 = vmatpush1.msra.mxu0 0.0
    %9113 = vmatprep.subr.mxu0 0.0
    %9114 = vmatpush1.msra.mxu0 0.0
    %9115 = vmatprep.subr.mxu0 0.0
    %9116 = vmatpush1.msra.mxu0 0.0
    %9117 = vmatprep.subr.mxu0 0.0
    %9118 = vmatpush1.msra.mxu0 0.0
    %9119 = vmatprep.subr.mxu0 0.0
    %9120 = vmatpush1.msra.mxu0 0.0
    %9121 = vmatprep.mubr.f32.mxu0 0.0
    %9122 = vmatmul.mubr.f32.gmra.mrb[0].mxu0 %v8913
    %v9123 = vpop.f32.mrb[0].mxu0
    %v9124 = vadd.f32 0.0, %v9123
    %v9125 = vpop.f32.mrb[0].mxu0
    %v9126 = vadd.f32 0.0, %v9125
    %9127 = vdwg.mxu0
    %9128 = vmatprep.subr.mxu0 %v8911
    %9129 = vmatpush1.msra.mxu0 %v8910
    %9130 = vmatprep.subr.mxu0 0.0
    %9131 = vmatpush1.msra.mxu0 0.0
    %9132 = vmatprep.subr.mxu0 0.0
    %9133 = vmatpush1.msra.mxu0 0.0
    %9134 = vmatprep.subr.mxu0 0.0
    %9135 = vmatpush1.msra.mxu0 0.0
    %9136 = vmatprep.subr.mxu0 0.0
    %9137 = vmatpush1.msra.mxu0 0.0
    %9138 = vmatprep.subr.mxu0 0.0
    %9139 = vmatpush1.msra.mxu0 0.0
    %9140 = vmatprep.subr.mxu0 0.0
    %9141 = vmatpush1.msra.mxu0 0.0
    %9142 = vmatprep.subr.mxu0 0.0
    %9143 = vmatpush1.msra.mxu0 0.0
    %9144 = vmatprep.subr.mxu0 0.0
    %9145 = vmatpush1.msra.mxu0 0.0
    %9146 = vmatprep.subr.mxu0 0.0
    %9147 = vmatpush1.msra.mxu0 0.0
    %9148 = vmatprep.subr.mxu0 0.0
    %9149 = vmatpush1.msra.mxu0 0.0
    %9150 = vmatprep.subr.mxu0 0.0
    %9151 = vmatpush1.msra.mxu0 0.0
    %9152 = vmatprep.subr.mxu0 0.0
    %9153 = vmatpush1.msra.mxu0 0.0
    %9154 = vmatprep.subr.mxu0 0.0
    %9155 = vmatpush1.msra.mxu0 0.0
    %9156 = vmatprep.subr.mxu0 0.0
    %9157 = vmatpush1.msra.mxu0 0.0
    %9158 = vmatprep.subr.mxu0 0.0
    %9159 = vmatpush1.msra.mxu0 0.0
    %9160 = vmatprep.subr.mxu0 0.0
    %9161 = vmatpush1.msra.mxu0 0.0
    %9162 = vmatprep.subr.mxu0 0.0
    %9163 = vmatpush1.msra.mxu0 0.0
    %9164 = vmatprep.subr.mxu0 0.0
    %9165 = vmatpush1.msra.mxu0 0.0
    %9166 = vmatprep.subr.mxu0 0.0
    %9167 = vmatpush1.msra.mxu0 0.0
    %9168 = vmatprep.subr.mxu0 0.0
    %9169 = vmatpush1.msra.mxu0 0.0
    %9170 = vmatprep.subr.mxu0 0.0
    %9171 = vmatpush1.msra.mxu0 0.0
    %9172 = vmatprep.subr.mxu0 0.0
    %9173 = vmatpush1.msra.mxu0 0.0
    %9174 = vmatprep.subr.mxu0 0.0
    %9175 = vmatpush1.msra.mxu0 0.0
    %9176 = vmatprep.subr.mxu0 0.0
    %9177 = vmatpush1.msra.mxu0 0.0
    %9178 = vmatprep.subr.mxu0 0.0
    %9179 = vmatpush1.msra.mxu0 0.0
    %9180 = vmatprep.subr.mxu0 0.0
    %9181 = vmatpush1.msra.mxu0 0.0
    %9182 = vmatprep.subr.mxu0 0.0
    %9183 = vmatpush1.msra.mxu0 0.0
    %9184 = vmatprep.subr.mxu0 0.0
    %9185 = vmatpush1.msra.mxu0 0.0
    %9186 = vmatprep.subr.mxu0 0.0
    %9187 = vmatpush1.msra.mxu0 0.0
    %9188 = vmatprep.subr.mxu0 0.0
    %9189 = vmatpush1.msra.mxu0 0.0
    %9190 = vmatprep.subr.mxu0 0.0
    %9191 = vmatpush1.msra.mxu0 0.0
    %9192 = vmatprep.mubr.f32.mxu0 0.0
    %9193 = vmatmul.mubr.f32.gmra.mrb[0].mxu0 %v8913
    %v9194 = vpop.f32.mrb[0].mxu0
    %v9195 = vadd.f32 0.0, %v9194
    %v9196 = vpop.f32.mrb[0].mxu0
    %v9197 = vadd.f32 0.0, %v9196
    %9198 = vdwg.mxu0
    %9199 = vmatprep.subr.mxu0 0.0
    %9200 = vmatpush1.msra.mxu0 1.0
    %9201 = vmatprep.subr.mxu0 0.0
    %9202 = vmatpush1.msra.mxu0 1.0
    %9203 = vmatprep.subr.mxu0 0.0
    %9204 = vmatpush1.msra.mxu0 1.0
    %9205 = vmatprep.subr.mxu0 0.0
    %9206 = vmatpush1.msra.mxu0 1.0
    %9207 = vmatprep.subr.mxu0 0.0
    %9208 = vmatpush1.msra.mxu0 1.0
    %9209 = vmatprep.subr.mxu0 0.0
    %9210 = vmatpush1.msra.mxu0 1.0
    %9211 = vmatprep.subr.mxu0 0.0
    %9212 = vmatpush1.msra.mxu0 1.0
    %9213 = vmatprep.subr.mxu0 0.0
    %9214 = vmatpush1.msra.mxu0 1.0
    %9215 = vmatprep.subr.mxu0 0.0
    %9216 = vmatpush1.msra.mxu0 1.0
    %9217 = vmatprep.subr.mxu0 0.0
    %9218 = vmatpush1.msra.mxu0 1.0
    %9219 = vmatprep.subr.mxu0 0.0
    %9220 = vmatpush1.msra.mxu0 1.0
    %9221 = vmatprep.subr.mxu0 0.0
    %9222 = vmatpush1.msra.mxu0 1.0
    %9223 = vmatprep.subr.mxu0 0.0
    %9224 = vmatpush1.msra.mxu0 1.0
    %9225 = vmatprep.subr.mxu0 0.0
    %9226 = vmatpush1.msra.mxu0 1.0
    %9227 = vmatprep.subr.mxu0 0.0
    %9228 = vmatpush1.msra.mxu0 1.0
    %9229 = vmatprep.subr.mxu0 0.0
    %9230 = vmatpush1.msra.mxu0 1.0
    %9231 = vmatprep.subr.mxu0 0.0
    %9232 = vmatpush1.msra.mxu0 1.0
    %9233 = vmatprep.subr.mxu0 0.0
    %9234 = vmatpush1.msra.mxu0 1.0
    %9235 = vmatprep.subr.mxu0 0.0
    %9236 = vmatpush1.msra.mxu0 1.0
    %9237 = vmatprep.subr.mxu0 0.0
    %9238 = vmatpush1.msra.mxu0 1.0
    %9239 = vmatprep.subr.mxu0 0.0
    %9240 = vmatpush1.msra.mxu0 1.0
    %9241 = vmatprep.subr.mxu0 0.0
    %9242 = vmatpush1.msra.mxu0 1.0
    %9243 = vmatprep.subr.mxu0 0.0
    %9244 = vmatpush1.msra.mxu0 1.0
    %9245 = vmatprep.subr.mxu0 0.0
    %9246 = vmatpush1.msra.mxu0 1.0
    %9247 = vmatprep.subr.mxu0 0.0
    %9248 = vmatpush1.msra.mxu0 1.0
    %9249 = vmatprep.subr.mxu0 0.0
    %9250 = vmatpush1.msra.mxu0 1.0
    %9251 = vmatprep.subr.mxu0 0.0
    %9252 = vmatpush1.msra.mxu0 1.0
    %9253 = vmatprep.subr.mxu0 0.0
    %9254 = vmatpush1.msra.mxu0 1.0
    %9255 = vmatprep.subr.mxu0 0.0
    %9256 = vmatpush1.msra.mxu0 1.0
    %9257 = vmatprep.subr.mxu0 0.0
    %9258 = vmatpush1.msra.mxu0 1.0
    %9259 = vmatprep.subr.mxu0 0.0
    %9260 = vmatpush1.msra.mxu0 1.0
    %9261 = vmatprep.subr.mxu0 0.0
    %9262 = vmatpush1.msra.mxu0 1.0
    %9263 = vmatprep.mubr.f32.mxu0 %v8984
    %9264 = vmatmul.mubr.f32.gmra.mrb[0].mxu0 %v8982
    %v9265 = vpop.f32.mrb[0].mxu0
    %v9266 = vadd.f32 0.0, %v9265
    %v9267 = vpop.f32.mrb[0].mxu0
    %9268 = vdwg.mxu0
    %9269 = vmatprep.subr.mxu0 0.0
    %9270 = vmatpush1.msra.mxu0 1.0
    %9271 = vmatprep.subr.mxu0 0.0
    %9272 = vmatpush1.msra.mxu0 1.0
    %9273 = vmatprep.subr.mxu0 0.0
    %9274 = vmatpush1.msra.mxu0 1.0
    %9275 = vmatprep.subr.mxu0 0.0
    %9276 = vmatpush1.msra.mxu0 1.0
    %9277 = vmatprep.subr.mxu0 0.0
    %9278 = vmatpush1.msra.mxu0 1.0
    %9279 = vmatprep.subr.mxu0 0.0
    %9280 = vmatpush1.msra.mxu0 1.0
    %9281 = vmatprep.subr.mxu0 0.0
    %9282 = vmatpush1.msra.mxu0 1.0
    %9283 = vmatprep.subr.mxu0 0.0
    %9284 = vmatpush1.msra.mxu0 1.0
    %9285 = vmatprep.subr.mxu0 0.0
    %9286 = vmatpush1.msra.mxu0 1.0
    %9287 = vmatprep.subr.mxu0 0.0
    %9288 = vmatpush1.msra.mxu0 1.0
    %9289 = vmatprep.subr.mxu0 0.0
    %9290 = vmatpush1.msra.mxu0 1.0
    %9291 = vmatprep.subr.mxu0 0.0
    %9292 = vmatpush1.msra.mxu0 1.0
    %9293 = vmatprep.subr.mxu0 0.0
    %9294 = vmatpush1.msra.mxu0 1.0
    %9295 = vmatprep.subr.mxu0 0.0
    %9296 = vmatpush1.msra.mxu0 1.0
    %9297 = vmatprep.subr.mxu0 0.0
    %9298 = vmatpush1.msra.mxu0 1.0
    %9299 = vmatprep.subr.mxu0 0.0
    %9300 = vmatpush1.msra.mxu0 1.0
    %9301 = vmatprep.subr.mxu0 0.0
    %9302 = vmatpush1.msra.mxu0 1.0
    %9303 = vmatprep.subr.mxu0 0.0
    %9304 = vmatpush1.msra.mxu0 1.0
    %9305 = vmatprep.subr.mxu0 0.0
    %9306 = vmatpush1.msra.mxu0 1.0
    %9307 = vmatprep.subr.mxu0 0.0
    %9308 = vmatpush1.msra.mxu0 1.0
    %9309 = vmatprep.subr.mxu0 0.0
    %9310 = vmatpush1.msra.mxu0 1.0
    %9311 = vmatprep.subr.mxu0 0.0
    %9312 = vmatpush1.msra.mxu0 1.0
    %9313 = vmatprep.subr.mxu0 0.0
    %9314 = vmatpush1.msra.mxu0 1.0
    %9315 = vmatprep.subr.mxu0 0.0
    %9316 = vmatpush1.msra.mxu0 1.0
    %9317 = vmatprep.subr.mxu0 0.0
    %9318 = vmatpush1.msra.mxu0 1.0
    %9319 = vmatprep.subr.mxu0 0.0
    %9320 = vmatpush1.msra.mxu0 1.0
    %9321 = vmatprep.subr.mxu0 0.0
    %9322 = vmatpush1.msra.mxu0 1.0
    %9323 = vmatprep.subr.mxu0 0.0
    %9324 = vmatpush1.msra.mxu0 1.0
    %9325 = vmatprep.subr.mxu0 0.0
    %9326 = vmatpush1.msra.mxu0 1.0
    %9327 = vmatprep.subr.mxu0 0.0
    %9328 = vmatpush1.msra.mxu0 1.0
    %9329 = vmatprep.subr.mxu0 0.0
    %9330 = vmatpush1.msra.mxu0 1.0
    %9331 = vmatprep.subr.mxu0 0.0
    %9332 = vmatpush1.msra.mxu0 1.0
    %9333 = vmatprep.mubr.f32.mxu0 %v9055
    %9334 = vmatmul.mubr.f32.gmra.mrb[0].mxu0 %v9053
    %v9335 = vpop.f32.mrb[0].mxu0
    %v9336 = vadd.f32 %v9266, %v9335
    %v9337 = vpop.f32.mrb[0].mxu0
    %9338 = vdwg.mxu0
    %9339 = vmatprep.subr.mxu0 0.0
    %9340 = vmatpush1.msra.mxu0 1.0
    %9341 = vmatprep.subr.mxu0 0.0
    %9342 = vmatpush1.msra.mxu0 1.0
    %9343 = vmatprep.subr.mxu0 0.0
    %9344 = vmatpush1.msra.mxu0 1.0
    %9345 = vmatprep.subr.mxu0 0.0
    %9346 = vmatpush1.msra.mxu0 1.0
    %9347 = vmatprep.subr.mxu0 0.0
    %9348 = vmatpush1.msra.mxu0 1.0
    %9349 = vmatprep.subr.mxu0 0.0
    %9350 = vmatpush1.msra.mxu0 1.0
    %9351 = vmatprep.subr.mxu0 0.0
    %9352 = vmatpush1.msra.mxu0 1.0
    %9353 = vmatprep.subr.mxu0 0.0
    %9354 = vmatpush1.msra.mxu0 1.0
    %9355 = vmatprep.subr.mxu0 0.0
    %9356 = vmatpush1.msra.mxu0 1.0
    %9357 = vmatprep.subr.mxu0 0.0
    %9358 = vmatpush1.msra.mxu0 1.0
    %9359 = vmatprep.subr.mxu0 0.0
    %9360 = vmatpush1.msra.mxu0 1.0
    %9361 = vmatprep.subr.mxu0 0.0
    %9362 = vmatpush1.msra.mxu0 1.0
    %9363 = vmatprep.subr.mxu0 0.0
    %9364 = vmatpush1.msra.mxu0 1.0
    %9365 = vmatprep.subr.mxu0 0.0
    %9366 = vmatpush1.msra.mxu0 1.0
    %9367 = vmatprep.subr.mxu0 0.0
    %9368 = vmatpush1.msra.mxu0 1.0
    %9369 = vmatprep.subr.mxu0 0.0
    %9370 = vmatpush1.msra.mxu0 1.0
    %9371 = vmatprep.subr.mxu0 0.0
    %9372 = vmatpush1.msra.mxu0 1.0
    %9373 = vmatprep.subr.mxu0 0.0
    %9374 = vmatpush1.msra.mxu0 1.0
    %9375 = vmatprep.subr.mxu0 0.0
    %9376 = vmatpush1.msra.mxu0 1.0
    %9377 = vmatprep.subr.mxu0 0.0
    %9378 = vmatpush1.msra.mxu0 1.0
    %9379 = vmatprep.subr.mxu0 0.0
    %9380 = vmatpush1.msra.mxu0 1.0
    %9381 = vmatprep.subr.mxu0 0.0
    %9382 = vmatpush1.msra.mxu0 1.0
    %9383 = vmatprep.subr.mxu0 0.0
    %9384 = vmatpush1.msra.mxu0 1.0
    %9385 = vmatprep.subr.mxu0 0.0
    %9386 = vmatpush1.msra.mxu0 1.0
    %9387 = vmatprep.subr.mxu0 0.0
    %9388 = vmatpush1.msra.mxu0 1.0
    %9389 = vmatprep.subr.mxu0 0.0
    %9390 = vmatpush1.msra.mxu0 1.0
    %9391 = vmatprep.subr.mxu0 0.0
    %9392 = vmatpush1.msra.mxu0 1.0
    %9393 = vmatprep.subr.mxu0 0.0
    %9394 = vmatpush1.msra.mxu0 1.0
    %9395 = vmatprep.subr.mxu0 0.0
    %9396 = vmatpush1.msra.mxu0 1.0
    %9397 = vmatprep.subr.mxu0 0.0
    %9398 = vmatpush1.msra.mxu0 1.0
    %9399 = vmatprep.subr.mxu0 0.0
    %9400 = vmatpush1.msra.mxu0 1.0
    %9401 = vmatprep.subr.mxu0 0.0
    %9402 = vmatpush1.msra.mxu0 1.0
    %9403 = vmatprep.mubr.f32.mxu0 %v9126
    %9404 = vmatmul.mubr.f32.gmra.mrb[0].mxu0 %v9124
    %v9405 = vpop.f32.mrb[0].mxu0
    %v9406 = vadd.f32 %v9336, %v9405
    %v9407 = vpop.f32.mrb[0].mxu0
    %9408 = vdwg.mxu0
    %9409 = vmatprep.subr.mxu0 0.0
    %9410 = vmatpush1.msra.mxu0 1.0
    %9411 = vmatprep.subr.mxu0 0.0
    %9412 = vmatpush1.msra.mxu0 1.0
    %9413 = vmatprep.subr.mxu0 0.0
    %9414 = vmatpush1.msra.mxu0 1.0
    %9415 = vmatprep.subr.mxu0 0.0
    %9416 = vmatpush1.msra.mxu0 1.0
    %9417 = vmatprep.subr.mxu0 0.0
    %9418 = vmatpush1.msra.mxu0 1.0
    %9419 = vmatprep.subr.mxu0 0.0
    %9420 = vmatpush1.msra.mxu0 1.0
    %9421 = vmatprep.subr.mxu0 0.0
    %9422 = vmatpush1.msra.mxu0 1.0
    %9423 = vmatprep.subr.mxu0 0.0
    %9424 = vmatpush1.msra.mxu0 1.0
    %9425 = vmatprep.subr.mxu0 0.0
    %9426 = vmatpush1.msra.mxu0 1.0
    %9427 = vmatprep.subr.mxu0 0.0
    %9428 = vmatpush1.msra.mxu0 1.0
    %9429 = vmatprep.subr.mxu0 0.0
    %9430 = vmatpush1.msra.mxu0 1.0
    %9431 = vmatprep.subr.mxu0 0.0
    %9432 = vmatpush1.msra.mxu0 1.0
    %9433 = vmatprep.subr.mxu0 0.0
    %9434 = vmatpush1.msra.mxu0 1.0
    %9435 = vmatprep.subr.mxu0 0.0
    %9436 = vmatpush1.msra.mxu0 1.0
    %9437 = vmatprep.subr.mxu0 0.0
    %9438 = vmatpush1.msra.mxu0 1.0
    %9439 = vmatprep.subr.mxu0 0.0
    %9440 = vmatpush1.msra.mxu0 1.0
    %9441 = vmatprep.subr.mxu0 0.0
    %9442 = vmatpush1.msra.mxu0 1.0
    %9443 = vmatprep.subr.mxu0 0.0
    %9444 = vmatpush1.msra.mxu0 1.0
    %9445 = vmatprep.subr.mxu0 0.0
    %9446 = vmatpush1.msra.mxu0 1.0
    %9447 = vmatprep.subr.mxu0 0.0
    %9448 = vmatpush1.msra.mxu0 1.0
    %9449 = vmatprep.subr.mxu0 0.0
    %9450 = vmatpush1.msra.mxu0 1.0
    %9451 = vmatprep.subr.mxu0 0.0
    %9452 = vmatpush1.msra.mxu0 1.0
    %9453 = vmatprep.subr.mxu0 0.0
    %9454 = vmatpush1.msra.mxu0 1.0
    %9455 = vmatprep.subr.mxu0 0.0
    %9456 = vmatpush1.msra.mxu0 1.0
    %9457 = vmatprep.subr.mxu0 0.0
    %9458 = vmatpush1.msra.mxu0 1.0
    %9459 = vmatprep.subr.mxu0 0.0
    %9460 = vmatpush1.msra.mxu0 1.0
    %9461 = vmatprep.subr.mxu0 0.0
    %9462 = vmatpush1.msra.mxu0 1.0
    %9463 = vmatprep.subr.mxu0 0.0
    %9464 = vmatpush1.msra.mxu0 1.0
    %9465 = vmatprep.subr.mxu0 0.0
    %9466 = vmatpush1.msra.mxu0 1.0
    %9467 = vmatprep.subr.mxu0 0.0
    %9468 = vmatpush1.msra.mxu0 1.0
    %9469 = vmatprep.subr.mxu0 0.0
    %9470 = vmatpush1.msra.mxu0 1.0
    %9471 = vmatprep.subr.mxu0 0.0
    %9472 = vmatpush1.msra.mxu0 1.0
    %9473 = vmatprep.mubr.f32.mxu0 %v9197
    %9474 = vmatmul.mubr.f32.gmra.mrb[0].mxu0 %v9195
    %v9475 = vpop.f32.mrb[0].mxu0
    %v9476 = vadd.f32 %v9406, %v9475
    %v9477 = vpop.f32.mrb[0].mxu0
    %9478 = vdwg.mxu0
    %9479 = vadd.xlane.f32.xlu0 %v9476
    %v9480 = vpop.xlane.xlu0 %9479
    %v9481 = vmul.f32 %v9480, %v988
    %v9482 = vmul.f32 %v9481, 0.0009765625
    %v9483 = vsub.f32 %v8982, %v9482
    %v9484 = vsub.f32 %v8984, %v9482
    %v9485 = vsub.f32 %v9053, %v9482
    %v9486 = vsub.f32 %v9055, %v9482
    %v9487 = vsub.f32 %v9124, %v9482
    %v9488 = vsub.f32 %v9126, %v9482
    %v9489 = vsub.f32 %v9195, %v9482
    %v9490 = vsub.f32 %v9197, %v9482
    %v9491 = vmul.f32 %v9483, %v9483
    %v9492 = vmul.f32 %v9484, %v9484
    %v9493 = vmul.f32 %v9485, %v9485
    %v9494 = vmul.f32 %v9486, %v9486
    %v9495 = vmul.f32 %v9487, %v9487
    %v9496 = vmul.f32 %v9488, %v9488
    %v9497 = vmul.f32 %v9489, %v9489
    %v9498 = vmul.f32 %v9490, %v9490
    %9499 = vmatprep.subr.mxu0 0.0
    %9500 = vmatpush1.msra.mxu0 1.0
    %9501 = vmatprep.subr.mxu0 0.0
    %9502 = vmatpush1.msra.mxu0 1.0
    %9503 = vmatprep.subr.mxu0 0.0
    %9504 = vmatpush1.msra.mxu0 1.0
    %9505 = vmatprep.subr.mxu0 0.0
    %9506 = vmatpush1.msra.mxu0 1.0
    %9507 = vmatprep.subr.mxu0 0.0
    %9508 = vmatpush1.msra.mxu0 1.0
    %9509 = vmatprep.subr.mxu0 0.0
    %9510 = vmatpush1.msra.mxu0 1.0
    %9511 = vmatprep.subr.mxu0 0.0
    %9512 = vmatpush1.msra.mxu0 1.0
    %9513 = vmatprep.subr.mxu0 0.0
    %9514 = vmatpush1.msra.mxu0 1.0
    %9515 = vmatprep.subr.mxu0 0.0
    %9516 = vmatpush1.msra.mxu0 1.0
    %9517 = vmatprep.subr.mxu0 0.0
    %9518 = vmatpush1.msra.mxu0 1.0
    %9519 = vmatprep.subr.mxu0 0.0
    %9520 = vmatpush1.msra.mxu0 1.0
    %9521 = vmatprep.subr.mxu0 0.0
    %9522 = vmatpush1.msra.mxu0 1.0
    %9523 = vmatprep.subr.mxu0 0.0
    %9524 = vmatpush1.msra.mxu0 1.0
    %9525 = vmatprep.subr.mxu0 0.0
    %9526 = vmatpush1.msra.mxu0 1.0
    %9527 = vmatprep.subr.mxu0 0.0
    %9528 = vmatpush1.msra.mxu0 1.0
    %9529 = vmatprep.subr.mxu0 0.0
    %9530 = vmatpush1.msra.mxu0 1.0
    %9531 = vmatprep.subr.mxu0 0.0
    %9532 = vmatpush1.msra.mxu0 1.0
    %9533 = vmatprep.subr.mxu0 0.0
    %9534 = vmatpush1.msra.mxu0 1.0
    %9535 = vmatprep.subr.mxu0 0.0
    %9536 = vmatpush1.msra.mxu0 1.0
    %9537 = vmatprep.subr.mxu0 0.0
    %9538 = vmatpush1.msra.mxu0 1.0
    %9539 = vmatprep.subr.mxu0 0.0
    %9540 = vmatpush1.msra.mxu0 1.0
    %9541 = vmatprep.subr.mxu0 0.0
    %9542 = vmatpush1.msra.mxu0 1.0
    %9543 = vmatprep.subr.mxu0 0.0
    %9544 = vmatpush1.msra.mxu0 1.0
    %9545 = vmatprep.subr.mxu0 0.0
    %9546 = vmatpush1.msra.mxu0 1.0
    %9547 = vmatprep.subr.mxu0 0.0
    %9548 = vmatpush1.msra.mxu0 1.0
    %9549 = vmatprep.subr.mxu0 0.0
    %9550 = vmatpush1.msra.mxu0 1.0
    %9551 = vmatprep.subr.mxu0 0.0
    %9552 = vmatpush1.msra.mxu0 1.0
    %9553 = vmatprep.subr.mxu0 0.0
    %9554 = vmatpush1.msra.mxu0 1.0
    %9555 = vmatprep.subr.mxu0 0.0
    %9556 = vmatpush1.msra.mxu0 1.0
    %9557 = vmatprep.subr.mxu0 0.0
    %9558 = vmatpush1.msra.mxu0 1.0
    %9559 = vmatprep.subr.mxu0 0.0
    %9560 = vmatpush1.msra.mxu0 1.0
    %9561 = vmatprep.subr.mxu0 0.0
    %9562 = vmatpush1.msra.mxu0 1.0
    %9563 = vmatprep.mubr.f32.mxu0 %v9492
    %9564 = vmatmul.mubr.f32.gmra.mrb[0].mxu0 %v9491
    %v9565 = vpop.f32.mrb[0].mxu0
    %v9566 = vadd.f32 0.0, %v9565
    %v9567 = vpop.f32.mrb[0].mxu0
    %9568 = vdwg.mxu0
    %9569 = vmatprep.subr.mxu0 0.0
    %9570 = vmatpush1.msra.mxu0 1.0
    %9571 = vmatprep.subr.mxu0 0.0
    %9572 = vmatpush1.msra.mxu0 1.0
    %9573 = vmatprep.subr.mxu0 0.0
    %9574 = vmatpush1.msra.mxu0 1.0
    %9575 = vmatprep.subr.mxu0 0.0
    %9576 = vmatpush1.msra.mxu0 1.0
    %9577 = vmatprep.subr.mxu0 0.0
    %9578 = vmatpush1.msra.mxu0 1.0
    %9579 = vmatprep.subr.mxu0 0.0
    %9580 = vmatpush1.msra.mxu0 1.0
    %9581 = vmatprep.subr.mxu0 0.0
    %9582 = vmatpush1.msra.mxu0 1.0
    %9583 = vmatprep.subr.mxu0 0.0
    %9584 = vmatpush1.msra.mxu0 1.0
    %9585 = vmatprep.subr.mxu0 0.0
    %9586 = vmatpush1.msra.mxu0 1.0
    %9587 = vmatprep.subr.mxu0 0.0
    %9588 = vmatpush1.msra.mxu0 1.0
    %9589 = vmatprep.subr.mxu0 0.0
    %9590 = vmatpush1.msra.mxu0 1.0
    %9591 = vmatprep.subr.mxu0 0.0
    %9592 = vmatpush1.msra.mxu0 1.0
    %9593 = vmatprep.subr.mxu0 0.0
    %9594 = vmatpush1.msra.mxu0 1.0
    %9595 = vmatprep.subr.mxu0 0.0
    %9596 = vmatpush1.msra.mxu0 1.0
    %9597 = vmatprep.subr.mxu0 0.0
    %9598 = vmatpush1.msra.mxu0 1.0
    %9599 = vmatprep.subr.mxu0 0.0
    %9600 = vmatpush1.msra.mxu0 1.0
    %9601 = vmatprep.subr.mxu0 0.0
    %9602 = vmatpush1.msra.mxu0 1.0
    %9603 = vmatprep.subr.mxu0 0.0
    %9604 = vmatpush1.msra.mxu0 1.0
    %9605 = vmatprep.subr.mxu0 0.0
    %9606 = vmatpush1.msra.mxu0 1.0
    %9607 = vmatprep.subr.mxu0 0.0
    %9608 = vmatpush1.msra.mxu0 1.0
    %9609 = vmatprep.subr.mxu0 0.0
    %9610 = vmatpush1.msra.mxu0 1.0
    %9611 = vmatprep.subr.mxu0 0.0
    %9612 = vmatpush1.msra.mxu0 1.0
    %9613 = vmatprep.subr.mxu0 0.0
    %9614 = vmatpush1.msra.mxu0 1.0
    %9615 = vmatprep.subr.mxu0 0.0
    %9616 = vmatpush1.msra.mxu0 1.0
    %9617 = vmatprep.subr.mxu0 0.0
    %9618 = vmatpush1.msra.mxu0 1.0
    %9619 = vmatprep.subr.mxu0 0.0
    %9620 = vmatpush1.msra.mxu0 1.0
    %9621 = vmatprep.subr.mxu0 0.0
    %9622 = vmatpush1.msra.mxu0 1.0
    %9623 = vmatprep.subr.mxu0 0.0
    %9624 = vmatpush1.msra.mxu0 1.0
    %9625 = vmatprep.subr.mxu0 0.0
    %9626 = vmatpush1.msra.mxu0 1.0
    %9627 = vmatprep.subr.mxu0 0.0
    %9628 = vmatpush1.msra.mxu0 1.0
    %9629 = vmatprep.subr.mxu0 0.0
    %9630 = vmatpush1.msra.mxu0 1.0
    %9631 = vmatprep.subr.mxu0 0.0
    %9632 = vmatpush1.msra.mxu0 1.0
    %9633 = vmatprep.mubr.f32.mxu0 %v9494
    %9634 = vmatmul.mubr.f32.gmra.mrb[0].mxu0 %v9493
    %v9635 = vpop.f32.mrb[0].mxu0
    %v9636 = vadd.f32 %v9566, %v9635
    %v9637 = vpop.f32.mrb[0].mxu0
    %9638 = vdwg.mxu0
    %9639 = vmatprep.subr.mxu0 0.0
    %9640 = vmatpush1.msra.mxu0 1.0
    %9641 = vmatprep.subr.mxu0 0.0
    %9642 = vmatpush1.msra.mxu0 1.0
    %9643 = vmatprep.subr.mxu0 0.0
    %9644 = vmatpush1.msra.mxu0 1.0
    %9645 = vmatprep.subr.mxu0 0.0
    %9646 = vmatpush1.msra.mxu0 1.0
    %9647 = vmatprep.subr.mxu0 0.0
    %9648 = vmatpush1.msra.mxu0 1.0
    %9649 = vmatprep.subr.mxu0 0.0
    %9650 = vmatpush1.msra.mxu0 1.0
    %9651 = vmatprep.subr.mxu0 0.0
    %9652 = vmatpush1.msra.mxu0 1.0
    %9653 = vmatprep.subr.mxu0 0.0
    %9654 = vmatpush1.msra.mxu0 1.0
    %9655 = vmatprep.subr.mxu0 0.0
    %9656 = vmatpush1.msra.mxu0 1.0
    %9657 = vmatprep.subr.mxu0 0.0
    %9658 = vmatpush1.msra.mxu0 1.0
    %9659 = vmatprep.subr.mxu0 0.0
    %9660 = vmatpush1.msra.mxu0 1.0
    %9661 = vmatprep.subr.mxu0 0.0
    %9662 = vmatpush1.msra.mxu0 1.0
    %9663 = vmatprep.subr.mxu0 0.0
    %9664 = vmatpush1.msra.mxu0 1.0
    %9665 = vmatprep.subr.mxu0 0.0
    %9666 = vmatpush1.msra.mxu0 1.0
    %9667 = vmatprep.subr.mxu0 0.0
    %9668 = vmatpush1.msra.mxu0 1.0
    %9669 = vmatprep.subr.mxu0 0.0
    %9670 = vmatpush1.msra.mxu0 1.0
    %9671 = vmatprep.subr.mxu0 0.0
    %9672 = vmatpush1.msra.mxu0 1.0
    %9673 = vmatprep.subr.mxu0 0.0
    %9674 = vmatpush1.msra.mxu0 1.0
    %9675 = vmatprep.subr.mxu0 0.0
    %9676 = vmatpush1.msra.mxu0 1.0
    %9677 = vmatprep.subr.mxu0 0.0
    %9678 = vmatpush1.msra.mxu0 1.0
    %9679 = vmatprep.subr.mxu0 0.0
    %9680 = vmatpush1.msra.mxu0 1.0
    %9681 = vmatprep.subr.mxu0 0.0
    %9682 = vmatpush1.msra.mxu0 1.0
    %9683 = vmatprep.subr.mxu0 0.0
    %9684 = vmatpush1.msra.mxu0 1.0
    %9685 = vmatprep.subr.mxu0 0.0
    %9686 = vmatpush1.msra.mxu0 1.0
    %9687 = vmatprep.subr.mxu0 0.0
    %9688 = vmatpush1.msra.mxu0 1.0
    %9689 = vmatprep.subr.mxu0 0.0
    %9690 = vmatpush1.msra.mxu0 1.0
    %9691 = vmatprep.subr.mxu0 0.0
    %9692 = vmatpush1.msra.mxu0 1.0
    %9693 = vmatprep.subr.mxu0 0.0
    %9694 = vmatpush1.msra.mxu0 1.0
    %9695 = vmatprep.subr.mxu0 0.0
    %9696 = vmatpush1.msra.mxu0 1.0
    %9697 = vmatprep.subr.mxu0 0.0
    %9698 = vmatpush1.msra.mxu0 1.0
    %9699 = vmatprep.subr.mxu0 0.0
    %9700 = vmatpush1.msra.mxu0 1.0
    %9701 = vmatprep.subr.mxu0 0.0
    %9702 = vmatpush1.msra.mxu0 1.0
    %9703 = vmatprep.mubr.f32.mxu0 %v9496
    %9704 = vmatmul.mubr.f32.gmra.mrb[0].mxu0 %v9495
    %v9705 = vpop.f32.mrb[0].mxu0
    %v9706 = vadd.f32 %v9636, %v9705
    %v9707 = vpop.f32.mrb[0].mxu0
    %9708 = vdwg.mxu0
    %9709 = vmatprep.subr.mxu0 0.0
    %9710 = vmatpush1.msra.mxu0 1.0
    %9711 = vmatprep.subr.mxu0 0.0
    %9712 = vmatpush1.msra.mxu0 1.0
    %9713 = vmatprep.subr.mxu0 0.0
    %9714 = vmatpush1.msra.mxu0 1.0
    %9715 = vmatprep.subr.mxu0 0.0
    %9716 = vmatpush1.msra.mxu0 1.0
    %9717 = vmatprep.subr.mxu0 0.0
    %9718 = vmatpush1.msra.mxu0 1.0
    %9719 = vmatprep.subr.mxu0 0.0
    %9720 = vmatpush1.msra.mxu0 1.0
    %9721 = vmatprep.subr.mxu0 0.0
    %9722 = vmatpush1.msra.mxu0 1.0
    %9723 = vmatprep.subr.mxu0 0.0
    %9724 = vmatpush1.msra.mxu0 1.0
    %9725 = vmatprep.subr.mxu0 0.0
    %9726 = vmatpush1.msra.mxu0 1.0
    %9727 = vmatprep.subr.mxu0 0.0
    %9728 = vmatpush1.msra.mxu0 1.0
    %9729 = vmatprep.subr.mxu0 0.0
    %9730 = vmatpush1.msra.mxu0 1.0
    %9731 = vmatprep.subr.mxu0 0.0
    %9732 = vmatpush1.msra.mxu0 1.0
    %9733 = vmatprep.subr.mxu0 0.0
    %9734 = vmatpush1.msra.mxu0 1.0
    %9735 = vmatprep.subr.mxu0 0.0
    %9736 = vmatpush1.msra.mxu0 1.0
    %9737 = vmatprep.subr.mxu0 0.0
    %9738 = vmatpush1.msra.mxu0 1.0
    %9739 = vmatprep.subr.mxu0 0.0
    %9740 = vmatpush1.msra.mxu0 1.0
    %9741 = vmatprep.subr.mxu0 0.0
    %9742 = vmatpush1.msra.mxu0 1.0
    %9743 = vmatprep.subr.mxu0 0.0
    %9744 = vmatpush1.msra.mxu0 1.0
    %9745 = vmatprep.subr.mxu0 0.0
    %9746 = vmatpush1.msra.mxu0 1.0
    %9747 = vmatprep.subr.mxu0 0.0
    %9748 = vmatpush1.msra.mxu0 1.0
    %9749 = vmatprep.subr.mxu0 0.0
    %9750 = vmatpush1.msra.mxu0 1.0
    %9751 = vmatprep.subr.mxu0 0.0
    %9752 = vmatpush1.msra.mxu0 1.0
    %9753 = vmatprep.subr.mxu0 0.0
    %9754 = vmatpush1.msra.mxu0 1.0
    %9755 = vmatprep.subr.mxu0 0.0
    %9756 = vmatpush1.msra.mxu0 1.0
    %9757 = vmatprep.subr.mxu0 0.0
    %9758 = vmatpush1.msra.mxu0 1.0
    %9759 = vmatprep.subr.mxu0 0.0
    %9760 = vmatpush1.msra.mxu0 1.0
    %9761 = vmatprep.subr.mxu0 0.0
    %9762 = vmatpush1.msra.mxu0 1.0
    %9763 = vmatprep.subr.mxu0 0.0
    %9764 = vmatpush1.msra.mxu0 1.0
    %9765 = vmatprep.subr.mxu0 0.0
    %9766 = vmatpush1.msra.mxu0 1.0
    %9767 = vmatprep.subr.mxu0 0.0
    %9768 = vmatpush1.msra.mxu0 1.0
    %9769 = vmatprep.subr.mxu0 0.0
    %9770 = vmatpush1.msra.mxu0 1.0
    %9771 = vmatprep.subr.mxu0 0.0
    %9772 = vmatpush1.msra.mxu0 1.0
    %9773 = vmatprep.mubr.f32.mxu0 %v9498
    %9774 = vmatmul.mubr.f32.gmra.mrb[0].mxu0 %v9497
    %v9775 = vpop.f32.mrb[0].mxu0
    %v9776 = vadd.f32 %v9706, %v9775
    %v9777 = vpop.f32.mrb[0].mxu0
    %9778 = vdwg.mxu0
    %9779 = vadd.xlane.f32.xlu0 %v9776
    %v9780 = vpop.xlane.xlu0 %9779
    %v9781 = vmul.f32 %v9780, %v988
    %v9782 = vmul.f32 %v9781, 0.0009765625
    %v9783 = vadd.f32 %v9782, 1e-05
    %v9784 = vrsqrt.pop %v9783
    %v9785 = vmul.f32 %v9483, %v9784
    %v9786 = vmul.f32 %v9484, %v9784
    %v9787 = vmul.f32 %v9485, %v9784
    %v9788 = vmul.f32 %v9486, %v9784
    %v9789 = vmul.f32 %v9487, %v9784
    %v9790 = vmul.f32 %v9488, %v9784
    %v9791 = vmul.f32 %v9489, %v9784
    %v9792 = vmul.f32 %v9490, %v9784
    %v9793 = vstv %s8901
    %v9794 = vmul.f32 %v9793, %v9785
    %v9795 = vmul.f32 %v9793, %v9786
    %v9796 = vmul.f32 %v9793, %v9787
    %v9797 = vmul.f32 %v9793, %v9788
    %v9798 = vmul.f32 %v9793, %v9789
    %v9799 = vmul.f32 %v9793, %v9790
    %v9800 = vmul.f32 %v9793, %v9791
    %v9801 = vmul.f32 %v9793, %v9792
    %v9802 = vadd.f32 %v8893, %v9794
    %v9803 = vadd.f32 %v8894, %v9795
    %v9804 = vadd.f32 %v8895, %v9796
    %v9805 = vadd.f32 %v8896, %v9797
    %v9806 = vadd.f32 %v8897, %v9798
    %v9807 = vadd.f32 %v8898, %v9799
    %v9808 = vadd.f32 %v8899, %v9800
    %v9809 = vadd.f32 %v8900, %v9801
    %9810 = vst [vmem:[%s7] sm:$0xff] %v7267
    %9811 = vst [vmem:[%s7 + $0x8] sm:$0xff] %v7268
    %9812 = vst [vmem:[%s7 + $0x10] sm:$0xff] %v7269
    %9813 = vst [vmem:[%s7 + $0x18] sm:$0xff] %v7270
    %9814 = vst [vmem:[%s7 + $0x20] sm:$0xff] %v7271
    %9815 = vst [vmem:[%s7 + $0x28] sm:$0xff] %v7272
    %9816 = vst [vmem:[%s7 + $0x30] sm:$0xff] %v7273
    %9817 = vst [vmem:[%s7 + $0x38] sm:$0xff] %v7274
    %9818 = vst [vmem:[%s7 + $0x40] sm:$0xff] %v9802
    %9819 = vst [vmem:[%s7 + $0x48] sm:$0xff] %v9803
    %9820 = vst [vmem:[%s7 + $0x50] sm:$0xff] %v9804
    %9821 = vst [vmem:[%s7 + $0x58] sm:$0xff] %v9805
    %9822 = vst [vmem:[%s7 + $0x60] sm:$0xff] %v9806
    %9823 = vst [vmem:[%s7 + $0x68] sm:$0xff] %v9807
    %9824 = vst [vmem:[%s7 + $0x70] sm:$0xff] %v9808
    %9825 = vst [vmem:[%s7 + $0x78] sm:$0xff] %v9809
    // Predicated region
    $region34: #{cell3d_forward.1} parent=1 // pred_check
      _
    $region35: #{cell3d_forward.1} parent=1 // pred_check_branch
      %9827 = sbr.rel (0) target = $region37
    $region36: #{cell3d_forward.1} parent=1 // pred_region
      _
    $region37: #{cell3d_forward.1} parent=1 // pred_fallthru
      _
    // Predicated region
    $region38: #{cell3d_forward.1} parent=1 // pred_check
      _
    $region39: #{cell3d_forward.1} parent=1 // pred_check_branch
      %9829 = sbr.rel (0) target = $region41
    $region40: #{cell3d_forward.1} parent=1 // pred_region
      _
    $region41: #{cell3d_forward.1} parent=1 // pred_fallthru
      _
    %9830 = vsyncpa [#allocation3], 1

</llo_original>
